<compile_context>
chip_gen: v7x
topology: tpu7x:2x2x1
jax: 0.10.0
libtpu: 0.0.40
codegen_flags: <defaults>
</compile_context>

<pallas_src>
from functools import partial

import numpy as np
import jax
import jax.numpy as jnp
from jax import lax
from jax.experimental import pallas as pl
from jax.experimental.pallas import tpu as pltpu

MODEL_DIM = 32          # hidden_dim of UnifiedClassifier
ENC_H = MODEL_DIM // 2  # GRU hidden per direction (enc_hidden_dim) = 16
NUM_HEADS = 8           # num_attn_heads; cancels out for Lq=Lk=1 attention
STATE_PAD = 128         # padded combined recurrent width (4*ENC_H = 64 active lanes)


# ----------------------------- in-kernel math helpers -----------------------------

def _erf(x):
    # Abramowitz & Stegun 7.1.26 rational approximation, |err| <= 1.5e-7 (f32-exact).
    # Off the recurrent critical path (runs once on (B, 32) tensors).
    # TODO(synk): switch to jax.lax.erf once its Mosaic lowering is guaranteed.
    a1, a2, a3, a4, a5 = 0.254829592, -0.284496736, 1.421413741, -1.453152027, 1.061405429
    p = 0.3275911
    s = jnp.where(x >= 0.0, 1.0, -1.0)
    ax = jnp.abs(x)
    t = 1.0 / (1.0 + p * ax)
    poly = ((((a5 * t + a4) * t + a3) * t + a2) * t + a1) * t
    return s * (1.0 - poly * jnp.exp(-ax * ax))


def _gelu(x):
    # exact (erf-based) GELU, matching torch.nn.GELU() default
    return 0.5 * x * (1.0 + _erf(x * 0.7071067811865476))


# ----------------------------- the fused kernel -----------------------------
# Combined "channel" layout of the recurrent state (STATE_PAD = 128 lanes):
#   lanes [0:16)  image forward   [16:32) image backward
#   lanes [32:48) text  forward   [48:64) text  backward   [64:128) zero padding
# Backward channels consume the time-reversed input, so at loop index i every channel
# reads the same xp row block i (forward channels hold time i, backward channels hold
# time T-1-i).  Gate g of the fused per-step matmul lives at lanes [g*128, g*128+64).

def unified_kernel(x0_ref,
                   w0_ref, b0_ref, whh0_ref, bhn0_ref,
                   w1_ref, b1_ref, whh1_ref, bhn1_ref,
                   t_lng_ref, t_lnb_ref, t_aw1_ref, t_ab1_ref,
                   t_aw2_ref, t_ab2_ref, t_rw_ref, t_rb_ref,
                   f_wv_ref, f_bv_ref, f_wo_ref, f_bo_ref,
                   f_gwi_ref, f_gwa_ref, f_gb_ref, f_lng_ref, f_lnb_ref,
                   f_hw1_ref, f_hb1_ref, f_hw2_ref, f_hb2_ref,
                   out_ref,
                   xp_all, hcat, hs1, seq,
                   *, T, B):
    Hh = ENC_H
    CP = STATE_PAD
    F = 2 * Hh          # per-encoder bidirectional feature width (32) = model_dim

    # ---- hoisted layer-0 input projection: ONE matmul over all T*B rows, all gates ----
    xp_all[...] = (jnp.dot(x0_ref[...], w0_ref[...], preferred_element_type=jnp.float32)
                   + b0_ref[...])

    def run_layer(whh_ref, bhn_ref, store_ref, lane0):
        whh = whh_ref[...]                                    # (CP, 3*CP) bf16, loaded once
        bhn = jnp.broadcast_to(bhn_ref[...], (B, CP))         # hoisted out of the loop

        def body(i, h):
            row = pl.multiple_of(i * B, B)
            xp = xp_all[pl.ds(row, B), :]                     # (B, 3*CP), vreg-aligned gates
            hp = jnp.dot(h.astype(jnp.bfloat16), whh,         # ONE fused MXU push per step
                         preferred_element_type=jnp.float32)
            r = jax.nn.sigmoid(xp[:, 0:CP] + hp[:, 0:CP])                 # b_ir+b_hr in xp
            z = jax.nn.sigmoid(xp[:, CP:2 * CP] + hp[:, CP:2 * CP])       # b_iz+b_hz in xp
            n = jnp.tanh(xp[:, 2 * CP:3 * CP] + r * (hp[:, 2 * CP:3 * CP] + bhn))
            h_new = (1.0 - z) * n + z * h
            store_ref[pl.ds(row, B), pl.ds(lane0, CP)] = h_new  # single (8,128) store
            return h_new

        lax.fori_loop(0, T, body, jnp.zeros((B, CP), jnp.float32), unroll=True)

    # ---- GRU layer 0: img-fwd / img-bwd / txt-fwd / txt-bwd in one recurrence ----
    run_layer(whh0_ref, bhn0_ref, hcat, 0)

    # fill hcat lanes [CP:2CP) with the time-reversed layer-0 states (off critical path)
    for t in range(T):
        hcat[pl.ds(t * B, B), pl.ds(CP, CP)] = hcat[pl.ds((T - 1 - t) * B, B), pl.ds(0, CP)]

    # ---- hoisted layer-1 input projection: ONE matmul on [h0 | h0_reversed] ----
    # (inter-layer dropout = identity in eval mode)
    xp_all[...] = (jnp.dot(hcat[...], w1_ref[...], preferred_element_type=jnp.float32)
                   + b1_ref[...])

    # ---- GRU layer 1 ----
    run_layer(whh1_ref, bhn1_ref, hs1, 0)

    # ---- reassemble time-ordered bidirectional outputs: one lane mask + T selects ----
    lane = lax.broadcasted_iota(jnp.int32, (B, CP), 1)
    fwd_mask = (lane % F) < Hh
    for t in range(T):
        fwd = hs1[pl.ds(t * B, B), :]
        bwd = hs1[pl.ds((T - 1 - t) * B, B), :]
        seq[pl.ds(t * B, B), :] = jnp.where(fwd_mask, fwd, bwd)

    seq3 = seq[...].reshape(T, B, CP)   # B == 8 sublanes -> tile-preserving reshape

    # ---- per-encoder tail: LayerNorm + attention pooling + refiner (Linear + GELU) ----
    def encoder_tail(sm, lng, lnb, aw1, ab1, aw2, ab2, rw, rb):
        mean = jnp.mean(sm, axis=-1, keepdims=True)
        var = jnp.mean(jnp.square(sm - mean), axis=-1, keepdims=True)
        sn = (sm - mean) * lax.rsqrt(var + 1e-5) * lng.reshape(1, 1, F) + lnb.reshape(1, 1, F)
        flat = sn.reshape(T * B, F)
        hid = jnp.tanh(jnp.dot(flat, aw1, preferred_element_type=jnp.float32) + ab1)
        logits = (jnp.dot(hid, aw2, preferred_element_type=jnp.float32) + ab2).reshape(T, B, 1)
        m = jnp.max(logits, axis=0, keepdims=True)
        e = jnp.exp(logits - m)
        w = e / jnp.sum(e, axis=0, keepdims=True)
        pooled = jnp.sum(sn * w, axis=0)            # (B, F)
        y = jnp.dot(pooled, rw, preferred_element_type=jnp.float32) + rb
        return _gelu(y)                             # (B, F) = (B, model_dim)

    img_emb = encoder_tail(seq3[:, :, 0:F],
                           t_lng_ref[0], t_lnb_ref[0], t_aw1_ref[0], t_ab1_ref[0],
                           t_aw2_ref[0], t_ab2_ref[0], t_rw_ref[0], t_rb_ref[0])
    txt_emb = encoder_tail(seq3[:, :, F:2 * F],
                           t_lng_ref[1], t_lnb_ref[1], t_aw1_ref[1], t_ab1_ref[1],
                           t_aw2_ref[1], t_ab2_ref[1], t_rw_ref[1], t_rb_ref[1])

    # ---- fusion: MHA with Lq=Lk=1 collapses to out_proj(v_proj(txt));
    #      gate computed as two half-matmuls (no lane concat); gated residual + LN ----
    v = jnp.dot(txt_emb, f_wv_ref[...], preferred_element_type=jnp.float32) + f_bv_ref[...]
    aux = jnp.dot(v, f_wo_ref[...], preferred_element_type=jnp.float32) + f_bo_ref[...]
    gate = jax.nn.sigmoid(jnp.dot(img_emb, f_gwi_ref[...], preferred_element_type=jnp.float32)
                          + jnp.dot(aux, f_gwa_ref[...], preferred_element_type=jnp.float32)
                          + f_gb_ref[...])
    fused = img_emb + gate * aux
    mean = jnp.mean(fused, axis=-1, keepdims=True)
    var = jnp.mean(jnp.square(fused - mean), axis=-1, keepdims=True)
    final = (fused - mean) * lax.rsqrt(var + 1e-5) * f_lng_ref[...] + f_lnb_ref[...]

    # ---- VA heads combined: cols [0:E/2) valence hidden, [E/2:E) arousal hidden;
    #      block-diagonal second layer gives (B, 2) = [valence, arousal] directly ----
    hd = _gelu(jnp.dot(final, f_hw1_ref[...], preferred_element_type=jnp.float32) + f_hb1_ref[...])
    out = jnp.dot(hd, f_hw2_ref[...], preferred_element_type=jnp.float32) + f_hb2_ref[...]
    out_ref[...] = out.astype(out_ref.dtype)


# ----------------------------- host-side parameter repacking -----------------------------
# One-time (host / numpy) repack of the PyTorch-granularity parameters into the fused,
# gate-at-128-lane-offset, block-diagonal layout the kernel consumes.

def prepare_kernel_params(params, d_img, d_txt):
    H, CP, E = ENC_H, STATE_PAD, MODEL_DIM
    pi, pt, pf = params['image'], params['text'], params['fusion']
    g = lambda a: np.asarray(a, np.float32)
    gc = lambda gi: slice(gi * H, (gi + 1) * H)   # gate column slice (order r | z | n)

    # channel order: 0 img-fwd, 1 img-bwd, 2 txt-fwd, 3 txt-bwd
    wih0 = [g(pi['wih0'][0]), g(pi['wih0'][1]), g(pt['wih0'][0]), g(pt['wih0'][1])]
    whh0 = [g(pi['whh0'][0]), g(pi['whh0'][1]), g(pt['whh0'][0]), g(pt['whh0'][1])]
    bih0 = [g(pi['bih0'][0]), g(pi['bih0'][1]), g(pt['bih0'][0]), g(pt['bih0'][1])]
    bhh0 = [g(pi['bhh0'][0]), g(pi['bhh0'][1]), g(pt['bhh0'][0]), g(pt['bhh0'][1])]
    wih1 = [g(pi['wih1'][0]), g(pi['wih1'][1]), g(pt['wih1'][0]), g(pt['wih1'][1])]
    whh1 = [g(pi['whh1'][0]), g(pi['whh1'][1]), g(pt['whh1'][0]), g(pt['whh1'][1])]
    bih1 = [g(pi['bih1'][0]), g(pi['bih1'][1]), g(pt['bih1'][0]), g(pt['bih1'][1])]
    bhh1 = [g(pi['bhh1'][0]), g(pi['bhh1'][1]), g(pt['bhh1'][0]), g(pt['bhh1'][1])]

    din0 = 2 * d_img + 2 * d_txt
    row_off = [0, d_img, 2 * d_img, 2 * d_img + d_txt]   # input rows of each channel in X0

    # ---- layer 0: fused hoist weight (Din0, 3*CP) + fused block-diag recurrent (CP, 3*CP) ----
    w0 = np.zeros((din0, 3 * CP), np.float32)
    b0 = np.zeros((1, 3 * CP), np.float32)
    whh0_f = np.zeros((CP, 3 * CP), np.float32)
    bhn0 = np.zeros((1, CP), np.float32)
    for gi in range(3):
        for c in range(4):
            col = gi * CP + c * H
            w0[row_off[c]:row_off[c] + wih0[c].shape[0], col:col + H] = wih0[c][:, gc(gi)]
            b = bih0[c][:, gc(gi)]
            if gi < 2:                         # fold b_hr / b_hz; b_hn stays with hp_n
                b = b + bhh0[c][:, gc(gi)]
            b0[:, col:col + H] = b
            whh0_f[c * H:(c + 1) * H, col:col + H] = whh0[c][:, gc(gi)]
    for c in range(4):
        bhn0[:, c * H:(c + 1) * H] = bhh0[c][:, gc(2)]

    # ---- layer 1: XP1 = [H0 | H0_reversed] @ W1 (contraction rows [0:CP)=P part,
    #      [CP:2CP)=Q part), routing fwd/bwd layer-0 outputs into each layer-1 channel ----
    w1 = np.zeros((2 * CP, 3 * CP), np.float32)
    b1 = np.zeros((1, 3 * CP), np.float32)
    whh1_f = np.zeros((CP, 3 * CP), np.float32)
    bhn1 = np.zeros((1, CP), np.float32)
    mod_base = [0, 0, 2 * H, 2 * H]
    is_bwd = [False, True, False, True]
    for gi in range(3):
        for c in range(4):
            col = gi * CP + c * H
            wfwd = wih1[c][0:H, gc(gi)]        # multiplies layer-0 forward output
            wbwd = wih1[c][H:2 * H, gc(gi)]    # multiplies layer-0 backward output
            mb = mod_base[c]
            if not is_bwd[c]:
                w1[mb:mb + H, col:col + H] = wfwd                       # P (same time idx)
                w1[CP + mb + H:CP + mb + 2 * H, col:col + H] = wbwd     # Q (reversed idx)
            else:
                w1[CP + mb:CP + mb + H, col:col + H] = wfwd             # Q
                w1[mb + H:mb + 2 * H, col:col + H] = wbwd               # P
            b = bih1[c][:, gc(gi)]
            if gi < 2:
                b = b + bhh1[c][:, gc(gi)]
            b1[:, col:col + H] = b
            whh1_f[c * H:(c + 1) * H, col:col + H] = whh1[c][:, gc(gi)]
    for c in range(4):
        bhn1[:, c * H:(c + 1) * H] = bhh1[c][:, gc(2)]

    # ---- encoder tails, stacked [image, text] ----
    st = lambda k: np.stack([g(pi[k]), g(pt[k])])
    tails = (st('ln_g'), st('ln_b'), st('a_w1'), st('a_b1'),
             st('a_w2'), st('a_b2'), st('r_w'), st('r_b'))

    # ---- fusion + combined VA heads ----
    wv = g(pf['inproj_w'])[:, 2 * E:3 * E]
    bv = g(pf['inproj_b'])[:, 2 * E:3 * E]
    gw = g(pf['gate_w'])
    gw_img, gw_aux = gw[0:E, :], gw[E:2 * E, :]          # split gate weight (no in-kernel concat)
    head_w1 = np.concatenate([g(pf['v_w1']), g(pf['a_w1'])], axis=1)        # (E, E)
    head_b1 = np.concatenate([g(pf['v_b1']), g(pf['a_b1'])], axis=1)        # (1, E)
    head_w2 = np.zeros((E, 2), np.float32)
    head_w2[0:E // 2, 0:1] = g(pf['v_w2'])
    head_w2[E // 2:E, 1:2] = g(pf['a_w2'])
    head_b2 = np.concatenate([g(pf['v_b2']), g(pf['a_b2'])], axis=1)        # (1, 2)
    fusion = (wv, bv, g(pf['outproj_w']), g(pf['outproj_b']),
              gw_img, gw_aux, g(pf['gate_b']), g(pf['ln_g']), g(pf['ln_b']),
              head_w1, head_b1, head_w2, head_b2)

    dev = lambda a, dt=jnp.float32: jnp.asarray(a, dt)
    # Recurrent weights in bf16 (matmul inputs); f32 accumulation in-kernel.
    # TODO(synk): bf16 recurrent matmuls drift slightly vs an f32 PyTorch reference.
    packed = [dev(w0), dev(b0), dev(whh0_f, jnp.bfloat16), dev(bhn0),
              dev(w1), dev(b1), dev(whh1_f, jnp.bfloat16), dev(bhn1)]
    packed += [dev(a) for a in tails]
    packed += [dev(a) for a in fusion]
    return tuple(packed)


# ----------------------------- wrapper (pallas_call glue) -----------------------------

def _vmem_spec():
    return pl.BlockSpec(memory_space=pltpu.MemorySpace.VMEM)


def unified_classifier_forward(params, **feats):
    # 'visual' -> 'image' aliasing like the PyTorch module
    feats = {('image' if k == 'visual' else k): v for k, v in feats.items()}
    xi, xt = feats['image'], feats['text']
    if xi.ndim == 4:                   # mirrors `if x.dim() == 4: x = x.squeeze(1)`
        xi = jnp.squeeze(xi, axis=1)
    if xt.ndim == 4:
        xt = jnp.squeeze(xt, axis=1)
    B, T, d_img = xi.shape
    d_txt = xt.shape[-1]

    # Pad batch to a full f32 sublane tile (8): per-step state = one (8,128) vreg,
    # unmasked stores in the recurrence, tile-preserving reshapes in the tail.
    B_pad = max(8, ((B + 7) // 8) * 8)
    pad = B_pad - B
    xi_p = jnp.pad(xi.astype(jnp.float32), ((0, pad), (0, 0), (0, 0)))
    xt_p = jnp.pad(xt.astype(jnp.float32), ((0, pad), (0, 0), (0, 0)))

    # Layout plumbing (host-side XLA, outside the kernel): time-major + time-reversed
    # copies side by side, pre-flattened to (T*B_pad, Din0) so the kernel never
    # reshapes across (8,128) tiles.
    xi_tm = jnp.transpose(xi_p, (1, 0, 2))
    xt_tm = jnp.transpose(xt_p, (1, 0, 2))
    x0 = jnp.concatenate([xi_tm, xi_tm[::-1], xt_tm, xt_tm[::-1]], axis=-1)
    x0 = x0.reshape(T * B_pad, 2 * d_img + 2 * d_txt)

    packed = prepare_kernel_params(params, d_img, d_txt)   # host-side one-time repack
    n_in = 1 + len(packed)

    kernel = partial(unified_kernel, T=T, B=B_pad)
    out = pl.pallas_call(
        kernel,
        out_shape=jax.ShapeDtypeStruct((B_pad, 2), jnp.float32),
        in_specs=[_vmem_spec() for _ in range(n_in)],
        out_specs=_vmem_spec(),
        scratch_shapes=[
            pltpu.VMEM((T * B_pad, 3 * STATE_PAD), jnp.float32),   # fused xp (r|z|n)
            pltpu.VMEM((T * B_pad, 2 * STATE_PAD), jnp.float32),   # [h0 | h0 reversed]
            pltpu.VMEM((T * B_pad, STATE_PAD), jnp.float32),       # layer-1 states
            pltpu.VMEM((T * B_pad, STATE_PAD), jnp.float32),       # time-ordered seq
        ],
        compiler_params=pltpu.CompilerParams(vmem_limit_bytes=32 * 1024 * 1024),
    )(x0, *packed)
    # TODO(synk): at production batch sizes, add a batch grid axis with
    # dimension_semantics=("parallel",) so v7x's two TensorCores split the batch.
    return out[:B]


# ----------------------------- deterministic parameter init -----------------------------

def _linear(key, din, dout, scale=0.1):
    kw, kb = jax.random.split(key)
    return (jax.random.normal(kw, (din, dout), jnp.float32) * scale,
            jax.random.normal(kb, (1, dout), jnp.float32) * scale)


def init_encoder_params(key, D, H):
    ks = jax.random.split(key, 8)

    def gru_dir(k, din):
        k1, k2, k3, k4 = jax.random.split(k, 4)
        return (jax.random.normal(k1, (din, 3 * H), jnp.float32) * 0.1,   # W_ih^T, gate cols r|z|n
                jax.random.normal(k2, (H, 3 * H), jnp.float32) * 0.1,     # W_hh^T
                jax.random.normal(k3, (1, 3 * H), jnp.float32) * 0.1,     # b_ih
                jax.random.normal(k4, (1, 3 * H), jnp.float32) * 0.1)     # b_hh

    p = {}
    f0, b0 = gru_dir(ks[0], D), gru_dir(ks[1], D)
    p['wih0'] = jnp.stack([f0[0], b0[0]]); p['whh0'] = jnp.stack([f0[1], b0[1]])
    p['bih0'] = jnp.stack([f0[2], b0[2]]); p['bhh0'] = jnp.stack([f0[3], b0[3]])
    f1, b1 = gru_dir(ks[2], 2 * H), gru_dir(ks[3], 2 * H)
    p['wih1'] = jnp.stack([f1[0], b1[0]]); p['whh1'] = jnp.stack([f1[1], b1[1]])
    p['bih1'] = jnp.stack([f1[2], b1[2]]); p['bhh1'] = jnp.stack([f1[3], b1[3]])
    p['ln_g'] = jnp.ones((1, 2 * H), jnp.float32)
    p['ln_b'] = jnp.zeros((1, 2 * H), jnp.float32)
    p['a_w1'], p['a_b1'] = _linear(ks[4], 2 * H, H)
    p['a_w2'], p['a_b2'] = _linear(ks[5], H, 1)
    p['r_w'], p['r_b'] = _linear(ks[6], 2 * H, 2 * H)
    return p


def init_fusion_params(key, E):
    ks = jax.random.split(key, 8)
    p = {}
    p['inproj_w'] = jax.random.normal(ks[0], (E, 3 * E), jnp.float32) * 0.1   # packed [q|k|v]
    p['inproj_b'] = jax.random.normal(ks[1], (1, 3 * E), jnp.float32) * 0.1
    p['outproj_w'], p['outproj_b'] = _linear(ks[2], E, E)
    p['gate_w'], p['gate_b'] = _linear(ks[3], 2 * E, E)
    p['ln_g'] = jnp.ones((1, E), jnp.float32)
    p['ln_b'] = jnp.zeros((1, E), jnp.float32)
    p['v_w1'], p['v_b1'] = _linear(ks[4], E, E // 2)
    p['v_w2'], p['v_b2'] = _linear(ks[5], E // 2, 1)
    p['a_w1'], p['a_b1'] = _linear(ks[6], E, E // 2)
    p['a_w2'], p['a_b2'] = _linear(ks[7], E // 2, 1)
    return p


# ----------------------------- demo -----------------------------

if __name__ == "__main__":
    key = jax.random.PRNGKey(0)
    k_img, k_txt, kp1, kp2, kp3 = jax.random.split(key, 5)

    B, T, D_IMG, D_TXT = 2, 8, 24, 16
    image = jax.random.normal(k_img, (B, T, D_IMG), jnp.float32)
    text = jax.random.normal(k_txt, (B, T, D_TXT), jnp.float32)

    params = {
        'image': init_encoder_params(kp1, D_IMG, ENC_H),
        'text': init_encoder_params(kp2, D_TXT, ENC_H),
        'fusion': init_fusion_params(kp3, MODEL_DIM),
    }

    out = unified_classifier_forward(params, image=image, text=text)
    out = jax.block_until_ready(out)
    assert out.shape == (B, 2) and out.dtype == jnp.float32
    print("KERNEL_OK")
</pallas_src>

<mosaic_0001>
module attributes {stable_mosaic.version = 11 : i64} {
  func.func @unified_kernel(%arg0: memref<64x80xf32, #tpu.memory_space<vmem>>, %arg1: memref<80x384xf32, #tpu.memory_space<vmem>>, %arg2: memref<1x384xf32, #tpu.memory_space<vmem>>, %arg3: memref<128x384xbf16, #tpu.memory_space<vmem>>, %arg4: memref<1x128xf32, #tpu.memory_space<vmem>>, %arg5: memref<256x384xf32, #tpu.memory_space<vmem>>, %arg6: memref<1x384xf32, #tpu.memory_space<vmem>>, %arg7: memref<128x384xbf16, #tpu.memory_space<vmem>>, %arg8: memref<1x128xf32, #tpu.memory_space<vmem>>, %arg9: memref<2x1x32xf32, #tpu.memory_space<vmem>>, %arg10: memref<2x1x32xf32, #tpu.memory_space<vmem>>, %arg11: memref<2x32x16xf32, #tpu.memory_space<vmem>>, %arg12: memref<2x1x16xf32, #tpu.memory_space<vmem>>, %arg13: memref<2x16x1xf32, #tpu.memory_space<vmem>>, %arg14: memref<2x1x1xf32, #tpu.memory_space<vmem>>, %arg15: memref<2x32x32xf32, #tpu.memory_space<vmem>>, %arg16: memref<2x1x32xf32, #tpu.memory_space<vmem>>, %arg17: memref<32x32xf32, #tpu.memory_space<vmem>>, %arg18: memref<1x32xf32, #tpu.memory_space<vmem>>, %arg19: memref<32x32xf32, #tpu.memory_space<vmem>>, %arg20: memref<1x32xf32, #tpu.memory_space<vmem>>, %arg21: memref<32x32xf32, #tpu.memory_space<vmem>>, %arg22: memref<32x32xf32, #tpu.memory_space<vmem>>, %arg23: memref<1x32xf32, #tpu.memory_space<vmem>>, %arg24: memref<1x32xf32, #tpu.memory_space<vmem>>, %arg25: memref<1x32xf32, #tpu.memory_space<vmem>>, %arg26: memref<32x32xf32, #tpu.memory_space<vmem>>, %arg27: memref<1x32xf32, #tpu.memory_space<vmem>>, %arg28: memref<32x2xf32, #tpu.memory_space<vmem>>, %arg29: memref<1x2xf32, #tpu.memory_space<vmem>>, %arg30: memref<8x2xf32, #tpu.memory_space<vmem>>, %arg31: memref<64x384xf32, #tpu.memory_space<vmem>>, %arg32: memref<64x256xf32, #tpu.memory_space<vmem>>, %arg33: memref<64x128xf32, #tpu.memory_space<vmem>>, %arg34: memref<64x128xf32, #tpu.memory_space<vmem>>) attributes {dimension_semantics = [], scalar_prefetch = 0 : i64, scratch_operands = 4 : i64, tpu.core_type = #tpu.core_type<tc>} {
    %c0 = arith.constant 0 : index
    %c0_0 = arith.constant 0 : index
    %0 = vector.load %arg0[%c0, %c0_0] : memref<64x80xf32, #tpu.memory_space<vmem>>, vector<64x80xf32>
    %c0_1 = arith.constant 0 : index
    %c0_2 = arith.constant 0 : index
    %1 = vector.load %arg1[%c0_1, %c0_2] : memref<80x384xf32, #tpu.memory_space<vmem>>, vector<80x384xf32>
    %cst = arith.constant dense<0.000000e+00> : vector<64x384xf32>
    %2 = tpu.matmul %0, %1, %cst {dimension_numbers = #tpu.dot_dimension_numbers<[1], [0], [0], [1], [0, 0, 1, 1], [], []>} : vector<64x80xf32>, vector<80x384xf32>, vector<64x384xf32> -> vector<64x384xf32>
    %c0_3 = arith.constant 0 : index
    %c0_4 = arith.constant 0 : index
    %3 = vector.load %arg2[%c0_3, %c0_4] : memref<1x384xf32, #tpu.memory_space<vmem>>, vector<1x384xf32>
    %4 = vector.broadcast %3 : vector<1x384xf32> to vector<64x384xf32>
    %5 = arith.addf %2, %4 : vector<64x384xf32>
    %c0_5 = arith.constant 0 : index
    %c0_6 = arith.constant 0 : index
    %6 = vector.load %arg31[%c0_5, %c0_6] : memref<64x384xf32, #tpu.memory_space<vmem>>, vector<64x384xf32>
    tpu.vector_store %arg31[%c0_5, %c0_6], %5 {strides = array<i32>} : memref<64x384xf32, #tpu.memory_space<vmem>>, vector<64x384xf32>,
    %c0_7 = arith.constant 0 : index
    %c0_8 = arith.constant 0 : index
    %7 = vector.load %arg3[%c0_7, %c0_8] : memref<128x384xbf16, #tpu.memory_space<vmem>>, vector<128x384xbf16>
    %c0_9 = arith.constant 0 : index
    %c0_10 = arith.constant 0 : index
    %8 = vector.load %arg4[%c0_9, %c0_10] : memref<1x128xf32, #tpu.memory_space<vmem>>, vector<1x128xf32>
    %9 = vector.shape_cast %8 : vector<1x128xf32> to vector<1x128xf32>
    %10 = vector.broadcast %9 : vector<1x128xf32> to vector<8x128xf32>
    %cst_11 = arith.constant 0.000000e+00 : f32
    %11 = vector.broadcast %cst_11 : f32 to vector<8x128xf32>
    %c0_i32 = arith.constant 0 : i32
    %c8_i32 = arith.constant 8 : i32
    %12 = arith.muli %c0_i32, %c8_i32 : i32
    %13 = tpu.assume_multiple %12, 8 : i32
    %14 = arith.index_cast %13 : i32 to index
    %c0_12 = arith.constant 0 : index
    %15 = vector.load %arg31[%14, %c0_12] : memref<64x384xf32, #tpu.memory_space<vmem>>, vector<8x384xf32>
    %16 = arith.truncf %11 : vector<8x128xf32> to vector<8x128xbf16>
    %cst_13 = arith.constant dense<0.000000e+00> : vector<8x384xf32>
    %17 = tpu.matmul %16, %7, %cst_13 {dimension_numbers = #tpu.dot_dimension_numbers<[1], [0], [0], [1], [0, 0, 1, 1], [], []>} : vector<8x128xbf16>, vector<128x384xbf16>, vector<8x384xf32> -> vector<8x384xf32>
    %18 = vector.extract_strided_slice %15 {offsets = [0, 0], sizes = [8, 128], strides = [1, 1]} : vector<8x384xf32> to vector<8x128xf32>
    %19 = vector.extract_strided_slice %17 {offsets = [0, 0], sizes = [8, 128], strides = [1, 1]} : vector<8x384xf32> to vector<8x128xf32>
    %20 = arith.addf %18, %19 : vector<8x128xf32>
    %21 = arith.negf %20 : vector<8x128xf32>
    %22 = math.exp %21 : vector<8x128xf32>
    %cst_14 = arith.constant 1.000000e+00 : f32
    %23 = vector.broadcast %cst_14 : f32 to vector<8x128xf32>
    %24 = arith.addf %23, %22 : vector<8x128xf32>
    %25 = arith.divf %23, %24 : vector<8x128xf32>
    %26 = vector.extract_strided_slice %15 {offsets = [0, 128], sizes = [8, 128], strides = [1, 1]} : vector<8x384xf32> to vector<8x128xf32>
    %27 = vector.extract_strided_slice %17 {offsets = [0, 128], sizes = [8, 128], strides = [1, 1]} : vector<8x384xf32> to vector<8x128xf32>
    %28 = arith.addf %26, %27 : vector<8x128xf32>
    %29 = arith.negf %28 : vector<8x128xf32>
    %30 = math.exp %29 : vector<8x128xf32>
    %cst_15 = arith.constant 1.000000e+00 : f32
    %31 = vector.broadcast %cst_15 : f32 to vector<8x128xf32>
    %32 = arith.addf %31, %30 : vector<8x128xf32>
    %33 = arith.divf %31, %32 : vector<8x128xf32>
    %34 = vector.extract_strided_slice %15 {offsets = [0, 256], sizes = [8, 128], strides = [1, 1]} : vector<8x384xf32> to vector<8x128xf32>
    %35 = vector.extract_strided_slice %17 {offsets = [0, 256], sizes = [8, 128], strides = [1, 1]} : vector<8x384xf32> to vector<8x128xf32>
    %36 = arith.addf %35, %10 : vector<8x128xf32>
    %37 = arith.mulf %25, %36 : vector<8x128xf32>
    %38 = arith.addf %34, %37 : vector<8x128xf32>
    %39 = math.tanh %38 : vector<8x128xf32>
    %cst_16 = arith.constant 1.000000e+00 : f32
    %40 = vector.broadcast %cst_16 : f32 to vector<8x128xf32>
    %41 = arith.subf %40, %33 : vector<8x128xf32>
    %42 = arith.mulf %41, %39 : vector<8x128xf32>
    %43 = arith.mulf %33, %11 : vector<8x128xf32>
    %44 = arith.addf %42, %43 : vector<8x128xf32>
    %45 = arith.index_cast %13 : i32 to index
    %c0_17 = arith.constant 0 : index
    %46 = vector.load %arg32[%45, %c0_17] : memref<64x256xf32, #tpu.memory_space<vmem>>, vector<8x128xf32>
    tpu.vector_store %arg32[%45, %c0_17], %44 {strides = array<i32>} : memref<64x256xf32, #tpu.memory_space<vmem>>, vector<8x128xf32>,
    %c1_i32 = arith.constant 1 : i32
    %c8_i32_18 = arith.constant 8 : i32
    %47 = arith.muli %c1_i32, %c8_i32_18 : i32
    %48 = tpu.assume_multiple %47, 8 : i32
    %49 = arith.index_cast %48 : i32 to index
    %c0_19 = arith.constant 0 : index
    %50 = vector.load %arg31[%49, %c0_19] : memref<64x384xf32, #tpu.memory_space<vmem>>, vector<8x384xf32>
    %51 = arith.truncf %44 : vector<8x128xf32> to vector<8x128xbf16>
    %cst_20 = arith.constant dense<0.000000e+00> : vector<8x384xf32>
    %52 = tpu.matmul %51, %7, %cst_20 {dimension_numbers = #tpu.dot_dimension_numbers<[1], [0], [0], [1], [0, 0, 1, 1], [], []>} : vector<8x128xbf16>, vector<128x384xbf16>, vector<8x384xf32> -> vector<8x384xf32>
    %53 = vector.extract_strided_slice %50 {offsets = [0, 0], sizes = [8, 128], strides = [1, 1]} : vector<8x384xf32> to vector<8x128xf32>
    %54 = vector.extract_strided_slice %52 {offsets = [0, 0], sizes = [8, 128], strides = [1, 1]} : vector<8x384xf32> to vector<8x128xf32>
    %55 = arith.addf %53, %54 : vector<8x128xf32>
    %56 = arith.negf %55 : vector<8x128xf32>
    %57 = math.exp %56 : vector<8x128xf32>
    %cst_21 = arith.constant 1.000000e+00 : f32
    %58 = vector.broadcast %cst_21 : f32 to vector<8x128xf32>
    %59 = arith.addf %58, %57 : vector<8x128xf32>
    %60 = arith.divf %58, %59 : vector<8x128xf32>
    %61 = vector.extract_strided_slice %50 {offsets = [0, 128], sizes = [8, 128], strides = [1, 1]} : vector<8x384xf32> to vector<8x128xf32>
    %62 = vector.extract_strided_slice %52 {offsets = [0, 128], sizes = [8, 128], strides = [1, 1]} : vector<8x384xf32> to vector<8x128xf32>
    %63 = arith.addf %61, %62 : vector<8x128xf32>
    %64 = arith.negf %63 : vector<8x128xf32>
    %65 = math.exp %64 : vector<8x128xf32>
    %cst_22 = arith.constant 1.000000e+00 : f32
    %66 = vector.broadcast %cst_22 : f32 to vector<8x128xf32>
    %67 = arith.addf %66, %65 : vector<8x128xf32>
    %68 = arith.divf %66, %67 : vector<8x128xf32>
    %69 = vector.extract_strided_slice %50 {offsets = [0, 256], sizes = [8, 128], strides = [1, 1]} : vector<8x384xf32> to vector<8x128xf32>
    %70 = vector.extract_strided_slice %52 {offsets = [0, 256], sizes = [8, 128], strides = [1, 1]} : vector<8x384xf32> to vector<8x128xf32>
    %71 = arith.addf %70, %10 : vector<8x128xf32>
    %72 = arith.mulf %60, %71 : vector<8x128xf32>
    %73 = arith.addf %69, %72 : vector<8x128xf32>
    %74 = math.tanh %73 : vector<8x128xf32>
    %cst_23 = arith.constant 1.000000e+00 : f32
    %75 = vector.broadcast %cst_23 : f32 to vector<8x128xf32>
    %76 = arith.subf %75, %68 : vector<8x128xf32>
    %77 = arith.mulf %76, %74 : vector<8x128xf32>
    %78 = arith.mulf %68, %44 : vector<8x128xf32>
    %79 = arith.addf %77, %78 : vector<8x128xf32>
    %80 = arith.index_cast %48 : i32 to index
    %c0_24 = arith.constant 0 : index
    %81 = vector.load %arg32[%80, %c0_24] : memref<64x256xf32, #tpu.memory_space<vmem>>, vector<8x128xf32>
    tpu.vector_store %arg32[%80, %c0_24], %79 {strides = array<i32>} : memref<64x256xf32, #tpu.memory_space<vmem>>, vector<8x128xf32>,
    %c2_i32 = arith.constant 2 : i32
    %c8_i32_25 = arith.constant 8 : i32
    %82 = arith.muli %c2_i32, %c8_i32_25 : i32
    %83 = tpu.assume_multiple %82, 8 : i32
    %84 = arith.index_cast %83 : i32 to index
    %c0_26 = arith.constant 0 : index
    %85 = vector.load %arg31[%84, %c0_26] : memref<64x384xf32, #tpu.memory_space<vmem>>, vector<8x384xf32>
    %86 = arith.truncf %79 : vector<8x128xf32> to vector<8x128xbf16>
    %cst_27 = arith.constant dense<0.000000e+00> : vector<8x384xf32>
    %87 = tpu.matmul %86, %7, %cst_27 {dimension_numbers = #tpu.dot_dimension_numbers<[1], [0], [0], [1], [0, 0, 1, 1], [], []>} : vector<8x128xbf16>, vector<128x384xbf16>, vector<8x384xf32> -> vector<8x384xf32>
    %88 = vector.extract_strided_slice %85 {offsets = [0, 0], sizes = [8, 128], strides = [1, 1]} : vector<8x384xf32> to vector<8x128xf32>
    %89 = vector.extract_strided_slice %87 {offsets = [0, 0], sizes = [8, 128], strides = [1, 1]} : vector<8x384xf32> to vector<8x128xf32>
    %90 = arith.addf %88, %89 : vector<8x128xf32>
    %91 = arith.negf %90 : vector<8x128xf32>
    %92 = math.exp %91 : vector<8x128xf32>
    %cst_28 = arith.constant 1.000000e+00 : f32
    %93 = vector.broadcast %cst_28 : f32 to vector<8x128xf32>
    %94 = arith.addf %93, %92 : vector<8x128xf32>
    %95 = arith.divf %93, %94 : vector<8x128xf32>
    %96 = vector.extract_strided_slice %85 {offsets = [0, 128], sizes = [8, 128], strides = [1, 1]} : vector<8x384xf32> to vector<8x128xf32>
    %97 = vector.extract_strided_slice %87 {offsets = [0, 128], sizes = [8, 128], strides = [1, 1]} : vector<8x384xf32> to vector<8x128xf32>
    %98 = arith.addf %96, %97 : vector<8x128xf32>
    %99 = arith.negf %98 : vector<8x128xf32>
    %100 = math.exp %99 : vector<8x128xf32>
    %cst_29 = arith.constant 1.000000e+00 : f32
    %101 = vector.broadcast %cst_29 : f32 to vector<8x128xf32>
    %102 = arith.addf %101, %100 : vector<8x128xf32>
    %103 = arith.divf %101, %102 : vector<8x128xf32>
    %104 = vector.extract_strided_slice %85 {offsets = [0, 256], sizes = [8, 128], strides = [1, 1]} : vector<8x384xf32> to vector<8x128xf32>
    %105 = vector.extract_strided_slice %87 {offsets = [0, 256], sizes = [8, 128], strides = [1, 1]} : vector<8x384xf32> to vector<8x128xf32>
    %106 = arith.addf %105, %10 : vector<8x128xf32>
    %107 = arith.mulf %95, %106 : vector<8x128xf32>
    %108 = arith.addf %104, %107 : vector<8x128xf32>
    %109 = math.tanh %108 : vector<8x128xf32>
    %cst_30 = arith.constant 1.000000e+00 : f32
    %110 = vector.broadcast %cst_30 : f32 to vector<8x128xf32>
    %111 = arith.subf %110, %103 : vector<8x128xf32>
    %112 = arith.mulf %111, %109 : vector<8x128xf32>
    %113 = arith.mulf %103, %79 : vector<8x128xf32>
    %114 = arith.addf %112, %113 : vector<8x128xf32>
    %115 = arith.index_cast %83 : i32 to index
    %c0_31 = arith.constant 0 : index
    %116 = vector.load %arg32[%115, %c0_31] : memref<64x256xf32, #tpu.memory_space<vmem>>, vector<8x128xf32>
    tpu.vector_store %arg32[%115, %c0_31], %114 {strides = array<i32>} : memref<64x256xf32, #tpu.memory_space<vmem>>, vector<8x128xf32>,
    %c3_i32 = arith.constant 3 : i32
    %c8_i32_32 = arith.constant 8 : i32
    %117 = arith.muli %c3_i32, %c8_i32_32 : i32
    %118 = tpu.assume_multiple %117, 8 : i32
    %119 = arith.index_cast %118 : i32 to index
    %c0_33 = arith.constant 0 : index
    %120 = vector.load %arg31[%119, %c0_33] : memref<64x384xf32, #tpu.memory_space<vmem>>, vector<8x384xf32>
    %121 = arith.truncf %114 : vector<8x128xf32> to vector<8x128xbf16>
    %cst_34 = arith.constant dense<0.000000e+00> : vector<8x384xf32>
    %122 = tpu.matmul %121, %7, %cst_34 {dimension_numbers = #tpu.dot_dimension_numbers<[1], [0], [0], [1], [0, 0, 1, 1], [], []>} : vector<8x128xbf16>, vector<128x384xbf16>, vector<8x384xf32> -> vector<8x384xf32>
    %123 = vector.extract_strided_slice %120 {offsets = [0, 0], sizes = [8, 128], strides = [1, 1]} : vector<8x384xf32> to vector<8x128xf32>
    %124 = vector.extract_strided_slice %122 {offsets = [0, 0], sizes = [8, 128], strides = [1, 1]} : vector<8x384xf32> to vector<8x128xf32>
    %125 = arith.addf %123, %124 : vector<8x128xf32>
    %126 = arith.negf %125 : vector<8x128xf32>
    %127 = math.exp %126 : vector<8x128xf32>
    %cst_35 = arith.constant 1.000000e+00 : f32
    %128 = vector.broadcast %cst_35 : f32 to vector<8x128xf32>
    %129 = arith.addf %128, %127 : vector<8x128xf32>
    %130 = arith.divf %128, %129 : vector<8x128xf32>
    %131 = vector.extract_strided_slice %120 {offsets = [0, 128], sizes = [8, 128], strides = [1, 1]} : vector<8x384xf32> to vector<8x128xf32>
    %132 = vector.extract_strided_slice %122 {offsets = [0, 128], sizes = [8, 128], strides = [1, 1]} : vector<8x384xf32> to vector<8x128xf32>
    %133 = arith.addf %131, %132 : vector<8x128xf32>
    %134 = arith.negf %133 : vector<8x128xf32>
    %135 = math.exp %134 : vector<8x128xf32>
    %cst_36 = arith.constant 1.000000e+00 : f32
    %136 = vector.broadcast %cst_36 : f32 to vector<8x128xf32>
    %137 = arith.addf %136, %135 : vector<8x128xf32>
    %138 = arith.divf %136, %137 : vector<8x128xf32>
    %139 = vector.extract_strided_slice %120 {offsets = [0, 256], sizes = [8, 128], strides = [1, 1]} : vector<8x384xf32> to vector<8x128xf32>
    %140 = vector.extract_strided_slice %122 {offsets = [0, 256], sizes = [8, 128], strides = [1, 1]} : vector<8x384xf32> to vector<8x128xf32>
    %141 = arith.addf %140, %10 : vector<8x128xf32>
    %142 = arith.mulf %130, %141 : vector<8x128xf32>
    %143 = arith.addf %139, %142 : vector<8x128xf32>
    %144 = math.tanh %143 : vector<8x128xf32>
    %cst_37 = arith.constant 1.000000e+00 : f32
    %145 = vector.broadcast %cst_37 : f32 to vector<8x128xf32>
    %146 = arith.subf %145, %138 : vector<8x128xf32>
    %147 = arith.mulf %146, %144 : vector<8x128xf32>
    %148 = arith.mulf %138, %114 : vector<8x128xf32>
    %149 = arith.addf %147, %148 : vector<8x128xf32>
    %150 = arith.index_cast %118 : i32 to index
    %c0_38 = arith.constant 0 : index
    %151 = vector.load %arg32[%150, %c0_38] : memref<64x256xf32, #tpu.memory_space<vmem>>, vector<8x128xf32>
    tpu.vector_store %arg32[%150, %c0_38], %149 {strides = array<i32>} : memref<64x256xf32, #tpu.memory_space<vmem>>, vector<8x128xf32>,
    %c4_i32 = arith.constant 4 : i32
    %c8_i32_39 = arith.constant 8 : i32
    %152 = arith.muli %c4_i32, %c8_i32_39 : i32
    %153 = tpu.assume_multiple %152, 8 : i32
    %154 = arith.index_cast %153 : i32 to index
    %c0_40 = arith.constant 0 : index
    %155 = vector.load %arg31[%154, %c0_40] : memref<64x384xf32, #tpu.memory_space<vmem>>, vector<8x384xf32>
    %156 = arith.truncf %149 : vector<8x128xf32> to vector<8x128xbf16>
    %cst_41 = arith.constant dense<0.000000e+00> : vector<8x384xf32>
    %157 = tpu.matmul %156, %7, %cst_41 {dimension_numbers = #tpu.dot_dimension_numbers<[1], [0], [0], [1], [0, 0, 1, 1], [], []>} : vector<8x128xbf16>, vector<128x384xbf16>, vector<8x384xf32> -> vector<8x384xf32>
    %158 = vector.extract_strided_slice %155 {offsets = [0, 0], sizes = [8, 128], strides = [1, 1]} : vector<8x384xf32> to vector<8x128xf32>
    %159 = vector.extract_strided_slice %157 {offsets = [0, 0], sizes = [8, 128], strides = [1, 1]} : vector<8x384xf32> to vector<8x128xf32>
    %160 = arith.addf %158, %159 : vector<8x128xf32>
    %161 = arith.negf %160 : vector<8x128xf32>
    %162 = math.exp %161 : vector<8x128xf32>
    %cst_42 = arith.constant 1.000000e+00 : f32
    %163 = vector.broadcast %cst_42 : f32 to vector<8x128xf32>
    %164 = arith.addf %163, %162 : vector<8x128xf32>
    %165 = arith.divf %163, %164 : vector<8x128xf32>
    %166 = vector.extract_strided_slice %155 {offsets = [0, 128], sizes = [8, 128], strides = [1, 1]} : vector<8x384xf32> to vector<8x128xf32>
    %167 = vector.extract_strided_slice %157 {offsets = [0, 128], sizes = [8, 128], strides = [1, 1]} : vector<8x384xf32> to vector<8x128xf32>
    %168 = arith.addf %166, %167 : vector<8x128xf32>
    %169 = arith.negf %168 : vector<8x128xf32>
    %170 = math.exp %169 : vector<8x128xf32>
    %cst_43 = arith.constant 1.000000e+00 : f32
    %171 = vector.broadcast %cst_43 : f32 to vector<8x128xf32>
    %172 = arith.addf %171, %170 : vector<8x128xf32>
    %173 = arith.divf %171, %172 : vector<8x128xf32>
    %174 = vector.extract_strided_slice %155 {offsets = [0, 256], sizes = [8, 128], strides = [1, 1]} : vector<8x384xf32> to vector<8x128xf32>
    %175 = vector.extract_strided_slice %157 {offsets = [0, 256], sizes = [8, 128], strides = [1, 1]} : vector<8x384xf32> to vector<8x128xf32>
    %176 = arith.addf %175, %10 : vector<8x128xf32>
    %177 = arith.mulf %165, %176 : vector<8x128xf32>
    %178 = arith.addf %174, %177 : vector<8x128xf32>
    %179 = math.tanh %178 : vector<8x128xf32>
    %cst_44 = arith.constant 1.000000e+00 : f32
    %180 = vector.broadcast %cst_44 : f32 to vector<8x128xf32>
    %181 = arith.subf %180, %173 : vector<8x128xf32>
    %182 = arith.mulf %181, %179 : vector<8x128xf32>
    %183 = arith.mulf %173, %149 : vector<8x128xf32>
    %184 = arith.addf %182, %183 : vector<8x128xf32>
    %185 = arith.index_cast %153 : i32 to index
    %c0_45 = arith.constant 0 : index
    %186 = vector.load %arg32[%185, %c0_45] : memref<64x256xf32, #tpu.memory_space<vmem>>, vector<8x128xf32>
    tpu.vector_store %arg32[%185, %c0_45], %184 {strides = array<i32>} : memref<64x256xf32, #tpu.memory_space<vmem>>, vector<8x128xf32>,
    %c5_i32 = arith.constant 5 : i32
    %c8_i32_46 = arith.constant 8 : i32
    %187 = arith.muli %c5_i32, %c8_i32_46 : i32
    %188 = tpu.assume_multiple %187, 8 : i32
    %189 = arith.index_cast %188 : i32 to index
    %c0_47 = arith.constant 0 : index
    %190 = vector.load %arg31[%189, %c0_47] : memref<64x384xf32, #tpu.memory_space<vmem>>, vector<8x384xf32>
    %191 = arith.truncf %184 : vector<8x128xf32> to vector<8x128xbf16>
    %cst_48 = arith.constant dense<0.000000e+00> : vector<8x384xf32>
    %192 = tpu.matmul %191, %7, %cst_48 {dimension_numbers = #tpu.dot_dimension_numbers<[1], [0], [0], [1], [0, 0, 1, 1], [], []>} : vector<8x128xbf16>, vector<128x384xbf16>, vector<8x384xf32> -> vector<8x384xf32>
    %193 = vector.extract_strided_slice %190 {offsets = [0, 0], sizes = [8, 128], strides = [1, 1]} : vector<8x384xf32> to vector<8x128xf32>
    %194 = vector.extract_strided_slice %192 {offsets = [0, 0], sizes = [8, 128], strides = [1, 1]} : vector<8x384xf32> to vector<8x128xf32>
    %195 = arith.addf %193, %194 : vector<8x128xf32>
    %196 = arith.negf %195 : vector<8x128xf32>
    %197 = math.exp %196 : vector<8x128xf32>
    %cst_49 = arith.constant 1.000000e+00 : f32
    %198 = vector.broadcast %cst_49 : f32 to vector<8x128xf32>
    %199 = arith.addf %198, %197 : vector<8x128xf32>
    %200 = arith.divf %198, %199 : vector<8x128xf32>
    %201 = vector.extract_strided_slice %190 {offsets = [0, 128], sizes = [8, 128], strides = [1, 1]} : vector<8x384xf32> to vector<8x128xf32>
    %202 = vector.extract_strided_slice %192 {offsets = [0, 128], sizes = [8, 128], strides = [1, 1]} : vector<8x384xf32> to vector<8x128xf32>
    %203 = arith.addf %201, %202 : vector<8x128xf32>
    %204 = arith.negf %203 : vector<8x128xf32>
    %205 = math.exp %204 : vector<8x128xf32>
    %cst_50 = arith.constant 1.000000e+00 : f32
    %206 = vector.broadcast %cst_50 : f32 to vector<8x128xf32>
    %207 = arith.addf %206, %205 : vector<8x128xf32>
    %208 = arith.divf %206, %207 : vector<8x128xf32>
    %209 = vector.extract_strided_slice %190 {offsets = [0, 256], sizes = [8, 128], strides = [1, 1]} : vector<8x384xf32> to vector<8x128xf32>
    %210 = vector.extract_strided_slice %192 {offsets = [0, 256], sizes = [8, 128], strides = [1, 1]} : vector<8x384xf32> to vector<8x128xf32>
    %211 = arith.addf %210, %10 : vector<8x128xf32>
    %212 = arith.mulf %200, %211 : vector<8x128xf32>
    %213 = arith.addf %209, %212 : vector<8x128xf32>
    %214 = math.tanh %213 : vector<8x128xf32>
    %cst_51 = arith.constant 1.000000e+00 : f32
    %215 = vector.broadcast %cst_51 : f32 to vector<8x128xf32>
    %216 = arith.subf %215, %208 : vector<8x128xf32>
    %217 = arith.mulf %216, %214 : vector<8x128xf32>
    %218 = arith.mulf %208, %184 : vector<8x128xf32>
    %219 = arith.addf %217, %218 : vector<8x128xf32>
    %220 = arith.index_cast %188 : i32 to index
    %c0_52 = arith.constant 0 : index
    %221 = vector.load %arg32[%220, %c0_52] : memref<64x256xf32, #tpu.memory_space<vmem>>, vector<8x128xf32>
    tpu.vector_store %arg32[%220, %c0_52], %219 {strides = array<i32>} : memref<64x256xf32, #tpu.memory_space<vmem>>, vector<8x128xf32>,
    %c6_i32 = arith.constant 6 : i32
    %c8_i32_53 = arith.constant 8 : i32
    %222 = arith.muli %c6_i32, %c8_i32_53 : i32
    %223 = tpu.assume_multiple %222, 8 : i32
    %224 = arith.index_cast %223 : i32 to index
    %c0_54 = arith.constant 0 : index
    %225 = vector.load %arg31[%224, %c0_54] : memref<64x384xf32, #tpu.memory_space<vmem>>, vector<8x384xf32>
    %226 = arith.truncf %219 : vector<8x128xf32> to vector<8x128xbf16>
    %cst_55 = arith.constant dense<0.000000e+00> : vector<8x384xf32>
    %227 = tpu.matmul %226, %7, %cst_55 {dimension_numbers = #tpu.dot_dimension_numbers<[1], [0], [0], [1], [0, 0, 1, 1], [], []>} : vector<8x128xbf16>, vector<128x384xbf16>, vector<8x384xf32> -> vector<8x384xf32>
    %228 = vector.extract_strided_slice %225 {offsets = [0, 0], sizes = [8, 128], strides = [1, 1]} : vector<8x384xf32> to vector<8x128xf32>
    %229 = vector.extract_strided_slice %227 {offsets = [0, 0], sizes = [8, 128], strides = [1, 1]} : vector<8x384xf32> to vector<8x128xf32>
    %230 = arith.addf %228, %229 : vector<8x128xf32>
    %231 = arith.negf %230 : vector<8x128xf32>
    %232 = math.exp %231 : vector<8x128xf32>
    %cst_56 = arith.constant 1.000000e+00 : f32
    %233 = vector.broadcast %cst_56 : f32 to vector<8x128xf32>
    %234 = arith.addf %233, %232 : vector<8x128xf32>
    %235 = arith.divf %233, %234 : vector<8x128xf32>
    %236 = vector.extract_strided_slice %225 {offsets = [0, 128], sizes = [8, 128], strides = [1, 1]} : vector<8x384xf32> to vector<8x128xf32>
    %237 = vector.extract_strided_slice %227 {offsets = [0, 128], sizes = [8, 128], strides = [1, 1]} : vector<8x384xf32> to vector<8x128xf32>
    %238 = arith.addf %236, %237 : vector<8x128xf32>
    %239 = arith.negf %238 : vector<8x128xf32>
    %240 = math.exp %239 : vector<8x128xf32>
    %cst_57 = arith.constant 1.000000e+00 : f32
    %241 = vector.broadcast %cst_57 : f32 to vector<8x128xf32>
    %242 = arith.addf %241, %240 : vector<8x128xf32>
    %243 = arith.divf %241, %242 : vector<8x128xf32>
    %244 = vector.extract_strided_slice %225 {offsets = [0, 256], sizes = [8, 128], strides = [1, 1]} : vector<8x384xf32> to vector<8x128xf32>
    %245 = vector.extract_strided_slice %227 {offsets = [0, 256], sizes = [8, 128], strides = [1, 1]} : vector<8x384xf32> to vector<8x128xf32>
    %246 = arith.addf %245, %10 : vector<8x128xf32>
    %247 = arith.mulf %235, %246 : vector<8x128xf32>
    %248 = arith.addf %244, %247 : vector<8x128xf32>
    %249 = math.tanh %248 : vector<8x128xf32>
    %cst_58 = arith.constant 1.000000e+00 : f32
    %250 = vector.broadcast %cst_58 : f32 to vector<8x128xf32>
    %251 = arith.subf %250, %243 : vector<8x128xf32>
    %252 = arith.mulf %251, %249 : vector<8x128xf32>
    %253 = arith.mulf %243, %219 : vector<8x128xf32>
    %254 = arith.addf %252, %253 : vector<8x128xf32>
    %255 = arith.index_cast %223 : i32 to index
    %c0_59 = arith.constant 0 : index
    %256 = vector.load %arg32[%255, %c0_59] : memref<64x256xf32, #tpu.memory_space<vmem>>, vector<8x128xf32>
    tpu.vector_store %arg32[%255, %c0_59], %254 {strides = array<i32>} : memref<64x256xf32, #tpu.memory_space<vmem>>, vector<8x128xf32>,
    %c7_i32 = arith.constant 7 : i32
    %c8_i32_60 = arith.constant 8 : i32
    %257 = arith.muli %c7_i32, %c8_i32_60 : i32
    %258 = tpu.assume_multiple %257, 8 : i32
    %259 = arith.index_cast %258 : i32 to index
    %c0_61 = arith.constant 0 : index
    %260 = vector.load %arg31[%259, %c0_61] : memref<64x384xf32, #tpu.memory_space<vmem>>, vector<8x384xf32>
    %261 = arith.truncf %254 : vector<8x128xf32> to vector<8x128xbf16>
    %cst_62 = arith.constant dense<0.000000e+00> : vector<8x384xf32>
    %262 = tpu.matmul %261, %7, %cst_62 {dimension_numbers = #tpu.dot_dimension_numbers<[1], [0], [0], [1], [0, 0, 1, 1], [], []>} : vector<8x128xbf16>, vector<128x384xbf16>, vector<8x384xf32> -> vector<8x384xf32>
    %263 = vector.extract_strided_slice %260 {offsets = [0, 0], sizes = [8, 128], strides = [1, 1]} : vector<8x384xf32> to vector<8x128xf32>
    %264 = vector.extract_strided_slice %262 {offsets = [0, 0], sizes = [8, 128], strides = [1, 1]} : vector<8x384xf32> to vector<8x128xf32>
    %265 = arith.addf %263, %264 : vector<8x128xf32>
    %266 = arith.negf %265 : vector<8x128xf32>
    %267 = math.exp %266 : vector<8x128xf32>
    %cst_63 = arith.constant 1.000000e+00 : f32
    %268 = vector.broadcast %cst_63 : f32 to vector<8x128xf32>
    %269 = arith.addf %268, %267 : vector<8x128xf32>
    %270 = arith.divf %268, %269 : vector<8x128xf32>
    %271 = vector.extract_strided_slice %260 {offsets = [0, 128], sizes = [8, 128], strides = [1, 1]} : vector<8x384xf32> to vector<8x128xf32>
    %272 = vector.extract_strided_slice %262 {offsets = [0, 128], sizes = [8, 128], strides = [1, 1]} : vector<8x384xf32> to vector<8x128xf32>
    %273 = arith.addf %271, %272 : vector<8x128xf32>
    %274 = arith.negf %273 : vector<8x128xf32>
    %275 = math.exp %274 : vector<8x128xf32>
    %cst_64 = arith.constant 1.000000e+00 : f32
    %276 = vector.broadcast %cst_64 : f32 to vector<8x128xf32>
    %277 = arith.addf %276, %275 : vector<8x128xf32>
    %278 = arith.divf %276, %277 : vector<8x128xf32>
    %279 = vector.extract_strided_slice %260 {offsets = [0, 256], sizes = [8, 128], strides = [1, 1]} : vector<8x384xf32> to vector<8x128xf32>
    %280 = vector.extract_strided_slice %262 {offsets = [0, 256], sizes = [8, 128], strides = [1, 1]} : vector<8x384xf32> to vector<8x128xf32>
    %281 = arith.addf %280, %10 : vector<8x128xf32>
    %282 = arith.mulf %270, %281 : vector<8x128xf32>
    %283 = arith.addf %279, %282 : vector<8x128xf32>
    %284 = math.tanh %283 : vector<8x128xf32>
    %cst_65 = arith.constant 1.000000e+00 : f32
    %285 = vector.broadcast %cst_65 : f32 to vector<8x128xf32>
    %286 = arith.subf %285, %278 : vector<8x128xf32>
    %287 = arith.mulf %286, %284 : vector<8x128xf32>
    %288 = arith.mulf %278, %254 : vector<8x128xf32>
    %289 = arith.addf %287, %288 : vector<8x128xf32>
    %290 = arith.index_cast %258 : i32 to index
    %c0_66 = arith.constant 0 : index
    %291 = vector.load %arg32[%290, %c0_66] : memref<64x256xf32, #tpu.memory_space<vmem>>, vector<8x128xf32>
    tpu.vector_store %arg32[%290, %c0_66], %289 {strides = array<i32>} : memref<64x256xf32, #tpu.memory_space<vmem>>, vector<8x128xf32>,
    %c8_i32_67 = arith.constant 8 : i32
    %c56 = arith.constant 56 : index
    %c0_68 = arith.constant 0 : index
    %292 = vector.load %arg32[%c56, %c0_68] : memref<64x256xf32, #tpu.memory_space<vmem>>, vector<8x128xf32>
    %c0_69 = arith.constant 0 : index
    %c128 = arith.constant 128 : index
    %293 = vector.load %arg32[%c0_69, %c128] : memref<64x256xf32, #tpu.memory_space<vmem>>, vector<8x128xf32>
    tpu.vector_store %arg32[%c0_69, %c128], %292 {strides = array<i32>} : memref<64x256xf32, #tpu.memory_space<vmem>>, vector<8x128xf32>,
    %c48 = arith.constant 48 : index
    %c0_70 = arith.constant 0 : index
    %294 = vector.load %arg32[%c48, %c0_70] : memref<64x256xf32, #tpu.memory_space<vmem>>, vector<8x128xf32>
    %c8 = arith.constant 8 : index
    %c128_71 = arith.constant 128 : index
    %295 = vector.load %arg32[%c8, %c128_71] : memref<64x256xf32, #tpu.memory_space<vmem>>, vector<8x128xf32>
    tpu.vector_store %arg32[%c8, %c128_71], %294 {strides = array<i32>} : memref<64x256xf32, #tpu.memory_space<vmem>>, vector<8x128xf32>,
    %c40 = arith.constant 40 : index
    %c0_72 = arith.constant 0 : index
    %296 = vector.load %arg32[%c40, %c0_72] : memref<64x256xf32, #tpu.memory_space<vmem>>, vector<8x128xf32>
    %c16 = arith.constant 16 : index
    %c128_73 = arith.constant 128 : index
    %297 = vector.load %arg32[%c16, %c128_73] : memref<64x256xf32, #tpu.memory_space<vmem>>, vector<8x128xf32>
    tpu.vector_store %arg32[%c16, %c128_73], %296 {strides = array<i32>} : memref<64x256xf32, #tpu.memory_space<vmem>>, vector<8x128xf32>,
    %c32 = arith.constant 32 : index
    %c0_74 = arith.constant 0 : index
    %298 = vector.load %arg32[%c32, %c0_74] : memref<64x256xf32, #tpu.memory_space<vmem>>, vector<8x128xf32>
    %c24 = arith.constant 24 : index
    %c128_75 = arith.constant 128 : index
    %299 = vector.load %arg32[%c24, %c128_75] : memref<64x256xf32, #tpu.memory_space<vmem>>, vector<8x128xf32>
    tpu.vector_store %arg32[%c24, %c128_75], %298 {strides = array<i32>} : memref<64x256xf32, #tpu.memory_space<vmem>>, vector<8x128xf32>,
    %c24_76 = arith.constant 24 : index
    %c0_77 = arith.constant 0 : index
    %300 = vector.load %arg32[%c24_76, %c0_77] : memref<64x256xf32, #tpu.memory_space<vmem>>, vector<8x128xf32>
    %c32_78 = arith.constant 32 : index
    %c128_79 = arith.constant 128 : index
    %301 = vector.load %arg32[%c32_78, %c128_79] : memref<64x256xf32, #tpu.memory_space<vmem>>, vector<8x128xf32>
    tpu.vector_store %arg32[%c32_78, %c128_79], %300 {strides = array<i32>} : memref<64x256xf32, #tpu.memory_space<vmem>>, vector<8x128xf32>,
    %c16_80 = arith.constant 16 : index
    %c0_81 = arith.constant 0 : index
    %302 = vector.load %arg32[%c16_80, %c0_81] : memref<64x256xf32, #tpu.memory_space<vmem>>, vector<8x128xf32>
    %c40_82 = arith.constant 40 : index
    %c128_83 = arith.constant 128 : index
    %303 = vector.load %arg32[%c40_82, %c128_83] : memref<64x256xf32, #tpu.memory_space<vmem>>, vector<8x128xf32>
    tpu.vector_store %arg32[%c40_82, %c128_83], %302 {strides = array<i32>} : memref<64x256xf32, #tpu.memory_space<vmem>>, vector<8x128xf32>,
    %c8_84 = arith.constant 8 : index
    %c0_85 = arith.constant 0 : index
    %304 = vector.load %arg32[%c8_84, %c0_85] : memref<64x256xf32, #tpu.memory_space<vmem>>, vector<8x128xf32>
    %c48_86 = arith.constant 48 : index
    %c128_87 = arith.constant 128 : index
    %305 = vector.load %arg32[%c48_86, %c128_87] : memref<64x256xf32, #tpu.memory_space<vmem>>, vector<8x128xf32>
    tpu.vector_store %arg32[%c48_86, %c128_87], %304 {strides = array<i32>} : memref<64x256xf32, #tpu.memory_space<vmem>>, vector<8x128xf32>,
    %c0_88 = arith.constant 0 : index
    %c0_89 = arith.constant 0 : index
    %306 = vector.load %arg32[%c0_88, %c0_89] : memref<64x256xf32, #tpu.memory_space<vmem>>, vector<8x128xf32>
    %c56_90 = arith.constant 56 : index
    %c128_91 = arith.constant 128 : index
    %307 = vector.load %arg32[%c56_90, %c128_91] : memref<64x256xf32, #tpu.memory_space<vmem>>, vector<8x128xf32>
    tpu.vector_store %arg32[%c56_90, %c128_91], %306 {strides = array<i32>} : memref<64x256xf32, #tpu.memory_space<vmem>>, vector<8x128xf32>,
    %c0_92 = arith.constant 0 : index
    %c0_93 = arith.constant 0 : index
    %308 = vector.load %arg32[%c0_92, %c0_93] : memref<64x256xf32, #tpu.memory_space<vmem>>, vector<64x256xf32>
    %c0_94 = arith.constant 0 : index
    %c0_95 = arith.constant 0 : index
    %309 = vector.load %arg5[%c0_94, %c0_95] : memref<256x384xf32, #tpu.memory_space<vmem>>, vector<256x384xf32>
    %cst_96 = arith.constant dense<0.000000e+00> : vector<64x384xf32>
    %310 = tpu.matmul %308, %309, %cst_96 {dimension_numbers = #tpu.dot_dimension_numbers<[1], [0], [0], [1], [0, 0, 1, 1], [], []>} : vector<64x256xf32>, vector<256x384xf32>, vector<64x384xf32> -> vector<64x384xf32>
    %c0_97 = arith.constant 0 : index
    %c0_98 = arith.constant 0 : index
    %311 = vector.load %arg6[%c0_97, %c0_98] : memref<1x384xf32, #tpu.memory_space<vmem>>, vector<1x384xf32>
    %312 = vector.broadcast %311 : vector<1x384xf32> to vector<64x384xf32>
    %313 = arith.addf %310, %312 : vector<64x384xf32>
    %c0_99 = arith.constant 0 : index
    %c0_100 = arith.constant 0 : index
    %314 = vector.load %arg31[%c0_99, %c0_100] : memref<64x384xf32, #tpu.memory_space<vmem>>, vector<64x384xf32>
    tpu.vector_store %arg31[%c0_99, %c0_100], %313 {strides = array<i32>} : memref<64x384xf32, #tpu.memory_space<vmem>>, vector<64x384xf32>,
    %c0_101 = arith.constant 0 : index
    %c0_102 = arith.constant 0 : index
    %315 = vector.load %arg7[%c0_101, %c0_102] : memref<128x384xbf16, #tpu.memory_space<vmem>>, vector<128x384xbf16>
    %c0_103 = arith.constant 0 : index
    %c0_104 = arith.constant 0 : index
    %316 = vector.load %arg8[%c0_103, %c0_104] : memref<1x128xf32, #tpu.memory_space<vmem>>, vector<1x128xf32>
    %317 = vector.shape_cast %316 : vector<1x128xf32> to vector<1x128xf32>
    %318 = vector.broadcast %317 : vector<1x128xf32> to vector<8x128xf32>
    %cst_105 = arith.constant 0.000000e+00 : f32
    %319 = vector.broadcast %cst_105 : f32 to vector<8x128xf32>
    %c0_i32_106 = arith.constant 0 : i32
    %c8_i32_107 = arith.constant 8 : i32
    %320 = arith.muli %c0_i32_106, %c8_i32_107 : i32
    %321 = tpu.assume_multiple %320, 8 : i32
    %322 = arith.index_cast %321 : i32 to index
    %c0_108 = arith.constant 0 : index
    %323 = vector.load %arg31[%322, %c0_108] : memref<64x384xf32, #tpu.memory_space<vmem>>, vector<8x384xf32>
    %324 = arith.truncf %319 : vector<8x128xf32> to vector<8x128xbf16>
    %cst_109 = arith.constant dense<0.000000e+00> : vector<8x384xf32>
    %325 = tpu.matmul %324, %315, %cst_109 {dimension_numbers = #tpu.dot_dimension_numbers<[1], [0], [0], [1], [0, 0, 1, 1], [], []>} : vector<8x128xbf16>, vector<128x384xbf16>, vector<8x384xf32> -> vector<8x384xf32>
    %326 = vector.extract_strided_slice %323 {offsets = [0, 0], sizes = [8, 128], strides = [1, 1]} : vector<8x384xf32> to vector<8x128xf32>
    %327 = vector.extract_strided_slice %325 {offsets = [0, 0], sizes = [8, 128], strides = [1, 1]} : vector<8x384xf32> to vector<8x128xf32>
    %328 = arith.addf %326, %327 : vector<8x128xf32>
    %329 = arith.negf %328 : vector<8x128xf32>
    %330 = math.exp %329 : vector<8x128xf32>
    %cst_110 = arith.constant 1.000000e+00 : f32
    %331 = vector.broadcast %cst_110 : f32 to vector<8x128xf32>
    %332 = arith.addf %331, %330 : vector<8x128xf32>
    %333 = arith.divf %331, %332 : vector<8x128xf32>
    %334 = vector.extract_strided_slice %323 {offsets = [0, 128], sizes = [8, 128], strides = [1, 1]} : vector<8x384xf32> to vector<8x128xf32>
    %335 = vector.extract_strided_slice %325 {offsets = [0, 128], sizes = [8, 128], strides = [1, 1]} : vector<8x384xf32> to vector<8x128xf32>
    %336 = arith.addf %334, %335 : vector<8x128xf32>
    %337 = arith.negf %336 : vector<8x128xf32>
    %338 = math.exp %337 : vector<8x128xf32>
    %cst_111 = arith.constant 1.000000e+00 : f32
    %339 = vector.broadcast %cst_111 : f32 to vector<8x128xf32>
    %340 = arith.addf %339, %338 : vector<8x128xf32>
    %341 = arith.divf %339, %340 : vector<8x128xf32>
    %342 = vector.extract_strided_slice %323 {offsets = [0, 256], sizes = [8, 128], strides = [1, 1]} : vector<8x384xf32> to vector<8x128xf32>
    %343 = vector.extract_strided_slice %325 {offsets = [0, 256], sizes = [8, 128], strides = [1, 1]} : vector<8x384xf32> to vector<8x128xf32>
    %344 = arith.addf %343, %318 : vector<8x128xf32>
    %345 = arith.mulf %333, %344 : vector<8x128xf32>
    %346 = arith.addf %342, %345 : vector<8x128xf32>
    %347 = math.tanh %346 : vector<8x128xf32>
    %cst_112 = arith.constant 1.000000e+00 : f32
    %348 = vector.broadcast %cst_112 : f32 to vector<8x128xf32>
    %349 = arith.subf %348, %341 : vector<8x128xf32>
    %350 = arith.mulf %349, %347 : vector<8x128xf32>
    %351 = arith.mulf %341, %319 : vector<8x128xf32>
    %352 = arith.addf %350, %351 : vector<8x128xf32>
    %353 = arith.index_cast %321 : i32 to index
    %c0_113 = arith.constant 0 : index
    %354 = vector.load %arg33[%353, %c0_113] : memref<64x128xf32, #tpu.memory_space<vmem>>, vector<8x128xf32>
    tpu.vector_store %arg33[%353, %c0_113], %352 {strides = array<i32>} : memref<64x128xf32, #tpu.memory_space<vmem>>, vector<8x128xf32>,
    %c1_i32_114 = arith.constant 1 : i32
    %c8_i32_115 = arith.constant 8 : i32
    %355 = arith.muli %c1_i32_114, %c8_i32_115 : i32
    %356 = tpu.assume_multiple %355, 8 : i32
    %357 = arith.index_cast %356 : i32 to index
    %c0_116 = arith.constant 0 : index
    %358 = vector.load %arg31[%357, %c0_116] : memref<64x384xf32, #tpu.memory_space<vmem>>, vector<8x384xf32>
    %359 = arith.truncf %352 : vector<8x128xf32> to vector<8x128xbf16>
    %cst_117 = arith.constant dense<0.000000e+00> : vector<8x384xf32>
    %360 = tpu.matmul %359, %315, %cst_117 {dimension_numbers = #tpu.dot_dimension_numbers<[1], [0], [0], [1], [0, 0, 1, 1], [], []>} : vector<8x128xbf16>, vector<128x384xbf16>, vector<8x384xf32> -> vector<8x384xf32>
    %361 = vector.extract_strided_slice %358 {offsets = [0, 0], sizes = [8, 128], strides = [1, 1]} : vector<8x384xf32> to vector<8x128xf32>
    %362 = vector.extract_strided_slice %360 {offsets = [0, 0], sizes = [8, 128], strides = [1, 1]} : vector<8x384xf32> to vector<8x128xf32>
    %363 = arith.addf %361, %362 : vector<8x128xf32>
    %364 = arith.negf %363 : vector<8x128xf32>
    %365 = math.exp %364 : vector<8x128xf32>
    %cst_118 = arith.constant 1.000000e+00 : f32
    %366 = vector.broadcast %cst_118 : f32 to vector<8x128xf32>
    %367 = arith.addf %366, %365 : vector<8x128xf32>
    %368 = arith.divf %366, %367 : vector<8x128xf32>
    %369 = vector.extract_strided_slice %358 {offsets = [0, 128], sizes = [8, 128], strides = [1, 1]} : vector<8x384xf32> to vector<8x128xf32>
    %370 = vector.extract_strided_slice %360 {offsets = [0, 128], sizes = [8, 128], strides = [1, 1]} : vector<8x384xf32> to vector<8x128xf32>
    %371 = arith.addf %369, %370 : vector<8x128xf32>
    %372 = arith.negf %371 : vector<8x128xf32>
    %373 = math.exp %372 : vector<8x128xf32>
    %cst_119 = arith.constant 1.000000e+00 : f32
    %374 = vector.broadcast %cst_119 : f32 to vector<8x128xf32>
    %375 = arith.addf %374, %373 : vector<8x128xf32>
    %376 = arith.divf %374, %375 : vector<8x128xf32>
    %377 = vector.extract_strided_slice %358 {offsets = [0, 256], sizes = [8, 128], strides = [1, 1]} : vector<8x384xf32> to vector<8x128xf32>
    %378 = vector.extract_strided_slice %360 {offsets = [0, 256], sizes = [8, 128], strides = [1, 1]} : vector<8x384xf32> to vector<8x128xf32>
    %379 = arith.addf %378, %318 : vector<8x128xf32>
    %380 = arith.mulf %368, %379 : vector<8x128xf32>
    %381 = arith.addf %377, %380 : vector<8x128xf32>
    %382 = math.tanh %381 : vector<8x128xf32>
    %cst_120 = arith.constant 1.000000e+00 : f32
    %383 = vector.broadcast %cst_120 : f32 to vector<8x128xf32>
    %384 = arith.subf %383, %376 : vector<8x128xf32>
    %385 = arith.mulf %384, %382 : vector<8x128xf32>
    %386 = arith.mulf %376, %352 : vector<8x128xf32>
    %387 = arith.addf %385, %386 : vector<8x128xf32>
    %388 = arith.index_cast %356 : i32 to index
    %c0_121 = arith.constant 0 : index
    %389 = vector.load %arg33[%388, %c0_121] : memref<64x128xf32, #tpu.memory_space<vmem>>, vector<8x128xf32>
    tpu.vector_store %arg33[%388, %c0_121], %387 {strides = array<i32>} : memref<64x128xf32, #tpu.memory_space<vmem>>, vector<8x128xf32>,
    %c2_i32_122 = arith.constant 2 : i32
    %c8_i32_123 = arith.constant 8 : i32
    %390 = arith.muli %c2_i32_122, %c8_i32_123 : i32
    %391 = tpu.assume_multiple %390, 8 : i32
    %392 = arith.index_cast %391 : i32 to index
    %c0_124 = arith.constant 0 : index
    %393 = vector.load %arg31[%392, %c0_124] : memref<64x384xf32, #tpu.memory_space<vmem>>, vector<8x384xf32>
    %394 = arith.truncf %387 : vector<8x128xf32> to vector<8x128xbf16>
    %cst_125 = arith.constant dense<0.000000e+00> : vector<8x384xf32>
    %395 = tpu.matmul %394, %315, %cst_125 {dimension_numbers = #tpu.dot_dimension_numbers<[1], [0], [0], [1], [0, 0, 1, 1], [], []>} : vector<8x128xbf16>, vector<128x384xbf16>, vector<8x384xf32> -> vector<8x384xf32>
    %396 = vector.extract_strided_slice %393 {offsets = [0, 0], sizes = [8, 128], strides = [1, 1]} : vector<8x384xf32> to vector<8x128xf32>
    %397 = vector.extract_strided_slice %395 {offsets = [0, 0], sizes = [8, 128], strides = [1, 1]} : vector<8x384xf32> to vector<8x128xf32>
    %398 = arith.addf %396, %397 : vector<8x128xf32>
    %399 = arith.negf %398 : vector<8x128xf32>
    %400 = math.exp %399 : vector<8x128xf32>
    %cst_126 = arith.constant 1.000000e+00 : f32
    %401 = vector.broadcast %cst_126 : f32 to vector<8x128xf32>
    %402 = arith.addf %401, %400 : vector<8x128xf32>
    %403 = arith.divf %401, %402 : vector<8x128xf32>
    %404 = vector.extract_strided_slice %393 {offsets = [0, 128], sizes = [8, 128], strides = [1, 1]} : vector<8x384xf32> to vector<8x128xf32>
    %405 = vector.extract_strided_slice %395 {offsets = [0, 128], sizes = [8, 128], strides = [1, 1]} : vector<8x384xf32> to vector<8x128xf32>
    %406 = arith.addf %404, %405 : vector<8x128xf32>
    %407 = arith.negf %406 : vector<8x128xf32>
    %408 = math.exp %407 : vector<8x128xf32>
    %cst_127 = arith.constant 1.000000e+00 : f32
    %409 = vector.broadcast %cst_127 : f32 to vector<8x128xf32>
    %410 = arith.addf %409, %408 : vector<8x128xf32>
    %411 = arith.divf %409, %410 : vector<8x128xf32>
    %412 = vector.extract_strided_slice %393 {offsets = [0, 256], sizes = [8, 128], strides = [1, 1]} : vector<8x384xf32> to vector<8x128xf32>
    %413 = vector.extract_strided_slice %395 {offsets = [0, 256], sizes = [8, 128], strides = [1, 1]} : vector<8x384xf32> to vector<8x128xf32>
    %414 = arith.addf %413, %318 : vector<8x128xf32>
    %415 = arith.mulf %403, %414 : vector<8x128xf32>
    %416 = arith.addf %412, %415 : vector<8x128xf32>
    %417 = math.tanh %416 : vector<8x128xf32>
    %cst_128 = arith.constant 1.000000e+00 : f32
    %418 = vector.broadcast %cst_128 : f32 to vector<8x128xf32>
    %419 = arith.subf %418, %411 : vector<8x128xf32>
    %420 = arith.mulf %419, %417 : vector<8x128xf32>
    %421 = arith.mulf %411, %387 : vector<8x128xf32>
    %422 = arith.addf %420, %421 : vector<8x128xf32>
    %423 = arith.index_cast %391 : i32 to index
    %c0_129 = arith.constant 0 : index
    %424 = vector.load %arg33[%423, %c0_129] : memref<64x128xf32, #tpu.memory_space<vmem>>, vector<8x128xf32>
    tpu.vector_store %arg33[%423, %c0_129], %422 {strides = array<i32>} : memref<64x128xf32, #tpu.memory_space<vmem>>, vector<8x128xf32>,
    %c3_i32_130 = arith.constant 3 : i32
    %c8_i32_131 = arith.constant 8 : i32
    %425 = arith.muli %c3_i32_130, %c8_i32_131 : i32
    %426 = tpu.assume_multiple %425, 8 : i32
    %427 = arith.index_cast %426 : i32 to index
    %c0_132 = arith.constant 0 : index
    %428 = vector.load %arg31[%427, %c0_132] : memref<64x384xf32, #tpu.memory_space<vmem>>, vector<8x384xf32>
    %429 = arith.truncf %422 : vector<8x128xf32> to vector<8x128xbf16>
    %cst_133 = arith.constant dense<0.000000e+00> : vector<8x384xf32>
    %430 = tpu.matmul %429, %315, %cst_133 {dimension_numbers = #tpu.dot_dimension_numbers<[1], [0], [0], [1], [0, 0, 1, 1], [], []>} : vector<8x128xbf16>, vector<128x384xbf16>, vector<8x384xf32> -> vector<8x384xf32>
    %431 = vector.extract_strided_slice %428 {offsets = [0, 0], sizes = [8, 128], strides = [1, 1]} : vector<8x384xf32> to vector<8x128xf32>
    %432 = vector.extract_strided_slice %430 {offsets = [0, 0], sizes = [8, 128], strides = [1, 1]} : vector<8x384xf32> to vector<8x128xf32>
    %433 = arith.addf %431, %432 : vector<8x128xf32>
    %434 = arith.negf %433 : vector<8x128xf32>
    %435 = math.exp %434 : vector<8x128xf32>
    %cst_134 = arith.constant 1.000000e+00 : f32
    %436 = vector.broadcast %cst_134 : f32 to vector<8x128xf32>
    %437 = arith.addf %436, %435 : vector<8x128xf32>
    %438 = arith.divf %436, %437 : vector<8x128xf32>
    %439 = vector.extract_strided_slice %428 {offsets = [0, 128], sizes = [8, 128], strides = [1, 1]} : vector<8x384xf32> to vector<8x128xf32>
    %440 = vector.extract_strided_slice %430 {offsets = [0, 128], sizes = [8, 128], strides = [1, 1]} : vector<8x384xf32> to vector<8x128xf32>
    %441 = arith.addf %439, %440 : vector<8x128xf32>
    %442 = arith.negf %441 : vector<8x128xf32>
    %443 = math.exp %442 : vector<8x128xf32>
    %cst_135 = arith.constant 1.000000e+00 : f32
    %444 = vector.broadcast %cst_135 : f32 to vector<8x128xf32>
    %445 = arith.addf %444, %443 : vector<8x128xf32>
    %446 = arith.divf %444, %445 : vector<8x128xf32>
    %447 = vector.extract_strided_slice %428 {offsets = [0, 256], sizes = [8, 128], strides = [1, 1]} : vector<8x384xf32> to vector<8x128xf32>
    %448 = vector.extract_strided_slice %430 {offsets = [0, 256], sizes = [8, 128], strides = [1, 1]} : vector<8x384xf32> to vector<8x128xf32>
    %449 = arith.addf %448, %318 : vector<8x128xf32>
    %450 = arith.mulf %438, %449 : vector<8x128xf32>
    %451 = arith.addf %447, %450 : vector<8x128xf32>
    %452 = math.tanh %451 : vector<8x128xf32>
    %cst_136 = arith.constant 1.000000e+00 : f32
    %453 = vector.broadcast %cst_136 : f32 to vector<8x128xf32>
    %454 = arith.subf %453, %446 : vector<8x128xf32>
    %455 = arith.mulf %454, %452 : vector<8x128xf32>
    %456 = arith.mulf %446, %422 : vector<8x128xf32>
    %457 = arith.addf %455, %456 : vector<8x128xf32>
    %458 = arith.index_cast %426 : i32 to index
    %c0_137 = arith.constant 0 : index
    %459 = vector.load %arg33[%458, %c0_137] : memref<64x128xf32, #tpu.memory_space<vmem>>, vector<8x128xf32>
    tpu.vector_store %arg33[%458, %c0_137], %457 {strides = array<i32>} : memref<64x128xf32, #tpu.memory_space<vmem>>, vector<8x128xf32>,
    %c4_i32_138 = arith.constant 4 : i32
    %c8_i32_139 = arith.constant 8 : i32
    %460 = arith.muli %c4_i32_138, %c8_i32_139 : i32
    %461 = tpu.assume_multiple %460, 8 : i32
    %462 = arith.index_cast %461 : i32 to index
    %c0_140 = arith.constant 0 : index
    %463 = vector.load %arg31[%462, %c0_140] : memref<64x384xf32, #tpu.memory_space<vmem>>, vector<8x384xf32>
    %464 = arith.truncf %457 : vector<8x128xf32> to vector<8x128xbf16>
    %cst_141 = arith.constant dense<0.000000e+00> : vector<8x384xf32>
    %465 = tpu.matmul %464, %315, %cst_141 {dimension_numbers = #tpu.dot_dimension_numbers<[1], [0], [0], [1], [0, 0, 1, 1], [], []>} : vector<8x128xbf16>, vector<128x384xbf16>, vector<8x384xf32> -> vector<8x384xf32>
    %466 = vector.extract_strided_slice %463 {offsets = [0, 0], sizes = [8, 128], strides = [1, 1]} : vector<8x384xf32> to vector<8x128xf32>
    %467 = vector.extract_strided_slice %465 {offsets = [0, 0], sizes = [8, 128], strides = [1, 1]} : vector<8x384xf32> to vector<8x128xf32>
    %468 = arith.addf %466, %467 : vector<8x128xf32>
    %469 = arith.negf %468 : vector<8x128xf32>
    %470 = math.exp %469 : vector<8x128xf32>
    %cst_142 = arith.constant 1.000000e+00 : f32
    %471 = vector.broadcast %cst_142 : f32 to vector<8x128xf32>
    %472 = arith.addf %471, %470 : vector<8x128xf32>
    %473 = arith.divf %471, %472 : vector<8x128xf32>
    %474 = vector.extract_strided_slice %463 {offsets = [0, 128], sizes = [8, 128], strides = [1, 1]} : vector<8x384xf32> to vector<8x128xf32>
    %475 = vector.extract_strided_slice %465 {offsets = [0, 128], sizes = [8, 128], strides = [1, 1]} : vector<8x384xf32> to vector<8x128xf32>
    %476 = arith.addf %474, %475 : vector<8x128xf32>
    %477 = arith.negf %476 : vector<8x128xf32>
    %478 = math.exp %477 : vector<8x128xf32>
    %cst_143 = arith.constant 1.000000e+00 : f32
    %479 = vector.broadcast %cst_143 : f32 to vector<8x128xf32>
    %480 = arith.addf %479, %478 : vector<8x128xf32>
    %481 = arith.divf %479, %480 : vector<8x128xf32>
    %482 = vector.extract_strided_slice %463 {offsets = [0, 256], sizes = [8, 128], strides = [1, 1]} : vector<8x384xf32> to vector<8x128xf32>
    %483 = vector.extract_strided_slice %465 {offsets = [0, 256], sizes = [8, 128], strides = [1, 1]} : vector<8x384xf32> to vector<8x128xf32>
    %484 = arith.addf %483, %318 : vector<8x128xf32>
    %485 = arith.mulf %473, %484 : vector<8x128xf32>
    %486 = arith.addf %482, %485 : vector<8x128xf32>
    %487 = math.tanh %486 : vector<8x128xf32>
    %cst_144 = arith.constant 1.000000e+00 : f32
    %488 = vector.broadcast %cst_144 : f32 to vector<8x128xf32>
    %489 = arith.subf %488, %481 : vector<8x128xf32>
    %490 = arith.mulf %489, %487 : vector<8x128xf32>
    %491 = arith.mulf %481, %457 : vector<8x128xf32>
    %492 = arith.addf %490, %491 : vector<8x128xf32>
    %493 = arith.index_cast %461 : i32 to index
    %c0_145 = arith.constant 0 : index
    %494 = vector.load %arg33[%493, %c0_145] : memref<64x128xf32, #tpu.memory_space<vmem>>, vector<8x128xf32>
    tpu.vector_store %arg33[%493, %c0_145], %492 {strides = array<i32>} : memref<64x128xf32, #tpu.memory_space<vmem>>, vector<8x128xf32>,
    %c5_i32_146 = arith.constant 5 : i32
    %c8_i32_147 = arith.constant 8 : i32
    %495 = arith.muli %c5_i32_146, %c8_i32_147 : i32
    %496 = tpu.assume_multiple %495, 8 : i32
    %497 = arith.index_cast %496 : i32 to index
    %c0_148 = arith.constant 0 : index
    %498 = vector.load %arg31[%497, %c0_148] : memref<64x384xf32, #tpu.memory_space<vmem>>, vector<8x384xf32>
    %499 = arith.truncf %492 : vector<8x128xf32> to vector<8x128xbf16>
    %cst_149 = arith.constant dense<0.000000e+00> : vector<8x384xf32>
    %500 = tpu.matmul %499, %315, %cst_149 {dimension_numbers = #tpu.dot_dimension_numbers<[1], [0], [0], [1], [0, 0, 1, 1], [], []>} : vector<8x128xbf16>, vector<128x384xbf16>, vector<8x384xf32> -> vector<8x384xf32>
    %501 = vector.extract_strided_slice %498 {offsets = [0, 0], sizes = [8, 128], strides = [1, 1]} : vector<8x384xf32> to vector<8x128xf32>
    %502 = vector.extract_strided_slice %500 {offsets = [0, 0], sizes = [8, 128], strides = [1, 1]} : vector<8x384xf32> to vector<8x128xf32>
    %503 = arith.addf %501, %502 : vector<8x128xf32>
    %504 = arith.negf %503 : vector<8x128xf32>
    %505 = math.exp %504 : vector<8x128xf32>
    %cst_150 = arith.constant 1.000000e+00 : f32
    %506 = vector.broadcast %cst_150 : f32 to vector<8x128xf32>
    %507 = arith.addf %506, %505 : vector<8x128xf32>
    %508 = arith.divf %506, %507 : vector<8x128xf32>
    %509 = vector.extract_strided_slice %498 {offsets = [0, 128], sizes = [8, 128], strides = [1, 1]} : vector<8x384xf32> to vector<8x128xf32>
    %510 = vector.extract_strided_slice %500 {offsets = [0, 128], sizes = [8, 128], strides = [1, 1]} : vector<8x384xf32> to vector<8x128xf32>
    %511 = arith.addf %509, %510 : vector<8x128xf32>
    %512 = arith.negf %511 : vector<8x128xf32>
    %513 = math.exp %512 : vector<8x128xf32>
    %cst_151 = arith.constant 1.000000e+00 : f32
    %514 = vector.broadcast %cst_151 : f32 to vector<8x128xf32>
    %515 = arith.addf %514, %513 : vector<8x128xf32>
    %516 = arith.divf %514, %515 : vector<8x128xf32>
    %517 = vector.extract_strided_slice %498 {offsets = [0, 256], sizes = [8, 128], strides = [1, 1]} : vector<8x384xf32> to vector<8x128xf32>
    %518 = vector.extract_strided_slice %500 {offsets = [0, 256], sizes = [8, 128], strides = [1, 1]} : vector<8x384xf32> to vector<8x128xf32>
    %519 = arith.addf %518, %318 : vector<8x128xf32>
    %520 = arith.mulf %508, %519 : vector<8x128xf32>
    %521 = arith.addf %517, %520 : vector<8x128xf32>
    %522 = math.tanh %521 : vector<8x128xf32>
    %cst_152 = arith.constant 1.000000e+00 : f32
    %523 = vector.broadcast %cst_152 : f32 to vector<8x128xf32>
    %524 = arith.subf %523, %516 : vector<8x128xf32>
    %525 = arith.mulf %524, %522 : vector<8x128xf32>
    %526 = arith.mulf %516, %492 : vector<8x128xf32>
    %527 = arith.addf %525, %526 : vector<8x128xf32>
    %528 = arith.index_cast %496 : i32 to index
    %c0_153 = arith.constant 0 : index
    %529 = vector.load %arg33[%528, %c0_153] : memref<64x128xf32, #tpu.memory_space<vmem>>, vector<8x128xf32>
    tpu.vector_store %arg33[%528, %c0_153], %527 {strides = array<i32>} : memref<64x128xf32, #tpu.memory_space<vmem>>, vector<8x128xf32>,
    %c6_i32_154 = arith.constant 6 : i32
    %c8_i32_155 = arith.constant 8 : i32
    %530 = arith.muli %c6_i32_154, %c8_i32_155 : i32
    %531 = tpu.assume_multiple %530, 8 : i32
    %532 = arith.index_cast %531 : i32 to index
    %c0_156 = arith.constant 0 : index
    %533 = vector.load %arg31[%532, %c0_156] : memref<64x384xf32, #tpu.memory_space<vmem>>, vector<8x384xf32>
    %534 = arith.truncf %527 : vector<8x128xf32> to vector<8x128xbf16>
    %cst_157 = arith.constant dense<0.000000e+00> : vector<8x384xf32>
    %535 = tpu.matmul %534, %315, %cst_157 {dimension_numbers = #tpu.dot_dimension_numbers<[1], [0], [0], [1], [0, 0, 1, 1], [], []>} : vector<8x128xbf16>, vector<128x384xbf16>, vector<8x384xf32> -> vector<8x384xf32>
    %536 = vector.extract_strided_slice %533 {offsets = [0, 0], sizes = [8, 128], strides = [1, 1]} : vector<8x384xf32> to vector<8x128xf32>
    %537 = vector.extract_strided_slice %535 {offsets = [0, 0], sizes = [8, 128], strides = [1, 1]} : vector<8x384xf32> to vector<8x128xf32>
    %538 = arith.addf %536, %537 : vector<8x128xf32>
    %539 = arith.negf %538 : vector<8x128xf32>
    %540 = math.exp %539 : vector<8x128xf32>
    %cst_158 = arith.constant 1.000000e+00 : f32
    %541 = vector.broadcast %cst_158 : f32 to vector<8x128xf32>
    %542 = arith.addf %541, %540 : vector<8x128xf32>
    %543 = arith.divf %541, %542 : vector<8x128xf32>
    %544 = vector.extract_strided_slice %533 {offsets = [0, 128], sizes = [8, 128], strides = [1, 1]} : vector<8x384xf32> to vector<8x128xf32>
    %545 = vector.extract_strided_slice %535 {offsets = [0, 128], sizes = [8, 128], strides = [1, 1]} : vector<8x384xf32> to vector<8x128xf32>
    %546 = arith.addf %544, %545 : vector<8x128xf32>
    %547 = arith.negf %546 : vector<8x128xf32>
    %548 = math.exp %547 : vector<8x128xf32>
    %cst_159 = arith.constant 1.000000e+00 : f32
    %549 = vector.broadcast %cst_159 : f32 to vector<8x128xf32>
    %550 = arith.addf %549, %548 : vector<8x128xf32>
    %551 = arith.divf %549, %550 : vector<8x128xf32>
    %552 = vector.extract_strided_slice %533 {offsets = [0, 256], sizes = [8, 128], strides = [1, 1]} : vector<8x384xf32> to vector<8x128xf32>
    %553 = vector.extract_strided_slice %535 {offsets = [0, 256], sizes = [8, 128], strides = [1, 1]} : vector<8x384xf32> to vector<8x128xf32>
    %554 = arith.addf %553, %318 : vector<8x128xf32>
    %555 = arith.mulf %543, %554 : vector<8x128xf32>
    %556 = arith.addf %552, %555 : vector<8x128xf32>
    %557 = math.tanh %556 : vector<8x128xf32>
    %cst_160 = arith.constant 1.000000e+00 : f32
    %558 = vector.broadcast %cst_160 : f32 to vector<8x128xf32>
    %559 = arith.subf %558, %551 : vector<8x128xf32>
    %560 = arith.mulf %559, %557 : vector<8x128xf32>
    %561 = arith.mulf %551, %527 : vector<8x128xf32>
    %562 = arith.addf %560, %561 : vector<8x128xf32>
    %563 = arith.index_cast %531 : i32 to index
    %c0_161 = arith.constant 0 : index
    %564 = vector.load %arg33[%563, %c0_161] : memref<64x128xf32, #tpu.memory_space<vmem>>, vector<8x128xf32>
    tpu.vector_store %arg33[%563, %c0_161], %562 {strides = array<i32>} : memref<64x128xf32, #tpu.memory_space<vmem>>, vector<8x128xf32>,
    %c7_i32_162 = arith.constant 7 : i32
    %c8_i32_163 = arith.constant 8 : i32
    %565 = arith.muli %c7_i32_162, %c8_i32_163 : i32
    %566 = tpu.assume_multiple %565, 8 : i32
    %567 = arith.index_cast %566 : i32 to index
    %c0_164 = arith.constant 0 : index
    %568 = vector.load %arg31[%567, %c0_164] : memref<64x384xf32, #tpu.memory_space<vmem>>, vector<8x384xf32>
    %569 = arith.truncf %562 : vector<8x128xf32> to vector<8x128xbf16>
    %cst_165 = arith.constant dense<0.000000e+00> : vector<8x384xf32>
    %570 = tpu.matmul %569, %315, %cst_165 {dimension_numbers = #tpu.dot_dimension_numbers<[1], [0], [0], [1], [0, 0, 1, 1], [], []>} : vector<8x128xbf16>, vector<128x384xbf16>, vector<8x384xf32> -> vector<8x384xf32>
    %571 = vector.extract_strided_slice %568 {offsets = [0, 0], sizes = [8, 128], strides = [1, 1]} : vector<8x384xf32> to vector<8x128xf32>
    %572 = vector.extract_strided_slice %570 {offsets = [0, 0], sizes = [8, 128], strides = [1, 1]} : vector<8x384xf32> to vector<8x128xf32>
    %573 = arith.addf %571, %572 : vector<8x128xf32>
    %574 = arith.negf %573 : vector<8x128xf32>
    %575 = math.exp %574 : vector<8x128xf32>
    %cst_166 = arith.constant 1.000000e+00 : f32
    %576 = vector.broadcast %cst_166 : f32 to vector<8x128xf32>
    %577 = arith.addf %576, %575 : vector<8x128xf32>
    %578 = arith.divf %576, %577 : vector<8x128xf32>
    %579 = vector.extract_strided_slice %568 {offsets = [0, 128], sizes = [8, 128], strides = [1, 1]} : vector<8x384xf32> to vector<8x128xf32>
    %580 = vector.extract_strided_slice %570 {offsets = [0, 128], sizes = [8, 128], strides = [1, 1]} : vector<8x384xf32> to vector<8x128xf32>
    %581 = arith.addf %579, %580 : vector<8x128xf32>
    %582 = arith.negf %581 : vector<8x128xf32>
    %583 = math.exp %582 : vector<8x128xf32>
    %cst_167 = arith.constant 1.000000e+00 : f32
    %584 = vector.broadcast %cst_167 : f32 to vector<8x128xf32>
    %585 = arith.addf %584, %583 : vector<8x128xf32>
    %586 = arith.divf %584, %585 : vector<8x128xf32>
    %587 = vector.extract_strided_slice %568 {offsets = [0, 256], sizes = [8, 128], strides = [1, 1]} : vector<8x384xf32> to vector<8x128xf32>
    %588 = vector.extract_strided_slice %570 {offsets = [0, 256], sizes = [8, 128], strides = [1, 1]} : vector<8x384xf32> to vector<8x128xf32>
    %589 = arith.addf %588, %318 : vector<8x128xf32>
    %590 = arith.mulf %578, %589 : vector<8x128xf32>
    %591 = arith.addf %587, %590 : vector<8x128xf32>
    %592 = math.tanh %591 : vector<8x128xf32>
    %cst_168 = arith.constant 1.000000e+00 : f32
    %593 = vector.broadcast %cst_168 : f32 to vector<8x128xf32>
    %594 = arith.subf %593, %586 : vector<8x128xf32>
    %595 = arith.mulf %594, %592 : vector<8x128xf32>
    %596 = arith.mulf %586, %562 : vector<8x128xf32>
    %597 = arith.addf %595, %596 : vector<8x128xf32>
    %598 = arith.index_cast %566 : i32 to index
    %c0_169 = arith.constant 0 : index
    %599 = vector.load %arg33[%598, %c0_169] : memref<64x128xf32, #tpu.memory_space<vmem>>, vector<8x128xf32>
    tpu.vector_store %arg33[%598, %c0_169], %597 {strides = array<i32>} : memref<64x128xf32, #tpu.memory_space<vmem>>, vector<8x128xf32>,
    %c8_i32_170 = arith.constant 8 : i32
    %600 = tpu.iota {dimensions = array<i32: 1>} : vector<8x128xi32>
    %c32_i32 = arith.constant 32 : i32
    %c0_i32_171 = arith.constant 0 : i32
    %601 = arith.cmpi eq, %c32_i32, %c0_i32_171 : i32
    %c1_i32_172 = arith.constant 1 : i32
    %602 = arith.select %601, %c1_i32_172, %c32_i32 : i32
    %603 = vector.broadcast %602 : i32 to vector<8x128xi32>
    %604 = arith.remsi %600, %603 : vector<8x128xi32>
    %c0_i32_173 = arith.constant 0 : i32
    %605 = vector.broadcast %c0_i32_173 : i32 to vector<8x128xi32>
    %606 = arith.cmpi ne, %604, %605 : vector<8x128xi32>
    %c0_i32_174 = arith.constant 0 : i32
    %607 = vector.broadcast %c0_i32_174 : i32 to vector<8x128xi32>
    %608 = arith.cmpi slt, %604, %607 : vector<8x128xi32>
    %c0_i32_175 = arith.constant 0 : i32
    %609 = arith.cmpi slt, %602, %c0_i32_175 : i32
    %610 = vector.broadcast %609 : i1 to vector<8x128xi1>
    %611 = vector.broadcast %610 : vector<8x128xi1> to vector<8x128xi1>
    %612 = arith.xori %608, %611 : vector<8x128xi1>
    %613 = arith.andi %612, %606 : vector<8x128xi1>
    %614 = vector.broadcast %602 : i32 to vector<8x128xi32>
    %615 = arith.addi %604, %614 : vector<8x128xi32>
    %616 = arith.select %613, %615, %604 : vector<8x128xi1>, vector<8x128xi32>
    %c16_i32 = arith.constant 16 : i32
    %617 = vector.broadcast %c16_i32 : i32 to vector<8x128xi32>
    %618 = arith.cmpi slt, %616, %617 : vector<8x128xi32>
    %c0_176 = arith.constant 0 : index
    %c0_177 = arith.constant 0 : index
    %619 = vector.load %arg33[%c0_176, %c0_177] : memref<64x128xf32, #tpu.memory_space<vmem>>, vector<8x128xf32>
    %c56_178 = arith.constant 56 : index
    %c0_179 = arith.constant 0 : index
    %620 = vector.load %arg33[%c56_178, %c0_179] : memref<64x128xf32, #tpu.memory_space<vmem>>, vector<8x128xf32>
    %621 = arith.select %618, %619, %620 : vector<8x128xi1>, vector<8x128xf32>
    %c0_180 = arith.constant 0 : index
    %c0_181 = arith.constant 0 : index
    %622 = vector.load %arg34[%c0_180, %c0_181] : memref<64x128xf32, #tpu.memory_space<vmem>>, vector<8x128xf32>
    tpu.vector_store %arg34[%c0_180, %c0_181], %621 {strides = array<i32>} : memref<64x128xf32, #tpu.memory_space<vmem>>, vector<8x128xf32>,
    %c8_182 = arith.constant 8 : index
    %c0_183 = arith.constant 0 : index
    %623 = vector.load %arg33[%c8_182, %c0_183] : memref<64x128xf32, #tpu.memory_space<vmem>>, vector<8x128xf32>
    %c48_184 = arith.constant 48 : index
    %c0_185 = arith.constant 0 : index
    %624 = vector.load %arg33[%c48_184, %c0_185] : memref<64x128xf32, #tpu.memory_space<vmem>>, vector<8x128xf32>
    %625 = arith.select %618, %623, %624 : vector<8x128xi1>, vector<8x128xf32>
    %c8_186 = arith.constant 8 : index
    %c0_187 = arith.constant 0 : index
    %626 = vector.load %arg34[%c8_186, %c0_187] : memref<64x128xf32, #tpu.memory_space<vmem>>, vector<8x128xf32>
    tpu.vector_store %arg34[%c8_186, %c0_187], %625 {strides = array<i32>} : memref<64x128xf32, #tpu.memory_space<vmem>>, vector<8x128xf32>,
    %c16_188 = arith.constant 16 : index
    %c0_189 = arith.constant 0 : index
    %627 = vector.load %arg33[%c16_188, %c0_189] : memref<64x128xf32, #tpu.memory_space<vmem>>, vector<8x128xf32>
    %c40_190 = arith.constant 40 : index
    %c0_191 = arith.constant 0 : index
    %628 = vector.load %arg33[%c40_190, %c0_191] : memref<64x128xf32, #tpu.memory_space<vmem>>, vector<8x128xf32>
    %629 = arith.select %618, %627, %628 : vector<8x128xi1>, vector<8x128xf32>
    %c16_192 = arith.constant 16 : index
    %c0_193 = arith.constant 0 : index
    %630 = vector.load %arg34[%c16_192, %c0_193] : memref<64x128xf32, #tpu.memory_space<vmem>>, vector<8x128xf32>
    tpu.vector_store %arg34[%c16_192, %c0_193], %629 {strides = array<i32>} : memref<64x128xf32, #tpu.memory_space<vmem>>, vector<8x128xf32>,
    %c24_194 = arith.constant 24 : index
    %c0_195 = arith.constant 0 : index
    %631 = vector.load %arg33[%c24_194, %c0_195] : memref<64x128xf32, #tpu.memory_space<vmem>>, vector<8x128xf32>
    %c32_196 = arith.constant 32 : index
    %c0_197 = arith.constant 0 : index
    %632 = vector.load %arg33[%c32_196, %c0_197] : memref<64x128xf32, #tpu.memory_space<vmem>>, vector<8x128xf32>
    %633 = arith.select %618, %631, %632 : vector<8x128xi1>, vector<8x128xf32>
    %c24_198 = arith.constant 24 : index
    %c0_199 = arith.constant 0 : index
    %634 = vector.load %arg34[%c24_198, %c0_199] : memref<64x128xf32, #tpu.memory_space<vmem>>, vector<8x128xf32>
    tpu.vector_store %arg34[%c24_198, %c0_199], %633 {strides = array<i32>} : memref<64x128xf32, #tpu.memory_space<vmem>>, vector<8x128xf32>,
    %c32_200 = arith.constant 32 : index
    %c0_201 = arith.constant 0 : index
    %635 = vector.load %arg33[%c32_200, %c0_201] : memref<64x128xf32, #tpu.memory_space<vmem>>, vector<8x128xf32>
    %c24_202 = arith.constant 24 : index
    %c0_203 = arith.constant 0 : index
    %636 = vector.load %arg33[%c24_202, %c0_203] : memref<64x128xf32, #tpu.memory_space<vmem>>, vector<8x128xf32>
    %637 = arith.select %618, %635, %636 : vector<8x128xi1>, vector<8x128xf32>
    %c32_204 = arith.constant 32 : index
    %c0_205 = arith.constant 0 : index
    %638 = vector.load %arg34[%c32_204, %c0_205] : memref<64x128xf32, #tpu.memory_space<vmem>>, vector<8x128xf32>
    tpu.vector_store %arg34[%c32_204, %c0_205], %637 {strides = array<i32>} : memref<64x128xf32, #tpu.memory_space<vmem>>, vector<8x128xf32>,
    %c40_206 = arith.constant 40 : index
    %c0_207 = arith.constant 0 : index
    %639 = vector.load %arg33[%c40_206, %c0_207] : memref<64x128xf32, #tpu.memory_space<vmem>>, vector<8x128xf32>
    %c16_208 = arith.constant 16 : index
    %c0_209 = arith.constant 0 : index
    %640 = vector.load %arg33[%c16_208, %c0_209] : memref<64x128xf32, #tpu.memory_space<vmem>>, vector<8x128xf32>
    %641 = arith.select %618, %639, %640 : vector<8x128xi1>, vector<8x128xf32>
    %c40_210 = arith.constant 40 : index
    %c0_211 = arith.constant 0 : index
    %642 = vector.load %arg34[%c40_210, %c0_211] : memref<64x128xf32, #tpu.memory_space<vmem>>, vector<8x128xf32>
    tpu.vector_store %arg34[%c40_210, %c0_211], %641 {strides = array<i32>} : memref<64x128xf32, #tpu.memory_space<vmem>>, vector<8x128xf32>,
    %c48_212 = arith.constant 48 : index
    %c0_213 = arith.constant 0 : index
    %643 = vector.load %arg33[%c48_212, %c0_213] : memref<64x128xf32, #tpu.memory_space<vmem>>, vector<8x128xf32>
    %c8_214 = arith.constant 8 : index
    %c0_215 = arith.constant 0 : index
    %644 = vector.load %arg33[%c8_214, %c0_215] : memref<64x128xf32, #tpu.memory_space<vmem>>, vector<8x128xf32>
    %645 = arith.select %618, %643, %644 : vector<8x128xi1>, vector<8x128xf32>
    %c48_216 = arith.constant 48 : index
    %c0_217 = arith.constant 0 : index
    %646 = vector.load %arg34[%c48_216, %c0_217] : memref<64x128xf32, #tpu.memory_space<vmem>>, vector<8x128xf32>
    tpu.vector_store %arg34[%c48_216, %c0_217], %645 {strides = array<i32>} : memref<64x128xf32, #tpu.memory_space<vmem>>, vector<8x128xf32>,
    %c56_218 = arith.constant 56 : index
    %c0_219 = arith.constant 0 : index
    %647 = vector.load %arg33[%c56_218, %c0_219] : memref<64x128xf32, #tpu.memory_space<vmem>>, vector<8x128xf32>
    %c0_220 = arith.constant 0 : index
    %c0_221 = arith.constant 0 : index
    %648 = vector.load %arg33[%c0_220, %c0_221] : memref<64x128xf32, #tpu.memory_space<vmem>>, vector<8x128xf32>
    %649 = arith.select %618, %647, %648 : vector<8x128xi1>, vector<8x128xf32>
    %c56_222 = arith.constant 56 : index
    %c0_223 = arith.constant 0 : index
    %650 = vector.load %arg34[%c56_222, %c0_223] : memref<64x128xf32, #tpu.memory_space<vmem>>, vector<8x128xf32>
    tpu.vector_store %arg34[%c56_222, %c0_223], %649 {strides = array<i32>} : memref<64x128xf32, #tpu.memory_space<vmem>>, vector<8x128xf32>,
    %c0_224 = arith.constant 0 : index
    %c0_225 = arith.constant 0 : index
    %651 = vector.load %arg34[%c0_224, %c0_225] : memref<64x128xf32, #tpu.memory_space<vmem>>, vector<64x128xf32>
    %652 = vector.shape_cast %651 : vector<64x128xf32> to vector<8x8x128xf32>
    %653 = vector.extract_strided_slice %652 {offsets = [0, 0, 0], sizes = [8, 8, 32], strides = [1, 1, 1]} : vector<8x8x128xf32> to vector<8x8x32xf32>
    %c0_226 = arith.constant 0 : index
    %c0_227 = arith.constant 0 : index
    %c0_228 = arith.constant 0 : index
    %654 = vector.load %arg9[%c0_226, %c0_227, %c0_228] : memref<2x1x32xf32, #tpu.memory_space<vmem>>, vector<1x1x32xf32>
    %655 = vector.shape_cast %654 : vector<1x1x32xf32> to vector<1x32xf32>
    %c0_229 = arith.constant 0 : index
    %c0_230 = arith.constant 0 : index
    %c0_231 = arith.constant 0 : index
    %656 = vector.load %arg10[%c0_229, %c0_230, %c0_231] : memref<2x1x32xf32, #tpu.memory_space<vmem>>, vector<1x1x32xf32>
    %657 = vector.shape_cast %656 : vector<1x1x32xf32> to vector<1x32xf32>
    %c0_232 = arith.constant 0 : index
    %c0_233 = arith.constant 0 : index
    %c0_234 = arith.constant 0 : index
    %658 = vector.load %arg11[%c0_232, %c0_233, %c0_234] : memref<2x32x16xf32, #tpu.memory_space<vmem>>, vector<1x32x16xf32>
    %659 = vector.shape_cast %658 : vector<1x32x16xf32> to vector<32x16xf32>
    %c0_235 = arith.constant 0 : index
    %c0_236 = arith.constant 0 : index
    %c0_237 = arith.constant 0 : index
    %660 = vector.load %arg12[%c0_235, %c0_236, %c0_237] : memref<2x1x16xf32, #tpu.memory_space<vmem>>, vector<1x1x16xf32>
    %661 = vector.shape_cast %660 : vector<1x1x16xf32> to vector<1x16xf32>
    %c0_238 = arith.constant 0 : index
    %c0_239 = arith.constant 0 : index
    %c0_240 = arith.constant 0 : index
    %662 = vector.load %arg13[%c0_238, %c0_239, %c0_240] : memref<2x16x1xf32, #tpu.memory_space<vmem>>, vector<1x16x1xf32>
    %663 = vector.shape_cast %662 : vector<1x16x1xf32> to vector<16x1xf32>
    %c0_241 = arith.constant 0 : index
    %c0_242 = arith.constant 0 : index
    %c0_243 = arith.constant 0 : index
    %664 = vector.load %arg14[%c0_241, %c0_242, %c0_243] : memref<2x1x1xf32, #tpu.memory_space<vmem>>, vector<1x1x1xf32>
    %665 = vector.shape_cast %664 : vector<1x1x1xf32> to vector<1x1xf32>
    %c0_244 = arith.constant 0 : index
    %c0_245 = arith.constant 0 : index
    %c0_246 = arith.constant 0 : index
    %666 = vector.load %arg15[%c0_244, %c0_245, %c0_246] : memref<2x32x32xf32, #tpu.memory_space<vmem>>, vector<1x32x32xf32>
    %667 = vector.shape_cast %666 : vector<1x32x32xf32> to vector<32x32xf32>
    %c0_247 = arith.constant 0 : index
    %c0_248 = arith.constant 0 : index
    %c0_249 = arith.constant 0 : index
    %668 = vector.load %arg16[%c0_247, %c0_248, %c0_249] : memref<2x1x32xf32, #tpu.memory_space<vmem>>, vector<1x1x32xf32>
    %669 = vector.shape_cast %668 : vector<1x1x32xf32> to vector<1x32xf32>
    %cst_250 = arith.constant dense<0.000000e+00> : vector<8x8xf32>
    %670 = vector.multi_reduction <add>, %653, %cst_250 [2] : vector<8x8x32xf32> to vector<8x8xf32>
    %671 = vector.shape_cast %670 : vector<8x8xf32> to vector<8x8x1xf32>
    %cst_251 = arith.constant 3.200000e+01 : f32
    %672 = vector.broadcast %cst_251 : f32 to vector<8x8x1xf32>
    %673 = arith.divf %671, %672 : vector<8x8x1xf32>
    %674 = vector.broadcast %673 : vector<8x8x1xf32> to vector<8x8x32xf32>
    %675 = arith.subf %653, %674 : vector<8x8x32xf32>
    %676 = arith.mulf %675, %675 : vector<8x8x32xf32>
    %cst_252 = arith.constant dense<0.000000e+00> : vector<8x8xf32>
    %677 = vector.multi_reduction <add>, %676, %cst_252 [2] : vector<8x8x32xf32> to vector<8x8xf32>
    %678 = vector.shape_cast %677 : vector<8x8xf32> to vector<8x8x1xf32>
    %cst_253 = arith.constant 3.200000e+01 : f32
    %679 = vector.broadcast %cst_253 : f32 to vector<8x8x1xf32>
    %680 = arith.divf %678, %679 : vector<8x8x1xf32>
    %681 = vector.broadcast %673 : vector<8x8x1xf32> to vector<8x8x32xf32>
    %682 = arith.subf %653, %681 : vector<8x8x32xf32>
    %cst_254 = arith.constant 9.99999974E-6 : f32
    %683 = vector.broadcast %cst_254 : f32 to vector<8x8x1xf32>
    %684 = arith.addf %680, %683 : vector<8x8x1xf32>
    %685 = math.rsqrt %684 : vector<8x8x1xf32>
    %686 = vector.broadcast %685 : vector<8x8x1xf32> to vector<8x8x32xf32>
    %687 = arith.mulf %682, %686 : vector<8x8x32xf32>
    %688 = vector.shape_cast %655 : vector<1x32xf32> to vector<1x1x32xf32>
    %689 = vector.broadcast %688 : vector<1x1x32xf32> to vector<8x8x32xf32>
    %690 = arith.mulf %687, %689 : vector<8x8x32xf32>
    %691 = vector.shape_cast %657 : vector<1x32xf32> to vector<1x1x32xf32>
    %692 = vector.broadcast %691 : vector<1x1x32xf32> to vector<8x8x32xf32>
    %693 = arith.addf %690, %692 : vector<8x8x32xf32>
    %694 = vector.shape_cast %693 : vector<8x8x32xf32> to vector<64x32xf32>
    %cst_255 = arith.constant dense<0.000000e+00> : vector<64x16xf32>
    %695 = tpu.matmul %694, %659, %cst_255 {dimension_numbers = #tpu.dot_dimension_numbers<[1], [0], [0], [1], [0, 0, 1, 1], [], []>} : vector<64x32xf32>, vector<32x16xf32>, vector<64x16xf32> -> vector<64x16xf32>
    %696 = vector.broadcast %661 : vector<1x16xf32> to vector<64x16xf32>
    %697 = arith.addf %695, %696 : vector<64x16xf32>
    %698 = math.tanh %697 : vector<64x16xf32>
    %cst_256 = arith.constant dense<0.000000e+00> : vector<64x1xf32>
    %699 = tpu.matmul %698, %663, %cst_256 {dimension_numbers = #tpu.dot_dimension_numbers<[1], [0], [0], [1], [0, 0, 1, 1], [], []>} : vector<64x16xf32>, vector<16x1xf32>, vector<64x1xf32> -> vector<64x1xf32>
    %700 = vector.broadcast %665 : vector<1x1xf32> to vector<64x1xf32>
    %701 = arith.addf %699, %700 : vector<64x1xf32>
    %702 = vector.shape_cast %701 : vector<64x1xf32> to vector<8x8x1xf32>
    %cst_257 = arith.constant dense<0xFF800000> : vector<8x1xf32>
    %703 = vector.multi_reduction <maximumf>, %702, %cst_257 [0] : vector<8x8x1xf32> to vector<8x1xf32>
    %704 = vector.shape_cast %703 : vector<8x1xf32> to vector<1x8x1xf32>
    %705 = vector.broadcast %704 : vector<1x8x1xf32> to vector<8x8x1xf32>
    %706 = arith.subf %702, %705 : vector<8x8x1xf32>
    %707 = math.exp %706 : vector<8x8x1xf32>
    %cst_258 = arith.constant dense<0.000000e+00> : vector<8x1xf32>
    %708 = vector.multi_reduction <add>, %707, %cst_258 [0] : vector<8x8x1xf32> to vector<8x1xf32>
    %709 = vector.shape_cast %708 : vector<8x1xf32> to vector<1x8x1xf32>
    %710 = vector.broadcast %709 : vector<1x8x1xf32> to vector<8x8x1xf32>
    %711 = arith.divf %707, %710 : vector<8x8x1xf32>
    %712 = vector.broadcast %711 : vector<8x8x1xf32> to vector<8x8x32xf32>
    %713 = arith.mulf %693, %712 : vector<8x8x32xf32>
    %cst_259 = arith.constant dense<0.000000e+00> : vector<8x32xf32>
    %714 = vector.multi_reduction <add>, %713, %cst_259 [0] : vector<8x8x32xf32> to vector<8x32xf32>
    %cst_260 = arith.constant dense<0.000000e+00> : vector<8x32xf32>
    %715 = tpu.matmul %714, %667, %cst_260 {dimension_numbers = #tpu.dot_dimension_numbers<[1], [0], [0], [1], [0, 0, 1, 1], [], []>} : vector<8x32xf32>, vector<32x32xf32>, vector<8x32xf32> -> vector<8x32xf32>
    %716 = vector.broadcast %669 : vector<1x32xf32> to vector<8x32xf32>
    %717 = arith.addf %715, %716 : vector<8x32xf32>
    %cst_261 = arith.constant 5.000000e-01 : f32
    %718 = vector.broadcast %cst_261 : f32 to vector<8x32xf32>
    %719 = arith.mulf %718, %717 : vector<8x32xf32>
    %cst_262 = arith.constant 0.707106769 : f32
    %720 = vector.broadcast %cst_262 : f32 to vector<8x32xf32>
    %721 = arith.mulf %717, %720 : vector<8x32xf32>
    %cst_263 = arith.constant 0.000000e+00 : f32
    %722 = vector.broadcast %cst_263 : f32 to vector<8x32xf32>
    %723 = arith.cmpf oge, %721, %722 : vector<8x32xf32>
    %cst_264 = arith.constant 1.000000e+00 : f32
    %cst_265 = arith.constant -1.000000e+00 : f32
    %724 = vector.broadcast %cst_264 : f32 to vector<8x32xf32>
    %725 = vector.broadcast %cst_265 : f32 to vector<8x32xf32>
    %726 = arith.select %723, %724, %725 : vector<8x32xi1>, vector<8x32xf32>
    %727 = math.absf %721 : vector<8x32xf32>
    %cst_266 = arith.constant 0.327591091 : f32
    %728 = vector.broadcast %cst_266 : f32 to vector<8x32xf32>
    %729 = arith.mulf %728, %727 : vector<8x32xf32>
    %cst_267 = arith.constant 1.000000e+00 : f32
    %730 = vector.broadcast %cst_267 : f32 to vector<8x32xf32>
    %731 = arith.addf %730, %729 : vector<8x32xf32>
    %cst_268 = arith.constant 1.000000e+00 : f32
    %732 = vector.broadcast %cst_268 : f32 to vector<8x32xf32>
    %733 = arith.divf %732, %731 : vector<8x32xf32>
    %cst_269 = arith.constant 1.06140542 : f32
    %734 = vector.broadcast %cst_269 : f32 to vector<8x32xf32>
    %735 = arith.mulf %734, %733 : vector<8x32xf32>
    %cst_270 = arith.constant -1.45315206 : f32
    %736 = vector.broadcast %cst_270 : f32 to vector<8x32xf32>
    %737 = arith.addf %735, %736 : vector<8x32xf32>
    %738 = arith.mulf %737, %733 : vector<8x32xf32>
    %cst_271 = arith.constant 1.42141378 : f32
    %739 = vector.broadcast %cst_271 : f32 to vector<8x32xf32>
    %740 = arith.addf %738, %739 : vector<8x32xf32>
    %741 = arith.mulf %740, %733 : vector<8x32xf32>
    %cst_272 = arith.constant -0.284496725 : f32
    %742 = vector.broadcast %cst_272 : f32 to vector<8x32xf32>
    %743 = arith.addf %741, %742 : vector<8x32xf32>
    %744 = arith.mulf %743, %733 : vector<8x32xf32>
    %cst_273 = arith.constant 0.254829586 : f32
    %745 = vector.broadcast %cst_273 : f32 to vector<8x32xf32>
    %746 = arith.addf %744, %745 : vector<8x32xf32>
    %747 = arith.mulf %746, %733 : vector<8x32xf32>
    %cst_274 = arith.constant 0.000000e+00 : f32
    %748 = vector.broadcast %cst_274 : f32 to vector<8x32xf32>
    %749 = arith.subf %748, %727 : vector<8x32xf32>
    %750 = arith.mulf %749, %727 : vector<8x32xf32>
    %751 = math.exp %750 : vector<8x32xf32>
    %752 = arith.mulf %747, %751 : vector<8x32xf32>
    %cst_275 = arith.constant 1.000000e+00 : f32
    %753 = vector.broadcast %cst_275 : f32 to vector<8x32xf32>
    %754 = arith.subf %753, %752 : vector<8x32xf32>
    %755 = arith.mulf %726, %754 : vector<8x32xf32>
    %cst_276 = arith.constant 1.000000e+00 : f32
    %756 = vector.broadcast %cst_276 : f32 to vector<8x32xf32>
    %757 = arith.addf %756, %755 : vector<8x32xf32>
    %758 = arith.mulf %719, %757 : vector<8x32xf32>
    %759 = vector.extract_strided_slice %652 {offsets = [0, 0, 32], sizes = [8, 8, 32], strides = [1, 1, 1]} : vector<8x8x128xf32> to vector<8x8x32xf32>
    %c1 = arith.constant 1 : index
    %c0_277 = arith.constant 0 : index
    %c0_278 = arith.constant 0 : index
    %760 = vector.load %arg9[%c1, %c0_277, %c0_278] : memref<2x1x32xf32, #tpu.memory_space<vmem>>, vector<1x1x32xf32>
    %761 = vector.shape_cast %760 : vector<1x1x32xf32> to vector<1x32xf32>
    %c1_279 = arith.constant 1 : index
    %c0_280 = arith.constant 0 : index
    %c0_281 = arith.constant 0 : index
    %762 = vector.load %arg10[%c1_279, %c0_280, %c0_281] : memref<2x1x32xf32, #tpu.memory_space<vmem>>, vector<1x1x32xf32>
    %763 = vector.shape_cast %762 : vector<1x1x32xf32> to vector<1x32xf32>
    %c1_282 = arith.constant 1 : index
    %c0_283 = arith.constant 0 : index
    %c0_284 = arith.constant 0 : index
    %764 = vector.load %arg11[%c1_282, %c0_283, %c0_284] : memref<2x32x16xf32, #tpu.memory_space<vmem>>, vector<1x32x16xf32>
    %765 = vector.shape_cast %764 : vector<1x32x16xf32> to vector<32x16xf32>
    %c1_285 = arith.constant 1 : index
    %c0_286 = arith.constant 0 : index
    %c0_287 = arith.constant 0 : index
    %766 = vector.load %arg12[%c1_285, %c0_286, %c0_287] : memref<2x1x16xf32, #tpu.memory_space<vmem>>, vector<1x1x16xf32>
    %767 = vector.shape_cast %766 : vector<1x1x16xf32> to vector<1x16xf32>
    %c1_288 = arith.constant 1 : index
    %c0_289 = arith.constant 0 : index
    %c0_290 = arith.constant 0 : index
    %768 = vector.load %arg13[%c1_288, %c0_289, %c0_290] : memref<2x16x1xf32, #tpu.memory_space<vmem>>, vector<1x16x1xf32>
    %769 = vector.shape_cast %768 : vector<1x16x1xf32> to vector<16x1xf32>
    %c1_291 = arith.constant 1 : index
    %c0_292 = arith.constant 0 : index
    %c0_293 = arith.constant 0 : index
    %770 = vector.load %arg14[%c1_291, %c0_292, %c0_293] : memref<2x1x1xf32, #tpu.memory_space<vmem>>, vector<1x1x1xf32>
    %771 = vector.shape_cast %770 : vector<1x1x1xf32> to vector<1x1xf32>
    %c1_294 = arith.constant 1 : index
    %c0_295 = arith.constant 0 : index
    %c0_296 = arith.constant 0 : index
    %772 = vector.load %arg15[%c1_294, %c0_295, %c0_296] : memref<2x32x32xf32, #tpu.memory_space<vmem>>, vector<1x32x32xf32>
    %773 = vector.shape_cast %772 : vector<1x32x32xf32> to vector<32x32xf32>
    %c1_297 = arith.constant 1 : index
    %c0_298 = arith.constant 0 : index
    %c0_299 = arith.constant 0 : index
    %774 = vector.load %arg16[%c1_297, %c0_298, %c0_299] : memref<2x1x32xf32, #tpu.memory_space<vmem>>, vector<1x1x32xf32>
    %775 = vector.shape_cast %774 : vector<1x1x32xf32> to vector<1x32xf32>
    %cst_300 = arith.constant dense<0.000000e+00> : vector<8x8xf32>
    %776 = vector.multi_reduction <add>, %759, %cst_300 [2] : vector<8x8x32xf32> to vector<8x8xf32>
    %777 = vector.shape_cast %776 : vector<8x8xf32> to vector<8x8x1xf32>
    %cst_301 = arith.constant 3.200000e+01 : f32
    %778 = vector.broadcast %cst_301 : f32 to vector<8x8x1xf32>
    %779 = arith.divf %777, %778 : vector<8x8x1xf32>
    %780 = vector.broadcast %779 : vector<8x8x1xf32> to vector<8x8x32xf32>
    %781 = arith.subf %759, %780 : vector<8x8x32xf32>
    %782 = arith.mulf %781, %781 : vector<8x8x32xf32>
    %cst_302 = arith.constant dense<0.000000e+00> : vector<8x8xf32>
    %783 = vector.multi_reduction <add>, %782, %cst_302 [2] : vector<8x8x32xf32> to vector<8x8xf32>
    %784 = vector.shape_cast %783 : vector<8x8xf32> to vector<8x8x1xf32>
    %cst_303 = arith.constant 3.200000e+01 : f32
    %785 = vector.broadcast %cst_303 : f32 to vector<8x8x1xf32>
    %786 = arith.divf %784, %785 : vector<8x8x1xf32>
    %787 = vector.broadcast %779 : vector<8x8x1xf32> to vector<8x8x32xf32>
    %788 = arith.subf %759, %787 : vector<8x8x32xf32>
    %cst_304 = arith.constant 9.99999974E-6 : f32
    %789 = vector.broadcast %cst_304 : f32 to vector<8x8x1xf32>
    %790 = arith.addf %786, %789 : vector<8x8x1xf32>
    %791 = math.rsqrt %790 : vector<8x8x1xf32>
    %792 = vector.broadcast %791 : vector<8x8x1xf32> to vector<8x8x32xf32>
    %793 = arith.mulf %788, %792 : vector<8x8x32xf32>
    %794 = vector.shape_cast %761 : vector<1x32xf32> to vector<1x1x32xf32>
    %795 = vector.broadcast %794 : vector<1x1x32xf32> to vector<8x8x32xf32>
    %796 = arith.mulf %793, %795 : vector<8x8x32xf32>
    %797 = vector.shape_cast %763 : vector<1x32xf32> to vector<1x1x32xf32>
    %798 = vector.broadcast %797 : vector<1x1x32xf32> to vector<8x8x32xf32>
    %799 = arith.addf %796, %798 : vector<8x8x32xf32>
    %800 = vector.shape_cast %799 : vector<8x8x32xf32> to vector<64x32xf32>
    %cst_305 = arith.constant dense<0.000000e+00> : vector<64x16xf32>
    %801 = tpu.matmul %800, %765, %cst_305 {dimension_numbers = #tpu.dot_dimension_numbers<[1], [0], [0], [1], [0, 0, 1, 1], [], []>} : vector<64x32xf32>, vector<32x16xf32>, vector<64x16xf32> -> vector<64x16xf32>
    %802 = vector.broadcast %767 : vector<1x16xf32> to vector<64x16xf32>
    %803 = arith.addf %801, %802 : vector<64x16xf32>
    %804 = math.tanh %803 : vector<64x16xf32>
    %cst_306 = arith.constant dense<0.000000e+00> : vector<64x1xf32>
    %805 = tpu.matmul %804, %769, %cst_306 {dimension_numbers = #tpu.dot_dimension_numbers<[1], [0], [0], [1], [0, 0, 1, 1], [], []>} : vector<64x16xf32>, vector<16x1xf32>, vector<64x1xf32> -> vector<64x1xf32>
    %806 = vector.broadcast %771 : vector<1x1xf32> to vector<64x1xf32>
    %807 = arith.addf %805, %806 : vector<64x1xf32>
    %808 = vector.shape_cast %807 : vector<64x1xf32> to vector<8x8x1xf32>
    %cst_307 = arith.constant dense<0xFF800000> : vector<8x1xf32>
    %809 = vector.multi_reduction <maximumf>, %808, %cst_307 [0] : vector<8x8x1xf32> to vector<8x1xf32>
    %810 = vector.shape_cast %809 : vector<8x1xf32> to vector<1x8x1xf32>
    %811 = vector.broadcast %810 : vector<1x8x1xf32> to vector<8x8x1xf32>
    %812 = arith.subf %808, %811 : vector<8x8x1xf32>
    %813 = math.exp %812 : vector<8x8x1xf32>
    %cst_308 = arith.constant dense<0.000000e+00> : vector<8x1xf32>
    %814 = vector.multi_reduction <add>, %813, %cst_308 [0] : vector<8x8x1xf32> to vector<8x1xf32>
    %815 = vector.shape_cast %814 : vector<8x1xf32> to vector<1x8x1xf32>
    %816 = vector.broadcast %815 : vector<1x8x1xf32> to vector<8x8x1xf32>
    %817 = arith.divf %813, %816 : vector<8x8x1xf32>
    %818 = vector.broadcast %817 : vector<8x8x1xf32> to vector<8x8x32xf32>
    %819 = arith.mulf %799, %818 : vector<8x8x32xf32>
    %cst_309 = arith.constant dense<0.000000e+00> : vector<8x32xf32>
    %820 = vector.multi_reduction <add>, %819, %cst_309 [0] : vector<8x8x32xf32> to vector<8x32xf32>
    %cst_310 = arith.constant dense<0.000000e+00> : vector<8x32xf32>
    %821 = tpu.matmul %820, %773, %cst_310 {dimension_numbers = #tpu.dot_dimension_numbers<[1], [0], [0], [1], [0, 0, 1, 1], [], []>} : vector<8x32xf32>, vector<32x32xf32>, vector<8x32xf32> -> vector<8x32xf32>
    %822 = vector.broadcast %775 : vector<1x32xf32> to vector<8x32xf32>
    %823 = arith.addf %821, %822 : vector<8x32xf32>
    %cst_311 = arith.constant 5.000000e-01 : f32
    %824 = vector.broadcast %cst_311 : f32 to vector<8x32xf32>
    %825 = arith.mulf %824, %823 : vector<8x32xf32>
    %cst_312 = arith.constant 0.707106769 : f32
    %826 = vector.broadcast %cst_312 : f32 to vector<8x32xf32>
    %827 = arith.mulf %823, %826 : vector<8x32xf32>
    %cst_313 = arith.constant 0.000000e+00 : f32
    %828 = vector.broadcast %cst_313 : f32 to vector<8x32xf32>
    %829 = arith.cmpf oge, %827, %828 : vector<8x32xf32>
    %cst_314 = arith.constant 1.000000e+00 : f32
    %cst_315 = arith.constant -1.000000e+00 : f32
    %830 = vector.broadcast %cst_314 : f32 to vector<8x32xf32>
    %831 = vector.broadcast %cst_315 : f32 to vector<8x32xf32>
    %832 = arith.select %829, %830, %831 : vector<8x32xi1>, vector<8x32xf32>
    %833 = math.absf %827 : vector<8x32xf32>
    %cst_316 = arith.constant 0.327591091 : f32
    %834 = vector.broadcast %cst_316 : f32 to vector<8x32xf32>
    %835 = arith.mulf %834, %833 : vector<8x32xf32>
    %cst_317 = arith.constant 1.000000e+00 : f32
    %836 = vector.broadcast %cst_317 : f32 to vector<8x32xf32>
    %837 = arith.addf %836, %835 : vector<8x32xf32>
    %cst_318 = arith.constant 1.000000e+00 : f32
    %838 = vector.broadcast %cst_318 : f32 to vector<8x32xf32>
    %839 = arith.divf %838, %837 : vector<8x32xf32>
    %cst_319 = arith.constant 1.06140542 : f32
    %840 = vector.broadcast %cst_319 : f32 to vector<8x32xf32>
    %841 = arith.mulf %840, %839 : vector<8x32xf32>
    %cst_320 = arith.constant -1.45315206 : f32
    %842 = vector.broadcast %cst_320 : f32 to vector<8x32xf32>
    %843 = arith.addf %841, %842 : vector<8x32xf32>
    %844 = arith.mulf %843, %839 : vector<8x32xf32>
    %cst_321 = arith.constant 1.42141378 : f32
    %845 = vector.broadcast %cst_321 : f32 to vector<8x32xf32>
    %846 = arith.addf %844, %845 : vector<8x32xf32>
    %847 = arith.mulf %846, %839 : vector<8x32xf32>
    %cst_322 = arith.constant -0.284496725 : f32
    %848 = vector.broadcast %cst_322 : f32 to vector<8x32xf32>
    %849 = arith.addf %847, %848 : vector<8x32xf32>
    %850 = arith.mulf %849, %839 : vector<8x32xf32>
    %cst_323 = arith.constant 0.254829586 : f32
    %851 = vector.broadcast %cst_323 : f32 to vector<8x32xf32>
    %852 = arith.addf %850, %851 : vector<8x32xf32>
    %853 = arith.mulf %852, %839 : vector<8x32xf32>
    %cst_324 = arith.constant 0.000000e+00 : f32
    %854 = vector.broadcast %cst_324 : f32 to vector<8x32xf32>
    %855 = arith.subf %854, %833 : vector<8x32xf32>
    %856 = arith.mulf %855, %833 : vector<8x32xf32>
    %857 = math.exp %856 : vector<8x32xf32>
    %858 = arith.mulf %853, %857 : vector<8x32xf32>
    %cst_325 = arith.constant 1.000000e+00 : f32
    %859 = vector.broadcast %cst_325 : f32 to vector<8x32xf32>
    %860 = arith.subf %859, %858 : vector<8x32xf32>
    %861 = arith.mulf %832, %860 : vector<8x32xf32>
    %cst_326 = arith.constant 1.000000e+00 : f32
    %862 = vector.broadcast %cst_326 : f32 to vector<8x32xf32>
    %863 = arith.addf %862, %861 : vector<8x32xf32>
    %864 = arith.mulf %825, %863 : vector<8x32xf32>
    %c0_327 = arith.constant 0 : index
    %c0_328 = arith.constant 0 : index
    %865 = vector.load %arg17[%c0_327, %c0_328] : memref<32x32xf32, #tpu.memory_space<vmem>>, vector<32x32xf32>
    %cst_329 = arith.constant dense<0.000000e+00> : vector<8x32xf32>
    %866 = tpu.matmul %864, %865, %cst_329 {dimension_numbers = #tpu.dot_dimension_numbers<[1], [0], [0], [1], [0, 0, 1, 1], [], []>} : vector<8x32xf32>, vector<32x32xf32>, vector<8x32xf32> -> vector<8x32xf32>
    %c0_330 = arith.constant 0 : index
    %c0_331 = arith.constant 0 : index
    %867 = vector.load %arg18[%c0_330, %c0_331] : memref<1x32xf32, #tpu.memory_space<vmem>>, vector<1x32xf32>
    %868 = vector.broadcast %867 : vector<1x32xf32> to vector<8x32xf32>
    %869 = arith.addf %866, %868 : vector<8x32xf32>
    %c0_332 = arith.constant 0 : index
    %c0_333 = arith.constant 0 : index
    %870 = vector.load %arg19[%c0_332, %c0_333] : memref<32x32xf32, #tpu.memory_space<vmem>>, vector<32x32xf32>
    %cst_334 = arith.constant dense<0.000000e+00> : vector<8x32xf32>
    %871 = tpu.matmul %869, %870, %cst_334 {dimension_numbers = #tpu.dot_dimension_numbers<[1], [0], [0], [1], [0, 0, 1, 1], [], []>} : vector<8x32xf32>, vector<32x32xf32>, vector<8x32xf32> -> vector<8x32xf32>
    %c0_335 = arith.constant 0 : index
    %c0_336 = arith.constant 0 : index
    %872 = vector.load %arg20[%c0_335, %c0_336] : memref<1x32xf32, #tpu.memory_space<vmem>>, vector<1x32xf32>
    %873 = vector.broadcast %872 : vector<1x32xf32> to vector<8x32xf32>
    %874 = arith.addf %871, %873 : vector<8x32xf32>
    %c0_337 = arith.constant 0 : index
    %c0_338 = arith.constant 0 : index
    %875 = vector.load %arg21[%c0_337, %c0_338] : memref<32x32xf32, #tpu.memory_space<vmem>>, vector<32x32xf32>
    %cst_339 = arith.constant dense<0.000000e+00> : vector<8x32xf32>
    %876 = tpu.matmul %758, %875, %cst_339 {dimension_numbers = #tpu.dot_dimension_numbers<[1], [0], [0], [1], [0, 0, 1, 1], [], []>} : vector<8x32xf32>, vector<32x32xf32>, vector<8x32xf32> -> vector<8x32xf32>
    %c0_340 = arith.constant 0 : index
    %c0_341 = arith.constant 0 : index
    %877 = vector.load %arg22[%c0_340, %c0_341] : memref<32x32xf32, #tpu.memory_space<vmem>>, vector<32x32xf32>
    %cst_342 = arith.constant dense<0.000000e+00> : vector<8x32xf32>
    %878 = tpu.matmul %874, %877, %cst_342 {dimension_numbers = #tpu.dot_dimension_numbers<[1], [0], [0], [1], [0, 0, 1, 1], [], []>} : vector<8x32xf32>, vector<32x32xf32>, vector<8x32xf32> -> vector<8x32xf32>
    %879 = arith.addf %876, %878 : vector<8x32xf32>
    %c0_343 = arith.constant 0 : index
    %c0_344 = arith.constant 0 : index
    %880 = vector.load %arg23[%c0_343, %c0_344] : memref<1x32xf32, #tpu.memory_space<vmem>>, vector<1x32xf32>
    %881 = vector.broadcast %880 : vector<1x32xf32> to vector<8x32xf32>
    %882 = arith.addf %879, %881 : vector<8x32xf32>
    %883 = arith.negf %882 : vector<8x32xf32>
    %884 = math.exp %883 : vector<8x32xf32>
    %cst_345 = arith.constant 1.000000e+00 : f32
    %885 = vector.broadcast %cst_345 : f32 to vector<8x32xf32>
    %886 = arith.addf %885, %884 : vector<8x32xf32>
    %887 = arith.divf %885, %886 : vector<8x32xf32>
    %888 = arith.mulf %887, %874 : vector<8x32xf32>
    %889 = arith.addf %758, %888 : vector<8x32xf32>
    %cst_346 = arith.constant dense<0.000000e+00> : vector<8xf32>
    %890 = vector.multi_reduction <add>, %889, %cst_346 [1] : vector<8x32xf32> to vector<8xf32>
    %891 = vector.shape_cast %890 : vector<8xf32> to vector<8x1xf32>
    %cst_347 = arith.constant 3.200000e+01 : f32
    %892 = vector.broadcast %cst_347 : f32 to vector<8x1xf32>
    %893 = arith.divf %891, %892 : vector<8x1xf32>
    %894 = vector.broadcast %893 : vector<8x1xf32> to vector<8x32xf32>
    %895 = arith.subf %889, %894 : vector<8x32xf32>
    %896 = arith.mulf %895, %895 : vector<8x32xf32>
    %cst_348 = arith.constant dense<0.000000e+00> : vector<8xf32>
    %897 = vector.multi_reduction <add>, %896, %cst_348 [1] : vector<8x32xf32> to vector<8xf32>
    %898 = vector.shape_cast %897 : vector<8xf32> to vector<8x1xf32>
    %cst_349 = arith.constant 3.200000e+01 : f32
    %899 = vector.broadcast %cst_349 : f32 to vector<8x1xf32>
    %900 = arith.divf %898, %899 : vector<8x1xf32>
    %901 = vector.broadcast %893 : vector<8x1xf32> to vector<8x32xf32>
    %902 = arith.subf %889, %901 : vector<8x32xf32>
    %cst_350 = arith.constant 9.99999974E-6 : f32
    %903 = vector.broadcast %cst_350 : f32 to vector<8x1xf32>
    %904 = arith.addf %900, %903 : vector<8x1xf32>
    %905 = math.rsqrt %904 : vector<8x1xf32>
    %906 = vector.broadcast %905 : vector<8x1xf32> to vector<8x32xf32>
    %907 = arith.mulf %902, %906 : vector<8x32xf32>
    %c0_351 = arith.constant 0 : index
    %c0_352 = arith.constant 0 : index
    %908 = vector.load %arg24[%c0_351, %c0_352] : memref<1x32xf32, #tpu.memory_space<vmem>>, vector<1x32xf32>
    %909 = vector.broadcast %908 : vector<1x32xf32> to vector<8x32xf32>
    %910 = arith.mulf %907, %909 : vector<8x32xf32>
    %c0_353 = arith.constant 0 : index
    %c0_354 = arith.constant 0 : index
    %911 = vector.load %arg25[%c0_353, %c0_354] : memref<1x32xf32, #tpu.memory_space<vmem>>, vector<1x32xf32>
    %912 = vector.broadcast %911 : vector<1x32xf32> to vector<8x32xf32>
    %913 = arith.addf %910, %912 : vector<8x32xf32>
    %c0_355 = arith.constant 0 : index
    %c0_356 = arith.constant 0 : index
    %914 = vector.load %arg26[%c0_355, %c0_356] : memref<32x32xf32, #tpu.memory_space<vmem>>, vector<32x32xf32>
    %cst_357 = arith.constant dense<0.000000e+00> : vector<8x32xf32>
    %915 = tpu.matmul %913, %914, %cst_357 {dimension_numbers = #tpu.dot_dimension_numbers<[1], [0], [0], [1], [0, 0, 1, 1], [], []>} : vector<8x32xf32>, vector<32x32xf32>, vector<8x32xf32> -> vector<8x32xf32>
    %c0_358 = arith.constant 0 : index
    %c0_359 = arith.constant 0 : index
    %916 = vector.load %arg27[%c0_358, %c0_359] : memref<1x32xf32, #tpu.memory_space<vmem>>, vector<1x32xf32>
    %917 = vector.broadcast %916 : vector<1x32xf32> to vector<8x32xf32>
    %918 = arith.addf %915, %917 : vector<8x32xf32>
    %cst_360 = arith.constant 5.000000e-01 : f32
    %919 = vector.broadcast %cst_360 : f32 to vector<8x32xf32>
    %920 = arith.mulf %919, %918 : vector<8x32xf32>
    %cst_361 = arith.constant 0.707106769 : f32
    %921 = vector.broadcast %cst_361 : f32 to vector<8x32xf32>
    %922 = arith.mulf %918, %921 : vector<8x32xf32>
    %cst_362 = arith.constant 0.000000e+00 : f32
    %923 = vector.broadcast %cst_362 : f32 to vector<8x32xf32>
    %924 = arith.cmpf oge, %922, %923 : vector<8x32xf32>
    %cst_363 = arith.constant 1.000000e+00 : f32
    %cst_364 = arith.constant -1.000000e+00 : f32
    %925 = vector.broadcast %cst_363 : f32 to vector<8x32xf32>
    %926 = vector.broadcast %cst_364 : f32 to vector<8x32xf32>
    %927 = arith.select %924, %925, %926 : vector<8x32xi1>, vector<8x32xf32>
    %928 = math.absf %922 : vector<8x32xf32>
    %cst_365 = arith.constant 0.327591091 : f32
    %929 = vector.broadcast %cst_365 : f32 to vector<8x32xf32>
    %930 = arith.mulf %929, %928 : vector<8x32xf32>
    %cst_366 = arith.constant 1.000000e+00 : f32
    %931 = vector.broadcast %cst_366 : f32 to vector<8x32xf32>
    %932 = arith.addf %931, %930 : vector<8x32xf32>
    %cst_367 = arith.constant 1.000000e+00 : f32
    %933 = vector.broadcast %cst_367 : f32 to vector<8x32xf32>
    %934 = arith.divf %933, %932 : vector<8x32xf32>
    %cst_368 = arith.constant 1.06140542 : f32
    %935 = vector.broadcast %cst_368 : f32 to vector<8x32xf32>
    %936 = arith.mulf %935, %934 : vector<8x32xf32>
    %cst_369 = arith.constant -1.45315206 : f32
    %937 = vector.broadcast %cst_369 : f32 to vector<8x32xf32>
    %938 = arith.addf %936, %937 : vector<8x32xf32>
    %939 = arith.mulf %938, %934 : vector<8x32xf32>
    %cst_370 = arith.constant 1.42141378 : f32
    %940 = vector.broadcast %cst_370 : f32 to vector<8x32xf32>
    %941 = arith.addf %939, %940 : vector<8x32xf32>
    %942 = arith.mulf %941, %934 : vector<8x32xf32>
    %cst_371 = arith.constant -0.284496725 : f32
    %943 = vector.broadcast %cst_371 : f32 to vector<8x32xf32>
    %944 = arith.addf %942, %943 : vector<8x32xf32>
    %945 = arith.mulf %944, %934 : vector<8x32xf32>
    %cst_372 = arith.constant 0.254829586 : f32
    %946 = vector.broadcast %cst_372 : f32 to vector<8x32xf32>
    %947 = arith.addf %945, %946 : vector<8x32xf32>
    %948 = arith.mulf %947, %934 : vector<8x32xf32>
    %cst_373 = arith.constant 0.000000e+00 : f32
    %949 = vector.broadcast %cst_373 : f32 to vector<8x32xf32>
    %950 = arith.subf %949, %928 : vector<8x32xf32>
    %951 = arith.mulf %950, %928 : vector<8x32xf32>
    %952 = math.exp %951 : vector<8x32xf32>
    %953 = arith.mulf %948, %952 : vector<8x32xf32>
    %cst_374 = arith.constant 1.000000e+00 : f32
    %954 = vector.broadcast %cst_374 : f32 to vector<8x32xf32>
    %955 = arith.subf %954, %953 : vector<8x32xf32>
    %956 = arith.mulf %927, %955 : vector<8x32xf32>
    %cst_375 = arith.constant 1.000000e+00 : f32
    %957 = vector.broadcast %cst_375 : f32 to vector<8x32xf32>
    %958 = arith.addf %957, %956 : vector<8x32xf32>
    %959 = arith.mulf %920, %958 : vector<8x32xf32>
    %c0_376 = arith.constant 0 : index
    %c0_377 = arith.constant 0 : index
    %960 = vector.load %arg28[%c0_376, %c0_377] : memref<32x2xf32, #tpu.memory_space<vmem>>, vector<32x2xf32>
    %cst_378 = arith.constant dense<0.000000e+00> : vector<8x2xf32>
    %961 = tpu.matmul %959, %960, %cst_378 {dimension_numbers = #tpu.dot_dimension_numbers<[1], [0], [0], [1], [0, 0, 1, 1], [], []>} : vector<8x32xf32>, vector<32x2xf32>, vector<8x2xf32> -> vector<8x2xf32>
    %c0_379 = arith.constant 0 : index
    %c0_380 = arith.constant 0 : index
    %962 = vector.load %arg29[%c0_379, %c0_380] : memref<1x2xf32, #tpu.memory_space<vmem>>, vector<1x2xf32>
    %963 = vector.broadcast %962 : vector<1x2xf32> to vector<8x2xf32>
    %964 = arith.addf %961, %963 : vector<8x2xf32>
    %c0_381 = arith.constant 0 : index
    %c0_382 = arith.constant 0 : index
    %965 = vector.load %arg30[%c0_381, %c0_382] : memref<8x2xf32, #tpu.memory_space<vmem>>, vector<8x2xf32>
    tpu.vector_store %arg30[%c0_381, %c0_382], %964 {strides = array<i32>} : memref<8x2xf32, #tpu.memory_space<vmem>>, vector<8x2xf32>,
    return
  }
}

</mosaic_0001>

<llo_original>
// kernel: tpu_custom_call.1
$region0: #{tpu_custom_call.1}
  #allocation0 [shape = 'u32[]', space=smem, size = 0x4, offset = 0x4, fixed_abs, tag = 'smem constant byte address 0x4 - core index']
  #allocation1 [shape = 'u32[144,128]{1,0:T(1,128)}', space=vmem, size = 0x12000, scoped, tag = 'internal scratch']
  #allocation2 [shape = 'f32[64,384]{1,0:T(8,128)}', space=vmem, size = 0x18000, scoped, tag = 'scratch operand']
  #allocation3 [shape = 'f32[64,256]{1,0:T(8,128)}', space=vmem, size = 0x10000, scoped, tag = 'scratch operand']
  #allocation4 [shape = 'f32[64,128]{1,0:T(8,128)}', space=vmem, size = 0x8000, scoped, tag = 'scratch operand']
  #allocation5 [shape = 'f32[64,128]{1,0:T(8,128)}', space=vmem, size = 0x8000, scoped, tag = 'scratch operand']
  %s0 = inlined_call_operand.smem [shape: u32[31], index: -1, kind: input, shape index: {}]
  %s1 = sld [smem:[%s0]]
  %s2 = scalar_lea.smem %s0, 1
  %s3 = sld [smem:[%s2]]
  %s4 = scalar_lea.smem %s0, 2
  %s5 = sld [smem:[%s4]]
  %s6 = scalar_lea.smem %s0, 3
  %s7 = sld [smem:[%s6]]
  %s8 = scalar_lea.smem %s0, 4
  %s9 = sld [smem:[%s8]]
  %s10 = scalar_lea.smem %s0, 5
  %s11 = sld [smem:[%s10]]
  %s12 = scalar_lea.smem %s0, 6
  %s13 = sld [smem:[%s12]]
  %s14 = scalar_lea.smem %s0, 7
  %s15 = sld [smem:[%s14]]
  %s16 = scalar_lea.smem %s0, 8
  %s17 = sld [smem:[%s16]]
  %s18 = scalar_lea.smem %s0, 9
  %s19 = sld [smem:[%s18]]
  %s20 = scalar_lea.smem %s0, 10
  %s21 = sld [smem:[%s20]]
  %s22 = scalar_lea.smem %s0, 11
  %s23 = sld [smem:[%s22]]
  %s24 = scalar_lea.smem %s0, 12
  %s25 = sld [smem:[%s24]]
  %s26 = scalar_lea.smem %s0, 13
  %s27 = sld [smem:[%s26]]
  %s28 = scalar_lea.smem %s0, 14
  %s29 = sld [smem:[%s28]]
  %s30 = scalar_lea.smem %s0, 15
  %s31 = sld [smem:[%s30]]
  %s32 = scalar_lea.smem %s0, 16
  %s33 = sld [smem:[%s32]]
  %s34 = scalar_lea.smem %s0, 17
  %s35 = sld [smem:[%s34]]
  %s36 = scalar_lea.smem %s0, 18
  %s37 = sld [smem:[%s36]]
  %s38 = scalar_lea.smem %s0, 19
  %s39 = sld [smem:[%s38]]
  %s40 = scalar_lea.smem %s0, 20
  %s41 = sld [smem:[%s40]]
  %s42 = scalar_lea.smem %s0, 21
  %s43 = sld [smem:[%s42]]
  %s44 = scalar_lea.smem %s0, 22
  %s45 = sld [smem:[%s44]]
  %s46 = scalar_lea.smem %s0, 23
  %s47 = sld [smem:[%s46]]
  %s48 = scalar_lea.smem %s0, 24
  %s49 = sld [smem:[%s48]]
  %s50 = scalar_lea.smem %s0, 25
  %s51 = sld [smem:[%s50]]
  %s52 = scalar_lea.smem %s0, 26
  %s53 = sld [smem:[%s52]]
  %s54 = scalar_lea.smem %s0, 27
  %s55 = sld [smem:[%s54]]
  %s56 = scalar_lea.smem %s0, 28
  %s57 = sld [smem:[%s56]]
  %s58 = scalar_lea.smem %s0, 29
  %s59 = sld [smem:[%s58]]
  %s60 = scalar_lea.smem %s0, 30
  %s61 = sld [smem:[%s60]]
  %s62 = sld [smem:[#allocation0]]
  $region206: #{tpu_custom_call.1} parent=0
    _
  %s64 = ssub.s32 1, %s62
  %s65 = scalar_select 0, %s64, %s62
  $region1: #{tpu_custom_call.1} parent=0
    #allocation6 [shape = 'u8[32768]{0}', space=vmem, size = 0x8000, scoped, tag = 'input window, operand 0, single buffered']
    #allocation7 [shape = 's32[1]{0}', space=sflag, size = 0x4, scoped, tag = 'scoped memory for tpu_custom_call.1']
    #allocation8 [shape = 'u8[122880]{0}', space=vmem, size = 0x1e000, scoped, tag = 'input window, operand 1, single buffered']
    #allocation9 [shape = 's32[1]{0}', space=sflag, size = 0x4, scoped, tag = 'scoped memory for tpu_custom_call.1']
    #allocation10 [shape = 'u8[1536]{0}', space=vmem, size = 0x800, scoped, tag = 'input window, operand 2, single buffered']
    #allocation11 [shape = 'u8[98304]{0}', space=vmem, size = 0x18000, scoped, tag = 'input window, operand 3, single buffered']
    #allocation12 [shape = 's32[1]{0}', space=sflag, size = 0x4, scoped, tag = 'scoped memory for tpu_custom_call.1']
    #allocation13 [shape = 'u8[512]{0}', space=vmem, size = 0x400, scoped, tag = 'input window, operand 4, single buffered']
    #allocation14 [shape = 'u8[393216]{0}', space=vmem, size = 0x60000, scoped, tag = 'input window, operand 5, single buffered']
    #allocation15 [shape = 's32[1]{0}', space=sflag, size = 0x4, scoped, tag = 'scoped memory for tpu_custom_call.1']
    #allocation16 [shape = 'u8[1536]{0}', space=vmem, size = 0x800, scoped, tag = 'input window, operand 6, single buffered']
    #allocation17 [shape = 'u8[512]{0}', space=vmem, size = 0x400, scoped, tag = 'input window, operand 8, single buffered']
    #allocation18 [shape = 's32[1]{0}', space=sflag, size = 0x4, scoped, tag = 'scoped memory for tpu_custom_call.1']
    #allocation19 [shape = 'u8[1024]{0}', space=vmem, size = 0x400, scoped, tag = 'input window, operand 9, single buffered']
    #allocation20 [shape = 'u8[1024]{0}', space=vmem, size = 0x400, scoped, tag = 'input window, operand 10, single buffered']
    #allocation21 [shape = 's32[1]{0}', space=sflag, size = 0x4, scoped, tag = 'scoped memory for tpu_custom_call.1']
    #allocation22 [shape = 'u8[1024]{0}', space=vmem, size = 0x400, scoped, tag = 'input window, operand 12, single buffered']
    #allocation23 [shape = 'u8[32768]{0}', space=vmem, size = 0x8000, scoped, tag = 'input window, operand 15, single buffered']
    #allocation24 [shape = 's32[1]{0}', space=sflag, size = 0x4, scoped, tag = 'scoped memory for tpu_custom_call.1']
    #allocation25 [shape = 'u8[512]{0}', space=vmem, size = 0x400, scoped, tag = 'input window, operand 18, single buffered']
    #allocation26 [shape = 'u8[16384]{0}', space=vmem, size = 0x4000, scoped, tag = 'input window, operand 19, single buffered']
    #allocation27 [shape = 's32[1]{0}', space=sflag, size = 0x4, scoped, tag = 'scoped memory for tpu_custom_call.1']
    #allocation28 [shape = 'u8[512]{0}', space=vmem, size = 0x400, scoped, tag = 'input window, operand 20, single buffered']
    #allocation29 [shape = 'u8[16384]{0}', space=vmem, size = 0x4000, scoped, tag = 'input window, operand 21, single buffered']
    #allocation30 [shape = 's32[1]{0}', space=sflag, size = 0x4, scoped, tag = 'scoped memory for tpu_custom_call.1']
    #allocation31 [shape = 'u8[16384]{0}', space=vmem, size = 0x4000, scoped, tag = 'input window, operand 22, single buffered']
    #allocation32 [shape = 'u8[512]{0}', space=vmem, size = 0x400, scoped, tag = 'input window, operand 23, single buffered']
    #allocation33 [shape = 's32[1]{0}', space=sflag, size = 0x4, scoped, tag = 'scoped memory for tpu_custom_call.1']
    #allocation34 [shape = 'u8[512]{0}', space=vmem, size = 0x400, scoped, tag = 'input window, operand 24, single buffered']
    %66 = vsyncpa [#allocation7], 0
    %67 = vsyncpa [#allocation9], 0
    %68 = vsyncpa [#allocation12], 0
    %69 = vsyncpa [#allocation15], 0
    %70 = vsyncpa [#allocation18], 0
    %71 = vsyncpa [#allocation21], 0
    %72 = vsyncpa [#allocation24], 0
    %73 = vsyncpa [#allocation27], 0
    %74 = vsyncpa [#allocation30], 0
    %75 = vsyncpa [#allocation33], 0
    // Predicated region
    $region2: #{tpu_custom_call.1} parent=1 // pred_check
      _
    $region3: #{tpu_custom_call.1} parent=1 // pred_check_branch
      %77 = sbr.rel (0) target = $region5
    $region4: #{tpu_custom_call.1} parent=1 // pred_region
      %s79 = ssub.s32 1024, 1024
      %80 = vsyncadd [#allocation7], %s79
      %s81 = sshll.u32 [#allocation6], 4
      %s82 = int_to_ptr.vmem [resolvable:$true] %s81
      %87 = dma.hbm_to_vmem [thread:$0]  %s1, 1024, %s82, [#allocation7], 128, 128, 8
    $region5: #{tpu_custom_call.1} parent=1 // pred_fallthru
      _
    // Predicated region
    $region6: #{tpu_custom_call.1} parent=1 // pred_check
      _
    $region7: #{tpu_custom_call.1} parent=1 // pred_check_branch
      %89 = sbr.rel (0) target = $region9
    $region8: #{tpu_custom_call.1} parent=1 // pred_region
      %s91 = ssub.s32 3840, 3840
      %92 = vsyncadd [#allocation9], %s91
      %s93 = sshll.u32 [#allocation8], 4
      %s94 = int_to_ptr.vmem [resolvable:$true] %s93
      %99 = dma.hbm_to_vmem [thread:$0]  %s3, 3840, %s94, [#allocation9], 384, 384, 24
    $region9: #{tpu_custom_call.1} parent=1 // pred_fallthru
      _
    // Predicated region
    $region10: #{tpu_custom_call.1} parent=1 // pred_check
      _
    $region11: #{tpu_custom_call.1} parent=1 // pred_check_branch
      %101 = sbr.rel (0) target = $region13
    $region12: #{tpu_custom_call.1} parent=1 // pred_region
      %s103 = ssub.s32 48, 48
      %104 = vsyncadd [#allocation9], %s103
      %s106 = sshll.u32 [#allocation10], 4
      %s107 = int_to_ptr.vmem [resolvable:$true] %s106
      %109 = dma.hbm_to_vmem [thread:$0]  %s5, 48, %s107, [#allocation9]
    $region13: #{tpu_custom_call.1} parent=1 // pred_fallthru
      _
    // Predicated region
    $region14: #{tpu_custom_call.1} parent=1 // pred_check
      _
    $region15: #{tpu_custom_call.1} parent=1 // pred_check_branch
      %111 = sbr.rel (0) target = $region17
    $region16: #{tpu_custom_call.1} parent=1 // pred_region
      %s113 = ssub.s32 3072, 3072
      %114 = vsyncadd [#allocation12], %s113
      %s115 = sshll.u32 [#allocation11], 4
      %s116 = int_to_ptr.vmem [resolvable:$true] %s115
      %121 = dma.hbm_to_vmem [thread:$0]  %s7, 3072, %s116, [#allocation12], 192, 192, 12
    $region17: #{tpu_custom_call.1} parent=1 // pred_fallthru
      _
    // Predicated region
    $region18: #{tpu_custom_call.1} parent=1 // pred_check
      _
    $region19: #{tpu_custom_call.1} parent=1 // pred_check_branch
      %123 = sbr.rel (0) target = $region21
    $region20: #{tpu_custom_call.1} parent=1 // pred_region
      %s125 = ssub.s32 16, 16
      %126 = vsyncadd [#allocation12], %s125
      %s128 = sshll.u32 [#allocation13], 4
      %s129 = int_to_ptr.vmem [resolvable:$true] %s128
      %131 = dma.hbm_to_vmem [thread:$0]  %s9, 16, %s129, [#allocation12]
    $region21: #{tpu_custom_call.1} parent=1 // pred_fallthru
      _
    // Predicated region
    $region22: #{tpu_custom_call.1} parent=1 // pred_check
      _
    $region23: #{tpu_custom_call.1} parent=1 // pred_check_branch
      %133 = sbr.rel (0) target = $region25
    $region24: #{tpu_custom_call.1} parent=1 // pred_region
      %s135 = ssub.s32 12288, 12288
      %136 = vsyncadd [#allocation15], %s135
      %s137 = sshll.u32 [#allocation14], 4
      %s138 = int_to_ptr.vmem [resolvable:$true] %s137
      %143 = dma.hbm_to_vmem [thread:$0]  %s11, 12288, %s138, [#allocation15], 384, 384, 24
    $region25: #{tpu_custom_call.1} parent=1 // pred_fallthru
      _
    // Predicated region
    $region26: #{tpu_custom_call.1} parent=1 // pred_check
      _
    $region27: #{tpu_custom_call.1} parent=1 // pred_check_branch
      %145 = sbr.rel (0) target = $region29
    $region28: #{tpu_custom_call.1} parent=1 // pred_region
      %s147 = ssub.s32 48, 48
      %148 = vsyncadd [#allocation15], %s147
      %s150 = sshll.u32 [#allocation16], 4
      %s151 = int_to_ptr.vmem [resolvable:$true] %s150
      %153 = dma.hbm_to_vmem [thread:$0]  %s13, 48, %s151, [#allocation15]
    $region29: #{tpu_custom_call.1} parent=1 // pred_fallthru
      _
    // Predicated region
    $region30: #{tpu_custom_call.1} parent=1 // pred_check
      _
    $region31: #{tpu_custom_call.1} parent=1 // pred_check_branch
      %155 = sbr.rel (0) target = $region33
    $region32: #{tpu_custom_call.1} parent=1 // pred_region
      _
    $region33: #{tpu_custom_call.1} parent=1 // pred_fallthru
      _
    // Predicated region
    $region34: #{tpu_custom_call.1} parent=1 // pred_check
      _
    $region35: #{tpu_custom_call.1} parent=1 // pred_check_branch
      %157 = sbr.rel (0) target = $region37
    $region36: #{tpu_custom_call.1} parent=1 // pred_region
      %s159 = ssub.s32 16, 16
      %160 = vsyncadd [#allocation18], %s159
      %s162 = sshll.u32 [#allocation17], 4
      %s163 = int_to_ptr.vmem [resolvable:$true] %s162
      %165 = dma.hbm_to_vmem [thread:$0]  %s17, 16, %s163, [#allocation18]
    $region37: #{tpu_custom_call.1} parent=1 // pred_fallthru
      _
    // Predicated region
    $region38: #{tpu_custom_call.1} parent=1 // pred_check
      _
    $region39: #{tpu_custom_call.1} parent=1 // pred_check_branch
      %167 = sbr.rel (0) target = $region41
    $region40: #{tpu_custom_call.1} parent=1 // pred_region
      %s169 = ssub.s32 32, 32
      %170 = vsyncadd [#allocation18], %s169
      %s171 = sshll.u32 [#allocation19], 4
      %s172 = int_to_ptr.vmem [resolvable:$true] %s171
      %177 = dma.hbm_to_vmem [thread:$0]  %s19, 32, %s172, [#allocation18], 16, 16, 1
    $region41: #{tpu_custom_call.1} parent=1 // pred_fallthru
      _
    // Predicated region
    $region42: #{tpu_custom_call.1} parent=1 // pred_check
      _
    $region43: #{tpu_custom_call.1} parent=1 // pred_check_branch
      %179 = sbr.rel (0) target = $region45
    $region44: #{tpu_custom_call.1} parent=1 // pred_region
      %s181 = ssub.s32 32, 32
      %182 = vsyncadd [#allocation21], %s181
      %s183 = sshll.u32 [#allocation20], 4
      %s184 = int_to_ptr.vmem [resolvable:$true] %s183
      %189 = dma.hbm_to_vmem [thread:$0]  %s21, 32, %s184, [#allocation21], 16, 16, 1
    $region45: #{tpu_custom_call.1} parent=1 // pred_fallthru
      _
    // Predicated region
    $region46: #{tpu_custom_call.1} parent=1 // pred_check
      _
    $region47: #{tpu_custom_call.1} parent=1 // pred_check_branch
      %191 = sbr.rel (0) target = $region49
    $region48: #{tpu_custom_call.1} parent=1 // pred_region
      _
    $region49: #{tpu_custom_call.1} parent=1 // pred_fallthru
      _
    // Predicated region
    $region50: #{tpu_custom_call.1} parent=1 // pred_check
      _
    $region51: #{tpu_custom_call.1} parent=1 // pred_check_branch
      %193 = sbr.rel (0) target = $region53
    $region52: #{tpu_custom_call.1} parent=1 // pred_region
      %s195 = ssub.s32 32, 32
      %196 = vsyncadd [#allocation21], %s195
      %s197 = sshll.u32 [#allocation22], 4
      %s198 = int_to_ptr.vmem [resolvable:$true] %s197
      %203 = dma.hbm_to_vmem [thread:$0]  %s25, 32, %s198, [#allocation21], 16, 16, 1
    $region53: #{tpu_custom_call.1} parent=1 // pred_fallthru
      _
    // Predicated region
    $region54: #{tpu_custom_call.1} parent=1 // pred_check
      _
    $region55: #{tpu_custom_call.1} parent=1 // pred_check_branch
      %205 = sbr.rel (0) target = $region57
    $region56: #{tpu_custom_call.1} parent=1 // pred_region
      _
    $region57: #{tpu_custom_call.1} parent=1 // pred_fallthru
      _
    // Predicated region
    $region58: #{tpu_custom_call.1} parent=1 // pred_check
      _
    $region59: #{tpu_custom_call.1} parent=1 // pred_check_branch
      %207 = sbr.rel (0) target = $region61
    $region60: #{tpu_custom_call.1} parent=1 // pred_region
      _
    $region61: #{tpu_custom_call.1} parent=1 // pred_fallthru
      _
    // Predicated region
    $region62: #{tpu_custom_call.1} parent=1 // pred_check
      _
    $region63: #{tpu_custom_call.1} parent=1 // pred_check_branch
      %209 = sbr.rel (0) target = $region65
    $region64: #{tpu_custom_call.1} parent=1 // pred_region
      %s211 = ssub.s32 1024, 1024
      %212 = vsyncadd [#allocation24], %s211
      %s213 = sshll.u32 [#allocation23], 4
      %s214 = int_to_ptr.vmem [resolvable:$true] %s213
      %219 = dma.hbm_to_vmem [thread:$0]  %s31, 1024, %s214, [#allocation24], 128, 128, 8
    $region65: #{tpu_custom_call.1} parent=1 // pred_fallthru
      _
    // Predicated region
    $region66: #{tpu_custom_call.1} parent=1 // pred_check
      _
    $region67: #{tpu_custom_call.1} parent=1 // pred_check_branch
      %221 = sbr.rel (0) target = $region69
    $region68: #{tpu_custom_call.1} parent=1 // pred_region
      _
    $region69: #{tpu_custom_call.1} parent=1 // pred_fallthru
      _
    // Predicated region
    $region70: #{tpu_custom_call.1} parent=1 // pred_check
      _
    $region71: #{tpu_custom_call.1} parent=1 // pred_check_branch
      %223 = sbr.rel (0) target = $region73
    $region72: #{tpu_custom_call.1} parent=1 // pred_region
      _
    $region73: #{tpu_custom_call.1} parent=1 // pred_fallthru
      _
    // Predicated region
    $region74: #{tpu_custom_call.1} parent=1 // pred_check
      _
    $region75: #{tpu_custom_call.1} parent=1 // pred_check_branch
      %225 = sbr.rel (0) target = $region77
    $region76: #{tpu_custom_call.1} parent=1 // pred_region
      %s227 = ssub.s32 16, 16
      %228 = vsyncadd [#allocation24], %s227
      %s230 = sshll.u32 [#allocation25], 4
      %s231 = int_to_ptr.vmem [resolvable:$true] %s230
      %233 = dma.hbm_to_vmem [thread:$0]  %s37, 16, %s231, [#allocation24]
    $region77: #{tpu_custom_call.1} parent=1 // pred_fallthru
      _
    // Predicated region
    $region78: #{tpu_custom_call.1} parent=1 // pred_check
      _
    $region79: #{tpu_custom_call.1} parent=1 // pred_check_branch
      %235 = sbr.rel (0) target = $region81
    $region80: #{tpu_custom_call.1} parent=1 // pred_region
      %s237 = ssub.s32 512, 512
      %238 = vsyncadd [#allocation27], %s237
      %s239 = sshll.u32 [#allocation26], 4
      %s240 = int_to_ptr.vmem [resolvable:$true] %s239
      %245 = dma.hbm_to_vmem [thread:$0]  %s39, 512, %s240, [#allocation27], 128, 128, 8
    $region81: #{tpu_custom_call.1} parent=1 // pred_fallthru
      _
    // Predicated region
    $region82: #{tpu_custom_call.1} parent=1 // pred_check
      _
    $region83: #{tpu_custom_call.1} parent=1 // pred_check_branch
      %247 = sbr.rel (0) target = $region85
    $region84: #{tpu_custom_call.1} parent=1 // pred_region
      %s249 = ssub.s32 16, 16
      %250 = vsyncadd [#allocation27], %s249
      %s252 = sshll.u32 [#allocation28], 4
      %s253 = int_to_ptr.vmem [resolvable:$true] %s252
      %255 = dma.hbm_to_vmem [thread:$0]  %s41, 16, %s253, [#allocation27]
    $region85: #{tpu_custom_call.1} parent=1 // pred_fallthru
      _
    // Predicated region
    $region86: #{tpu_custom_call.1} parent=1 // pred_check
      _
    $region87: #{tpu_custom_call.1} parent=1 // pred_check_branch
      %257 = sbr.rel (0) target = $region89
    $region88: #{tpu_custom_call.1} parent=1 // pred_region
      %s259 = ssub.s32 512, 512
      %260 = vsyncadd [#allocation30], %s259
      %s261 = sshll.u32 [#allocation29], 4
      %s262 = int_to_ptr.vmem [resolvable:$true] %s261
      %267 = dma.hbm_to_vmem [thread:$0]  %s43, 512, %s262, [#allocation30], 128, 128, 8
    $region89: #{tpu_custom_call.1} parent=1 // pred_fallthru
      _
    // Predicated region
    $region90: #{tpu_custom_call.1} parent=1 // pred_check
      _
    $region91: #{tpu_custom_call.1} parent=1 // pred_check_branch
      %269 = sbr.rel (0) target = $region93
    $region92: #{tpu_custom_call.1} parent=1 // pred_region
      %s271 = ssub.s32 512, 512
      %272 = vsyncadd [#allocation30], %s271
      %s273 = sshll.u32 [#allocation31], 4
      %s274 = int_to_ptr.vmem [resolvable:$true] %s273
      %279 = dma.hbm_to_vmem [thread:$0]  %s45, 512, %s274, [#allocation30], 128, 128, 8
    $region93: #{tpu_custom_call.1} parent=1 // pred_fallthru
      _
    // Predicated region
    $region94: #{tpu_custom_call.1} parent=1 // pred_check
      _
    $region95: #{tpu_custom_call.1} parent=1 // pred_check_branch
      %281 = sbr.rel (0) target = $region97
    $region96: #{tpu_custom_call.1} parent=1 // pred_region
      %s283 = ssub.s32 16, 16
      %284 = vsyncadd [#allocation33], %s283
      %s286 = sshll.u32 [#allocation32], 4
      %s287 = int_to_ptr.vmem [resolvable:$true] %s286
      %289 = dma.hbm_to_vmem [thread:$0]  %s47, 16, %s287, [#allocation33]
    $region97: #{tpu_custom_call.1} parent=1 // pred_fallthru
      _
    // Predicated region
    $region98: #{tpu_custom_call.1} parent=1 // pred_check
      _
    $region99: #{tpu_custom_call.1} parent=1 // pred_check_branch
      %291 = sbr.rel (0) target = $region101
    $region100: #{tpu_custom_call.1} parent=1 // pred_region
      %s293 = ssub.s32 16, 16
      %294 = vsyncadd [#allocation33], %s293
      %s296 = sshll.u32 [#allocation34], 4
      %s297 = int_to_ptr.vmem [resolvable:$true] %s296
      %299 = dma.hbm_to_vmem [thread:$0]  %s49, 16, %s297, [#allocation33]
    $region101: #{tpu_custom_call.1} parent=1 // pred_fallthru
      _
    // Predicated region
    $region102: #{tpu_custom_call.1} parent=1 // pred_check
      _
    $region103: #{tpu_custom_call.1} parent=1 // pred_check_branch
      %301 = sbr.rel (0) target = $region105
    $region104: #{tpu_custom_call.1} parent=1 // pred_region
      _
    $region105: #{tpu_custom_call.1} parent=1 // pred_fallthru
      _
    // Predicated region
    $region106: #{tpu_custom_call.1} parent=1 // pred_check
      _
    $region107: #{tpu_custom_call.1} parent=1 // pred_check_branch
      %303 = sbr.rel (0) target = $region109
    $region108: #{tpu_custom_call.1} parent=1 // pred_region
      _
    $region109: #{tpu_custom_call.1} parent=1 // pred_fallthru
      _
    // Predicated region
    $region110: #{tpu_custom_call.1} parent=1 // pred_check
      _
    $region111: #{tpu_custom_call.1} parent=1 // pred_check_branch
      %305 = sbr.rel (0) target = $region113
    $region112: #{tpu_custom_call.1} parent=1 // pred_region
      _
    $region113: #{tpu_custom_call.1} parent=1 // pred_fallthru
      _
    // Predicated region
    $region114: #{tpu_custom_call.1} parent=1 // pred_check
      _
    $region115: #{tpu_custom_call.1} parent=1 // pred_check_branch
      %307 = sbr.rel (0) target = $region117
    $region116: #{tpu_custom_call.1} parent=1 // pred_region
      _
    $region117: #{tpu_custom_call.1} parent=1 // pred_fallthru
      _
    // Predicated region
    $region118: #{tpu_custom_call.1} parent=1 // pred_check
      _
    $region119: #{tpu_custom_call.1} parent=1 // pred_check_branch
      %309 = sbr.rel (0) target = $region121
    $region120: #{tpu_custom_call.1} parent=1 // pred_region
      _
    $region121: #{tpu_custom_call.1} parent=1 // pred_fallthru
      _
    // Predicated region
    $region122: #{tpu_custom_call.1} parent=1 // pred_check
      _
    $region123: #{tpu_custom_call.1} parent=1 // pred_check_branch
      %311 = sbr.rel (0) target = $region125
    $region124: #{tpu_custom_call.1} parent=1 // pred_region
      %312 = dma.done [#allocation7], 1024
    $region125: #{tpu_custom_call.1} parent=1 // pred_fallthru
      _
    // Predicated region
    $region126: #{tpu_custom_call.1} parent=1 // pred_check
      _
    $region127: #{tpu_custom_call.1} parent=1 // pred_check_branch
      %314 = sbr.rel (0) target = $region129
    $region128: #{tpu_custom_call.1} parent=1 // pred_region
      %315 = dma.done [#allocation9], 3840
    $region129: #{tpu_custom_call.1} parent=1 // pred_fallthru
      _
    // Predicated region
    $region130: #{tpu_custom_call.1} parent=1 // pred_check
      _
    $region131: #{tpu_custom_call.1} parent=1 // pred_check_branch
      %317 = sbr.rel (0) target = $region133
    $region132: #{tpu_custom_call.1} parent=1 // pred_region
      %318 = dma.done [#allocation9], 48
    $region133: #{tpu_custom_call.1} parent=1 // pred_fallthru
      _
    // Predicated region
    $region134: #{tpu_custom_call.1} parent=1 // pred_check
      _
    $region135: #{tpu_custom_call.1} parent=1 // pred_check_branch
      %320 = sbr.rel (0) target = $region137
    $region136: #{tpu_custom_call.1} parent=1 // pred_region
      %321 = dma.done [#allocation12], 3072
    $region137: #{tpu_custom_call.1} parent=1 // pred_fallthru
      _
    // Predicated region
    $region138: #{tpu_custom_call.1} parent=1 // pred_check
      _
    $region139: #{tpu_custom_call.1} parent=1 // pred_check_branch
      %323 = sbr.rel (0) target = $region141
    $region140: #{tpu_custom_call.1} parent=1 // pred_region
      %324 = dma.done [#allocation12], 16
    $region141: #{tpu_custom_call.1} parent=1 // pred_fallthru
      _
    // Predicated region
    $region142: #{tpu_custom_call.1} parent=1 // pred_check
      _
    $region143: #{tpu_custom_call.1} parent=1 // pred_check_branch
      %326 = sbr.rel (0) target = $region145
    $region144: #{tpu_custom_call.1} parent=1 // pred_region
      %327 = dma.done [#allocation15], 12288
    $region145: #{tpu_custom_call.1} parent=1 // pred_fallthru
      _
    // Predicated region
    $region146: #{tpu_custom_call.1} parent=1 // pred_check
      _
    $region147: #{tpu_custom_call.1} parent=1 // pred_check_branch
      %329 = sbr.rel (0) target = $region149
    $region148: #{tpu_custom_call.1} parent=1 // pred_region
      %330 = dma.done [#allocation15], 48
    $region149: #{tpu_custom_call.1} parent=1 // pred_fallthru
      _
    // Predicated region
    $region150: #{tpu_custom_call.1} parent=1 // pred_check
      _
    $region151: #{tpu_custom_call.1} parent=1 // pred_check_branch
      %332 = sbr.rel (0) target = $region153
    $region152: #{tpu_custom_call.1} parent=1 // pred_region
      %333 = dma.done [#allocation18], 16
    $region153: #{tpu_custom_call.1} parent=1 // pred_fallthru
      _
    // Predicated region
    $region154: #{tpu_custom_call.1} parent=1 // pred_check
      _
    $region155: #{tpu_custom_call.1} parent=1 // pred_check_branch
      %335 = sbr.rel (0) target = $region157
    $region156: #{tpu_custom_call.1} parent=1 // pred_region
      %336 = dma.done [#allocation18], 32
    $region157: #{tpu_custom_call.1} parent=1 // pred_fallthru
      _
    // Predicated region
    $region158: #{tpu_custom_call.1} parent=1 // pred_check
      _
    $region159: #{tpu_custom_call.1} parent=1 // pred_check_branch
      %338 = sbr.rel (0) target = $region161
    $region160: #{tpu_custom_call.1} parent=1 // pred_region
      %339 = dma.done [#allocation21], 32
    $region161: #{tpu_custom_call.1} parent=1 // pred_fallthru
      _
    // Predicated region
    $region162: #{tpu_custom_call.1} parent=1 // pred_check
      _
    $region163: #{tpu_custom_call.1} parent=1 // pred_check_branch
      %341 = sbr.rel (0) target = $region165
    $region164: #{tpu_custom_call.1} parent=1 // pred_region
      %342 = dma.done [#allocation21], 32
    $region165: #{tpu_custom_call.1} parent=1 // pred_fallthru
      _
    // Predicated region
    $region166: #{tpu_custom_call.1} parent=1 // pred_check
      _
    $region167: #{tpu_custom_call.1} parent=1 // pred_check_branch
      %344 = sbr.rel (0) target = $region169
    $region168: #{tpu_custom_call.1} parent=1 // pred_region
      %345 = dma.done [#allocation24], 1024
    $region169: #{tpu_custom_call.1} parent=1 // pred_fallthru
      _
    // Predicated region
    $region170: #{tpu_custom_call.1} parent=1 // pred_check
      _
    $region171: #{tpu_custom_call.1} parent=1 // pred_check_branch
      %347 = sbr.rel (0) target = $region173
    $region172: #{tpu_custom_call.1} parent=1 // pred_region
      %348 = dma.done [#allocation24], 16
    $region173: #{tpu_custom_call.1} parent=1 // pred_fallthru
      _
    // Predicated region
    $region174: #{tpu_custom_call.1} parent=1 // pred_check
      _
    $region175: #{tpu_custom_call.1} parent=1 // pred_check_branch
      %350 = sbr.rel (0) target = $region177
    $region176: #{tpu_custom_call.1} parent=1 // pred_region
      %351 = dma.done [#allocation27], 512
    $region177: #{tpu_custom_call.1} parent=1 // pred_fallthru
      _
    // Predicated region
    $region178: #{tpu_custom_call.1} parent=1 // pred_check
      _
    $region179: #{tpu_custom_call.1} parent=1 // pred_check_branch
      %353 = sbr.rel (0) target = $region181
    $region180: #{tpu_custom_call.1} parent=1 // pred_region
      %354 = dma.done [#allocation27], 16
    $region181: #{tpu_custom_call.1} parent=1 // pred_fallthru
      _
    // Predicated region
    $region182: #{tpu_custom_call.1} parent=1 // pred_check
      _
    $region183: #{tpu_custom_call.1} parent=1 // pred_check_branch
      %356 = sbr.rel (0) target = $region185
    $region184: #{tpu_custom_call.1} parent=1 // pred_region
      %357 = dma.done [#allocation30], 512
    $region185: #{tpu_custom_call.1} parent=1 // pred_fallthru
      _
    // Predicated region
    $region186: #{tpu_custom_call.1} parent=1 // pred_check
      _
    $region187: #{tpu_custom_call.1} parent=1 // pred_check_branch
      %359 = sbr.rel (0) target = $region189
    $region188: #{tpu_custom_call.1} parent=1 // pred_region
      %360 = dma.done [#allocation30], 512
    $region189: #{tpu_custom_call.1} parent=1 // pred_fallthru
      _
    // Predicated region
    $region190: #{tpu_custom_call.1} parent=1 // pred_check
      _
    $region191: #{tpu_custom_call.1} parent=1 // pred_check_branch
      %362 = sbr.rel (0) target = $region193
    $region192: #{tpu_custom_call.1} parent=1 // pred_region
      %363 = dma.done [#allocation33], 16
    $region193: #{tpu_custom_call.1} parent=1 // pred_fallthru
      _
    // Predicated region
    $region194: #{tpu_custom_call.1} parent=1 // pred_check
      _
    $region195: #{tpu_custom_call.1} parent=1 // pred_check_branch
      %365 = sbr.rel (0) target = $region197
    $region196: #{tpu_custom_call.1} parent=1 // pred_region
      %366 = dma.done [#allocation33], 16
    $region197: #{tpu_custom_call.1} parent=1 // pred_fallthru
      _
    %v368 = vld [vmem:[#allocation6] sm:$0xff]
    %v369 = vld [vmem:[#allocation6 + $0x8] sm:$0xff]
    %v370 = vld [vmem:[#allocation6 + $0x10] sm:$0xff]
    %v371 = vld [vmem:[#allocation6 + $0x18] sm:$0xff]
    %v372 = vld [vmem:[#allocation6 + $0x20] sm:$0xff]
    %v373 = vld [vmem:[#allocation6 + $0x28] sm:$0xff]
    %v374 = vld [vmem:[#allocation6 + $0x30] sm:$0xff]
    %v375 = vld [vmem:[#allocation6 + $0x38] sm:$0xff]
    %v376 = vld [vmem:[#allocation8] sm:$0xff]
    %v377 = vld [vmem:[#allocation8 + $0x8] sm:$0xff]
    %v378 = vld [vmem:[#allocation8 + $0x10] sm:$0xff]
    %v379 = vld [vmem:[#allocation8 + $0x18] sm:$0xff]
    %v380 = vld [vmem:[#allocation8 + $0x20] sm:$0xff]
    %v381 = vld [vmem:[#allocation8 + $0x28] sm:$0xff]
    %v382 = vld [vmem:[#allocation8 + $0x30] sm:$0xff]
    %v383 = vld [vmem:[#allocation8 + $0x38] sm:$0xff]
    %v384 = vld [vmem:[#allocation8 + $0x40] sm:$0xff]
    %v385 = vld [vmem:[#allocation8 + $0x48] sm:$0xff]
    %v386 = vld [vmem:[#allocation8 + $0x50] sm:$0xff]
    %v387 = vld [vmem:[#allocation8 + $0x58] sm:$0xff]
    %v388 = vld [vmem:[#allocation8 + $0x60] sm:$0xff]
    %v389 = vld [vmem:[#allocation8 + $0x68] sm:$0xff]
    %v390 = vld [vmem:[#allocation8 + $0x70] sm:$0xff]
    %v391 = vld [vmem:[#allocation8 + $0x78] sm:$0xff]
    %v392 = vld [vmem:[#allocation8 + $0x80] sm:$0xff]
    %v393 = vld [vmem:[#allocation8 + $0x88] sm:$0xff]
    %v394 = vld [vmem:[#allocation8 + $0x90] sm:$0xff]
    %v395 = vld [vmem:[#allocation8 + $0x98] sm:$0xff]
    %v396 = vld [vmem:[#allocation8 + $0xa0] sm:$0xff]
    %v397 = vld [vmem:[#allocation8 + $0xa8] sm:$0xff]
    %v398 = vld [vmem:[#allocation8 + $0xb0] sm:$0xff]
    %v399 = vld [vmem:[#allocation8 + $0xb8] sm:$0xff]
    %v400 = vld [vmem:[#allocation8 + $0xc0] sm:$0xff]
    %v401 = vld [vmem:[#allocation8 + $0xc8] sm:$0xff]
    %v402 = vld [vmem:[#allocation8 + $0xd0] sm:$0xff]
    %v403 = vld [vmem:[#allocation8 + $0xd8] sm:$0xff]
    %v404 = vld [vmem:[#allocation8 + $0xe0] sm:$0xff]
    %v405 = vld [vmem:[#allocation8 + $0xe8] sm:$0xff]
    %v406 = vld [vmem:[#allocation10] sm:$0x7]
    %v408 = vlaneseq
    %v409 = vshrl.u32 %v408, 7
    %v410 = vsub.s32 0, %v409
    %v411 = vrot.slane %v406, %v410
    %v412 = vlaneseq
    %v413 = vshrl.u32 %v412, 7
    %v414 = vsub.s32 1, %v413
    %v415 = vrot.slane %v406, %v414
    %v416 = vlaneseq
    %v417 = vshrl.u32 %v416, 7
    %v418 = vsub.s32 2, %v417
    %v419 = vrot.slane %v406, %v418
    %vm423 = vcmask 654336
    %v425 = vsel %vm423, %v368, 0
    %v428 = vsel %vm423, %v369, 0
    %v431 = vsel %vm423, %v370, 0
    %v434 = vsel %vm423, %v371, 0
    %v437 = vsel %vm423, %v372, 0
    %v440 = vsel %vm423, %v373, 0
    %v443 = vsel %vm423, %v374, 0
    %v446 = vsel %vm423, %v375, 0
    %448 = vmatprep.subr.mxu0 %v377
    %449 = vmatpush1.msra.mxu0 %v376
    %450 = vmatprep.subr.mxu0 %v380
    %451 = vmatpush1.msra.mxu0 %v379
    %452 = vmatprep.subr.mxu0 %v383
    %453 = vmatpush1.msra.mxu0 %v382
    %454 = vmatprep.subr.mxu0 %v386
    %455 = vmatpush1.msra.mxu0 %v385
    %456 = vmatprep.subr.mxu0 %v389
    %457 = vmatpush1.msra.mxu0 %v388
    %458 = vmatprep.subr.mxu0 %v392
    %459 = vmatpush1.msra.mxu0 %v391
    %460 = vmatprep.subr.mxu0 %v395
    %461 = vmatpush1.msra.mxu0 %v394
    %462 = vmatprep.subr.mxu0 %v398
    %463 = vmatpush1.msra.mxu0 %v397
    %464 = vmatprep.subr.mxu0 %v401
    %465 = vmatpush1.msra.mxu0 %v400
    %466 = vmatprep.subr.mxu0 %v404
    %467 = vmatpush1.msra.mxu0 %v403
    %468 = vmatprep.subr.mxu0 0.0
    %469 = vmatpush1.msra.mxu0 0.0
    %470 = vmatprep.subr.mxu0 0.0
    %471 = vmatpush1.msra.mxu0 0.0
    %472 = vmatprep.subr.mxu0 0.0
    %473 = vmatpush1.msra.mxu0 0.0
    %474 = vmatprep.subr.mxu0 0.0
    %475 = vmatpush1.msra.mxu0 0.0
    %476 = vmatprep.subr.mxu0 0.0
    %477 = vmatpush1.msra.mxu0 0.0
    %478 = vmatprep.subr.mxu0 0.0
    %479 = vmatpush1.msra.mxu0 0.0
    %480 = vmatprep.subr.mxu0 0.0
    %481 = vmatpush1.msra.mxu0 0.0
    %482 = vmatprep.subr.mxu0 0.0
    %483 = vmatpush1.msra.mxu0 0.0
    %484 = vmatprep.subr.mxu0 0.0
    %485 = vmatpush1.msra.mxu0 0.0
    %486 = vmatprep.subr.mxu0 0.0
    %487 = vmatpush1.msra.mxu0 0.0
    %488 = vmatprep.subr.mxu0 0.0
    %489 = vmatpush1.msra.mxu0 0.0
    %490 = vmatprep.subr.mxu0 0.0
    %491 = vmatpush1.msra.mxu0 0.0
    %492 = vmatprep.subr.mxu0 0.0
    %493 = vmatpush1.msra.mxu0 0.0
    %494 = vmatprep.subr.mxu0 0.0
    %495 = vmatpush1.msra.mxu0 0.0
    %496 = vmatprep.subr.mxu0 0.0
    %497 = vmatpush1.msra.mxu0 0.0
    %498 = vmatprep.subr.mxu0 0.0
    %499 = vmatpush1.msra.mxu0 0.0
    %500 = vmatprep.subr.mxu0 0.0
    %501 = vmatpush1.msra.mxu0 0.0
    %502 = vmatprep.subr.mxu0 0.0
    %503 = vmatpush1.msra.mxu0 0.0
    %504 = vmatprep.subr.mxu0 0.0
    %505 = vmatpush1.msra.mxu0 0.0
    %506 = vmatprep.subr.mxu0 0.0
    %507 = vmatpush1.msra.mxu0 0.0
    %508 = vmatprep.subr.mxu0 0.0
    %509 = vmatpush1.msra.mxu0 0.0
    %510 = vmatprep.subr.mxu0 0.0
    %511 = vmatpush1.msra.mxu0 0.0
    %512 = vmatprep.mubr.f32.mxu0 0.0
    %513 = vmatmul.mubr.f32.gmra.mrb[0].mxu0 %v425
    %v514 = vpop.f32.mrb[0].mxu0
    %v515 = vadd.f32 %v411, %v514
    %v516 = vpop.f32.mrb[0].mxu0
    %v517 = vadd.f32 %v415, %v516
    %518 = vmatprep.mubr.f32.mxu0 0.0
    %519 = vmatmul.mubr.f32.gmra.mrb[0].mxu0 %v428
    %v520 = vpop.f32.mrb[0].mxu0
    %v521 = vadd.f32 %v411, %v520
    %v522 = vpop.f32.mrb[0].mxu0
    %v523 = vadd.f32 %v415, %v522
    %524 = vmatprep.mubr.f32.mxu0 0.0
    %525 = vmatmul.mubr.f32.gmra.mrb[0].mxu0 %v431
    %v526 = vpop.f32.mrb[0].mxu0
    %v527 = vadd.f32 %v411, %v526
    %v528 = vpop.f32.mrb[0].mxu0
    %v529 = vadd.f32 %v415, %v528
    %530 = vmatprep.mubr.f32.mxu0 0.0
    %531 = vmatmul.mubr.f32.gmra.mrb[0].mxu0 %v434
    %v532 = vpop.f32.mrb[0].mxu0
    %v533 = vadd.f32 %v411, %v532
    %v534 = vpop.f32.mrb[0].mxu0
    %v535 = vadd.f32 %v415, %v534
    %536 = vmatprep.mubr.f32.mxu0 0.0
    %537 = vmatmul.mubr.f32.gmra.mrb[0].mxu0 %v437
    %v538 = vpop.f32.mrb[0].mxu0
    %v539 = vadd.f32 %v411, %v538
    %v540 = vpop.f32.mrb[0].mxu0
    %v541 = vadd.f32 %v415, %v540
    %542 = vmatprep.mubr.f32.mxu0 0.0
    %543 = vmatmul.mubr.f32.gmra.mrb[0].mxu0 %v440
    %v544 = vpop.f32.mrb[0].mxu0
    %v545 = vadd.f32 %v411, %v544
    %v546 = vpop.f32.mrb[0].mxu0
    %v547 = vadd.f32 %v415, %v546
    %548 = vmatprep.mubr.f32.mxu0 0.0
    %549 = vmatmul.mubr.f32.gmra.mrb[0].mxu0 %v443
    %v550 = vpop.f32.mrb[0].mxu0
    %v551 = vadd.f32 %v411, %v550
    %v552 = vpop.f32.mrb[0].mxu0
    %v553 = vadd.f32 %v415, %v552
    %554 = vmatprep.mubr.f32.mxu0 0.0
    %555 = vmatmul.mubr.f32.gmra.mrb[0].mxu0 %v446
    %v556 = vpop.f32.mrb[0].mxu0
    %v557 = vadd.f32 %v411, %v556
    %v558 = vpop.f32.mrb[0].mxu0
    %v559 = vadd.f32 %v415, %v558
    %560 = vdwg.mxu0
    %561 = vmatprep.subr.mxu0 0.0
    %562 = vmatpush1.msra.mxu0 %v378
    %563 = vmatprep.subr.mxu0 0.0
    %564 = vmatpush1.msra.mxu0 %v381
    %565 = vmatprep.subr.mxu0 0.0
    %566 = vmatpush1.msra.mxu0 %v384
    %567 = vmatprep.subr.mxu0 0.0
    %568 = vmatpush1.msra.mxu0 %v387
    %569 = vmatprep.subr.mxu0 0.0
    %570 = vmatpush1.msra.mxu0 %v390
    %571 = vmatprep.subr.mxu0 0.0
    %572 = vmatpush1.msra.mxu0 %v393
    %573 = vmatprep.subr.mxu0 0.0
    %574 = vmatpush1.msra.mxu0 %v396
    %575 = vmatprep.subr.mxu0 0.0
    %576 = vmatpush1.msra.mxu0 %v399
    %577 = vmatprep.subr.mxu0 0.0
    %578 = vmatpush1.msra.mxu0 %v402
    %579 = vmatprep.subr.mxu0 0.0
    %580 = vmatpush1.msra.mxu0 %v405
    %581 = vmatprep.subr.mxu0 0.0
    %582 = vmatpush1.msra.mxu0 0.0
    %583 = vmatprep.subr.mxu0 0.0
    %584 = vmatpush1.msra.mxu0 0.0
    %585 = vmatprep.subr.mxu0 0.0
    %586 = vmatpush1.msra.mxu0 0.0
    %587 = vmatprep.subr.mxu0 0.0
    %588 = vmatpush1.msra.mxu0 0.0
    %589 = vmatprep.subr.mxu0 0.0
    %590 = vmatpush1.msra.mxu0 0.0
    %591 = vmatprep.subr.mxu0 0.0
    %592 = vmatpush1.msra.mxu0 0.0
    %593 = vmatprep.subr.mxu0 0.0
    %594 = vmatpush1.msra.mxu0 0.0
    %595 = vmatprep.subr.mxu0 0.0
    %596 = vmatpush1.msra.mxu0 0.0
    %597 = vmatprep.subr.mxu0 0.0
    %598 = vmatpush1.msra.mxu0 0.0
    %599 = vmatprep.subr.mxu0 0.0
    %600 = vmatpush1.msra.mxu0 0.0
    %601 = vmatprep.subr.mxu0 0.0
    %602 = vmatpush1.msra.mxu0 0.0
    %603 = vmatprep.subr.mxu0 0.0
    %604 = vmatpush1.msra.mxu0 0.0
    %605 = vmatprep.subr.mxu0 0.0
    %606 = vmatpush1.msra.mxu0 0.0
    %607 = vmatprep.subr.mxu0 0.0
    %608 = vmatpush1.msra.mxu0 0.0
    %609 = vmatprep.subr.mxu0 0.0
    %610 = vmatpush1.msra.mxu0 0.0
    %611 = vmatprep.subr.mxu0 0.0
    %612 = vmatpush1.msra.mxu0 0.0
    %613 = vmatprep.subr.mxu0 0.0
    %614 = vmatpush1.msra.mxu0 0.0
    %615 = vmatprep.subr.mxu0 0.0
    %616 = vmatpush1.msra.mxu0 0.0
    %617 = vmatprep.subr.mxu0 0.0
    %618 = vmatpush1.msra.mxu0 0.0
    %619 = vmatprep.subr.mxu0 0.0
    %620 = vmatpush1.msra.mxu0 0.0
    %621 = vmatprep.subr.mxu0 0.0
    %622 = vmatpush1.msra.mxu0 0.0
    %623 = vmatprep.subr.mxu0 0.0
    %624 = vmatpush1.msra.mxu0 0.0
    %625 = vmatprep.mubr.f32.mxu0 0.0
    %626 = vmatmul.mubr.f32.gmra.mrb[0].mxu0 %v425
    %v627 = vpop.f32.mrb[0].mxu0
    %v628 = vadd.f32 %v419, %v627
    %v629 = vpop.f32.mrb[0].mxu0
    %630 = vmatprep.mubr.f32.mxu0 0.0
    %631 = vmatmul.mubr.f32.gmra.mrb[0].mxu0 %v428
    %v632 = vpop.f32.mrb[0].mxu0
    %v633 = vadd.f32 %v419, %v632
    %v634 = vpop.f32.mrb[0].mxu0
    %635 = vmatprep.mubr.f32.mxu0 0.0
    %636 = vmatmul.mubr.f32.gmra.mrb[0].mxu0 %v431
    %v637 = vpop.f32.mrb[0].mxu0
    %v638 = vadd.f32 %v419, %v637
    %v639 = vpop.f32.mrb[0].mxu0
    %640 = vmatprep.mubr.f32.mxu0 0.0
    %641 = vmatmul.mubr.f32.gmra.mrb[0].mxu0 %v434
    %v642 = vpop.f32.mrb[0].mxu0
    %v643 = vadd.f32 %v419, %v642
    %v644 = vpop.f32.mrb[0].mxu0
    %645 = vmatprep.mubr.f32.mxu0 0.0
    %646 = vmatmul.mubr.f32.gmra.mrb[0].mxu0 %v437
    %v647 = vpop.f32.mrb[0].mxu0
    %v648 = vadd.f32 %v419, %v647
    %v649 = vpop.f32.mrb[0].mxu0
    %650 = vmatprep.mubr.f32.mxu0 0.0
    %651 = vmatmul.mubr.f32.gmra.mrb[0].mxu0 %v440
    %v652 = vpop.f32.mrb[0].mxu0
    %v653 = vadd.f32 %v419, %v652
    %v654 = vpop.f32.mrb[0].mxu0
    %655 = vmatprep.mubr.f32.mxu0 0.0
    %656 = vmatmul.mubr.f32.gmra.mrb[0].mxu0 %v443
    %v657 = vpop.f32.mrb[0].mxu0
    %v658 = vadd.f32 %v419, %v657
    %v659 = vpop.f32.mrb[0].mxu0
    %660 = vmatprep.mubr.f32.mxu0 0.0
    %661 = vmatmul.mubr.f32.gmra.mrb[0].mxu0 %v446
    %v662 = vpop.f32.mrb[0].mxu0
    %v663 = vadd.f32 %v419, %v662
    %v664 = vpop.f32.mrb[0].mxu0
    %665 = vdwg.mxu0
    %666 = vst [vmem:[#allocation2] sm:$0xff] %v515
    %667 = vst [vmem:[#allocation2 + $0x8] sm:$0xff] %v517
    %668 = vst [vmem:[#allocation2 + $0x10] sm:$0xff] %v628
    %669 = vst [vmem:[#allocation2 + $0x18] sm:$0xff] %v521
    %670 = vst [vmem:[#allocation2 + $0x20] sm:$0xff] %v523
    %671 = vst [vmem:[#allocation2 + $0x28] sm:$0xff] %v633
    %672 = vst [vmem:[#allocation2 + $0x30] sm:$0xff] %v527
    %673 = vst [vmem:[#allocation2 + $0x38] sm:$0xff] %v529
    %674 = vst [vmem:[#allocation2 + $0x40] sm:$0xff] %v638
    %675 = vst [vmem:[#allocation2 + $0x48] sm:$0xff] %v533
    %676 = vst [vmem:[#allocation2 + $0x50] sm:$0xff] %v535
    %677 = vst [vmem:[#allocation2 + $0x58] sm:$0xff] %v643
    %678 = vst [vmem:[#allocation2 + $0x60] sm:$0xff] %v539
    %679 = vst [vmem:[#allocation2 + $0x68] sm:$0xff] %v541
    %680 = vst [vmem:[#allocation2 + $0x70] sm:$0xff] %v648
    %681 = vst [vmem:[#allocation2 + $0x78] sm:$0xff] %v545
    %682 = vst [vmem:[#allocation2 + $0x80] sm:$0xff] %v547
    %683 = vst [vmem:[#allocation2 + $0x88] sm:$0xff] %v653
    %684 = vst [vmem:[#allocation2 + $0x90] sm:$0xff] %v551
    %685 = vst [vmem:[#allocation2 + $0x98] sm:$0xff] %v553
    %686 = vst [vmem:[#allocation2 + $0xa0] sm:$0xff] %v658
    %687 = vst [vmem:[#allocation2 + $0xa8] sm:$0xff] %v557
    %688 = vst [vmem:[#allocation2 + $0xb0] sm:$0xff] %v559
    %689 = vst [vmem:[#allocation2 + $0xb8] sm:$0xff] %v663
    %v690 = vld [vmem:[#allocation11] sm:$0xff]
    %v691 = vld [vmem:[#allocation11 + $0x8] sm:$0xf]
    %v692 = vld [vmem:[#allocation11 + $0xc] sm:$0xff]
    %v693 = vld [vmem:[#allocation11 + $0x14] sm:$0xf]
    %v694 = vld [vmem:[#allocation11 + $0x18] sm:$0xff]
    %v695 = vld [vmem:[#allocation11 + $0x20] sm:$0xf]
    %v696 = vld [vmem:[#allocation11 + $0x24] sm:$0xff]
    %v697 = vld [vmem:[#allocation11 + $0x2c] sm:$0xf]
    %v698 = vld [vmem:[#allocation11 + $0x30] sm:$0xff]
    %v699 = vld [vmem:[#allocation11 + $0x38] sm:$0xf]
    %v700 = vld [vmem:[#allocation11 + $0x3c] sm:$0xff]
    %v701 = vld [vmem:[#allocation11 + $0x44] sm:$0xf]
    %v702 = vld [vmem:[#allocation11 + $0x48] sm:$0xff]
    %v703 = vld [vmem:[#allocation11 + $0x50] sm:$0xf]
    %v704 = vld [vmem:[#allocation11 + $0x54] sm:$0xff]
    %v705 = vld [vmem:[#allocation11 + $0x5c] sm:$0xf]
    %v706 = vld [vmem:[#allocation11 + $0x60] sm:$0xff]
    %v707 = vld [vmem:[#allocation11 + $0x68] sm:$0xf]
    %v708 = vld [vmem:[#allocation11 + $0x6c] sm:$0xff]
    %v709 = vld [vmem:[#allocation11 + $0x74] sm:$0xf]
    %v710 = vld [vmem:[#allocation11 + $0x78] sm:$0xff]
    %v711 = vld [vmem:[#allocation11 + $0x80] sm:$0xf]
    %v712 = vld [vmem:[#allocation11 + $0x84] sm:$0xff]
    %v713 = vld [vmem:[#allocation11 + $0x8c] sm:$0xf]
    %v714 = vld [vmem:[#allocation11 + $0x90] sm:$0xff]
    %v715 = vld [vmem:[#allocation11 + $0x98] sm:$0xf]
    %v716 = vld [vmem:[#allocation11 + $0x9c] sm:$0xff]
    %v717 = vld [vmem:[#allocation11 + $0xa4] sm:$0xf]
    %v718 = vld [vmem:[#allocation11 + $0xa8] sm:$0xff]
    %v719 = vld [vmem:[#allocation11 + $0xb0] sm:$0xf]
    %v720 = vld [vmem:[#allocation11 + $0xb4] sm:$0xff]
    %v721 = vld [vmem:[#allocation11 + $0xbc] sm:$0xf]
    %v722 = vld [vmem:[#allocation13] sm:$0x1]
    %v724 = vlaneseq
    %v725 = vshrl.u32 %v724, 7
    %v726 = vsub.s32 0, %v725
    %v727 = vrot.slane %v722, %v726
    %s729 = smul.u32 0, 3
    %s730 = smul.addr %s729, 8
    %s731 = scalar_lea.vmem [#allocation2], %s730
    %v732 = vld [vmem:[%s731] sm:$0xff]
    %v733 = vld [vmem:[%s731 + $0x8] sm:$0xff]
    %v734 = vld [vmem:[%s731 + $0x10] sm:$0xff]
    %v767 = vunpack.c.l.b16 %v690
    %v768 = vunpack.c.h.b16 %v690
    %v769 = vunpack.c.l.b16 %v691
    %v770 = vunpack.c.l.b16 %v692
    %v771 = vunpack.c.h.b16 %v692
    %v772 = vunpack.c.l.b16 %v693
    %v773 = vunpack.c.l.b16 %v694
    %v774 = vunpack.c.h.b16 %v694
    %v775 = vunpack.c.l.b16 %v695
    %v776 = vunpack.c.l.b16 %v696
    %v777 = vunpack.c.h.b16 %v696
    %v778 = vunpack.c.l.b16 %v697
    %v779 = vunpack.c.l.b16 %v698
    %v780 = vunpack.c.h.b16 %v698
    %v781 = vunpack.c.l.b16 %v699
    %v782 = vunpack.c.l.b16 %v700
    %v783 = vunpack.c.h.b16 %v700
    %v784 = vunpack.c.l.b16 %v701
    %v785 = vunpack.c.l.b16 %v702
    %v786 = vunpack.c.h.b16 %v702
    %v787 = vunpack.c.l.b16 %v703
    %v788 = vunpack.c.l.b16 %v704
    %v789 = vunpack.c.h.b16 %v704
    %v790 = vunpack.c.l.b16 %v705
    %v791 = vunpack.c.l.b16 %v706
    %v792 = vunpack.c.h.b16 %v706
    %v793 = vunpack.c.l.b16 %v707
    %v794 = vunpack.c.l.b16 %v708
    %v795 = vunpack.c.h.b16 %v708
    %v796 = vunpack.c.l.b16 %v709
    %v797 = vunpack.c.l.b16 %v710
    %v798 = vunpack.c.h.b16 %v710
    %v799 = vunpack.c.l.b16 %v711
    %v800 = vunpack.c.l.b16 %v712
    %v801 = vunpack.c.h.b16 %v712
    %v802 = vunpack.c.l.b16 %v713
    %v803 = vunpack.c.l.b16 %v714
    %v804 = vunpack.c.h.b16 %v714
    %v805 = vunpack.c.l.b16 %v715
    %v806 = vunpack.c.l.b16 %v716
    %v807 = vunpack.c.h.b16 %v716
    %v808 = vunpack.c.l.b16 %v717
    %v809 = vunpack.c.l.b16 %v718
    %v810 = vunpack.c.h.b16 %v718
    %v811 = vunpack.c.l.b16 %v719
    %v812 = vunpack.c.l.b16 %v720
    %v813 = vunpack.c.h.b16 %v720
    %v814 = vunpack.c.l.b16 %v721
    %v815 = vpack.c.b16 %v770, %v767
    %v816 = vpack.c.b16 %v771, %v768
    %v817 = vpack.c.b16 %v772, %v769
    %v818 = vpack.c.b16 %v776, %v773
    %v819 = vpack.c.b16 %v777, %v774
    %v820 = vpack.c.b16 %v778, %v775
    %v821 = vpack.c.b16 %v782, %v779
    %v822 = vpack.c.b16 %v783, %v780
    %v823 = vpack.c.b16 %v784, %v781
    %v824 = vpack.c.b16 %v788, %v785
    %v825 = vpack.c.b16 %v789, %v786
    %v826 = vpack.c.b16 %v790, %v787
    %v827 = vpack.c.b16 %v794, %v791
    %v828 = vpack.c.b16 %v795, %v792
    %v829 = vpack.c.b16 %v796, %v793
    %v830 = vpack.c.b16 %v800, %v797
    %v831 = vpack.c.b16 %v801, %v798
    %v832 = vpack.c.b16 %v802, %v799
    %v833 = vpack.c.b16 %v806, %v803
    %v834 = vpack.c.b16 %v807, %v804
    %v835 = vpack.c.b16 %v808, %v805
    %v836 = vpack.c.b16 %v812, %v809
    %v837 = vpack.c.b16 %v813, %v810
    %v838 = vpack.c.b16 %v814, %v811
    %863 = vmatprep.subr.bf16.mxu0 %v816
    %864 = vmatpush1.bf16.msra.mxu0 %v815
    %865 = vmatprep.subr.bf16.mxu0 %v819
    %866 = vmatpush1.bf16.msra.mxu0 %v818
    %867 = vmatprep.subr.bf16.mxu0 %v822
    %868 = vmatpush1.bf16.msra.mxu0 %v821
    %869 = vmatprep.subr.bf16.mxu0 %v825
    %870 = vmatpush1.bf16.msra.mxu0 %v824
    %871 = vmatprep.subr.bf16.mxu0 %v828
    %872 = vmatpush1.bf16.msra.mxu0 %v827
    %873 = vmatprep.subr.bf16.mxu0 %v831
    %874 = vmatpush1.bf16.msra.mxu0 %v830
    %875 = vmatprep.subr.bf16.mxu0 %v834
    %876 = vmatpush1.bf16.msra.mxu0 %v833
    %877 = vmatprep.subr.bf16.mxu0 %v837
    %878 = vmatpush1.bf16.msra.mxu0 %v836
    %879 = vmatprep.subr.bf16.mxu0 0
    %880 = vmatpush1.bf16.msra.mxu0 0
    %881 = vmatprep.subr.bf16.mxu0 0
    %882 = vmatpush1.bf16.msra.mxu0 0
    %883 = vmatprep.subr.bf16.mxu0 0
    %884 = vmatpush1.bf16.msra.mxu0 0
    %885 = vmatprep.subr.bf16.mxu0 0
    %886 = vmatpush1.bf16.msra.mxu0 0
    %887 = vmatprep.subr.bf16.mxu0 0
    %888 = vmatpush1.bf16.msra.mxu0 0
    %889 = vmatprep.subr.bf16.mxu0 0
    %890 = vmatpush1.bf16.msra.mxu0 0
    %891 = vmatprep.subr.bf16.mxu0 0
    %892 = vmatpush1.bf16.msra.mxu0 0
    %893 = vmatprep.subr.bf16.mxu0 0
    %894 = vmatpush1.bf16.msra.mxu0 0
    %895 = vmatprep.mubr.bf16.mxu0 0
    %896 = vmatmul.mubr.bf16.gmra.mrb[0].mxu0 0
    %v897 = vpop.f32.mrb[0].mxu0
    %v898 = vadd.f32 0.0, %v897
    %v899 = vpop.f32.mrb[0].mxu0
    %v900 = vadd.f32 0.0, %v899
    %v901 = vpop.f32.mrb[0].mxu0
    %v902 = vpop.f32.mrb[0].mxu0
    %903 = vdwg.mxu0
    %904 = vmatprep.subr.bf16.mxu0 0
    %905 = vmatpush1.bf16.msra.mxu0 %v817
    %906 = vmatprep.subr.bf16.mxu0 0
    %907 = vmatpush1.bf16.msra.mxu0 %v820
    %908 = vmatprep.subr.bf16.mxu0 0
    %909 = vmatpush1.bf16.msra.mxu0 %v823
    %910 = vmatprep.subr.bf16.mxu0 0
    %911 = vmatpush1.bf16.msra.mxu0 %v826
    %912 = vmatprep.subr.bf16.mxu0 0
    %913 = vmatpush1.bf16.msra.mxu0 %v829
    %914 = vmatprep.subr.bf16.mxu0 0
    %915 = vmatpush1.bf16.msra.mxu0 %v832
    %916 = vmatprep.subr.bf16.mxu0 0
    %917 = vmatpush1.bf16.msra.mxu0 %v835
    %918 = vmatprep.subr.bf16.mxu0 0
    %919 = vmatpush1.bf16.msra.mxu0 %v838
    %920 = vmatprep.subr.bf16.mxu0 0
    %921 = vmatpush1.bf16.msra.mxu0 0
    %922 = vmatprep.subr.bf16.mxu0 0
    %923 = vmatpush1.bf16.msra.mxu0 0
    %924 = vmatprep.subr.bf16.mxu0 0
    %925 = vmatpush1.bf16.msra.mxu0 0
    %926 = vmatprep.subr.bf16.mxu0 0
    %927 = vmatpush1.bf16.msra.mxu0 0
    %928 = vmatprep.subr.bf16.mxu0 0
    %929 = vmatpush1.bf16.msra.mxu0 0
    %930 = vmatprep.subr.bf16.mxu0 0
    %931 = vmatpush1.bf16.msra.mxu0 0
    %932 = vmatprep.subr.bf16.mxu0 0
    %933 = vmatpush1.bf16.msra.mxu0 0
    %934 = vmatprep.subr.bf16.mxu0 0
    %935 = vmatpush1.bf16.msra.mxu0 0
    %936 = vmatprep.mubr.bf16.mxu0 0
    %937 = vmatmul.mubr.bf16.gmra.mrb[0].mxu0 0
    %v938 = vpop.f32.mrb[0].mxu0
    %v939 = vadd.f32 0.0, %v938
    %v940 = vpop.f32.mrb[0].mxu0
    %v941 = vpop.f32.mrb[0].mxu0
    %v942 = vpop.f32.mrb[0].mxu0
    %943 = vdwg.mxu0
    %v944 = vadd.f32 %v732, %v898
    %v945 = vxor.u32 %v944, 2147483648
    %v946 = vmul.f32 %v945, 1.442695
    %v947 = vpow.pop %v946
    %v948 = vadd.f32 %v947, 1.0
    %v949 = vrcp.pop %v948
    %v950 = vmul.f32 1.0, %v949
    %v951 = vadd.f32 %v733, %v900
    %v952 = vxor.u32 %v951, 2147483648
    %v953 = vmul.f32 %v952, 1.442695
    %v954 = vpow.pop %v953
    %v955 = vadd.f32 %v954, 1.0
    %v956 = vrcp.pop %v955
    %v957 = vmul.f32 1.0, %v956
    %v958 = vadd.f32 %v939, %v727
    %v959 = vmul.f32 %v950, %v958
    %v960 = vadd.f32 %v734, %v959
    %v961 = vtanh.pop %v960
    %v962 = vsub.f32 1.0, %v957
    %v963 = vmul.f32 %v962, %v961
    %v964 = vmul.f32 %v957, 0.0
    %v965 = vadd.f32 %v963, %v964
    %s966 = smul.u32 0, 2
    %s967 = smul.addr %s966, 8
    %s968 = scalar_lea.vmem [#allocation3], %s967
    %969 = vst [vmem:[%s968] sm:$0xff] %v965
    %s970 = smul.u32 1, 3
    %s971 = smul.addr %s970, 8
    %s972 = scalar_lea.vmem [#allocation2], %s971
    %v973 = vld [vmem:[%s972] sm:$0xff]
    %v974 = vld [vmem:[%s972 + $0x8] sm:$0xff]
    %v975 = vld [vmem:[%s972 + $0x10] sm:$0xff]
    %v976 = vpack.c.bf16 %v965, %v965
    %977 = vmatprep.subr.bf16.mxu0 %v816
    %978 = vmatpush1.bf16.msra.mxu0 %v815
    %979 = vmatprep.subr.bf16.mxu0 %v819
    %980 = vmatpush1.bf16.msra.mxu0 %v818
    %981 = vmatprep.subr.bf16.mxu0 %v822
    %982 = vmatpush1.bf16.msra.mxu0 %v821
    %983 = vmatprep.subr.bf16.mxu0 %v825
    %984 = vmatpush1.bf16.msra.mxu0 %v824
    %985 = vmatprep.subr.bf16.mxu0 %v828
    %986 = vmatpush1.bf16.msra.mxu0 %v827
    %987 = vmatprep.subr.bf16.mxu0 %v831
    %988 = vmatpush1.bf16.msra.mxu0 %v830
    %989 = vmatprep.subr.bf16.mxu0 %v834
    %990 = vmatpush1.bf16.msra.mxu0 %v833
    %991 = vmatprep.subr.bf16.mxu0 %v837
    %992 = vmatpush1.bf16.msra.mxu0 %v836
    %993 = vmatprep.subr.bf16.mxu0 0
    %994 = vmatpush1.bf16.msra.mxu0 0
    %995 = vmatprep.subr.bf16.mxu0 0
    %996 = vmatpush1.bf16.msra.mxu0 0
    %997 = vmatprep.subr.bf16.mxu0 0
    %998 = vmatpush1.bf16.msra.mxu0 0
    %999 = vmatprep.subr.bf16.mxu0 0
    %1000 = vmatpush1.bf16.msra.mxu0 0
    %1001 = vmatprep.subr.bf16.mxu0 0
    %1002 = vmatpush1.bf16.msra.mxu0 0
    %1003 = vmatprep.subr.bf16.mxu0 0
    %1004 = vmatpush1.bf16.msra.mxu0 0
    %1005 = vmatprep.subr.bf16.mxu0 0
    %1006 = vmatpush1.bf16.msra.mxu0 0
    %1007 = vmatprep.subr.bf16.mxu0 0
    %1008 = vmatpush1.bf16.msra.mxu0 0
    %1009 = vmatprep.mubr.bf16.mxu0 0
    %1010 = vmatmul.mubr.bf16.gmra.mrb[0].mxu0 %v976
    %v1011 = vpop.f32.mrb[0].mxu0
    %v1012 = vadd.f32 0.0, %v1011
    %v1013 = vpop.f32.mrb[0].mxu0
    %v1014 = vadd.f32 0.0, %v1013
    %v1015 = vpop.f32.mrb[0].mxu0
    %v1016 = vpop.f32.mrb[0].mxu0
    %1017 = vdwg.mxu0
    %1018 = vmatprep.subr.bf16.mxu0 0
    %1019 = vmatpush1.bf16.msra.mxu0 %v817
    %1020 = vmatprep.subr.bf16.mxu0 0
    %1021 = vmatpush1.bf16.msra.mxu0 %v820
    %1022 = vmatprep.subr.bf16.mxu0 0
    %1023 = vmatpush1.bf16.msra.mxu0 %v823
    %1024 = vmatprep.subr.bf16.mxu0 0
    %1025 = vmatpush1.bf16.msra.mxu0 %v826
    %1026 = vmatprep.subr.bf16.mxu0 0
    %1027 = vmatpush1.bf16.msra.mxu0 %v829
    %1028 = vmatprep.subr.bf16.mxu0 0
    %1029 = vmatpush1.bf16.msra.mxu0 %v832
    %1030 = vmatprep.subr.bf16.mxu0 0
    %1031 = vmatpush1.bf16.msra.mxu0 %v835
    %1032 = vmatprep.subr.bf16.mxu0 0
    %1033 = vmatpush1.bf16.msra.mxu0 %v838
    %1034 = vmatprep.subr.bf16.mxu0 0
    %1035 = vmatpush1.bf16.msra.mxu0 0
    %1036 = vmatprep.subr.bf16.mxu0 0
    %1037 = vmatpush1.bf16.msra.mxu0 0
    %1038 = vmatprep.subr.bf16.mxu0 0
    %1039 = vmatpush1.bf16.msra.mxu0 0
    %1040 = vmatprep.subr.bf16.mxu0 0
    %1041 = vmatpush1.bf16.msra.mxu0 0
    %1042 = vmatprep.subr.bf16.mxu0 0
    %1043 = vmatpush1.bf16.msra.mxu0 0
    %1044 = vmatprep.subr.bf16.mxu0 0
    %1045 = vmatpush1.bf16.msra.mxu0 0
    %1046 = vmatprep.subr.bf16.mxu0 0
    %1047 = vmatpush1.bf16.msra.mxu0 0
    %1048 = vmatprep.subr.bf16.mxu0 0
    %1049 = vmatpush1.bf16.msra.mxu0 0
    %1050 = vmatprep.mubr.bf16.mxu0 0
    %1051 = vmatmul.mubr.bf16.gmra.mrb[0].mxu0 %v976
    %v1052 = vpop.f32.mrb[0].mxu0
    %v1053 = vadd.f32 0.0, %v1052
    %v1054 = vpop.f32.mrb[0].mxu0
    %v1055 = vpop.f32.mrb[0].mxu0
    %v1056 = vpop.f32.mrb[0].mxu0
    %1057 = vdwg.mxu0
    %v1058 = vadd.f32 %v973, %v1012
    %v1059 = vxor.u32 %v1058, 2147483648
    %v1060 = vmul.f32 %v1059, 1.442695
    %v1061 = vpow.pop %v1060
    %v1062 = vadd.f32 %v1061, 1.0
    %v1063 = vrcp.pop %v1062
    %v1064 = vmul.f32 1.0, %v1063
    %v1065 = vadd.f32 %v974, %v1014
    %v1066 = vxor.u32 %v1065, 2147483648
    %v1067 = vmul.f32 %v1066, 1.442695
    %v1068 = vpow.pop %v1067
    %v1069 = vadd.f32 %v1068, 1.0
    %v1070 = vrcp.pop %v1069
    %v1071 = vmul.f32 1.0, %v1070
    %v1072 = vadd.f32 %v1053, %v727
    %v1073 = vmul.f32 %v1064, %v1072
    %v1074 = vadd.f32 %v975, %v1073
    %v1075 = vtanh.pop %v1074
    %v1076 = vsub.f32 1.0, %v1071
    %v1077 = vmul.f32 %v1076, %v1075
    %v1078 = vmul.f32 %v1071, %v965
    %v1079 = vadd.f32 %v1077, %v1078
    %s1080 = smul.u32 1, 2
    %s1081 = smul.addr %s1080, 8
    %s1082 = scalar_lea.vmem [#allocation3], %s1081
    %1083 = vst [vmem:[%s1082] sm:$0xff] %v1079
    %s1084 = smul.u32 2, 3
    %s1085 = smul.addr %s1084, 8
    %s1086 = scalar_lea.vmem [#allocation2], %s1085
    %v1087 = vld [vmem:[%s1086] sm:$0xff]
    %v1088 = vld [vmem:[%s1086 + $0x8] sm:$0xff]
    %v1089 = vld [vmem:[%s1086 + $0x10] sm:$0xff]
    %v1090 = vpack.c.bf16 %v1079, %v1079
    %1091 = vmatprep.subr.bf16.mxu0 %v816
    %1092 = vmatpush1.bf16.msra.mxu0 %v815
    %1093 = vmatprep.subr.bf16.mxu0 %v819
    %1094 = vmatpush1.bf16.msra.mxu0 %v818
    %1095 = vmatprep.subr.bf16.mxu0 %v822
    %1096 = vmatpush1.bf16.msra.mxu0 %v821
    %1097 = vmatprep.subr.bf16.mxu0 %v825
    %1098 = vmatpush1.bf16.msra.mxu0 %v824
    %1099 = vmatprep.subr.bf16.mxu0 %v828
    %1100 = vmatpush1.bf16.msra.mxu0 %v827
    %1101 = vmatprep.subr.bf16.mxu0 %v831
    %1102 = vmatpush1.bf16.msra.mxu0 %v830
    %1103 = vmatprep.subr.bf16.mxu0 %v834
    %1104 = vmatpush1.bf16.msra.mxu0 %v833
    %1105 = vmatprep.subr.bf16.mxu0 %v837
    %1106 = vmatpush1.bf16.msra.mxu0 %v836
    %1107 = vmatprep.subr.bf16.mxu0 0
    %1108 = vmatpush1.bf16.msra.mxu0 0
    %1109 = vmatprep.subr.bf16.mxu0 0
    %1110 = vmatpush1.bf16.msra.mxu0 0
    %1111 = vmatprep.subr.bf16.mxu0 0
    %1112 = vmatpush1.bf16.msra.mxu0 0
    %1113 = vmatprep.subr.bf16.mxu0 0
    %1114 = vmatpush1.bf16.msra.mxu0 0
    %1115 = vmatprep.subr.bf16.mxu0 0
    %1116 = vmatpush1.bf16.msra.mxu0 0
    %1117 = vmatprep.subr.bf16.mxu0 0
    %1118 = vmatpush1.bf16.msra.mxu0 0
    %1119 = vmatprep.subr.bf16.mxu0 0
    %1120 = vmatpush1.bf16.msra.mxu0 0
    %1121 = vmatprep.subr.bf16.mxu0 0
    %1122 = vmatpush1.bf16.msra.mxu0 0
    %1123 = vmatprep.mubr.bf16.mxu0 0
    %1124 = vmatmul.mubr.bf16.gmra.mrb[0].mxu0 %v1090
    %v1125 = vpop.f32.mrb[0].mxu0
    %v1126 = vadd.f32 0.0, %v1125
    %v1127 = vpop.f32.mrb[0].mxu0
    %v1128 = vadd.f32 0.0, %v1127
    %v1129 = vpop.f32.mrb[0].mxu0
    %v1130 = vpop.f32.mrb[0].mxu0
    %1131 = vdwg.mxu0
    %1132 = vmatprep.subr.bf16.mxu0 0
    %1133 = vmatpush1.bf16.msra.mxu0 %v817
    %1134 = vmatprep.subr.bf16.mxu0 0
    %1135 = vmatpush1.bf16.msra.mxu0 %v820
    %1136 = vmatprep.subr.bf16.mxu0 0
    %1137 = vmatpush1.bf16.msra.mxu0 %v823
    %1138 = vmatprep.subr.bf16.mxu0 0
    %1139 = vmatpush1.bf16.msra.mxu0 %v826
    %1140 = vmatprep.subr.bf16.mxu0 0
    %1141 = vmatpush1.bf16.msra.mxu0 %v829
    %1142 = vmatprep.subr.bf16.mxu0 0
    %1143 = vmatpush1.bf16.msra.mxu0 %v832
    %1144 = vmatprep.subr.bf16.mxu0 0
    %1145 = vmatpush1.bf16.msra.mxu0 %v835
    %1146 = vmatprep.subr.bf16.mxu0 0
    %1147 = vmatpush1.bf16.msra.mxu0 %v838
    %1148 = vmatprep.subr.bf16.mxu0 0
    %1149 = vmatpush1.bf16.msra.mxu0 0
    %1150 = vmatprep.subr.bf16.mxu0 0
    %1151 = vmatpush1.bf16.msra.mxu0 0
    %1152 = vmatprep.subr.bf16.mxu0 0
    %1153 = vmatpush1.bf16.msra.mxu0 0
    %1154 = vmatprep.subr.bf16.mxu0 0
    %1155 = vmatpush1.bf16.msra.mxu0 0
    %1156 = vmatprep.subr.bf16.mxu0 0
    %1157 = vmatpush1.bf16.msra.mxu0 0
    %1158 = vmatprep.subr.bf16.mxu0 0
    %1159 = vmatpush1.bf16.msra.mxu0 0
    %1160 = vmatprep.subr.bf16.mxu0 0
    %1161 = vmatpush1.bf16.msra.mxu0 0
    %1162 = vmatprep.subr.bf16.mxu0 0
    %1163 = vmatpush1.bf16.msra.mxu0 0
    %1164 = vmatprep.mubr.bf16.mxu0 0
    %1165 = vmatmul.mubr.bf16.gmra.mrb[0].mxu0 %v1090
    %v1166 = vpop.f32.mrb[0].mxu0
    %v1167 = vadd.f32 0.0, %v1166
    %v1168 = vpop.f32.mrb[0].mxu0
    %v1169 = vpop.f32.mrb[0].mxu0
    %v1170 = vpop.f32.mrb[0].mxu0
    %1171 = vdwg.mxu0
    %v1172 = vadd.f32 %v1087, %v1126
    %v1173 = vxor.u32 %v1172, 2147483648
    %v1174 = vmul.f32 %v1173, 1.442695
    %v1175 = vpow.pop %v1174
    %v1176 = vadd.f32 %v1175, 1.0
    %v1177 = vrcp.pop %v1176
    %v1178 = vmul.f32 1.0, %v1177
    %v1179 = vadd.f32 %v1088, %v1128
    %v1180 = vxor.u32 %v1179, 2147483648
    %v1181 = vmul.f32 %v1180, 1.442695
    %v1182 = vpow.pop %v1181
    %v1183 = vadd.f32 %v1182, 1.0
    %v1184 = vrcp.pop %v1183
    %v1185 = vmul.f32 1.0, %v1184
    %v1186 = vadd.f32 %v1167, %v727
    %v1187 = vmul.f32 %v1178, %v1186
    %v1188 = vadd.f32 %v1089, %v1187
    %v1189 = vtanh.pop %v1188
    %v1190 = vsub.f32 1.0, %v1185
    %v1191 = vmul.f32 %v1190, %v1189
    %v1192 = vmul.f32 %v1185, %v1079
    %v1193 = vadd.f32 %v1191, %v1192
    %s1194 = smul.u32 2, 2
    %s1195 = smul.addr %s1194, 8
    %s1196 = scalar_lea.vmem [#allocation3], %s1195
    %1197 = vst [vmem:[%s1196] sm:$0xff] %v1193
    %s1198 = smul.u32 3, 3
    %s1199 = smul.addr %s1198, 8
    %s1200 = scalar_lea.vmem [#allocation2], %s1199
    %v1201 = vld [vmem:[%s1200] sm:$0xff]
    %v1202 = vld [vmem:[%s1200 + $0x8] sm:$0xff]
    %v1203 = vld [vmem:[%s1200 + $0x10] sm:$0xff]
    %v1204 = vpack.c.bf16 %v1193, %v1193
    %1205 = vmatprep.subr.bf16.mxu0 %v816
    %1206 = vmatpush1.bf16.msra.mxu0 %v815
    %1207 = vmatprep.subr.bf16.mxu0 %v819
    %1208 = vmatpush1.bf16.msra.mxu0 %v818
    %1209 = vmatprep.subr.bf16.mxu0 %v822
    %1210 = vmatpush1.bf16.msra.mxu0 %v821
    %1211 = vmatprep.subr.bf16.mxu0 %v825
    %1212 = vmatpush1.bf16.msra.mxu0 %v824
    %1213 = vmatprep.subr.bf16.mxu0 %v828
    %1214 = vmatpush1.bf16.msra.mxu0 %v827
    %1215 = vmatprep.subr.bf16.mxu0 %v831
    %1216 = vmatpush1.bf16.msra.mxu0 %v830
    %1217 = vmatprep.subr.bf16.mxu0 %v834
    %1218 = vmatpush1.bf16.msra.mxu0 %v833
    %1219 = vmatprep.subr.bf16.mxu0 %v837
    %1220 = vmatpush1.bf16.msra.mxu0 %v836
    %1221 = vmatprep.subr.bf16.mxu0 0
    %1222 = vmatpush1.bf16.msra.mxu0 0
    %1223 = vmatprep.subr.bf16.mxu0 0
    %1224 = vmatpush1.bf16.msra.mxu0 0
    %1225 = vmatprep.subr.bf16.mxu0 0
    %1226 = vmatpush1.bf16.msra.mxu0 0
    %1227 = vmatprep.subr.bf16.mxu0 0
    %1228 = vmatpush1.bf16.msra.mxu0 0
    %1229 = vmatprep.subr.bf16.mxu0 0
    %1230 = vmatpush1.bf16.msra.mxu0 0
    %1231 = vmatprep.subr.bf16.mxu0 0
    %1232 = vmatpush1.bf16.msra.mxu0 0
    %1233 = vmatprep.subr.bf16.mxu0 0
    %1234 = vmatpush1.bf16.msra.mxu0 0
    %1235 = vmatprep.subr.bf16.mxu0 0
    %1236 = vmatpush1.bf16.msra.mxu0 0
    %1237 = vmatprep.mubr.bf16.mxu0 0
    %1238 = vmatmul.mubr.bf16.gmra.mrb[0].mxu0 %v1204
    %v1239 = vpop.f32.mrb[0].mxu0
    %v1240 = vadd.f32 0.0, %v1239
    %v1241 = vpop.f32.mrb[0].mxu0
    %v1242 = vadd.f32 0.0, %v1241
    %v1243 = vpop.f32.mrb[0].mxu0
    %v1244 = vpop.f32.mrb[0].mxu0
    %1245 = vdwg.mxu0
    %1246 = vmatprep.subr.bf16.mxu0 0
    %1247 = vmatpush1.bf16.msra.mxu0 %v817
    %1248 = vmatprep.subr.bf16.mxu0 0
    %1249 = vmatpush1.bf16.msra.mxu0 %v820
    %1250 = vmatprep.subr.bf16.mxu0 0
    %1251 = vmatpush1.bf16.msra.mxu0 %v823
    %1252 = vmatprep.subr.bf16.mxu0 0
    %1253 = vmatpush1.bf16.msra.mxu0 %v826
    %1254 = vmatprep.subr.bf16.mxu0 0
    %1255 = vmatpush1.bf16.msra.mxu0 %v829
    %1256 = vmatprep.subr.bf16.mxu0 0
    %1257 = vmatpush1.bf16.msra.mxu0 %v832
    %1258 = vmatprep.subr.bf16.mxu0 0
    %1259 = vmatpush1.bf16.msra.mxu0 %v835
    %1260 = vmatprep.subr.bf16.mxu0 0
    %1261 = vmatpush1.bf16.msra.mxu0 %v838
    %1262 = vmatprep.subr.bf16.mxu0 0
    %1263 = vmatpush1.bf16.msra.mxu0 0
    %1264 = vmatprep.subr.bf16.mxu0 0
    %1265 = vmatpush1.bf16.msra.mxu0 0
    %1266 = vmatprep.subr.bf16.mxu0 0
    %1267 = vmatpush1.bf16.msra.mxu0 0
    %1268 = vmatprep.subr.bf16.mxu0 0
    %1269 = vmatpush1.bf16.msra.mxu0 0
    %1270 = vmatprep.subr.bf16.mxu0 0
    %1271 = vmatpush1.bf16.msra.mxu0 0
    %1272 = vmatprep.subr.bf16.mxu0 0
    %1273 = vmatpush1.bf16.msra.mxu0 0
    %1274 = vmatprep.subr.bf16.mxu0 0
    %1275 = vmatpush1.bf16.msra.mxu0 0
    %1276 = vmatprep.subr.bf16.mxu0 0
    %1277 = vmatpush1.bf16.msra.mxu0 0
    %1278 = vmatprep.mubr.bf16.mxu0 0
    %1279 = vmatmul.mubr.bf16.gmra.mrb[0].mxu0 %v1204
    %v1280 = vpop.f32.mrb[0].mxu0
    %v1281 = vadd.f32 0.0, %v1280
    %v1282 = vpop.f32.mrb[0].mxu0
    %v1283 = vpop.f32.mrb[0].mxu0
    %v1284 = vpop.f32.mrb[0].mxu0
    %1285 = vdwg.mxu0
    %v1286 = vadd.f32 %v1201, %v1240
    %v1287 = vxor.u32 %v1286, 2147483648
    %v1288 = vmul.f32 %v1287, 1.442695
    %v1289 = vpow.pop %v1288
    %v1290 = vadd.f32 %v1289, 1.0
    %v1291 = vrcp.pop %v1290
    %v1292 = vmul.f32 1.0, %v1291
    %v1293 = vadd.f32 %v1202, %v1242
    %v1294 = vxor.u32 %v1293, 2147483648
    %v1295 = vmul.f32 %v1294, 1.442695
    %v1296 = vpow.pop %v1295
    %v1297 = vadd.f32 %v1296, 1.0
    %v1298 = vrcp.pop %v1297
    %v1299 = vmul.f32 1.0, %v1298
    %v1300 = vadd.f32 %v1281, %v727
    %v1301 = vmul.f32 %v1292, %v1300
    %v1302 = vadd.f32 %v1203, %v1301
    %v1303 = vtanh.pop %v1302
    %v1304 = vsub.f32 1.0, %v1299
    %v1305 = vmul.f32 %v1304, %v1303
    %v1306 = vmul.f32 %v1299, %v1193
    %v1307 = vadd.f32 %v1305, %v1306
    %s1308 = smul.u32 3, 2
    %s1309 = smul.addr %s1308, 8
    %s1310 = scalar_lea.vmem [#allocation3], %s1309
    %1311 = vst [vmem:[%s1310] sm:$0xff] %v1307
    %s1312 = smul.u32 4, 3
    %s1313 = smul.addr %s1312, 8
    %s1314 = scalar_lea.vmem [#allocation2], %s1313
    %v1315 = vld [vmem:[%s1314] sm:$0xff]
    %v1316 = vld [vmem:[%s1314 + $0x8] sm:$0xff]
    %v1317 = vld [vmem:[%s1314 + $0x10] sm:$0xff]
    %v1318 = vpack.c.bf16 %v1307, %v1307
    %1319 = vmatprep.subr.bf16.mxu0 %v816
    %1320 = vmatpush1.bf16.msra.mxu0 %v815
    %1321 = vmatprep.subr.bf16.mxu0 %v819
    %1322 = vmatpush1.bf16.msra.mxu0 %v818
    %1323 = vmatprep.subr.bf16.mxu0 %v822
    %1324 = vmatpush1.bf16.msra.mxu0 %v821
    %1325 = vmatprep.subr.bf16.mxu0 %v825
    %1326 = vmatpush1.bf16.msra.mxu0 %v824
    %1327 = vmatprep.subr.bf16.mxu0 %v828
    %1328 = vmatpush1.bf16.msra.mxu0 %v827
    %1329 = vmatprep.subr.bf16.mxu0 %v831
    %1330 = vmatpush1.bf16.msra.mxu0 %v830
    %1331 = vmatprep.subr.bf16.mxu0 %v834
    %1332 = vmatpush1.bf16.msra.mxu0 %v833
    %1333 = vmatprep.subr.bf16.mxu0 %v837
    %1334 = vmatpush1.bf16.msra.mxu0 %v836
    %1335 = vmatprep.subr.bf16.mxu0 0
    %1336 = vmatpush1.bf16.msra.mxu0 0
    %1337 = vmatprep.subr.bf16.mxu0 0
    %1338 = vmatpush1.bf16.msra.mxu0 0
    %1339 = vmatprep.subr.bf16.mxu0 0
    %1340 = vmatpush1.bf16.msra.mxu0 0
    %1341 = vmatprep.subr.bf16.mxu0 0
    %1342 = vmatpush1.bf16.msra.mxu0 0
    %1343 = vmatprep.subr.bf16.mxu0 0
    %1344 = vmatpush1.bf16.msra.mxu0 0
    %1345 = vmatprep.subr.bf16.mxu0 0
    %1346 = vmatpush1.bf16.msra.mxu0 0
    %1347 = vmatprep.subr.bf16.mxu0 0
    %1348 = vmatpush1.bf16.msra.mxu0 0
    %1349 = vmatprep.subr.bf16.mxu0 0
    %1350 = vmatpush1.bf16.msra.mxu0 0
    %1351 = vmatprep.mubr.bf16.mxu0 0
    %1352 = vmatmul.mubr.bf16.gmra.mrb[0].mxu0 %v1318
    %v1353 = vpop.f32.mrb[0].mxu0
    %v1354 = vadd.f32 0.0, %v1353
    %v1355 = vpop.f32.mrb[0].mxu0
    %v1356 = vadd.f32 0.0, %v1355
    %v1357 = vpop.f32.mrb[0].mxu0
    %v1358 = vpop.f32.mrb[0].mxu0
    %1359 = vdwg.mxu0
    %1360 = vmatprep.subr.bf16.mxu0 0
    %1361 = vmatpush1.bf16.msra.mxu0 %v817
    %1362 = vmatprep.subr.bf16.mxu0 0
    %1363 = vmatpush1.bf16.msra.mxu0 %v820
    %1364 = vmatprep.subr.bf16.mxu0 0
    %1365 = vmatpush1.bf16.msra.mxu0 %v823
    %1366 = vmatprep.subr.bf16.mxu0 0
    %1367 = vmatpush1.bf16.msra.mxu0 %v826
    %1368 = vmatprep.subr.bf16.mxu0 0
    %1369 = vmatpush1.bf16.msra.mxu0 %v829
    %1370 = vmatprep.subr.bf16.mxu0 0
    %1371 = vmatpush1.bf16.msra.mxu0 %v832
    %1372 = vmatprep.subr.bf16.mxu0 0
    %1373 = vmatpush1.bf16.msra.mxu0 %v835
    %1374 = vmatprep.subr.bf16.mxu0 0
    %1375 = vmatpush1.bf16.msra.mxu0 %v838
    %1376 = vmatprep.subr.bf16.mxu0 0
    %1377 = vmatpush1.bf16.msra.mxu0 0
    %1378 = vmatprep.subr.bf16.mxu0 0
    %1379 = vmatpush1.bf16.msra.mxu0 0
    %1380 = vmatprep.subr.bf16.mxu0 0
    %1381 = vmatpush1.bf16.msra.mxu0 0
    %1382 = vmatprep.subr.bf16.mxu0 0
    %1383 = vmatpush1.bf16.msra.mxu0 0
    %1384 = vmatprep.subr.bf16.mxu0 0
    %1385 = vmatpush1.bf16.msra.mxu0 0
    %1386 = vmatprep.subr.bf16.mxu0 0
    %1387 = vmatpush1.bf16.msra.mxu0 0
    %1388 = vmatprep.subr.bf16.mxu0 0
    %1389 = vmatpush1.bf16.msra.mxu0 0
    %1390 = vmatprep.subr.bf16.mxu0 0
    %1391 = vmatpush1.bf16.msra.mxu0 0
    %1392 = vmatprep.mubr.bf16.mxu0 0
    %1393 = vmatmul.mubr.bf16.gmra.mrb[0].mxu0 %v1318
    %v1394 = vpop.f32.mrb[0].mxu0
    %v1395 = vadd.f32 0.0, %v1394
    %v1396 = vpop.f32.mrb[0].mxu0
    %v1397 = vpop.f32.mrb[0].mxu0
    %v1398 = vpop.f32.mrb[0].mxu0
    %1399 = vdwg.mxu0
    %v1400 = vadd.f32 %v1315, %v1354
    %v1401 = vxor.u32 %v1400, 2147483648
    %v1402 = vmul.f32 %v1401, 1.442695
    %v1403 = vpow.pop %v1402
    %v1404 = vadd.f32 %v1403, 1.0
    %v1405 = vrcp.pop %v1404
    %v1406 = vmul.f32 1.0, %v1405
    %v1407 = vadd.f32 %v1316, %v1356
    %v1408 = vxor.u32 %v1407, 2147483648
    %v1409 = vmul.f32 %v1408, 1.442695
    %v1410 = vpow.pop %v1409
    %v1411 = vadd.f32 %v1410, 1.0
    %v1412 = vrcp.pop %v1411
    %v1413 = vmul.f32 1.0, %v1412
    %v1414 = vadd.f32 %v1395, %v727
    %v1415 = vmul.f32 %v1406, %v1414
    %v1416 = vadd.f32 %v1317, %v1415
    %v1417 = vtanh.pop %v1416
    %v1418 = vsub.f32 1.0, %v1413
    %v1419 = vmul.f32 %v1418, %v1417
    %v1420 = vmul.f32 %v1413, %v1307
    %v1421 = vadd.f32 %v1419, %v1420
    %s1422 = smul.u32 4, 2
    %s1423 = smul.addr %s1422, 8
    %s1424 = scalar_lea.vmem [#allocation3], %s1423
    %1425 = vst [vmem:[%s1424] sm:$0xff] %v1421
    %s1426 = smul.u32 5, 3
    %s1427 = smul.addr %s1426, 8
    %s1428 = scalar_lea.vmem [#allocation2], %s1427
    %v1429 = vld [vmem:[%s1428] sm:$0xff]
    %v1430 = vld [vmem:[%s1428 + $0x8] sm:$0xff]
    %v1431 = vld [vmem:[%s1428 + $0x10] sm:$0xff]
    %v1432 = vpack.c.bf16 %v1421, %v1421
    %1433 = vmatprep.subr.bf16.mxu0 %v816
    %1434 = vmatpush1.bf16.msra.mxu0 %v815
    %1435 = vmatprep.subr.bf16.mxu0 %v819
    %1436 = vmatpush1.bf16.msra.mxu0 %v818
    %1437 = vmatprep.subr.bf16.mxu0 %v822
    %1438 = vmatpush1.bf16.msra.mxu0 %v821
    %1439 = vmatprep.subr.bf16.mxu0 %v825
    %1440 = vmatpush1.bf16.msra.mxu0 %v824
    %1441 = vmatprep.subr.bf16.mxu0 %v828
    %1442 = vmatpush1.bf16.msra.mxu0 %v827
    %1443 = vmatprep.subr.bf16.mxu0 %v831
    %1444 = vmatpush1.bf16.msra.mxu0 %v830
    %1445 = vmatprep.subr.bf16.mxu0 %v834
    %1446 = vmatpush1.bf16.msra.mxu0 %v833
    %1447 = vmatprep.subr.bf16.mxu0 %v837
    %1448 = vmatpush1.bf16.msra.mxu0 %v836
    %1449 = vmatprep.subr.bf16.mxu0 0
    %1450 = vmatpush1.bf16.msra.mxu0 0
    %1451 = vmatprep.subr.bf16.mxu0 0
    %1452 = vmatpush1.bf16.msra.mxu0 0
    %1453 = vmatprep.subr.bf16.mxu0 0
    %1454 = vmatpush1.bf16.msra.mxu0 0
    %1455 = vmatprep.subr.bf16.mxu0 0
    %1456 = vmatpush1.bf16.msra.mxu0 0
    %1457 = vmatprep.subr.bf16.mxu0 0
    %1458 = vmatpush1.bf16.msra.mxu0 0
    %1459 = vmatprep.subr.bf16.mxu0 0
    %1460 = vmatpush1.bf16.msra.mxu0 0
    %1461 = vmatprep.subr.bf16.mxu0 0
    %1462 = vmatpush1.bf16.msra.mxu0 0
    %1463 = vmatprep.subr.bf16.mxu0 0
    %1464 = vmatpush1.bf16.msra.mxu0 0
    %1465 = vmatprep.mubr.bf16.mxu0 0
    %1466 = vmatmul.mubr.bf16.gmra.mrb[0].mxu0 %v1432
    %v1467 = vpop.f32.mrb[0].mxu0
    %v1468 = vadd.f32 0.0, %v1467
    %v1469 = vpop.f32.mrb[0].mxu0
    %v1470 = vadd.f32 0.0, %v1469
    %v1471 = vpop.f32.mrb[0].mxu0
    %v1472 = vpop.f32.mrb[0].mxu0
    %1473 = vdwg.mxu0
    %1474 = vmatprep.subr.bf16.mxu0 0
    %1475 = vmatpush1.bf16.msra.mxu0 %v817
    %1476 = vmatprep.subr.bf16.mxu0 0
    %1477 = vmatpush1.bf16.msra.mxu0 %v820
    %1478 = vmatprep.subr.bf16.mxu0 0
    %1479 = vmatpush1.bf16.msra.mxu0 %v823
    %1480 = vmatprep.subr.bf16.mxu0 0
    %1481 = vmatpush1.bf16.msra.mxu0 %v826
    %1482 = vmatprep.subr.bf16.mxu0 0
    %1483 = vmatpush1.bf16.msra.mxu0 %v829
    %1484 = vmatprep.subr.bf16.mxu0 0
    %1485 = vmatpush1.bf16.msra.mxu0 %v832
    %1486 = vmatprep.subr.bf16.mxu0 0
    %1487 = vmatpush1.bf16.msra.mxu0 %v835
    %1488 = vmatprep.subr.bf16.mxu0 0
    %1489 = vmatpush1.bf16.msra.mxu0 %v838
    %1490 = vmatprep.subr.bf16.mxu0 0
    %1491 = vmatpush1.bf16.msra.mxu0 0
    %1492 = vmatprep.subr.bf16.mxu0 0
    %1493 = vmatpush1.bf16.msra.mxu0 0
    %1494 = vmatprep.subr.bf16.mxu0 0
    %1495 = vmatpush1.bf16.msra.mxu0 0
    %1496 = vmatprep.subr.bf16.mxu0 0
    %1497 = vmatpush1.bf16.msra.mxu0 0
    %1498 = vmatprep.subr.bf16.mxu0 0
    %1499 = vmatpush1.bf16.msra.mxu0 0
    %1500 = vmatprep.subr.bf16.mxu0 0
    %1501 = vmatpush1.bf16.msra.mxu0 0
    %1502 = vmatprep.subr.bf16.mxu0 0
    %1503 = vmatpush1.bf16.msra.mxu0 0
    %1504 = vmatprep.subr.bf16.mxu0 0
    %1505 = vmatpush1.bf16.msra.mxu0 0
    %1506 = vmatprep.mubr.bf16.mxu0 0
    %1507 = vmatmul.mubr.bf16.gmra.mrb[0].mxu0 %v1432
    %v1508 = vpop.f32.mrb[0].mxu0
    %v1509 = vadd.f32 0.0, %v1508
    %v1510 = vpop.f32.mrb[0].mxu0
    %v1511 = vpop.f32.mrb[0].mxu0
    %v1512 = vpop.f32.mrb[0].mxu0
    %1513 = vdwg.mxu0
    %v1514 = vadd.f32 %v1429, %v1468
    %v1515 = vxor.u32 %v1514, 2147483648
    %v1516 = vmul.f32 %v1515, 1.442695
    %v1517 = vpow.pop %v1516
    %v1518 = vadd.f32 %v1517, 1.0
    %v1519 = vrcp.pop %v1518
    %v1520 = vmul.f32 1.0, %v1519
    %v1521 = vadd.f32 %v1430, %v1470
    %v1522 = vxor.u32 %v1521, 2147483648
    %v1523 = vmul.f32 %v1522, 1.442695
    %v1524 = vpow.pop %v1523
    %v1525 = vadd.f32 %v1524, 1.0
    %v1526 = vrcp.pop %v1525
    %v1527 = vmul.f32 1.0, %v1526
    %v1528 = vadd.f32 %v1509, %v727
    %v1529 = vmul.f32 %v1520, %v1528
    %v1530 = vadd.f32 %v1431, %v1529
    %v1531 = vtanh.pop %v1530
    %v1532 = vsub.f32 1.0, %v1527
    %v1533 = vmul.f32 %v1532, %v1531
    %v1534 = vmul.f32 %v1527, %v1421
    %v1535 = vadd.f32 %v1533, %v1534
    %s1536 = smul.u32 5, 2
    %s1537 = smul.addr %s1536, 8
    %s1538 = scalar_lea.vmem [#allocation3], %s1537
    %1539 = vst [vmem:[%s1538] sm:$0xff] %v1535
    %s1540 = smul.u32 6, 3
    %s1541 = smul.addr %s1540, 8
    %s1542 = scalar_lea.vmem [#allocation2], %s1541
    %v1543 = vld [vmem:[%s1542] sm:$0xff]
    %v1544 = vld [vmem:[%s1542 + $0x8] sm:$0xff]
    %v1545 = vld [vmem:[%s1542 + $0x10] sm:$0xff]
    %v1546 = vpack.c.bf16 %v1535, %v1535
    %1547 = vmatprep.subr.bf16.mxu0 %v816
    %1548 = vmatpush1.bf16.msra.mxu0 %v815
    %1549 = vmatprep.subr.bf16.mxu0 %v819
    %1550 = vmatpush1.bf16.msra.mxu0 %v818
    %1551 = vmatprep.subr.bf16.mxu0 %v822
    %1552 = vmatpush1.bf16.msra.mxu0 %v821
    %1553 = vmatprep.subr.bf16.mxu0 %v825
    %1554 = vmatpush1.bf16.msra.mxu0 %v824
    %1555 = vmatprep.subr.bf16.mxu0 %v828
    %1556 = vmatpush1.bf16.msra.mxu0 %v827
    %1557 = vmatprep.subr.bf16.mxu0 %v831
    %1558 = vmatpush1.bf16.msra.mxu0 %v830
    %1559 = vmatprep.subr.bf16.mxu0 %v834
    %1560 = vmatpush1.bf16.msra.mxu0 %v833
    %1561 = vmatprep.subr.bf16.mxu0 %v837
    %1562 = vmatpush1.bf16.msra.mxu0 %v836
    %1563 = vmatprep.subr.bf16.mxu0 0
    %1564 = vmatpush1.bf16.msra.mxu0 0
    %1565 = vmatprep.subr.bf16.mxu0 0
    %1566 = vmatpush1.bf16.msra.mxu0 0
    %1567 = vmatprep.subr.bf16.mxu0 0
    %1568 = vmatpush1.bf16.msra.mxu0 0
    %1569 = vmatprep.subr.bf16.mxu0 0
    %1570 = vmatpush1.bf16.msra.mxu0 0
    %1571 = vmatprep.subr.bf16.mxu0 0
    %1572 = vmatpush1.bf16.msra.mxu0 0
    %1573 = vmatprep.subr.bf16.mxu0 0
    %1574 = vmatpush1.bf16.msra.mxu0 0
    %1575 = vmatprep.subr.bf16.mxu0 0
    %1576 = vmatpush1.bf16.msra.mxu0 0
    %1577 = vmatprep.subr.bf16.mxu0 0
    %1578 = vmatpush1.bf16.msra.mxu0 0
    %1579 = vmatprep.mubr.bf16.mxu0 0
    %1580 = vmatmul.mubr.bf16.gmra.mrb[0].mxu0 %v1546
    %v1581 = vpop.f32.mrb[0].mxu0
    %v1582 = vadd.f32 0.0, %v1581
    %v1583 = vpop.f32.mrb[0].mxu0
    %v1584 = vadd.f32 0.0, %v1583
    %v1585 = vpop.f32.mrb[0].mxu0
    %v1586 = vpop.f32.mrb[0].mxu0
    %1587 = vdwg.mxu0
    %1588 = vmatprep.subr.bf16.mxu0 0
    %1589 = vmatpush1.bf16.msra.mxu0 %v817
    %1590 = vmatprep.subr.bf16.mxu0 0
    %1591 = vmatpush1.bf16.msra.mxu0 %v820
    %1592 = vmatprep.subr.bf16.mxu0 0
    %1593 = vmatpush1.bf16.msra.mxu0 %v823
    %1594 = vmatprep.subr.bf16.mxu0 0
    %1595 = vmatpush1.bf16.msra.mxu0 %v826
    %1596 = vmatprep.subr.bf16.mxu0 0
    %1597 = vmatpush1.bf16.msra.mxu0 %v829
    %1598 = vmatprep.subr.bf16.mxu0 0
    %1599 = vmatpush1.bf16.msra.mxu0 %v832
    %1600 = vmatprep.subr.bf16.mxu0 0
    %1601 = vmatpush1.bf16.msra.mxu0 %v835
    %1602 = vmatprep.subr.bf16.mxu0 0
    %1603 = vmatpush1.bf16.msra.mxu0 %v838
    %1604 = vmatprep.subr.bf16.mxu0 0
    %1605 = vmatpush1.bf16.msra.mxu0 0
    %1606 = vmatprep.subr.bf16.mxu0 0
    %1607 = vmatpush1.bf16.msra.mxu0 0
    %1608 = vmatprep.subr.bf16.mxu0 0
    %1609 = vmatpush1.bf16.msra.mxu0 0
    %1610 = vmatprep.subr.bf16.mxu0 0
    %1611 = vmatpush1.bf16.msra.mxu0 0
    %1612 = vmatprep.subr.bf16.mxu0 0
    %1613 = vmatpush1.bf16.msra.mxu0 0
    %1614 = vmatprep.subr.bf16.mxu0 0
    %1615 = vmatpush1.bf16.msra.mxu0 0
    %1616 = vmatprep.subr.bf16.mxu0 0
    %1617 = vmatpush1.bf16.msra.mxu0 0
    %1618 = vmatprep.subr.bf16.mxu0 0
    %1619 = vmatpush1.bf16.msra.mxu0 0
    %1620 = vmatprep.mubr.bf16.mxu0 0
    %1621 = vmatmul.mubr.bf16.gmra.mrb[0].mxu0 %v1546
    %v1622 = vpop.f32.mrb[0].mxu0
    %v1623 = vadd.f32 0.0, %v1622
    %v1624 = vpop.f32.mrb[0].mxu0
    %v1625 = vpop.f32.mrb[0].mxu0
    %v1626 = vpop.f32.mrb[0].mxu0
    %1627 = vdwg.mxu0
    %v1628 = vadd.f32 %v1543, %v1582
    %v1629 = vxor.u32 %v1628, 2147483648
    %v1630 = vmul.f32 %v1629, 1.442695
    %v1631 = vpow.pop %v1630
    %v1632 = vadd.f32 %v1631, 1.0
    %v1633 = vrcp.pop %v1632
    %v1634 = vmul.f32 1.0, %v1633
    %v1635 = vadd.f32 %v1544, %v1584
    %v1636 = vxor.u32 %v1635, 2147483648
    %v1637 = vmul.f32 %v1636, 1.442695
    %v1638 = vpow.pop %v1637
    %v1639 = vadd.f32 %v1638, 1.0
    %v1640 = vrcp.pop %v1639
    %v1641 = vmul.f32 1.0, %v1640
    %v1642 = vadd.f32 %v1623, %v727
    %v1643 = vmul.f32 %v1634, %v1642
    %v1644 = vadd.f32 %v1545, %v1643
    %v1645 = vtanh.pop %v1644
    %v1646 = vsub.f32 1.0, %v1641
    %v1647 = vmul.f32 %v1646, %v1645
    %v1648 = vmul.f32 %v1641, %v1535
    %v1649 = vadd.f32 %v1647, %v1648
    %s1650 = smul.u32 6, 2
    %s1651 = smul.addr %s1650, 8
    %s1652 = scalar_lea.vmem [#allocation3], %s1651
    %1653 = vst [vmem:[%s1652] sm:$0xff] %v1649
    %s1654 = smul.u32 7, 3
    %s1655 = smul.addr %s1654, 8
    %s1656 = scalar_lea.vmem [#allocation2], %s1655
    %v1657 = vld [vmem:[%s1656] sm:$0xff]
    %v1658 = vld [vmem:[%s1656 + $0x8] sm:$0xff]
    %v1659 = vld [vmem:[%s1656 + $0x10] sm:$0xff]
    %v1660 = vpack.c.bf16 %v1649, %v1649
    %1661 = vmatprep.subr.bf16.mxu0 %v816
    %1662 = vmatpush1.bf16.msra.mxu0 %v815
    %1663 = vmatprep.subr.bf16.mxu0 %v819
    %1664 = vmatpush1.bf16.msra.mxu0 %v818
    %1665 = vmatprep.subr.bf16.mxu0 %v822
    %1666 = vmatpush1.bf16.msra.mxu0 %v821
    %1667 = vmatprep.subr.bf16.mxu0 %v825
    %1668 = vmatpush1.bf16.msra.mxu0 %v824
    %1669 = vmatprep.subr.bf16.mxu0 %v828
    %1670 = vmatpush1.bf16.msra.mxu0 %v827
    %1671 = vmatprep.subr.bf16.mxu0 %v831
    %1672 = vmatpush1.bf16.msra.mxu0 %v830
    %1673 = vmatprep.subr.bf16.mxu0 %v834
    %1674 = vmatpush1.bf16.msra.mxu0 %v833
    %1675 = vmatprep.subr.bf16.mxu0 %v837
    %1676 = vmatpush1.bf16.msra.mxu0 %v836
    %1677 = vmatprep.subr.bf16.mxu0 0
    %1678 = vmatpush1.bf16.msra.mxu0 0
    %1679 = vmatprep.subr.bf16.mxu0 0
    %1680 = vmatpush1.bf16.msra.mxu0 0
    %1681 = vmatprep.subr.bf16.mxu0 0
    %1682 = vmatpush1.bf16.msra.mxu0 0
    %1683 = vmatprep.subr.bf16.mxu0 0
    %1684 = vmatpush1.bf16.msra.mxu0 0
    %1685 = vmatprep.subr.bf16.mxu0 0
    %1686 = vmatpush1.bf16.msra.mxu0 0
    %1687 = vmatprep.subr.bf16.mxu0 0
    %1688 = vmatpush1.bf16.msra.mxu0 0
    %1689 = vmatprep.subr.bf16.mxu0 0
    %1690 = vmatpush1.bf16.msra.mxu0 0
    %1691 = vmatprep.subr.bf16.mxu0 0
    %1692 = vmatpush1.bf16.msra.mxu0 0
    %1693 = vmatprep.mubr.bf16.mxu0 0
    %1694 = vmatmul.mubr.bf16.gmra.mrb[0].mxu0 %v1660
    %v1695 = vpop.f32.mrb[0].mxu0
    %v1696 = vadd.f32 0.0, %v1695
    %v1697 = vpop.f32.mrb[0].mxu0
    %v1698 = vadd.f32 0.0, %v1697
    %v1699 = vpop.f32.mrb[0].mxu0
    %v1700 = vpop.f32.mrb[0].mxu0
    %1701 = vdwg.mxu0
    %1702 = vmatprep.subr.bf16.mxu0 0
    %1703 = vmatpush1.bf16.msra.mxu0 %v817
    %1704 = vmatprep.subr.bf16.mxu0 0
    %1705 = vmatpush1.bf16.msra.mxu0 %v820
    %1706 = vmatprep.subr.bf16.mxu0 0
    %1707 = vmatpush1.bf16.msra.mxu0 %v823
    %1708 = vmatprep.subr.bf16.mxu0 0
    %1709 = vmatpush1.bf16.msra.mxu0 %v826
    %1710 = vmatprep.subr.bf16.mxu0 0
    %1711 = vmatpush1.bf16.msra.mxu0 %v829
    %1712 = vmatprep.subr.bf16.mxu0 0
    %1713 = vmatpush1.bf16.msra.mxu0 %v832
    %1714 = vmatprep.subr.bf16.mxu0 0
    %1715 = vmatpush1.bf16.msra.mxu0 %v835
    %1716 = vmatprep.subr.bf16.mxu0 0
    %1717 = vmatpush1.bf16.msra.mxu0 %v838
    %1718 = vmatprep.subr.bf16.mxu0 0
    %1719 = vmatpush1.bf16.msra.mxu0 0
    %1720 = vmatprep.subr.bf16.mxu0 0
    %1721 = vmatpush1.bf16.msra.mxu0 0
    %1722 = vmatprep.subr.bf16.mxu0 0
    %1723 = vmatpush1.bf16.msra.mxu0 0
    %1724 = vmatprep.subr.bf16.mxu0 0
    %1725 = vmatpush1.bf16.msra.mxu0 0
    %1726 = vmatprep.subr.bf16.mxu0 0
    %1727 = vmatpush1.bf16.msra.mxu0 0
    %1728 = vmatprep.subr.bf16.mxu0 0
    %1729 = vmatpush1.bf16.msra.mxu0 0
    %1730 = vmatprep.subr.bf16.mxu0 0
    %1731 = vmatpush1.bf16.msra.mxu0 0
    %1732 = vmatprep.subr.bf16.mxu0 0
    %1733 = vmatpush1.bf16.msra.mxu0 0
    %1734 = vmatprep.mubr.bf16.mxu0 0
    %1735 = vmatmul.mubr.bf16.gmra.mrb[0].mxu0 %v1660
    %v1736 = vpop.f32.mrb[0].mxu0
    %v1737 = vadd.f32 0.0, %v1736
    %v1738 = vpop.f32.mrb[0].mxu0
    %v1739 = vpop.f32.mrb[0].mxu0
    %v1740 = vpop.f32.mrb[0].mxu0
    %1741 = vdwg.mxu0
    %v1742 = vadd.f32 %v1657, %v1696
    %v1743 = vxor.u32 %v1742, 2147483648
    %v1744 = vmul.f32 %v1743, 1.442695
    %v1745 = vpow.pop %v1744
    %v1746 = vadd.f32 %v1745, 1.0
    %v1747 = vrcp.pop %v1746
    %v1748 = vmul.f32 1.0, %v1747
    %v1749 = vadd.f32 %v1658, %v1698
    %v1750 = vxor.u32 %v1749, 2147483648
    %v1751 = vmul.f32 %v1750, 1.442695
    %v1752 = vpow.pop %v1751
    %v1753 = vadd.f32 %v1752, 1.0
    %v1754 = vrcp.pop %v1753
    %v1755 = vmul.f32 1.0, %v1754
    %v1756 = vadd.f32 %v1737, %v727
    %v1757 = vmul.f32 %v1748, %v1756
    %v1758 = vadd.f32 %v1659, %v1757
    %v1759 = vtanh.pop %v1758
    %v1760 = vsub.f32 1.0, %v1755
    %v1761 = vmul.f32 %v1760, %v1759
    %v1762 = vmul.f32 %v1755, %v1649
    %v1763 = vadd.f32 %v1761, %v1762
    %s1764 = smul.u32 7, 2
    %s1765 = smul.addr %s1764, 8
    %s1766 = scalar_lea.vmem [#allocation3], %s1765
    %1767 = vst [vmem:[%s1766] sm:$0xff] %v1763
    %v1768 = vld [vmem:[#allocation3 + $0x70] sm:$0xff]
    %1769 = vst [vmem:[#allocation3 + $0x8] sm:$0xff] %v1768
    %v1770 = vld [vmem:[#allocation3 + $0x60] sm:$0xff]
    %1771 = vst [vmem:[#allocation3 + $0x18] sm:$0xff] %v1770
    %v1772 = vld [vmem:[#allocation3 + $0x50] sm:$0xff]
    %1773 = vst [vmem:[#allocation3 + $0x28] sm:$0xff] %v1772
    %v1774 = vld [vmem:[#allocation3 + $0x40] sm:$0xff]
    %1775 = vst [vmem:[#allocation3 + $0x38] sm:$0xff] %v1774
    %v1776 = vld [vmem:[#allocation3 + $0x30] sm:$0xff]
    %1777 = vst [vmem:[#allocation3 + $0x48] sm:$0xff] %v1776
    %v1778 = vld [vmem:[#allocation3 + $0x20] sm:$0xff]
    %1779 = vst [vmem:[#allocation3 + $0x58] sm:$0xff] %v1778
    %v1780 = vld [vmem:[#allocation3 + $0x10] sm:$0xff]
    %1781 = vst [vmem:[#allocation3 + $0x68] sm:$0xff] %v1780
    %v1782 = vld [vmem:[#allocation3] sm:$0xff]
    %1783 = vst [vmem:[#allocation3 + $0x78] sm:$0xff] %v1782
    %v1784 = vld [vmem:[#allocation3] sm:$0xff]
    %v1785 = vld [vmem:[#allocation3 + $0x8] sm:$0xff]
    %v1786 = vld [vmem:[#allocation3 + $0x10] sm:$0xff]
    %v1787 = vld [vmem:[#allocation3 + $0x18] sm:$0xff]
    %v1788 = vld [vmem:[#allocation3 + $0x20] sm:$0xff]
    %v1789 = vld [vmem:[#allocation3 + $0x28] sm:$0xff]
    %v1790 = vld [vmem:[#allocation3 + $0x30] sm:$0xff]
    %v1791 = vld [vmem:[#allocation3 + $0x38] sm:$0xff]
    %v1792 = vld [vmem:[#allocation3 + $0x40] sm:$0xff]
    %v1793 = vld [vmem:[#allocation3 + $0x48] sm:$0xff]
    %v1794 = vld [vmem:[#allocation3 + $0x50] sm:$0xff]
    %v1795 = vld [vmem:[#allocation3 + $0x58] sm:$0xff]
    %v1796 = vld [vmem:[#allocation3 + $0x60] sm:$0xff]
    %v1797 = vld [vmem:[#allocation3 + $0x68] sm:$0xff]
    %v1798 = vld [vmem:[#allocation3 + $0x70] sm:$0xff]
    %v1799 = vld [vmem:[#allocation3 + $0x78] sm:$0xff]
    %v1800 = vld [vmem:[#allocation14] sm:$0xff]
    %v1801 = vld [vmem:[#allocation14 + $0x8] sm:$0xff]
    %v1802 = vld [vmem:[#allocation14 + $0x10] sm:$0xff]
    %v1803 = vld [vmem:[#allocation14 + $0x18] sm:$0xff]
    %v1804 = vld [vmem:[#allocation14 + $0x20] sm:$0xff]
    %v1805 = vld [vmem:[#allocation14 + $0x28] sm:$0xff]
    %v1806 = vld [vmem:[#allocation14 + $0x30] sm:$0xff]
    %v1807 = vld [vmem:[#allocation14 + $0x38] sm:$0xff]
    %v1808 = vld [vmem:[#allocation14 + $0x40] sm:$0xff]
    %v1809 = vld [vmem:[#allocation14 + $0x48] sm:$0xff]
    %v1810 = vld [vmem:[#allocation14 + $0x50] sm:$0xff]
    %v1811 = vld [vmem:[#allocation14 + $0x58] sm:$0xff]
    %v1812 = vld [vmem:[#allocation14 + $0x60] sm:$0xff]
    %v1813 = vld [vmem:[#allocation14 + $0x68] sm:$0xff]
    %v1814 = vld [vmem:[#allocation14 + $0x70] sm:$0xff]
    %v1815 = vld [vmem:[#allocation14 + $0x78] sm:$0xff]
    %v1816 = vld [vmem:[#allocation14 + $0x80] sm:$0xff]
    %v1817 = vld [vmem:[#allocation14 + $0x88] sm:$0xff]
    %v1818 = vld [vmem:[#allocation14 + $0x90] sm:$0xff]
    %v1819 = vld [vmem:[#allocation14 + $0x98] sm:$0xff]
    %v1820 = vld [vmem:[#allocation14 + $0xa0] sm:$0xff]
    %v1821 = vld [vmem:[#allocation14 + $0xa8] sm:$0xff]
    %v1822 = vld [vmem:[#allocation14 + $0xb0] sm:$0xff]
    %v1823 = vld [vmem:[#allocation14 + $0xb8] sm:$0xff]
    %v1824 = vld [vmem:[#allocation14 + $0xc0] sm:$0xff]
    %v1825 = vld [vmem:[#allocation14 + $0xc8] sm:$0xff]
    %v1826 = vld [vmem:[#allocation14 + $0xd0] sm:$0xff]
    %v1827 = vld [vmem:[#allocation14 + $0xd8] sm:$0xff]
    %v1828 = vld [vmem:[#allocation14 + $0xe0] sm:$0xff]
    %v1829 = vld [vmem:[#allocation14 + $0xe8] sm:$0xff]
    %v1830 = vld [vmem:[#allocation14 + $0xf0] sm:$0xff]
    %v1831 = vld [vmem:[#allocation14 + $0xf8] sm:$0xff]
    %v1832 = vld [vmem:[#allocation14 + $0x100] sm:$0xff]
    %v1833 = vld [vmem:[#allocation14 + $0x108] sm:$0xff]
    %v1834 = vld [vmem:[#allocation14 + $0x110] sm:$0xff]
    %v1835 = vld [vmem:[#allocation14 + $0x118] sm:$0xff]
    %v1836 = vld [vmem:[#allocation14 + $0x120] sm:$0xff]
    %v1837 = vld [vmem:[#allocation14 + $0x128] sm:$0xff]
    %v1838 = vld [vmem:[#allocation14 + $0x130] sm:$0xff]
    %v1839 = vld [vmem:[#allocation14 + $0x138] sm:$0xff]
    %v1840 = vld [vmem:[#allocation14 + $0x140] sm:$0xff]
    %v1841 = vld [vmem:[#allocation14 + $0x148] sm:$0xff]
    %v1842 = vld [vmem:[#allocation14 + $0x150] sm:$0xff]
    %v1843 = vld [vmem:[#allocation14 + $0x158] sm:$0xff]
    %v1844 = vld [vmem:[#allocation14 + $0x160] sm:$0xff]
    %v1845 = vld [vmem:[#allocation14 + $0x168] sm:$0xff]
    %v1846 = vld [vmem:[#allocation14 + $0x170] sm:$0xff]
    %v1847 = vld [vmem:[#allocation14 + $0x178] sm:$0xff]
    %v1848 = vld [vmem:[#allocation14 + $0x180] sm:$0xff]
    %v1849 = vld [vmem:[#allocation14 + $0x188] sm:$0xff]
    %v1850 = vld [vmem:[#allocation14 + $0x190] sm:$0xff]
    %v1851 = vld [vmem:[#allocation14 + $0x198] sm:$0xff]
    %v1852 = vld [vmem:[#allocation14 + $0x1a0] sm:$0xff]
    %v1853 = vld [vmem:[#allocation14 + $0x1a8] sm:$0xff]
    %v1854 = vld [vmem:[#allocation14 + $0x1b0] sm:$0xff]
    %v1855 = vld [vmem:[#allocation14 + $0x1b8] sm:$0xff]
    %v1856 = vld [vmem:[#allocation14 + $0x1c0] sm:$0xff]
    %v1857 = vld [vmem:[#allocation14 + $0x1c8] sm:$0xff]
    %v1858 = vld [vmem:[#allocation14 + $0x1d0] sm:$0xff]
    %v1859 = vld [vmem:[#allocation14 + $0x1d8] sm:$0xff]
    %v1860 = vld [vmem:[#allocation14 + $0x1e0] sm:$0xff]
    %v1861 = vld [vmem:[#allocation14 + $0x1e8] sm:$0xff]
    %v1862 = vld [vmem:[#allocation14 + $0x1f0] sm:$0xff]
    %v1863 = vld [vmem:[#allocation14 + $0x1f8] sm:$0xff]
    %v1864 = vld [vmem:[#allocation14 + $0x200] sm:$0xff]
    %v1865 = vld [vmem:[#allocation14 + $0x208] sm:$0xff]
    %v1866 = vld [vmem:[#allocation14 + $0x210] sm:$0xff]
    %v1867 = vld [vmem:[#allocation14 + $0x218] sm:$0xff]
    %v1868 = vld [vmem:[#allocation14 + $0x220] sm:$0xff]
    %v1869 = vld [vmem:[#allocation14 + $0x228] sm:$0xff]
    %v1870 = vld [vmem:[#allocation14 + $0x230] sm:$0xff]
    %v1871 = vld [vmem:[#allocation14 + $0x238] sm:$0xff]
    %v1872 = vld [vmem:[#allocation14 + $0x240] sm:$0xff]
    %v1873 = vld [vmem:[#allocation14 + $0x248] sm:$0xff]
    %v1874 = vld [vmem:[#allocation14 + $0x250] sm:$0xff]
    %v1875 = vld [vmem:[#allocation14 + $0x258] sm:$0xff]
    %v1876 = vld [vmem:[#allocation14 + $0x260] sm:$0xff]
    %v1877 = vld [vmem:[#allocation14 + $0x268] sm:$0xff]
    %v1878 = vld [vmem:[#allocation14 + $0x270] sm:$0xff]
    %v1879 = vld [vmem:[#allocation14 + $0x278] sm:$0xff]
    %v1880 = vld [vmem:[#allocation14 + $0x280] sm:$0xff]
    %v1881 = vld [vmem:[#allocation14 + $0x288] sm:$0xff]
    %v1882 = vld [vmem:[#allocation14 + $0x290] sm:$0xff]
    %v1883 = vld [vmem:[#allocation14 + $0x298] sm:$0xff]
    %v1884 = vld [vmem:[#allocation14 + $0x2a0] sm:$0xff]
    %v1885 = vld [vmem:[#allocation14 + $0x2a8] sm:$0xff]
    %v1886 = vld [vmem:[#allocation14 + $0x2b0] sm:$0xff]
    %v1887 = vld [vmem:[#allocation14 + $0x2b8] sm:$0xff]
    %v1888 = vld [vmem:[#allocation14 + $0x2c0] sm:$0xff]
    %v1889 = vld [vmem:[#allocation14 + $0x2c8] sm:$0xff]
    %v1890 = vld [vmem:[#allocation14 + $0x2d0] sm:$0xff]
    %v1891 = vld [vmem:[#allocation14 + $0x2d8] sm:$0xff]
    %v1892 = vld [vmem:[#allocation14 + $0x2e0] sm:$0xff]
    %v1893 = vld [vmem:[#allocation14 + $0x2e8] sm:$0xff]
    %v1894 = vld [vmem:[#allocation14 + $0x2f0] sm:$0xff]
    %v1895 = vld [vmem:[#allocation14 + $0x2f8] sm:$0xff]
    %v1896 = vld [vmem:[#allocation16] sm:$0x7]
    %v1898 = vlaneseq
    %v1899 = vshrl.u32 %v1898, 7
    %v1900 = vsub.s32 0, %v1899
    %v1901 = vrot.slane %v1896, %v1900
    %v1902 = vlaneseq
    %v1903 = vshrl.u32 %v1902, 7
    %v1904 = vsub.s32 1, %v1903
    %v1905 = vrot.slane %v1896, %v1904
    %v1906 = vlaneseq
    %v1907 = vshrl.u32 %v1906, 7
    %v1908 = vsub.s32 2, %v1907
    %v1909 = vrot.slane %v1896, %v1908
    %1913 = vmatprep.subr.mxu0 %v1801
    %1914 = vmatpush1.msra.mxu0 %v1800
    %1915 = vmatprep.subr.mxu0 %v1804
    %1916 = vmatpush1.msra.mxu0 %v1803
    %1917 = vmatprep.subr.mxu0 %v1807
    %1918 = vmatpush1.msra.mxu0 %v1806
    %1919 = vmatprep.subr.mxu0 %v1810
    %1920 = vmatpush1.msra.mxu0 %v1809
    %1921 = vmatprep.subr.mxu0 %v1813
    %1922 = vmatpush1.msra.mxu0 %v1812
    %1923 = vmatprep.subr.mxu0 %v1816
    %1924 = vmatpush1.msra.mxu0 %v1815
    %1925 = vmatprep.subr.mxu0 %v1819
    %1926 = vmatpush1.msra.mxu0 %v1818
    %1927 = vmatprep.subr.mxu0 %v1822
    %1928 = vmatpush1.msra.mxu0 %v1821
    %1929 = vmatprep.subr.mxu0 %v1825
    %1930 = vmatpush1.msra.mxu0 %v1824
    %1931 = vmatprep.subr.mxu0 %v1828
    %1932 = vmatpush1.msra.mxu0 %v1827
    %1933 = vmatprep.subr.mxu0 %v1831
    %1934 = vmatpush1.msra.mxu0 %v1830
    %1935 = vmatprep.subr.mxu0 %v1834
    %1936 = vmatpush1.msra.mxu0 %v1833
    %1937 = vmatprep.subr.mxu0 %v1837
    %1938 = vmatpush1.msra.mxu0 %v1836
    %1939 = vmatprep.subr.mxu0 %v1840
    %1940 = vmatpush1.msra.mxu0 %v1839
    %1941 = vmatprep.subr.mxu0 %v1843
    %1942 = vmatpush1.msra.mxu0 %v1842
    %1943 = vmatprep.subr.mxu0 %v1846
    %1944 = vmatpush1.msra.mxu0 %v1845
    %1945 = vmatprep.subr.mxu0 %v1849
    %1946 = vmatpush1.msra.mxu0 %v1848
    %1947 = vmatprep.subr.mxu0 %v1852
    %1948 = vmatpush1.msra.mxu0 %v1851
    %1949 = vmatprep.subr.mxu0 %v1855
    %1950 = vmatpush1.msra.mxu0 %v1854
    %1951 = vmatprep.subr.mxu0 %v1858
    %1952 = vmatpush1.msra.mxu0 %v1857
    %1953 = vmatprep.subr.mxu0 %v1861
    %1954 = vmatpush1.msra.mxu0 %v1860
    %1955 = vmatprep.subr.mxu0 %v1864
    %1956 = vmatpush1.msra.mxu0 %v1863
    %1957 = vmatprep.subr.mxu0 %v1867
    %1958 = vmatpush1.msra.mxu0 %v1866
    %1959 = vmatprep.subr.mxu0 %v1870
    %1960 = vmatpush1.msra.mxu0 %v1869
    %1961 = vmatprep.subr.mxu0 %v1873
    %1962 = vmatpush1.msra.mxu0 %v1872
    %1963 = vmatprep.subr.mxu0 %v1876
    %1964 = vmatpush1.msra.mxu0 %v1875
    %1965 = vmatprep.subr.mxu0 %v1879
    %1966 = vmatpush1.msra.mxu0 %v1878
    %1967 = vmatprep.subr.mxu0 %v1882
    %1968 = vmatpush1.msra.mxu0 %v1881
    %1969 = vmatprep.subr.mxu0 %v1885
    %1970 = vmatpush1.msra.mxu0 %v1884
    %1971 = vmatprep.subr.mxu0 %v1888
    %1972 = vmatpush1.msra.mxu0 %v1887
    %1973 = vmatprep.subr.mxu0 %v1891
    %1974 = vmatpush1.msra.mxu0 %v1890
    %1975 = vmatprep.subr.mxu0 %v1894
    %1976 = vmatpush1.msra.mxu0 %v1893
    %1977 = vmatprep.mubr.f32.mxu0 %v1785
    %1978 = vmatmul.mubr.f32.gmra.mrb[0].mxu0 %v1784
    %v1979 = vpop.f32.mrb[0].mxu0
    %v1980 = vadd.f32 %v1901, %v1979
    %v1981 = vpop.f32.mrb[0].mxu0
    %v1982 = vadd.f32 %v1905, %v1981
    %1983 = vmatprep.mubr.f32.mxu0 %v1787
    %1984 = vmatmul.mubr.f32.gmra.mrb[0].mxu0 %v1786
    %v1985 = vpop.f32.mrb[0].mxu0
    %v1986 = vadd.f32 %v1901, %v1985
    %v1987 = vpop.f32.mrb[0].mxu0
    %v1988 = vadd.f32 %v1905, %v1987
    %1989 = vmatprep.mubr.f32.mxu0 %v1789
    %1990 = vmatmul.mubr.f32.gmra.mrb[0].mxu0 %v1788
    %v1991 = vpop.f32.mrb[0].mxu0
    %v1992 = vadd.f32 %v1901, %v1991
    %v1993 = vpop.f32.mrb[0].mxu0
    %v1994 = vadd.f32 %v1905, %v1993
    %1995 = vmatprep.mubr.f32.mxu0 %v1791
    %1996 = vmatmul.mubr.f32.gmra.mrb[0].mxu0 %v1790
    %v1997 = vpop.f32.mrb[0].mxu0
    %v1998 = vadd.f32 %v1901, %v1997
    %v1999 = vpop.f32.mrb[0].mxu0
    %v2000 = vadd.f32 %v1905, %v1999
    %2001 = vmatprep.mubr.f32.mxu0 %v1793
    %2002 = vmatmul.mubr.f32.gmra.mrb[0].mxu0 %v1792
    %v2003 = vpop.f32.mrb[0].mxu0
    %v2004 = vadd.f32 %v1901, %v2003
    %v2005 = vpop.f32.mrb[0].mxu0
    %v2006 = vadd.f32 %v1905, %v2005
    %2007 = vmatprep.mubr.f32.mxu0 %v1795
    %2008 = vmatmul.mubr.f32.gmra.mrb[0].mxu0 %v1794
    %v2009 = vpop.f32.mrb[0].mxu0
    %v2010 = vadd.f32 %v1901, %v2009
    %v2011 = vpop.f32.mrb[0].mxu0
    %v2012 = vadd.f32 %v1905, %v2011
    %2013 = vmatprep.mubr.f32.mxu0 %v1797
    %2014 = vmatmul.mubr.f32.gmra.mrb[0].mxu0 %v1796
    %v2015 = vpop.f32.mrb[0].mxu0
    %v2016 = vadd.f32 %v1901, %v2015
    %v2017 = vpop.f32.mrb[0].mxu0
    %v2018 = vadd.f32 %v1905, %v2017
    %2019 = vmatprep.mubr.f32.mxu0 %v1799
    %2020 = vmatmul.mubr.f32.gmra.mrb[0].mxu0 %v1798
    %v2021 = vpop.f32.mrb[0].mxu0
    %v2022 = vadd.f32 %v1901, %v2021
    %v2023 = vpop.f32.mrb[0].mxu0
    %v2024 = vadd.f32 %v1905, %v2023
    %2025 = vdwg.mxu0
    %2026 = vmatprep.subr.mxu0 0.0
    %2027 = vmatpush1.msra.mxu0 %v1802
    %2028 = vmatprep.subr.mxu0 0.0
    %2029 = vmatpush1.msra.mxu0 %v1805
    %2030 = vmatprep.subr.mxu0 0.0
    %2031 = vmatpush1.msra.mxu0 %v1808
    %2032 = vmatprep.subr.mxu0 0.0
    %2033 = vmatpush1.msra.mxu0 %v1811
    %2034 = vmatprep.subr.mxu0 0.0
    %2035 = vmatpush1.msra.mxu0 %v1814
    %2036 = vmatprep.subr.mxu0 0.0
    %2037 = vmatpush1.msra.mxu0 %v1817
    %2038 = vmatprep.subr.mxu0 0.0
    %2039 = vmatpush1.msra.mxu0 %v1820
    %2040 = vmatprep.subr.mxu0 0.0
    %2041 = vmatpush1.msra.mxu0 %v1823
    %2042 = vmatprep.subr.mxu0 0.0
    %2043 = vmatpush1.msra.mxu0 %v1826
    %2044 = vmatprep.subr.mxu0 0.0
    %2045 = vmatpush1.msra.mxu0 %v1829
    %2046 = vmatprep.subr.mxu0 0.0
    %2047 = vmatpush1.msra.mxu0 %v1832
    %2048 = vmatprep.subr.mxu0 0.0
    %2049 = vmatpush1.msra.mxu0 %v1835
    %2050 = vmatprep.subr.mxu0 0.0
    %2051 = vmatpush1.msra.mxu0 %v1838
    %2052 = vmatprep.subr.mxu0 0.0
    %2053 = vmatpush1.msra.mxu0 %v1841
    %2054 = vmatprep.subr.mxu0 0.0
    %2055 = vmatpush1.msra.mxu0 %v1844
    %2056 = vmatprep.subr.mxu0 0.0
    %2057 = vmatpush1.msra.mxu0 %v1847
    %2058 = vmatprep.subr.mxu0 0.0
    %2059 = vmatpush1.msra.mxu0 %v1850
    %2060 = vmatprep.subr.mxu0 0.0
    %2061 = vmatpush1.msra.mxu0 %v1853
    %2062 = vmatprep.subr.mxu0 0.0
    %2063 = vmatpush1.msra.mxu0 %v1856
    %2064 = vmatprep.subr.mxu0 0.0
    %2065 = vmatpush1.msra.mxu0 %v1859
    %2066 = vmatprep.subr.mxu0 0.0
    %2067 = vmatpush1.msra.mxu0 %v1862
    %2068 = vmatprep.subr.mxu0 0.0
    %2069 = vmatpush1.msra.mxu0 %v1865
    %2070 = vmatprep.subr.mxu0 0.0
    %2071 = vmatpush1.msra.mxu0 %v1868
    %2072 = vmatprep.subr.mxu0 0.0
    %2073 = vmatpush1.msra.mxu0 %v1871
    %2074 = vmatprep.subr.mxu0 0.0
    %2075 = vmatpush1.msra.mxu0 %v1874
    %2076 = vmatprep.subr.mxu0 0.0
    %2077 = vmatpush1.msra.mxu0 %v1877
    %2078 = vmatprep.subr.mxu0 0.0
    %2079 = vmatpush1.msra.mxu0 %v1880
    %2080 = vmatprep.subr.mxu0 0.0
    %2081 = vmatpush1.msra.mxu0 %v1883
    %2082 = vmatprep.subr.mxu0 0.0
    %2083 = vmatpush1.msra.mxu0 %v1886
    %2084 = vmatprep.subr.mxu0 0.0
    %2085 = vmatpush1.msra.mxu0 %v1889
    %2086 = vmatprep.subr.mxu0 0.0
    %2087 = vmatpush1.msra.mxu0 %v1892
    %2088 = vmatprep.subr.mxu0 0.0
    %2089 = vmatpush1.msra.mxu0 %v1895
    %2090 = vmatprep.mubr.f32.mxu0 %v1785
    %2091 = vmatmul.mubr.f32.gmra.mrb[0].mxu0 %v1784
    %v2092 = vpop.f32.mrb[0].mxu0
    %v2093 = vadd.f32 %v1909, %v2092
    %v2094 = vpop.f32.mrb[0].mxu0
    %2095 = vmatprep.mubr.f32.mxu0 %v1787
    %2096 = vmatmul.mubr.f32.gmra.mrb[0].mxu0 %v1786
    %v2097 = vpop.f32.mrb[0].mxu0
    %v2098 = vadd.f32 %v1909, %v2097
    %v2099 = vpop.f32.mrb[0].mxu0
    %2100 = vmatprep.mubr.f32.mxu0 %v1789
    %2101 = vmatmul.mubr.f32.gmra.mrb[0].mxu0 %v1788
    %v2102 = vpop.f32.mrb[0].mxu0
    %v2103 = vadd.f32 %v1909, %v2102
    %v2104 = vpop.f32.mrb[0].mxu0
    %2105 = vmatprep.mubr.f32.mxu0 %v1791
    %2106 = vmatmul.mubr.f32.gmra.mrb[0].mxu0 %v1790
    %v2107 = vpop.f32.mrb[0].mxu0
    %v2108 = vadd.f32 %v1909, %v2107
    %v2109 = vpop.f32.mrb[0].mxu0
    %2110 = vmatprep.mubr.f32.mxu0 %v1793
    %2111 = vmatmul.mubr.f32.gmra.mrb[0].mxu0 %v1792
    %v2112 = vpop.f32.mrb[0].mxu0
    %v2113 = vadd.f32 %v1909, %v2112
    %v2114 = vpop.f32.mrb[0].mxu0
    %2115 = vmatprep.mubr.f32.mxu0 %v1795
    %2116 = vmatmul.mubr.f32.gmra.mrb[0].mxu0 %v1794
    %v2117 = vpop.f32.mrb[0].mxu0
    %v2118 = vadd.f32 %v1909, %v2117
    %v2119 = vpop.f32.mrb[0].mxu0
    %2120 = vmatprep.mubr.f32.mxu0 %v1797
    %2121 = vmatmul.mubr.f32.gmra.mrb[0].mxu0 %v1796
    %v2122 = vpop.f32.mrb[0].mxu0
    %v2123 = vadd.f32 %v1909, %v2122
    %v2124 = vpop.f32.mrb[0].mxu0
    %2125 = vmatprep.mubr.f32.mxu0 %v1799
    %2126 = vmatmul.mubr.f32.gmra.mrb[0].mxu0 %v1798
    %v2127 = vpop.f32.mrb[0].mxu0
    %v2128 = vadd.f32 %v1909, %v2127
    %v2129 = vpop.f32.mrb[0].mxu0
    %2130 = vdwg.mxu0
    %2131 = vst [vmem:[#allocation2] sm:$0xff] %v1980
    %2132 = vst [vmem:[#allocation2 + $0x8] sm:$0xff] %v1982
    %2133 = vst [vmem:[#allocation2 + $0x10] sm:$0xff] %v2093
    %2134 = vst [vmem:[#allocation2 + $0x18] sm:$0xff] %v1986
    %2135 = vst [vmem:[#allocation2 + $0x20] sm:$0xff] %v1988
    %2136 = vst [vmem:[#allocation2 + $0x28] sm:$0xff] %v2098
    %2137 = vst [vmem:[#allocation2 + $0x30] sm:$0xff] %v1992
    %2138 = vst [vmem:[#allocation2 + $0x38] sm:$0xff] %v1994
    %2139 = vst [vmem:[#allocation2 + $0x40] sm:$0xff] %v2103
    %2140 = vst [vmem:[#allocation2 + $0x48] sm:$0xff] %v1998
    %2141 = vst [vmem:[#allocation2 + $0x50] sm:$0xff] %v2000
    %2142 = vst [vmem:[#allocation2 + $0x58] sm:$0xff] %v2108
    %2143 = vst [vmem:[#allocation2 + $0x60] sm:$0xff] %v2004
    %2144 = vst [vmem:[#allocation2 + $0x68] sm:$0xff] %v2006
    %2145 = vst [vmem:[#allocation2 + $0x70] sm:$0xff] %v2113
    %2146 = vst [vmem:[#allocation2 + $0x78] sm:$0xff] %v2010
    %2147 = vst [vmem:[#allocation2 + $0x80] sm:$0xff] %v2012
    %2148 = vst [vmem:[#allocation2 + $0x88] sm:$0xff] %v2118
    %2149 = vst [vmem:[#allocation2 + $0x90] sm:$0xff] %v2016
    %2150 = vst [vmem:[#allocation2 + $0x98] sm:$0xff] %v2018
    %2151 = vst [vmem:[#allocation2 + $0xa0] sm:$0xff] %v2123
    %2152 = vst [vmem:[#allocation2 + $0xa8] sm:$0xff] %v2022
    %2153 = vst [vmem:[#allocation2 + $0xb0] sm:$0xff] %v2024
    %2154 = vst [vmem:[#allocation2 + $0xb8] sm:$0xff] %v2128
    %v2155 = vld [vmem:[%s15] sm:$0xff]
    %v2156 = vld [vmem:[%s15 + $0x8] sm:$0xf]
    %v2157 = vld [vmem:[%s15 + $0xc] sm:$0xff]
    %v2158 = vld [vmem:[%s15 + $0x14] sm:$0xf]
    %v2159 = vld [vmem:[%s15 + $0x18] sm:$0xff]
    %v2160 = vld [vmem:[%s15 + $0x20] sm:$0xf]
    %v2161 = vld [vmem:[%s15 + $0x24] sm:$0xff]
    %v2162 = vld [vmem:[%s15 + $0x2c] sm:$0xf]
    %v2163 = vld [vmem:[%s15 + $0x30] sm:$0xff]
    %v2164 = vld [vmem:[%s15 + $0x38] sm:$0xf]
    %v2165 = vld [vmem:[%s15 + $0x3c] sm:$0xff]
    %v2166 = vld [vmem:[%s15 + $0x44] sm:$0xf]
    %v2167 = vld [vmem:[%s15 + $0x48] sm:$0xff]
    %v2168 = vld [vmem:[%s15 + $0x50] sm:$0xf]
    %v2169 = vld [vmem:[%s15 + $0x54] sm:$0xff]
    %v2170 = vld [vmem:[%s15 + $0x5c] sm:$0xf]
    %v2171 = vld [vmem:[%s15 + $0x60] sm:$0xff]
    %v2172 = vld [vmem:[%s15 + $0x68] sm:$0xf]
    %v2173 = vld [vmem:[%s15 + $0x6c] sm:$0xff]
    %v2174 = vld [vmem:[%s15 + $0x74] sm:$0xf]
    %v2175 = vld [vmem:[%s15 + $0x78] sm:$0xff]
    %v2176 = vld [vmem:[%s15 + $0x80] sm:$0xf]
    %v2177 = vld [vmem:[%s15 + $0x84] sm:$0xff]
    %v2178 = vld [vmem:[%s15 + $0x8c] sm:$0xf]
    %v2179 = vld [vmem:[%s15 + $0x90] sm:$0xff]
    %v2180 = vld [vmem:[%s15 + $0x98] sm:$0xf]
    %v2181 = vld [vmem:[%s15 + $0x9c] sm:$0xff]
    %v2182 = vld [vmem:[%s15 + $0xa4] sm:$0xf]
    %v2183 = vld [vmem:[%s15 + $0xa8] sm:$0xff]
    %v2184 = vld [vmem:[%s15 + $0xb0] sm:$0xf]
    %v2185 = vld [vmem:[%s15 + $0xb4] sm:$0xff]
    %v2186 = vld [vmem:[%s15 + $0xbc] sm:$0xf]
    %v2187 = vld [vmem:[#allocation17] sm:$0x1]
    %v2189 = vlaneseq
    %v2190 = vshrl.u32 %v2189, 7
    %v2191 = vsub.s32 0, %v2190
    %v2192 = vrot.slane %v2187, %v2191
    %v2194 = vld [vmem:[%s731] sm:$0xff]
    %v2195 = vld [vmem:[%s731 + $0x8] sm:$0xff]
    %v2196 = vld [vmem:[%s731 + $0x10] sm:$0xff]
    %v2229 = vunpack.c.l.b16 %v2155
    %v2230 = vunpack.c.h.b16 %v2155
    %v2231 = vunpack.c.l.b16 %v2156
    %v2232 = vunpack.c.l.b16 %v2157
    %v2233 = vunpack.c.h.b16 %v2157
    %v2234 = vunpack.c.l.b16 %v2158
    %v2235 = vunpack.c.l.b16 %v2159
    %v2236 = vunpack.c.h.b16 %v2159
    %v2237 = vunpack.c.l.b16 %v2160
    %v2238 = vunpack.c.l.b16 %v2161
    %v2239 = vunpack.c.h.b16 %v2161
    %v2240 = vunpack.c.l.b16 %v2162
    %v2241 = vunpack.c.l.b16 %v2163
    %v2242 = vunpack.c.h.b16 %v2163
    %v2243 = vunpack.c.l.b16 %v2164
    %v2244 = vunpack.c.l.b16 %v2165
    %v2245 = vunpack.c.h.b16 %v2165
    %v2246 = vunpack.c.l.b16 %v2166
    %v2247 = vunpack.c.l.b16 %v2167
    %v2248 = vunpack.c.h.b16 %v2167
    %v2249 = vunpack.c.l.b16 %v2168
    %v2250 = vunpack.c.l.b16 %v2169
    %v2251 = vunpack.c.h.b16 %v2169
    %v2252 = vunpack.c.l.b16 %v2170
    %v2253 = vunpack.c.l.b16 %v2171
    %v2254 = vunpack.c.h.b16 %v2171
    %v2255 = vunpack.c.l.b16 %v2172
    %v2256 = vunpack.c.l.b16 %v2173
    %v2257 = vunpack.c.h.b16 %v2173
    %v2258 = vunpack.c.l.b16 %v2174
    %v2259 = vunpack.c.l.b16 %v2175
    %v2260 = vunpack.c.h.b16 %v2175
    %v2261 = vunpack.c.l.b16 %v2176
    %v2262 = vunpack.c.l.b16 %v2177
    %v2263 = vunpack.c.h.b16 %v2177
    %v2264 = vunpack.c.l.b16 %v2178
    %v2265 = vunpack.c.l.b16 %v2179
    %v2266 = vunpack.c.h.b16 %v2179
    %v2267 = vunpack.c.l.b16 %v2180
    %v2268 = vunpack.c.l.b16 %v2181
    %v2269 = vunpack.c.h.b16 %v2181
    %v2270 = vunpack.c.l.b16 %v2182
    %v2271 = vunpack.c.l.b16 %v2183
    %v2272 = vunpack.c.h.b16 %v2183
    %v2273 = vunpack.c.l.b16 %v2184
    %v2274 = vunpack.c.l.b16 %v2185
    %v2275 = vunpack.c.h.b16 %v2185
    %v2276 = vunpack.c.l.b16 %v2186
    %v2277 = vpack.c.b16 %v2232, %v2229
    %v2278 = vpack.c.b16 %v2233, %v2230
    %v2279 = vpack.c.b16 %v2234, %v2231
    %v2280 = vpack.c.b16 %v2238, %v2235
    %v2281 = vpack.c.b16 %v2239, %v2236
    %v2282 = vpack.c.b16 %v2240, %v2237
    %v2283 = vpack.c.b16 %v2244, %v2241
    %v2284 = vpack.c.b16 %v2245, %v2242
    %v2285 = vpack.c.b16 %v2246, %v2243
    %v2286 = vpack.c.b16 %v2250, %v2247
    %v2287 = vpack.c.b16 %v2251, %v2248
    %v2288 = vpack.c.b16 %v2252, %v2249
    %v2289 = vpack.c.b16 %v2256, %v2253
    %v2290 = vpack.c.b16 %v2257, %v2254
    %v2291 = vpack.c.b16 %v2258, %v2255
    %v2292 = vpack.c.b16 %v2262, %v2259
    %v2293 = vpack.c.b16 %v2263, %v2260
    %v2294 = vpack.c.b16 %v2264, %v2261
    %v2295 = vpack.c.b16 %v2268, %v2265
    %v2296 = vpack.c.b16 %v2269, %v2266
    %v2297 = vpack.c.b16 %v2270, %v2267
    %v2298 = vpack.c.b16 %v2274, %v2271
    %v2299 = vpack.c.b16 %v2275, %v2272
    %v2300 = vpack.c.b16 %v2276, %v2273
    %2325 = vmatprep.subr.bf16.mxu0 %v2278
    %2326 = vmatpush1.bf16.msra.mxu0 %v2277
    %2327 = vmatprep.subr.bf16.mxu0 %v2281
    %2328 = vmatpush1.bf16.msra.mxu0 %v2280
    %2329 = vmatprep.subr.bf16.mxu0 %v2284
    %2330 = vmatpush1.bf16.msra.mxu0 %v2283
    %2331 = vmatprep.subr.bf16.mxu0 %v2287
    %2332 = vmatpush1.bf16.msra.mxu0 %v2286
    %2333 = vmatprep.subr.bf16.mxu0 %v2290
    %2334 = vmatpush1.bf16.msra.mxu0 %v2289
    %2335 = vmatprep.subr.bf16.mxu0 %v2293
    %2336 = vmatpush1.bf16.msra.mxu0 %v2292
    %2337 = vmatprep.subr.bf16.mxu0 %v2296
    %2338 = vmatpush1.bf16.msra.mxu0 %v2295
    %2339 = vmatprep.subr.bf16.mxu0 %v2299
    %2340 = vmatpush1.bf16.msra.mxu0 %v2298
    %2341 = vmatprep.subr.bf16.mxu0 0
    %2342 = vmatpush1.bf16.msra.mxu0 0
    %2343 = vmatprep.subr.bf16.mxu0 0
    %2344 = vmatpush1.bf16.msra.mxu0 0
    %2345 = vmatprep.subr.bf16.mxu0 0
    %2346 = vmatpush1.bf16.msra.mxu0 0
    %2347 = vmatprep.subr.bf16.mxu0 0
    %2348 = vmatpush1.bf16.msra.mxu0 0
    %2349 = vmatprep.subr.bf16.mxu0 0
    %2350 = vmatpush1.bf16.msra.mxu0 0
    %2351 = vmatprep.subr.bf16.mxu0 0
    %2352 = vmatpush1.bf16.msra.mxu0 0
    %2353 = vmatprep.subr.bf16.mxu0 0
    %2354 = vmatpush1.bf16.msra.mxu0 0
    %2355 = vmatprep.subr.bf16.mxu0 0
    %2356 = vmatpush1.bf16.msra.mxu0 0
    %2357 = vmatprep.mubr.bf16.mxu0 0
    %2358 = vmatmul.mubr.bf16.gmra.mrb[0].mxu0 0
    %v2359 = vpop.f32.mrb[0].mxu0
    %v2360 = vadd.f32 0.0, %v2359
    %v2361 = vpop.f32.mrb[0].mxu0
    %v2362 = vadd.f32 0.0, %v2361
    %v2363 = vpop.f32.mrb[0].mxu0
    %v2364 = vpop.f32.mrb[0].mxu0
    %2365 = vdwg.mxu0
    %2366 = vmatprep.subr.bf16.mxu0 0
    %2367 = vmatpush1.bf16.msra.mxu0 %v2279
    %2368 = vmatprep.subr.bf16.mxu0 0
    %2369 = vmatpush1.bf16.msra.mxu0 %v2282
    %2370 = vmatprep.subr.bf16.mxu0 0
    %2371 = vmatpush1.bf16.msra.mxu0 %v2285
    %2372 = vmatprep.subr.bf16.mxu0 0
    %2373 = vmatpush1.bf16.msra.mxu0 %v2288
    %2374 = vmatprep.subr.bf16.mxu0 0
    %2375 = vmatpush1.bf16.msra.mxu0 %v2291
    %2376 = vmatprep.subr.bf16.mxu0 0
    %2377 = vmatpush1.bf16.msra.mxu0 %v2294
    %2378 = vmatprep.subr.bf16.mxu0 0
    %2379 = vmatpush1.bf16.msra.mxu0 %v2297
    %2380 = vmatprep.subr.bf16.mxu0 0
    %2381 = vmatpush1.bf16.msra.mxu0 %v2300
    %2382 = vmatprep.subr.bf16.mxu0 0
    %2383 = vmatpush1.bf16.msra.mxu0 0
    %2384 = vmatprep.subr.bf16.mxu0 0
    %2385 = vmatpush1.bf16.msra.mxu0 0
    %2386 = vmatprep.subr.bf16.mxu0 0
    %2387 = vmatpush1.bf16.msra.mxu0 0
    %2388 = vmatprep.subr.bf16.mxu0 0
    %2389 = vmatpush1.bf16.msra.mxu0 0
    %2390 = vmatprep.subr.bf16.mxu0 0
    %2391 = vmatpush1.bf16.msra.mxu0 0
    %2392 = vmatprep.subr.bf16.mxu0 0
    %2393 = vmatpush1.bf16.msra.mxu0 0
    %2394 = vmatprep.subr.bf16.mxu0 0
    %2395 = vmatpush1.bf16.msra.mxu0 0
    %2396 = vmatprep.subr.bf16.mxu0 0
    %2397 = vmatpush1.bf16.msra.mxu0 0
    %2398 = vmatprep.mubr.bf16.mxu0 0
    %2399 = vmatmul.mubr.bf16.gmra.mrb[0].mxu0 0
    %v2400 = vpop.f32.mrb[0].mxu0
    %v2401 = vadd.f32 0.0, %v2400
    %v2402 = vpop.f32.mrb[0].mxu0
    %v2403 = vpop.f32.mrb[0].mxu0
    %v2404 = vpop.f32.mrb[0].mxu0
    %2405 = vdwg.mxu0
    %v2406 = vadd.f32 %v2194, %v2360
    %v2407 = vxor.u32 %v2406, 2147483648
    %v2408 = vmul.f32 %v2407, 1.442695
    %v2409 = vpow.pop %v2408
    %v2410 = vadd.f32 %v2409, 1.0
    %v2411 = vrcp.pop %v2410
    %v2412 = vmul.f32 1.0, %v2411
    %v2413 = vadd.f32 %v2195, %v2362
    %v2414 = vxor.u32 %v2413, 2147483648
    %v2415 = vmul.f32 %v2414, 1.442695
    %v2416 = vpow.pop %v2415
    %v2417 = vadd.f32 %v2416, 1.0
    %v2418 = vrcp.pop %v2417
    %v2419 = vmul.f32 1.0, %v2418
    %v2420 = vadd.f32 %v2401, %v2192
    %v2421 = vmul.f32 %v2412, %v2420
    %v2422 = vadd.f32 %v2196, %v2421
    %v2423 = vtanh.pop %v2422
    %v2424 = vsub.f32 1.0, %v2419
    %v2425 = vmul.f32 %v2424, %v2423
    %v2426 = vmul.f32 %v2419, 0.0
    %v2427 = vadd.f32 %v2425, %v2426
    %2428 = vst [vmem:[#allocation4] sm:$0xff] %v2427
    %v2429 = vld [vmem:[%s972] sm:$0xff]
    %v2430 = vld [vmem:[%s972 + $0x8] sm:$0xff]
    %v2431 = vld [vmem:[%s972 + $0x10] sm:$0xff]
    %v2432 = vpack.c.bf16 %v2427, %v2427
    %2433 = vmatprep.subr.bf16.mxu0 %v2278
    %2434 = vmatpush1.bf16.msra.mxu0 %v2277
    %2435 = vmatprep.subr.bf16.mxu0 %v2281
    %2436 = vmatpush1.bf16.msra.mxu0 %v2280
    %2437 = vmatprep.subr.bf16.mxu0 %v2284
    %2438 = vmatpush1.bf16.msra.mxu0 %v2283
    %2439 = vmatprep.subr.bf16.mxu0 %v2287
    %2440 = vmatpush1.bf16.msra.mxu0 %v2286
    %2441 = vmatprep.subr.bf16.mxu0 %v2290
    %2442 = vmatpush1.bf16.msra.mxu0 %v2289
    %2443 = vmatprep.subr.bf16.mxu0 %v2293
    %2444 = vmatpush1.bf16.msra.mxu0 %v2292
    %2445 = vmatprep.subr.bf16.mxu0 %v2296
    %2446 = vmatpush1.bf16.msra.mxu0 %v2295
    %2447 = vmatprep.subr.bf16.mxu0 %v2299
    %2448 = vmatpush1.bf16.msra.mxu0 %v2298
    %2449 = vmatprep.subr.bf16.mxu0 0
    %2450 = vmatpush1.bf16.msra.mxu0 0
    %2451 = vmatprep.subr.bf16.mxu0 0
    %2452 = vmatpush1.bf16.msra.mxu0 0
    %2453 = vmatprep.subr.bf16.mxu0 0
    %2454 = vmatpush1.bf16.msra.mxu0 0
    %2455 = vmatprep.subr.bf16.mxu0 0
    %2456 = vmatpush1.bf16.msra.mxu0 0
    %2457 = vmatprep.subr.bf16.mxu0 0
    %2458 = vmatpush1.bf16.msra.mxu0 0
    %2459 = vmatprep.subr.bf16.mxu0 0
    %2460 = vmatpush1.bf16.msra.mxu0 0
    %2461 = vmatprep.subr.bf16.mxu0 0
    %2462 = vmatpush1.bf16.msra.mxu0 0
    %2463 = vmatprep.subr.bf16.mxu0 0
    %2464 = vmatpush1.bf16.msra.mxu0 0
    %2465 = vmatprep.mubr.bf16.mxu0 0
    %2466 = vmatmul.mubr.bf16.gmra.mrb[0].mxu0 %v2432
    %v2467 = vpop.f32.mrb[0].mxu0
    %v2468 = vadd.f32 0.0, %v2467
    %v2469 = vpop.f32.mrb[0].mxu0
    %v2470 = vadd.f32 0.0, %v2469
    %v2471 = vpop.f32.mrb[0].mxu0
    %v2472 = vpop.f32.mrb[0].mxu0
    %2473 = vdwg.mxu0
    %2474 = vmatprep.subr.bf16.mxu0 0
    %2475 = vmatpush1.bf16.msra.mxu0 %v2279
    %2476 = vmatprep.subr.bf16.mxu0 0
    %2477 = vmatpush1.bf16.msra.mxu0 %v2282
    %2478 = vmatprep.subr.bf16.mxu0 0
    %2479 = vmatpush1.bf16.msra.mxu0 %v2285
    %2480 = vmatprep.subr.bf16.mxu0 0
    %2481 = vmatpush1.bf16.msra.mxu0 %v2288
    %2482 = vmatprep.subr.bf16.mxu0 0
    %2483 = vmatpush1.bf16.msra.mxu0 %v2291
    %2484 = vmatprep.subr.bf16.mxu0 0
    %2485 = vmatpush1.bf16.msra.mxu0 %v2294
    %2486 = vmatprep.subr.bf16.mxu0 0
    %2487 = vmatpush1.bf16.msra.mxu0 %v2297
    %2488 = vmatprep.subr.bf16.mxu0 0
    %2489 = vmatpush1.bf16.msra.mxu0 %v2300
    %2490 = vmatprep.subr.bf16.mxu0 0
    %2491 = vmatpush1.bf16.msra.mxu0 0
    %2492 = vmatprep.subr.bf16.mxu0 0
    %2493 = vmatpush1.bf16.msra.mxu0 0
    %2494 = vmatprep.subr.bf16.mxu0 0
    %2495 = vmatpush1.bf16.msra.mxu0 0
    %2496 = vmatprep.subr.bf16.mxu0 0
    %2497 = vmatpush1.bf16.msra.mxu0 0
    %2498 = vmatprep.subr.bf16.mxu0 0
    %2499 = vmatpush1.bf16.msra.mxu0 0
    %2500 = vmatprep.subr.bf16.mxu0 0
    %2501 = vmatpush1.bf16.msra.mxu0 0
    %2502 = vmatprep.subr.bf16.mxu0 0
    %2503 = vmatpush1.bf16.msra.mxu0 0
    %2504 = vmatprep.subr.bf16.mxu0 0
    %2505 = vmatpush1.bf16.msra.mxu0 0
    %2506 = vmatprep.mubr.bf16.mxu0 0
    %2507 = vmatmul.mubr.bf16.gmra.mrb[0].mxu0 %v2432
    %v2508 = vpop.f32.mrb[0].mxu0
    %v2509 = vadd.f32 0.0, %v2508
    %v2510 = vpop.f32.mrb[0].mxu0
    %v2511 = vpop.f32.mrb[0].mxu0
    %v2512 = vpop.f32.mrb[0].mxu0
    %2513 = vdwg.mxu0
    %v2514 = vadd.f32 %v2429, %v2468
    %v2515 = vxor.u32 %v2514, 2147483648
    %v2516 = vmul.f32 %v2515, 1.442695
    %v2517 = vpow.pop %v2516
    %v2518 = vadd.f32 %v2517, 1.0
    %v2519 = vrcp.pop %v2518
    %v2520 = vmul.f32 1.0, %v2519
    %v2521 = vadd.f32 %v2430, %v2470
    %v2522 = vxor.u32 %v2521, 2147483648
    %v2523 = vmul.f32 %v2522, 1.442695
    %v2524 = vpow.pop %v2523
    %v2525 = vadd.f32 %v2524, 1.0
    %v2526 = vrcp.pop %v2525
    %v2527 = vmul.f32 1.0, %v2526
    %v2528 = vadd.f32 %v2509, %v2192
    %v2529 = vmul.f32 %v2520, %v2528
    %v2530 = vadd.f32 %v2431, %v2529
    %v2531 = vtanh.pop %v2530
    %v2532 = vsub.f32 1.0, %v2527
    %v2533 = vmul.f32 %v2532, %v2531
    %v2534 = vmul.f32 %v2527, %v2427
    %v2535 = vadd.f32 %v2533, %v2534
    %s2536 = scalar_lea.vmem [#allocation4], 8
    %2537 = vst [vmem:[%s2536] sm:$0xff] %v2535
    %v2538 = vld [vmem:[%s1086] sm:$0xff]
    %v2539 = vld [vmem:[%s1086 + $0x8] sm:$0xff]
    %v2540 = vld [vmem:[%s1086 + $0x10] sm:$0xff]
    %v2541 = vpack.c.bf16 %v2535, %v2535
    %2542 = vmatprep.subr.bf16.mxu0 %v2278
    %2543 = vmatpush1.bf16.msra.mxu0 %v2277
    %2544 = vmatprep.subr.bf16.mxu0 %v2281
    %2545 = vmatpush1.bf16.msra.mxu0 %v2280
    %2546 = vmatprep.subr.bf16.mxu0 %v2284
    %2547 = vmatpush1.bf16.msra.mxu0 %v2283
    %2548 = vmatprep.subr.bf16.mxu0 %v2287
    %2549 = vmatpush1.bf16.msra.mxu0 %v2286
    %2550 = vmatprep.subr.bf16.mxu0 %v2290
    %2551 = vmatpush1.bf16.msra.mxu0 %v2289
    %2552 = vmatprep.subr.bf16.mxu0 %v2293
    %2553 = vmatpush1.bf16.msra.mxu0 %v2292
    %2554 = vmatprep.subr.bf16.mxu0 %v2296
    %2555 = vmatpush1.bf16.msra.mxu0 %v2295
    %2556 = vmatprep.subr.bf16.mxu0 %v2299
    %2557 = vmatpush1.bf16.msra.mxu0 %v2298
    %2558 = vmatprep.subr.bf16.mxu0 0
    %2559 = vmatpush1.bf16.msra.mxu0 0
    %2560 = vmatprep.subr.bf16.mxu0 0
    %2561 = vmatpush1.bf16.msra.mxu0 0
    %2562 = vmatprep.subr.bf16.mxu0 0
    %2563 = vmatpush1.bf16.msra.mxu0 0
    %2564 = vmatprep.subr.bf16.mxu0 0
    %2565 = vmatpush1.bf16.msra.mxu0 0
    %2566 = vmatprep.subr.bf16.mxu0 0
    %2567 = vmatpush1.bf16.msra.mxu0 0
    %2568 = vmatprep.subr.bf16.mxu0 0
    %2569 = vmatpush1.bf16.msra.mxu0 0
    %2570 = vmatprep.subr.bf16.mxu0 0
    %2571 = vmatpush1.bf16.msra.mxu0 0
    %2572 = vmatprep.subr.bf16.mxu0 0
    %2573 = vmatpush1.bf16.msra.mxu0 0
    %2574 = vmatprep.mubr.bf16.mxu0 0
    %2575 = vmatmul.mubr.bf16.gmra.mrb[0].mxu0 %v2541
    %v2576 = vpop.f32.mrb[0].mxu0
    %v2577 = vadd.f32 0.0, %v2576
    %v2578 = vpop.f32.mrb[0].mxu0
    %v2579 = vadd.f32 0.0, %v2578
    %v2580 = vpop.f32.mrb[0].mxu0
    %v2581 = vpop.f32.mrb[0].mxu0
    %2582 = vdwg.mxu0
    %2583 = vmatprep.subr.bf16.mxu0 0
    %2584 = vmatpush1.bf16.msra.mxu0 %v2279
    %2585 = vmatprep.subr.bf16.mxu0 0
    %2586 = vmatpush1.bf16.msra.mxu0 %v2282
    %2587 = vmatprep.subr.bf16.mxu0 0
    %2588 = vmatpush1.bf16.msra.mxu0 %v2285
    %2589 = vmatprep.subr.bf16.mxu0 0
    %2590 = vmatpush1.bf16.msra.mxu0 %v2288
    %2591 = vmatprep.subr.bf16.mxu0 0
    %2592 = vmatpush1.bf16.msra.mxu0 %v2291
    %2593 = vmatprep.subr.bf16.mxu0 0
    %2594 = vmatpush1.bf16.msra.mxu0 %v2294
    %2595 = vmatprep.subr.bf16.mxu0 0
    %2596 = vmatpush1.bf16.msra.mxu0 %v2297
    %2597 = vmatprep.subr.bf16.mxu0 0
    %2598 = vmatpush1.bf16.msra.mxu0 %v2300
    %2599 = vmatprep.subr.bf16.mxu0 0
    %2600 = vmatpush1.bf16.msra.mxu0 0
    %2601 = vmatprep.subr.bf16.mxu0 0
    %2602 = vmatpush1.bf16.msra.mxu0 0
    %2603 = vmatprep.subr.bf16.mxu0 0
    %2604 = vmatpush1.bf16.msra.mxu0 0
    %2605 = vmatprep.subr.bf16.mxu0 0
    %2606 = vmatpush1.bf16.msra.mxu0 0
    %2607 = vmatprep.subr.bf16.mxu0 0
    %2608 = vmatpush1.bf16.msra.mxu0 0
    %2609 = vmatprep.subr.bf16.mxu0 0
    %2610 = vmatpush1.bf16.msra.mxu0 0
    %2611 = vmatprep.subr.bf16.mxu0 0
    %2612 = vmatpush1.bf16.msra.mxu0 0
    %2613 = vmatprep.subr.bf16.mxu0 0
    %2614 = vmatpush1.bf16.msra.mxu0 0
    %2615 = vmatprep.mubr.bf16.mxu0 0
    %2616 = vmatmul.mubr.bf16.gmra.mrb[0].mxu0 %v2541
    %v2617 = vpop.f32.mrb[0].mxu0
    %v2618 = vadd.f32 0.0, %v2617
    %v2619 = vpop.f32.mrb[0].mxu0
    %v2620 = vpop.f32.mrb[0].mxu0
    %v2621 = vpop.f32.mrb[0].mxu0
    %2622 = vdwg.mxu0
    %v2623 = vadd.f32 %v2538, %v2577
    %v2624 = vxor.u32 %v2623, 2147483648
    %v2625 = vmul.f32 %v2624, 1.442695
    %v2626 = vpow.pop %v2625
    %v2627 = vadd.f32 %v2626, 1.0
    %v2628 = vrcp.pop %v2627
    %v2629 = vmul.f32 1.0, %v2628
    %v2630 = vadd.f32 %v2539, %v2579
    %v2631 = vxor.u32 %v2630, 2147483648
    %v2632 = vmul.f32 %v2631, 1.442695
    %v2633 = vpow.pop %v2632
    %v2634 = vadd.f32 %v2633, 1.0
    %v2635 = vrcp.pop %v2634
    %v2636 = vmul.f32 1.0, %v2635
    %v2637 = vadd.f32 %v2618, %v2192
    %v2638 = vmul.f32 %v2629, %v2637
    %v2639 = vadd.f32 %v2540, %v2638
    %v2640 = vtanh.pop %v2639
    %v2641 = vsub.f32 1.0, %v2636
    %v2642 = vmul.f32 %v2641, %v2640
    %v2643 = vmul.f32 %v2636, %v2535
    %v2644 = vadd.f32 %v2642, %v2643
    %s2645 = scalar_lea.vmem [#allocation4], 16
    %2646 = vst [vmem:[%s2645] sm:$0xff] %v2644
    %v2647 = vld [vmem:[%s1200] sm:$0xff]
    %v2648 = vld [vmem:[%s1200 + $0x8] sm:$0xff]
    %v2649 = vld [vmem:[%s1200 + $0x10] sm:$0xff]
    %v2650 = vpack.c.bf16 %v2644, %v2644
    %2651 = vmatprep.subr.bf16.mxu0 %v2278
    %2652 = vmatpush1.bf16.msra.mxu0 %v2277
    %2653 = vmatprep.subr.bf16.mxu0 %v2281
    %2654 = vmatpush1.bf16.msra.mxu0 %v2280
    %2655 = vmatprep.subr.bf16.mxu0 %v2284
    %2656 = vmatpush1.bf16.msra.mxu0 %v2283
    %2657 = vmatprep.subr.bf16.mxu0 %v2287
    %2658 = vmatpush1.bf16.msra.mxu0 %v2286
    %2659 = vmatprep.subr.bf16.mxu0 %v2290
    %2660 = vmatpush1.bf16.msra.mxu0 %v2289
    %2661 = vmatprep.subr.bf16.mxu0 %v2293
    %2662 = vmatpush1.bf16.msra.mxu0 %v2292
    %2663 = vmatprep.subr.bf16.mxu0 %v2296
    %2664 = vmatpush1.bf16.msra.mxu0 %v2295
    %2665 = vmatprep.subr.bf16.mxu0 %v2299
    %2666 = vmatpush1.bf16.msra.mxu0 %v2298
    %2667 = vmatprep.subr.bf16.mxu0 0
    %2668 = vmatpush1.bf16.msra.mxu0 0
    %2669 = vmatprep.subr.bf16.mxu0 0
    %2670 = vmatpush1.bf16.msra.mxu0 0
    %2671 = vmatprep.subr.bf16.mxu0 0
    %2672 = vmatpush1.bf16.msra.mxu0 0
    %2673 = vmatprep.subr.bf16.mxu0 0
    %2674 = vmatpush1.bf16.msra.mxu0 0
    %2675 = vmatprep.subr.bf16.mxu0 0
    %2676 = vmatpush1.bf16.msra.mxu0 0
    %2677 = vmatprep.subr.bf16.mxu0 0
    %2678 = vmatpush1.bf16.msra.mxu0 0
    %2679 = vmatprep.subr.bf16.mxu0 0
    %2680 = vmatpush1.bf16.msra.mxu0 0
    %2681 = vmatprep.subr.bf16.mxu0 0
    %2682 = vmatpush1.bf16.msra.mxu0 0
    %2683 = vmatprep.mubr.bf16.mxu0 0
    %2684 = vmatmul.mubr.bf16.gmra.mrb[0].mxu0 %v2650
    %v2685 = vpop.f32.mrb[0].mxu0
    %v2686 = vadd.f32 0.0, %v2685
    %v2687 = vpop.f32.mrb[0].mxu0
    %v2688 = vadd.f32 0.0, %v2687
    %v2689 = vpop.f32.mrb[0].mxu0
    %v2690 = vpop.f32.mrb[0].mxu0
    %2691 = vdwg.mxu0
    %2692 = vmatprep.subr.bf16.mxu0 0
    %2693 = vmatpush1.bf16.msra.mxu0 %v2279
    %2694 = vmatprep.subr.bf16.mxu0 0
    %2695 = vmatpush1.bf16.msra.mxu0 %v2282
    %2696 = vmatprep.subr.bf16.mxu0 0
    %2697 = vmatpush1.bf16.msra.mxu0 %v2285
    %2698 = vmatprep.subr.bf16.mxu0 0
    %2699 = vmatpush1.bf16.msra.mxu0 %v2288
    %2700 = vmatprep.subr.bf16.mxu0 0
    %2701 = vmatpush1.bf16.msra.mxu0 %v2291
    %2702 = vmatprep.subr.bf16.mxu0 0
    %2703 = vmatpush1.bf16.msra.mxu0 %v2294
    %2704 = vmatprep.subr.bf16.mxu0 0
    %2705 = vmatpush1.bf16.msra.mxu0 %v2297
    %2706 = vmatprep.subr.bf16.mxu0 0
    %2707 = vmatpush1.bf16.msra.mxu0 %v2300
    %2708 = vmatprep.subr.bf16.mxu0 0
    %2709 = vmatpush1.bf16.msra.mxu0 0
    %2710 = vmatprep.subr.bf16.mxu0 0
    %2711 = vmatpush1.bf16.msra.mxu0 0
    %2712 = vmatprep.subr.bf16.mxu0 0
    %2713 = vmatpush1.bf16.msra.mxu0 0
    %2714 = vmatprep.subr.bf16.mxu0 0
    %2715 = vmatpush1.bf16.msra.mxu0 0
    %2716 = vmatprep.subr.bf16.mxu0 0
    %2717 = vmatpush1.bf16.msra.mxu0 0
    %2718 = vmatprep.subr.bf16.mxu0 0
    %2719 = vmatpush1.bf16.msra.mxu0 0
    %2720 = vmatprep.subr.bf16.mxu0 0
    %2721 = vmatpush1.bf16.msra.mxu0 0
    %2722 = vmatprep.subr.bf16.mxu0 0
    %2723 = vmatpush1.bf16.msra.mxu0 0
    %2724 = vmatprep.mubr.bf16.mxu0 0
    %2725 = vmatmul.mubr.bf16.gmra.mrb[0].mxu0 %v2650
    %v2726 = vpop.f32.mrb[0].mxu0
    %v2727 = vadd.f32 0.0, %v2726
    %v2728 = vpop.f32.mrb[0].mxu0
    %v2729 = vpop.f32.mrb[0].mxu0
    %v2730 = vpop.f32.mrb[0].mxu0
    %2731 = vdwg.mxu0
    %v2732 = vadd.f32 %v2647, %v2686
    %v2733 = vxor.u32 %v2732, 2147483648
    %v2734 = vmul.f32 %v2733, 1.442695
    %v2735 = vpow.pop %v2734
    %v2736 = vadd.f32 %v2735, 1.0
    %v2737 = vrcp.pop %v2736
    %v2738 = vmul.f32 1.0, %v2737
    %v2739 = vadd.f32 %v2648, %v2688
    %v2740 = vxor.u32 %v2739, 2147483648
    %v2741 = vmul.f32 %v2740, 1.442695
    %v2742 = vpow.pop %v2741
    %v2743 = vadd.f32 %v2742, 1.0
    %v2744 = vrcp.pop %v2743
    %v2745 = vmul.f32 1.0, %v2744
    %v2746 = vadd.f32 %v2727, %v2192
    %v2747 = vmul.f32 %v2738, %v2746
    %v2748 = vadd.f32 %v2649, %v2747
    %v2749 = vtanh.pop %v2748
    %v2750 = vsub.f32 1.0, %v2745
    %v2751 = vmul.f32 %v2750, %v2749
    %v2752 = vmul.f32 %v2745, %v2644
    %v2753 = vadd.f32 %v2751, %v2752
    %s2754 = scalar_lea.vmem [#allocation4], 24
    %2755 = vst [vmem:[%s2754] sm:$0xff] %v2753
    %v2756 = vld [vmem:[%s1314] sm:$0xff]
    %v2757 = vld [vmem:[%s1314 + $0x8] sm:$0xff]
    %v2758 = vld [vmem:[%s1314 + $0x10] sm:$0xff]
    %v2759 = vpack.c.bf16 %v2753, %v2753
    %2760 = vmatprep.subr.bf16.mxu0 %v2278
    %2761 = vmatpush1.bf16.msra.mxu0 %v2277
    %2762 = vmatprep.subr.bf16.mxu0 %v2281
    %2763 = vmatpush1.bf16.msra.mxu0 %v2280
    %2764 = vmatprep.subr.bf16.mxu0 %v2284
    %2765 = vmatpush1.bf16.msra.mxu0 %v2283
    %2766 = vmatprep.subr.bf16.mxu0 %v2287
    %2767 = vmatpush1.bf16.msra.mxu0 %v2286
    %2768 = vmatprep.subr.bf16.mxu0 %v2290
    %2769 = vmatpush1.bf16.msra.mxu0 %v2289
    %2770 = vmatprep.subr.bf16.mxu0 %v2293
    %2771 = vmatpush1.bf16.msra.mxu0 %v2292
    %2772 = vmatprep.subr.bf16.mxu0 %v2296
    %2773 = vmatpush1.bf16.msra.mxu0 %v2295
    %2774 = vmatprep.subr.bf16.mxu0 %v2299
    %2775 = vmatpush1.bf16.msra.mxu0 %v2298
    %2776 = vmatprep.subr.bf16.mxu0 0
    %2777 = vmatpush1.bf16.msra.mxu0 0
    %2778 = vmatprep.subr.bf16.mxu0 0
    %2779 = vmatpush1.bf16.msra.mxu0 0
    %2780 = vmatprep.subr.bf16.mxu0 0
    %2781 = vmatpush1.bf16.msra.mxu0 0
    %2782 = vmatprep.subr.bf16.mxu0 0
    %2783 = vmatpush1.bf16.msra.mxu0 0
    %2784 = vmatprep.subr.bf16.mxu0 0
    %2785 = vmatpush1.bf16.msra.mxu0 0
    %2786 = vmatprep.subr.bf16.mxu0 0
    %2787 = vmatpush1.bf16.msra.mxu0 0
    %2788 = vmatprep.subr.bf16.mxu0 0
    %2789 = vmatpush1.bf16.msra.mxu0 0
    %2790 = vmatprep.subr.bf16.mxu0 0
    %2791 = vmatpush1.bf16.msra.mxu0 0
    %2792 = vmatprep.mubr.bf16.mxu0 0
    %2793 = vmatmul.mubr.bf16.gmra.mrb[0].mxu0 %v2759
    %v2794 = vpop.f32.mrb[0].mxu0
    %v2795 = vadd.f32 0.0, %v2794
    %v2796 = vpop.f32.mrb[0].mxu0
    %v2797 = vadd.f32 0.0, %v2796
    %v2798 = vpop.f32.mrb[0].mxu0
    %v2799 = vpop.f32.mrb[0].mxu0
    %2800 = vdwg.mxu0
    %2801 = vmatprep.subr.bf16.mxu0 0
    %2802 = vmatpush1.bf16.msra.mxu0 %v2279
    %2803 = vmatprep.subr.bf16.mxu0 0
    %2804 = vmatpush1.bf16.msra.mxu0 %v2282
    %2805 = vmatprep.subr.bf16.mxu0 0
    %2806 = vmatpush1.bf16.msra.mxu0 %v2285
    %2807 = vmatprep.subr.bf16.mxu0 0
    %2808 = vmatpush1.bf16.msra.mxu0 %v2288
    %2809 = vmatprep.subr.bf16.mxu0 0
    %2810 = vmatpush1.bf16.msra.mxu0 %v2291
    %2811 = vmatprep.subr.bf16.mxu0 0
    %2812 = vmatpush1.bf16.msra.mxu0 %v2294
    %2813 = vmatprep.subr.bf16.mxu0 0
    %2814 = vmatpush1.bf16.msra.mxu0 %v2297
    %2815 = vmatprep.subr.bf16.mxu0 0
    %2816 = vmatpush1.bf16.msra.mxu0 %v2300
    %2817 = vmatprep.subr.bf16.mxu0 0
    %2818 = vmatpush1.bf16.msra.mxu0 0
    %2819 = vmatprep.subr.bf16.mxu0 0
    %2820 = vmatpush1.bf16.msra.mxu0 0
    %2821 = vmatprep.subr.bf16.mxu0 0
    %2822 = vmatpush1.bf16.msra.mxu0 0
    %2823 = vmatprep.subr.bf16.mxu0 0
    %2824 = vmatpush1.bf16.msra.mxu0 0
    %2825 = vmatprep.subr.bf16.mxu0 0
    %2826 = vmatpush1.bf16.msra.mxu0 0
    %2827 = vmatprep.subr.bf16.mxu0 0
    %2828 = vmatpush1.bf16.msra.mxu0 0
    %2829 = vmatprep.subr.bf16.mxu0 0
    %2830 = vmatpush1.bf16.msra.mxu0 0
    %2831 = vmatprep.subr.bf16.mxu0 0
    %2832 = vmatpush1.bf16.msra.mxu0 0
    %2833 = vmatprep.mubr.bf16.mxu0 0
    %2834 = vmatmul.mubr.bf16.gmra.mrb[0].mxu0 %v2759
    %v2835 = vpop.f32.mrb[0].mxu0
    %v2836 = vadd.f32 0.0, %v2835
    %v2837 = vpop.f32.mrb[0].mxu0
    %v2838 = vpop.f32.mrb[0].mxu0
    %v2839 = vpop.f32.mrb[0].mxu0
    %2840 = vdwg.mxu0
    %v2841 = vadd.f32 %v2756, %v2795
    %v2842 = vxor.u32 %v2841, 2147483648
    %v2843 = vmul.f32 %v2842, 1.442695
    %v2844 = vpow.pop %v2843
    %v2845 = vadd.f32 %v2844, 1.0
    %v2846 = vrcp.pop %v2845
    %v2847 = vmul.f32 1.0, %v2846
    %v2848 = vadd.f32 %v2757, %v2797
    %v2849 = vxor.u32 %v2848, 2147483648
    %v2850 = vmul.f32 %v2849, 1.442695
    %v2851 = vpow.pop %v2850
    %v2852 = vadd.f32 %v2851, 1.0
    %v2853 = vrcp.pop %v2852
    %v2854 = vmul.f32 1.0, %v2853
    %v2855 = vadd.f32 %v2836, %v2192
    %v2856 = vmul.f32 %v2847, %v2855
    %v2857 = vadd.f32 %v2758, %v2856
    %v2858 = vtanh.pop %v2857
    %v2859 = vsub.f32 1.0, %v2854
    %v2860 = vmul.f32 %v2859, %v2858
    %v2861 = vmul.f32 %v2854, %v2753
    %v2862 = vadd.f32 %v2860, %v2861
    %s2863 = scalar_lea.vmem [#allocation4], 32
    %2864 = vst [vmem:[%s2863] sm:$0xff] %v2862
    %v2865 = vld [vmem:[%s1428] sm:$0xff]
    %v2866 = vld [vmem:[%s1428 + $0x8] sm:$0xff]
    %v2867 = vld [vmem:[%s1428 + $0x10] sm:$0xff]
    %v2868 = vpack.c.bf16 %v2862, %v2862
    %2869 = vmatprep.subr.bf16.mxu0 %v2278
    %2870 = vmatpush1.bf16.msra.mxu0 %v2277
    %2871 = vmatprep.subr.bf16.mxu0 %v2281
    %2872 = vmatpush1.bf16.msra.mxu0 %v2280
    %2873 = vmatprep.subr.bf16.mxu0 %v2284
    %2874 = vmatpush1.bf16.msra.mxu0 %v2283
    %2875 = vmatprep.subr.bf16.mxu0 %v2287
    %2876 = vmatpush1.bf16.msra.mxu0 %v2286
    %2877 = vmatprep.subr.bf16.mxu0 %v2290
    %2878 = vmatpush1.bf16.msra.mxu0 %v2289
    %2879 = vmatprep.subr.bf16.mxu0 %v2293
    %2880 = vmatpush1.bf16.msra.mxu0 %v2292
    %2881 = vmatprep.subr.bf16.mxu0 %v2296
    %2882 = vmatpush1.bf16.msra.mxu0 %v2295
    %2883 = vmatprep.subr.bf16.mxu0 %v2299
    %2884 = vmatpush1.bf16.msra.mxu0 %v2298
    %2885 = vmatprep.subr.bf16.mxu0 0
    %2886 = vmatpush1.bf16.msra.mxu0 0
    %2887 = vmatprep.subr.bf16.mxu0 0
    %2888 = vmatpush1.bf16.msra.mxu0 0
    %2889 = vmatprep.subr.bf16.mxu0 0
    %2890 = vmatpush1.bf16.msra.mxu0 0
    %2891 = vmatprep.subr.bf16.mxu0 0
    %2892 = vmatpush1.bf16.msra.mxu0 0
    %2893 = vmatprep.subr.bf16.mxu0 0
    %2894 = vmatpush1.bf16.msra.mxu0 0
    %2895 = vmatprep.subr.bf16.mxu0 0
    %2896 = vmatpush1.bf16.msra.mxu0 0
    %2897 = vmatprep.subr.bf16.mxu0 0
    %2898 = vmatpush1.bf16.msra.mxu0 0
    %2899 = vmatprep.subr.bf16.mxu0 0
    %2900 = vmatpush1.bf16.msra.mxu0 0
    %2901 = vmatprep.mubr.bf16.mxu0 0
    %2902 = vmatmul.mubr.bf16.gmra.mrb[0].mxu0 %v2868
    %v2903 = vpop.f32.mrb[0].mxu0
    %v2904 = vadd.f32 0.0, %v2903
    %v2905 = vpop.f32.mrb[0].mxu0
    %v2906 = vadd.f32 0.0, %v2905
    %v2907 = vpop.f32.mrb[0].mxu0
    %v2908 = vpop.f32.mrb[0].mxu0
    %2909 = vdwg.mxu0
    %2910 = vmatprep.subr.bf16.mxu0 0
    %2911 = vmatpush1.bf16.msra.mxu0 %v2279
    %2912 = vmatprep.subr.bf16.mxu0 0
    %2913 = vmatpush1.bf16.msra.mxu0 %v2282
    %2914 = vmatprep.subr.bf16.mxu0 0
    %2915 = vmatpush1.bf16.msra.mxu0 %v2285
    %2916 = vmatprep.subr.bf16.mxu0 0
    %2917 = vmatpush1.bf16.msra.mxu0 %v2288
    %2918 = vmatprep.subr.bf16.mxu0 0
    %2919 = vmatpush1.bf16.msra.mxu0 %v2291
    %2920 = vmatprep.subr.bf16.mxu0 0
    %2921 = vmatpush1.bf16.msra.mxu0 %v2294
    %2922 = vmatprep.subr.bf16.mxu0 0
    %2923 = vmatpush1.bf16.msra.mxu0 %v2297
    %2924 = vmatprep.subr.bf16.mxu0 0
    %2925 = vmatpush1.bf16.msra.mxu0 %v2300
    %2926 = vmatprep.subr.bf16.mxu0 0
    %2927 = vmatpush1.bf16.msra.mxu0 0
    %2928 = vmatprep.subr.bf16.mxu0 0
    %2929 = vmatpush1.bf16.msra.mxu0 0
    %2930 = vmatprep.subr.bf16.mxu0 0
    %2931 = vmatpush1.bf16.msra.mxu0 0
    %2932 = vmatprep.subr.bf16.mxu0 0
    %2933 = vmatpush1.bf16.msra.mxu0 0
    %2934 = vmatprep.subr.bf16.mxu0 0
    %2935 = vmatpush1.bf16.msra.mxu0 0
    %2936 = vmatprep.subr.bf16.mxu0 0
    %2937 = vmatpush1.bf16.msra.mxu0 0
    %2938 = vmatprep.subr.bf16.mxu0 0
    %2939 = vmatpush1.bf16.msra.mxu0 0
    %2940 = vmatprep.subr.bf16.mxu0 0
    %2941 = vmatpush1.bf16.msra.mxu0 0
    %2942 = vmatprep.mubr.bf16.mxu0 0
    %2943 = vmatmul.mubr.bf16.gmra.mrb[0].mxu0 %v2868
    %v2944 = vpop.f32.mrb[0].mxu0
    %v2945 = vadd.f32 0.0, %v2944
    %v2946 = vpop.f32.mrb[0].mxu0
    %v2947 = vpop.f32.mrb[0].mxu0
    %v2948 = vpop.f32.mrb[0].mxu0
    %2949 = vdwg.mxu0
    %v2950 = vadd.f32 %v2865, %v2904
    %v2951 = vxor.u32 %v2950, 2147483648
    %v2952 = vmul.f32 %v2951, 1.442695
    %v2953 = vpow.pop %v2952
    %v2954 = vadd.f32 %v2953, 1.0
    %v2955 = vrcp.pop %v2954
    %v2956 = vmul.f32 1.0, %v2955
    %v2957 = vadd.f32 %v2866, %v2906
    %v2958 = vxor.u32 %v2957, 2147483648
    %v2959 = vmul.f32 %v2958, 1.442695
    %v2960 = vpow.pop %v2959
    %v2961 = vadd.f32 %v2960, 1.0
    %v2962 = vrcp.pop %v2961
    %v2963 = vmul.f32 1.0, %v2962
    %v2964 = vadd.f32 %v2945, %v2192
    %v2965 = vmul.f32 %v2956, %v2964
    %v2966 = vadd.f32 %v2867, %v2965
    %v2967 = vtanh.pop %v2966
    %v2968 = vsub.f32 1.0, %v2963
    %v2969 = vmul.f32 %v2968, %v2967
    %v2970 = vmul.f32 %v2963, %v2862
    %v2971 = vadd.f32 %v2969, %v2970
    %s2972 = scalar_lea.vmem [#allocation4], 40
    %2973 = vst [vmem:[%s2972] sm:$0xff] %v2971
    %v2974 = vld [vmem:[%s1542] sm:$0xff]
    %v2975 = vld [vmem:[%s1542 + $0x8] sm:$0xff]
    %v2976 = vld [vmem:[%s1542 + $0x10] sm:$0xff]
    %v2977 = vpack.c.bf16 %v2971, %v2971
    %2978 = vmatprep.subr.bf16.mxu0 %v2278
    %2979 = vmatpush1.bf16.msra.mxu0 %v2277
    %2980 = vmatprep.subr.bf16.mxu0 %v2281
    %2981 = vmatpush1.bf16.msra.mxu0 %v2280
    %2982 = vmatprep.subr.bf16.mxu0 %v2284
    %2983 = vmatpush1.bf16.msra.mxu0 %v2283
    %2984 = vmatprep.subr.bf16.mxu0 %v2287
    %2985 = vmatpush1.bf16.msra.mxu0 %v2286
    %2986 = vmatprep.subr.bf16.mxu0 %v2290
    %2987 = vmatpush1.bf16.msra.mxu0 %v2289
    %2988 = vmatprep.subr.bf16.mxu0 %v2293
    %2989 = vmatpush1.bf16.msra.mxu0 %v2292
    %2990 = vmatprep.subr.bf16.mxu0 %v2296
    %2991 = vmatpush1.bf16.msra.mxu0 %v2295
    %2992 = vmatprep.subr.bf16.mxu0 %v2299
    %2993 = vmatpush1.bf16.msra.mxu0 %v2298
    %2994 = vmatprep.subr.bf16.mxu0 0
    %2995 = vmatpush1.bf16.msra.mxu0 0
    %2996 = vmatprep.subr.bf16.mxu0 0
    %2997 = vmatpush1.bf16.msra.mxu0 0
    %2998 = vmatprep.subr.bf16.mxu0 0
    %2999 = vmatpush1.bf16.msra.mxu0 0
    %3000 = vmatprep.subr.bf16.mxu0 0
    %3001 = vmatpush1.bf16.msra.mxu0 0
    %3002 = vmatprep.subr.bf16.mxu0 0
    %3003 = vmatpush1.bf16.msra.mxu0 0
    %3004 = vmatprep.subr.bf16.mxu0 0
    %3005 = vmatpush1.bf16.msra.mxu0 0
    %3006 = vmatprep.subr.bf16.mxu0 0
    %3007 = vmatpush1.bf16.msra.mxu0 0
    %3008 = vmatprep.subr.bf16.mxu0 0
    %3009 = vmatpush1.bf16.msra.mxu0 0
    %3010 = vmatprep.mubr.bf16.mxu0 0
    %3011 = vmatmul.mubr.bf16.gmra.mrb[0].mxu0 %v2977
    %v3012 = vpop.f32.mrb[0].mxu0
    %v3013 = vadd.f32 0.0, %v3012
    %v3014 = vpop.f32.mrb[0].mxu0
    %v3015 = vadd.f32 0.0, %v3014
    %v3016 = vpop.f32.mrb[0].mxu0
    %v3017 = vpop.f32.mrb[0].mxu0
    %3018 = vdwg.mxu0
    %3019 = vmatprep.subr.bf16.mxu0 0
    %3020 = vmatpush1.bf16.msra.mxu0 %v2279
    %3021 = vmatprep.subr.bf16.mxu0 0
    %3022 = vmatpush1.bf16.msra.mxu0 %v2282
    %3023 = vmatprep.subr.bf16.mxu0 0
    %3024 = vmatpush1.bf16.msra.mxu0 %v2285
    %3025 = vmatprep.subr.bf16.mxu0 0
    %3026 = vmatpush1.bf16.msra.mxu0 %v2288
    %3027 = vmatprep.subr.bf16.mxu0 0
    %3028 = vmatpush1.bf16.msra.mxu0 %v2291
    %3029 = vmatprep.subr.bf16.mxu0 0
    %3030 = vmatpush1.bf16.msra.mxu0 %v2294
    %3031 = vmatprep.subr.bf16.mxu0 0
    %3032 = vmatpush1.bf16.msra.mxu0 %v2297
    %3033 = vmatprep.subr.bf16.mxu0 0
    %3034 = vmatpush1.bf16.msra.mxu0 %v2300
    %3035 = vmatprep.subr.bf16.mxu0 0
    %3036 = vmatpush1.bf16.msra.mxu0 0
    %3037 = vmatprep.subr.bf16.mxu0 0
    %3038 = vmatpush1.bf16.msra.mxu0 0
    %3039 = vmatprep.subr.bf16.mxu0 0
    %3040 = vmatpush1.bf16.msra.mxu0 0
    %3041 = vmatprep.subr.bf16.mxu0 0
    %3042 = vmatpush1.bf16.msra.mxu0 0
    %3043 = vmatprep.subr.bf16.mxu0 0
    %3044 = vmatpush1.bf16.msra.mxu0 0
    %3045 = vmatprep.subr.bf16.mxu0 0
    %3046 = vmatpush1.bf16.msra.mxu0 0
    %3047 = vmatprep.subr.bf16.mxu0 0
    %3048 = vmatpush1.bf16.msra.mxu0 0
    %3049 = vmatprep.subr.bf16.mxu0 0
    %3050 = vmatpush1.bf16.msra.mxu0 0
    %3051 = vmatprep.mubr.bf16.mxu0 0
    %3052 = vmatmul.mubr.bf16.gmra.mrb[0].mxu0 %v2977
    %v3053 = vpop.f32.mrb[0].mxu0
    %v3054 = vadd.f32 0.0, %v3053
    %v3055 = vpop.f32.mrb[0].mxu0
    %v3056 = vpop.f32.mrb[0].mxu0
    %v3057 = vpop.f32.mrb[0].mxu0
    %3058 = vdwg.mxu0
    %v3059 = vadd.f32 %v2974, %v3013
    %v3060 = vxor.u32 %v3059, 2147483648
    %v3061 = vmul.f32 %v3060, 1.442695
    %v3062 = vpow.pop %v3061
    %v3063 = vadd.f32 %v3062, 1.0
    %v3064 = vrcp.pop %v3063
    %v3065 = vmul.f32 1.0, %v3064
    %v3066 = vadd.f32 %v2975, %v3015
    %v3067 = vxor.u32 %v3066, 2147483648
    %v3068 = vmul.f32 %v3067, 1.442695
    %v3069 = vpow.pop %v3068
    %v3070 = vadd.f32 %v3069, 1.0
    %v3071 = vrcp.pop %v3070
    %v3072 = vmul.f32 1.0, %v3071
    %v3073 = vadd.f32 %v3054, %v2192
    %v3074 = vmul.f32 %v3065, %v3073
    %v3075 = vadd.f32 %v2976, %v3074
    %v3076 = vtanh.pop %v3075
    %v3077 = vsub.f32 1.0, %v3072
    %v3078 = vmul.f32 %v3077, %v3076
    %v3079 = vmul.f32 %v3072, %v2971
    %v3080 = vadd.f32 %v3078, %v3079
    %s3081 = scalar_lea.vmem [#allocation4], 48
    %3082 = vst [vmem:[%s3081] sm:$0xff] %v3080
    %v3083 = vld [vmem:[%s1656] sm:$0xff]
    %v3084 = vld [vmem:[%s1656 + $0x8] sm:$0xff]
    %v3085 = vld [vmem:[%s1656 + $0x10] sm:$0xff]
    %v3086 = vpack.c.bf16 %v3080, %v3080
    %3087 = vmatprep.subr.bf16.mxu0 %v2278
    %3088 = vmatpush1.bf16.msra.mxu0 %v2277
    %3089 = vmatprep.subr.bf16.mxu0 %v2281
    %3090 = vmatpush1.bf16.msra.mxu0 %v2280
    %3091 = vmatprep.subr.bf16.mxu0 %v2284
    %3092 = vmatpush1.bf16.msra.mxu0 %v2283
    %3093 = vmatprep.subr.bf16.mxu0 %v2287
    %3094 = vmatpush1.bf16.msra.mxu0 %v2286
    %3095 = vmatprep.subr.bf16.mxu0 %v2290
    %3096 = vmatpush1.bf16.msra.mxu0 %v2289
    %3097 = vmatprep.subr.bf16.mxu0 %v2293
    %3098 = vmatpush1.bf16.msra.mxu0 %v2292
    %3099 = vmatprep.subr.bf16.mxu0 %v2296
    %3100 = vmatpush1.bf16.msra.mxu0 %v2295
    %3101 = vmatprep.subr.bf16.mxu0 %v2299
    %3102 = vmatpush1.bf16.msra.mxu0 %v2298
    %3103 = vmatprep.subr.bf16.mxu0 0
    %3104 = vmatpush1.bf16.msra.mxu0 0
    %3105 = vmatprep.subr.bf16.mxu0 0
    %3106 = vmatpush1.bf16.msra.mxu0 0
    %3107 = vmatprep.subr.bf16.mxu0 0
    %3108 = vmatpush1.bf16.msra.mxu0 0
    %3109 = vmatprep.subr.bf16.mxu0 0
    %3110 = vmatpush1.bf16.msra.mxu0 0
    %3111 = vmatprep.subr.bf16.mxu0 0
    %3112 = vmatpush1.bf16.msra.mxu0 0
    %3113 = vmatprep.subr.bf16.mxu0 0
    %3114 = vmatpush1.bf16.msra.mxu0 0
    %3115 = vmatprep.subr.bf16.mxu0 0
    %3116 = vmatpush1.bf16.msra.mxu0 0
    %3117 = vmatprep.subr.bf16.mxu0 0
    %3118 = vmatpush1.bf16.msra.mxu0 0
    %3119 = vmatprep.mubr.bf16.mxu0 0
    %3120 = vmatmul.mubr.bf16.gmra.mrb[0].mxu0 %v3086
    %v3121 = vpop.f32.mrb[0].mxu0
    %v3122 = vadd.f32 0.0, %v3121
    %v3123 = vpop.f32.mrb[0].mxu0
    %v3124 = vadd.f32 0.0, %v3123
    %v3125 = vpop.f32.mrb[0].mxu0
    %v3126 = vpop.f32.mrb[0].mxu0
    %3127 = vdwg.mxu0
    %3128 = vmatprep.subr.bf16.mxu0 0
    %3129 = vmatpush1.bf16.msra.mxu0 %v2279
    %3130 = vmatprep.subr.bf16.mxu0 0
    %3131 = vmatpush1.bf16.msra.mxu0 %v2282
    %3132 = vmatprep.subr.bf16.mxu0 0
    %3133 = vmatpush1.bf16.msra.mxu0 %v2285
    %3134 = vmatprep.subr.bf16.mxu0 0
    %3135 = vmatpush1.bf16.msra.mxu0 %v2288
    %3136 = vmatprep.subr.bf16.mxu0 0
    %3137 = vmatpush1.bf16.msra.mxu0 %v2291
    %3138 = vmatprep.subr.bf16.mxu0 0
    %3139 = vmatpush1.bf16.msra.mxu0 %v2294
    %3140 = vmatprep.subr.bf16.mxu0 0
    %3141 = vmatpush1.bf16.msra.mxu0 %v2297
    %3142 = vmatprep.subr.bf16.mxu0 0
    %3143 = vmatpush1.bf16.msra.mxu0 %v2300
    %3144 = vmatprep.subr.bf16.mxu0 0
    %3145 = vmatpush1.bf16.msra.mxu0 0
    %3146 = vmatprep.subr.bf16.mxu0 0
    %3147 = vmatpush1.bf16.msra.mxu0 0
    %3148 = vmatprep.subr.bf16.mxu0 0
    %3149 = vmatpush1.bf16.msra.mxu0 0
    %3150 = vmatprep.subr.bf16.mxu0 0
    %3151 = vmatpush1.bf16.msra.mxu0 0
    %3152 = vmatprep.subr.bf16.mxu0 0
    %3153 = vmatpush1.bf16.msra.mxu0 0
    %3154 = vmatprep.subr.bf16.mxu0 0
    %3155 = vmatpush1.bf16.msra.mxu0 0
    %3156 = vmatprep.subr.bf16.mxu0 0
    %3157 = vmatpush1.bf16.msra.mxu0 0
    %3158 = vmatprep.subr.bf16.mxu0 0
    %3159 = vmatpush1.bf16.msra.mxu0 0
    %3160 = vmatprep.mubr.bf16.mxu0 0
    %3161 = vmatmul.mubr.bf16.gmra.mrb[0].mxu0 %v3086
    %v3162 = vpop.f32.mrb[0].mxu0
    %v3163 = vadd.f32 0.0, %v3162
    %v3164 = vpop.f32.mrb[0].mxu0
    %v3165 = vpop.f32.mrb[0].mxu0
    %v3166 = vpop.f32.mrb[0].mxu0
    %3167 = vdwg.mxu0
    %v3168 = vadd.f32 %v3083, %v3122
    %v3169 = vxor.u32 %v3168, 2147483648
    %v3170 = vmul.f32 %v3169, 1.442695
    %v3171 = vpow.pop %v3170
    %v3172 = vadd.f32 %v3171, 1.0
    %v3173 = vrcp.pop %v3172
    %v3174 = vmul.f32 1.0, %v3173
    %v3175 = vadd.f32 %v3084, %v3124
    %v3176 = vxor.u32 %v3175, 2147483648
    %v3177 = vmul.f32 %v3176, 1.442695
    %v3178 = vpow.pop %v3177
    %v3179 = vadd.f32 %v3178, 1.0
    %v3180 = vrcp.pop %v3179
    %v3181 = vmul.f32 1.0, %v3180
    %v3182 = vadd.f32 %v3163, %v2192
    %v3183 = vmul.f32 %v3174, %v3182
    %v3184 = vadd.f32 %v3085, %v3183
    %v3185 = vtanh.pop %v3184
    %v3186 = vsub.f32 1.0, %v3181
    %v3187 = vmul.f32 %v3186, %v3185
    %v3188 = vmul.f32 %v3181, %v3080
    %v3189 = vadd.f32 %v3187, %v3188
    %s3190 = scalar_lea.vmem [#allocation4], 56
    %3191 = vst [vmem:[%s3190] sm:$0xff] %v3189
    %v3192 = vlaneseq
    %v3193 = vand.u32 %v3192, 127
    %vm3194 = vcmp.lt.s32.totalorder %v3193, 0
    %v3195 = vsub.s32 0, %v3193
    %v3196 = vsel %vm3194, %v3195, %v3193
    %v3197 = vshrl.u32 %v3196, 5
    %v3198 = vand.u32 %v3196, 31
    %v3199 = vsub.s32 0, %v3198
    %v3200 = vsel %vm3194, %v3199, %v3198
    %vm3201 = vcmp.ne.s32.totalorder %v3200, 0
    %vm3202 = vcmp.lt.s32.totalorder %v3200, 0
    %vm3203 = vmand %vm3202, %vm3201
    %v3204 = vadd.s32 %v3200, 32
    %v3205 = vsel %vm3203, %v3204, %v3200
    %vm3206 = vcmp.lt.s32.totalorder %v3205, 16
    %v3207 = vld [vmem:[#allocation4] sm:$0xff]
    %v3208 = vld [vmem:[#allocation4 + $0x38] sm:$0xff]
    %v3209 = vsel %vm3206, %v3207, %v3208
    %3210 = vst [vmem:[#allocation5] sm:$0xff] %v3209
    %v3211 = vld [vmem:[#allocation4 + $0x8] sm:$0xff]
    %v3212 = vld [vmem:[#allocation4 + $0x30] sm:$0xff]
    %v3213 = vsel %vm3206, %v3211, %v3212
    %3214 = vst [vmem:[#allocation5 + $0x8] sm:$0xff] %v3213
    %v3215 = vld [vmem:[#allocation4 + $0x10] sm:$0xff]
    %v3216 = vld [vmem:[#allocation4 + $0x28] sm:$0xff]
    %v3217 = vsel %vm3206, %v3215, %v3216
    %3218 = vst [vmem:[#allocation5 + $0x10] sm:$0xff] %v3217
    %v3219 = vld [vmem:[#allocation4 + $0x18] sm:$0xff]
    %v3220 = vld [vmem:[#allocation4 + $0x20] sm:$0xff]
    %v3221 = vsel %vm3206, %v3219, %v3220
    %3222 = vst [vmem:[#allocation5 + $0x18] sm:$0xff] %v3221
    %v3223 = vld [vmem:[#allocation4 + $0x20] sm:$0xff]
    %v3224 = vld [vmem:[#allocation4 + $0x18] sm:$0xff]
    %v3225 = vsel %vm3206, %v3223, %v3224
    %3226 = vst [vmem:[#allocation5 + $0x20] sm:$0xff] %v3225
    %v3227 = vld [vmem:[#allocation4 + $0x28] sm:$0xff]
    %v3228 = vld [vmem:[#allocation4 + $0x10] sm:$0xff]
    %v3229 = vsel %vm3206, %v3227, %v3228
    %3230 = vst [vmem:[#allocation5 + $0x28] sm:$0xff] %v3229
    %v3231 = vld [vmem:[#allocation4 + $0x30] sm:$0xff]
    %v3232 = vld [vmem:[#allocation4 + $0x8] sm:$0xff]
    %v3233 = vsel %vm3206, %v3231, %v3232
    %3234 = vst [vmem:[#allocation5 + $0x30] sm:$0xff] %v3233
    %v3235 = vld [vmem:[#allocation4 + $0x38] sm:$0xff]
    %v3236 = vld [vmem:[#allocation4] sm:$0xff]
    %v3237 = vsel %vm3206, %v3235, %v3236
    %3238 = vst [vmem:[#allocation5 + $0x38] sm:$0xff] %v3237
    %v3239 = vld [vmem:[#allocation5] sm:$0xff]
    %v3240 = vld [vmem:[#allocation5 + $0x8] sm:$0xff]
    %v3241 = vld [vmem:[#allocation5 + $0x10] sm:$0xff]
    %v3242 = vld [vmem:[#allocation5 + $0x18] sm:$0xff]
    %v3243 = vld [vmem:[#allocation5 + $0x20] sm:$0xff]
    %v3244 = vld [vmem:[#allocation5 + $0x28] sm:$0xff]
    %v3245 = vld [vmem:[#allocation5 + $0x30] sm:$0xff]
    %v3246 = vld [vmem:[#allocation5 + $0x38] sm:$0xff]
    %v3247 = vld [vmem:[#allocation19] sm:$0x1]
    %v3248 = vld [vmem:[#allocation20] sm:$0x1]
    %v3249 = vld [vmem:[%s23] sm:$0xff]
    %v3250 = vld [vmem:[%s23 + $0x8] sm:$0xff]
    %v3251 = vld [vmem:[%s23 + $0x10] sm:$0xff]
    %v3252 = vld [vmem:[%s23 + $0x18] sm:$0xff]
    %v3253 = vld [vmem:[#allocation22] sm:$0x1]
    %v3254 = vld [vmem:[%s27] sm:$0xff]
    %v3255 = vld [vmem:[%s27 + $0x8] sm:$0xff]
    %v3256 = vld [vmem:[%s29] sm:$0x1]
    %v3257 = vld [vmem:[#allocation23] sm:$0xff]
    %v3258 = vld [vmem:[#allocation23 + $0x8] sm:$0xff]
    %v3259 = vld [vmem:[#allocation23 + $0x10] sm:$0xff]
    %v3260 = vld [vmem:[#allocation23 + $0x18] sm:$0xff]
    %v3261 = vld [vmem:[%s33] sm:$0x1]
    %vm3262 = vcmask 261120
    %v3263 = vsel %vm3262, %v3239, 0.0
    %3264 = vadd.xlane.f32.xlu0 %v3263
    %v3265 = vpop.xlane.xlu0 %3264
    %v3266 = vsel %vm3262, %v3240, 0.0
    %3267 = vadd.xlane.f32.xlu0 %v3266
    %v3268 = vpop.xlane.xlu0 %3267
    %v3269 = vsel %vm3262, %v3241, 0.0
    %3270 = vadd.xlane.f32.xlu0 %v3269
    %v3271 = vpop.xlane.xlu0 %3270
    %v3272 = vsel %vm3262, %v3242, 0.0
    %3273 = vadd.xlane.f32.xlu0 %v3272
    %v3274 = vpop.xlane.xlu0 %3273
    %v3275 = vsel %vm3262, %v3243, 0.0
    %3276 = vadd.xlane.f32.xlu0 %v3275
    %v3277 = vpop.xlane.xlu0 %3276
    %v3278 = vsel %vm3262, %v3244, 0.0
    %3279 = vadd.xlane.f32.xlu0 %v3278
    %v3280 = vpop.xlane.xlu0 %3279
    %v3281 = vsel %vm3262, %v3245, 0.0
    %3282 = vadd.xlane.f32.xlu0 %v3281
    %v3283 = vpop.xlane.xlu0 %3282
    %v3284 = vsel %vm3262, %v3246, 0.0
    %3285 = vadd.xlane.f32.xlu0 %v3284
    %v3286 = vpop.xlane.xlu0 %3285
    %v3287 = vrcp.pop 32.0
    %v3288 = vmul.f32 %v3265, %v3287
    %v3289 = vmul.f32 %v3268, %v3287
    %v3290 = vmul.f32 %v3271, %v3287
    %v3291 = vmul.f32 %v3274, %v3287
    %v3292 = vmul.f32 %v3277, %v3287
    %v3293 = vmul.f32 %v3280, %v3287
    %v3294 = vmul.f32 %v3283, %v3287
    %v3295 = vmul.f32 %v3286, %v3287
    %v3296 = vsub.f32 %v3239, %v3288
    %v3297 = vsub.f32 %v3240, %v3289
    %v3298 = vsub.f32 %v3241, %v3290
    %v3299 = vsub.f32 %v3242, %v3291
    %v3300 = vsub.f32 %v3243, %v3292
    %v3301 = vsub.f32 %v3244, %v3293
    %v3302 = vsub.f32 %v3245, %v3294
    %v3303 = vsub.f32 %v3246, %v3295
    %v3304 = vmul.f32 %v3296, %v3296
    %v3305 = vmul.f32 %v3297, %v3297
    %v3306 = vmul.f32 %v3298, %v3298
    %v3307 = vmul.f32 %v3299, %v3299
    %v3308 = vmul.f32 %v3300, %v3300
    %v3309 = vmul.f32 %v3301, %v3301
    %v3310 = vmul.f32 %v3302, %v3302
    %v3311 = vmul.f32 %v3303, %v3303
    %v3312 = vsel %vm3262, %v3304, 0.0
    %3313 = vadd.xlane.f32.xlu0 %v3312
    %v3314 = vpop.xlane.xlu0 %3313
    %v3315 = vsel %vm3262, %v3305, 0.0
    %3316 = vadd.xlane.f32.xlu0 %v3315
    %v3317 = vpop.xlane.xlu0 %3316
    %v3318 = vsel %vm3262, %v3306, 0.0
    %3319 = vadd.xlane.f32.xlu0 %v3318
    %v3320 = vpop.xlane.xlu0 %3319
    %v3321 = vsel %vm3262, %v3307, 0.0
    %3322 = vadd.xlane.f32.xlu0 %v3321
    %v3323 = vpop.xlane.xlu0 %3322
    %v3324 = vsel %vm3262, %v3308, 0.0
    %3325 = vadd.xlane.f32.xlu0 %v3324
    %v3326 = vpop.xlane.xlu0 %3325
    %v3327 = vsel %vm3262, %v3309, 0.0
    %3328 = vadd.xlane.f32.xlu0 %v3327
    %v3329 = vpop.xlane.xlu0 %3328
    %v3330 = vsel %vm3262, %v3310, 0.0
    %3331 = vadd.xlane.f32.xlu0 %v3330
    %v3332 = vpop.xlane.xlu0 %3331
    %v3333 = vsel %vm3262, %v3311, 0.0
    %3334 = vadd.xlane.f32.xlu0 %v3333
    %v3335 = vpop.xlane.xlu0 %3334
    %v3336 = vmul.f32 %v3314, %v3287
    %v3337 = vmul.f32 %v3317, %v3287
    %v3338 = vmul.f32 %v3320, %v3287
    %v3339 = vmul.f32 %v3323, %v3287
    %v3340 = vmul.f32 %v3326, %v3287
    %v3341 = vmul.f32 %v3329, %v3287
    %v3342 = vmul.f32 %v3332, %v3287
    %v3343 = vmul.f32 %v3335, %v3287
    %v3344 = vadd.f32 %v3336, 1e-05
    %v3345 = vadd.f32 %v3337, 1e-05
    %v3346 = vadd.f32 %v3338, 1e-05
    %v3347 = vadd.f32 %v3339, 1e-05
    %v3348 = vadd.f32 %v3340, 1e-05
    %v3349 = vadd.f32 %v3341, 1e-05
    %v3350 = vadd.f32 %v3342, 1e-05
    %v3351 = vadd.f32 %v3343, 1e-05
    %v3352 = vrsqrt.pop %v3344
    %v3353 = vrsqrt.pop %v3345
    %v3354 = vrsqrt.pop %v3346
    %v3355 = vrsqrt.pop %v3347
    %v3356 = vrsqrt.pop %v3348
    %v3357 = vrsqrt.pop %v3349
    %v3358 = vrsqrt.pop %v3350
    %v3359 = vrsqrt.pop %v3351
    %v3360 = vmul.f32 %v3296, %v3352
    %v3361 = vmul.f32 %v3297, %v3353
    %v3362 = vmul.f32 %v3298, %v3354
    %v3363 = vmul.f32 %v3299, %v3355
    %v3364 = vmul.f32 %v3300, %v3356
    %v3365 = vmul.f32 %v3301, %v3357
    %v3366 = vmul.f32 %v3302, %v3358
    %v3367 = vmul.f32 %v3303, %v3359
    %v3369 = vlaneseq
    %v3370 = vshrl.u32 %v3369, 7
    %v3371 = vsub.s32 0, %v3370
    %v3372 = vrot.slane %v3247, %v3371
    %v3374 = vmul.f32 %v3360, %v3372
    %v3375 = vmul.f32 %v3361, %v3372
    %v3376 = vmul.f32 %v3362, %v3372
    %v3377 = vmul.f32 %v3363, %v3372
    %v3378 = vmul.f32 %v3364, %v3372
    %v3379 = vmul.f32 %v3365, %v3372
    %v3380 = vmul.f32 %v3366, %v3372
    %v3381 = vmul.f32 %v3367, %v3372
    %v3383 = vlaneseq
    %v3384 = vshrl.u32 %v3383, 7
    %v3385 = vsub.s32 0, %v3384
    %v3386 = vrot.slane %v3248, %v3385
    %v3388 = vadd.f32 %v3374, %v3386
    %v3389 = vadd.f32 %v3375, %v3386
    %v3390 = vadd.f32 %v3376, %v3386
    %v3391 = vadd.f32 %v3377, %v3386
    %v3392 = vadd.f32 %v3378, %v3386
    %v3393 = vadd.f32 %v3379, %v3386
    %v3394 = vadd.f32 %v3380, %v3386
    %v3395 = vadd.f32 %v3381, %v3386
    %v3397 = vlaneseq
    %v3398 = vshrl.u32 %v3397, 7
    %v3399 = vsub.s32 0, %v3398
    %v3400 = vrot.slane %v3253, %v3399
    %v3403 = vsel %vm3262, %v3388, 0
    %v3406 = vsel %vm3262, %v3389, 0
    %v3409 = vsel %vm3262, %v3390, 0
    %v3412 = vsel %vm3262, %v3391, 0
    %v3415 = vsel %vm3262, %v3392, 0
    %v3418 = vsel %vm3262, %v3393, 0
    %v3421 = vsel %vm3262, %v3394, 0
    %v3424 = vsel %vm3262, %v3395, 0
    %3426 = vmatprep.subr.mxu0 0.0
    %3427 = vmatpush1.msra.mxu0 %v3249
    %3428 = vmatprep.subr.mxu0 0.0
    %3429 = vmatpush1.msra.mxu0 %v3250
    %3430 = vmatprep.subr.mxu0 0.0
    %3431 = vmatpush1.msra.mxu0 %v3251
    %3432 = vmatprep.subr.mxu0 0.0
    %3433 = vmatpush1.msra.mxu0 %v3252
    %3434 = vmatprep.subr.mxu0 0.0
    %3435 = vmatpush1.msra.mxu0 0.0
    %3436 = vmatprep.subr.mxu0 0.0
    %3437 = vmatpush1.msra.mxu0 0.0
    %3438 = vmatprep.subr.mxu0 0.0
    %3439 = vmatpush1.msra.mxu0 0.0
    %3440 = vmatprep.subr.mxu0 0.0
    %3441 = vmatpush1.msra.mxu0 0.0
    %3442 = vmatprep.subr.mxu0 0.0
    %3443 = vmatpush1.msra.mxu0 0.0
    %3444 = vmatprep.subr.mxu0 0.0
    %3445 = vmatpush1.msra.mxu0 0.0
    %3446 = vmatprep.subr.mxu0 0.0
    %3447 = vmatpush1.msra.mxu0 0.0
    %3448 = vmatprep.subr.mxu0 0.0
    %3449 = vmatpush1.msra.mxu0 0.0
    %3450 = vmatprep.subr.mxu0 0.0
    %3451 = vmatpush1.msra.mxu0 0.0
    %3452 = vmatprep.subr.mxu0 0.0
    %3453 = vmatpush1.msra.mxu0 0.0
    %3454 = vmatprep.subr.mxu0 0.0
    %3455 = vmatpush1.msra.mxu0 0.0
    %3456 = vmatprep.subr.mxu0 0.0
    %3457 = vmatpush1.msra.mxu0 0.0
    %3458 = vmatprep.subr.mxu0 0.0
    %3459 = vmatpush1.msra.mxu0 0.0
    %3460 = vmatprep.subr.mxu0 0.0
    %3461 = vmatpush1.msra.mxu0 0.0
    %3462 = vmatprep.subr.mxu0 0.0
    %3463 = vmatpush1.msra.mxu0 0.0
    %3464 = vmatprep.subr.mxu0 0.0
    %3465 = vmatpush1.msra.mxu0 0.0
    %3466 = vmatprep.subr.mxu0 0.0
    %3467 = vmatpush1.msra.mxu0 0.0
    %3468 = vmatprep.subr.mxu0 0.0
    %3469 = vmatpush1.msra.mxu0 0.0
    %3470 = vmatprep.subr.mxu0 0.0
    %3471 = vmatpush1.msra.mxu0 0.0
    %3472 = vmatprep.subr.mxu0 0.0
    %3473 = vmatpush1.msra.mxu0 0.0
    %3474 = vmatprep.subr.mxu0 0.0
    %3475 = vmatpush1.msra.mxu0 0.0
    %3476 = vmatprep.subr.mxu0 0.0
    %3477 = vmatpush1.msra.mxu0 0.0
    %3478 = vmatprep.subr.mxu0 0.0
    %3479 = vmatpush1.msra.mxu0 0.0
    %3480 = vmatprep.subr.mxu0 0.0
    %3481 = vmatpush1.msra.mxu0 0.0
    %3482 = vmatprep.subr.mxu0 0.0
    %3483 = vmatpush1.msra.mxu0 0.0
    %3484 = vmatprep.subr.mxu0 0.0
    %3485 = vmatpush1.msra.mxu0 0.0
    %3486 = vmatprep.subr.mxu0 0.0
    %3487 = vmatpush1.msra.mxu0 0.0
    %3488 = vmatprep.subr.mxu0 0.0
    %3489 = vmatpush1.msra.mxu0 0.0
    %3490 = vmatprep.mubr.f32.mxu0 0.0
    %3491 = vmatmul.mubr.f32.gmra.mrb[0].mxu0 %v3403
    %v3492 = vpop.f32.mrb[0].mxu0
    %v3493 = vadd.f32 %v3400, %v3492
    %v3494 = vpop.f32.mrb[0].mxu0
    %3495 = vmatprep.mubr.f32.mxu0 0.0
    %3496 = vmatmul.mubr.f32.gmra.mrb[0].mxu0 %v3406
    %v3497 = vpop.f32.mrb[0].mxu0
    %v3498 = vadd.f32 %v3400, %v3497
    %v3499 = vpop.f32.mrb[0].mxu0
    %3500 = vmatprep.mubr.f32.mxu0 0.0
    %3501 = vmatmul.mubr.f32.gmra.mrb[0].mxu0 %v3409
    %v3502 = vpop.f32.mrb[0].mxu0
    %v3503 = vadd.f32 %v3400, %v3502
    %v3504 = vpop.f32.mrb[0].mxu0
    %3505 = vmatprep.mubr.f32.mxu0 0.0
    %3506 = vmatmul.mubr.f32.gmra.mrb[0].mxu0 %v3412
    %v3507 = vpop.f32.mrb[0].mxu0
    %v3508 = vadd.f32 %v3400, %v3507
    %v3509 = vpop.f32.mrb[0].mxu0
    %3510 = vmatprep.mubr.f32.mxu0 0.0
    %3511 = vmatmul.mubr.f32.gmra.mrb[0].mxu0 %v3415
    %v3512 = vpop.f32.mrb[0].mxu0
    %v3513 = vadd.f32 %v3400, %v3512
    %v3514 = vpop.f32.mrb[0].mxu0
    %3515 = vmatprep.mubr.f32.mxu0 0.0
    %3516 = vmatmul.mubr.f32.gmra.mrb[0].mxu0 %v3418
    %v3517 = vpop.f32.mrb[0].mxu0
    %v3518 = vadd.f32 %v3400, %v3517
    %v3519 = vpop.f32.mrb[0].mxu0
    %3520 = vmatprep.mubr.f32.mxu0 0.0
    %3521 = vmatmul.mubr.f32.gmra.mrb[0].mxu0 %v3421
    %v3522 = vpop.f32.mrb[0].mxu0
    %v3523 = vadd.f32 %v3400, %v3522
    %v3524 = vpop.f32.mrb[0].mxu0
    %3525 = vmatprep.mubr.f32.mxu0 0.0
    %3526 = vmatmul.mubr.f32.gmra.mrb[0].mxu0 %v3424
    %v3527 = vpop.f32.mrb[0].mxu0
    %v3528 = vadd.f32 %v3400, %v3527
    %v3529 = vpop.f32.mrb[0].mxu0
    %3530 = vdwg.mxu0
    %v3531 = vtanh.pop %v3493
    %v3532 = vtanh.pop %v3498
    %v3533 = vtanh.pop %v3503
    %v3534 = vtanh.pop %v3508
    %v3535 = vtanh.pop %v3513
    %v3536 = vtanh.pop %v3518
    %v3537 = vtanh.pop %v3523
    %v3538 = vtanh.pop %v3528
    %v3540 = vlaneseq
    %v3541 = vshrl.u32 %v3540, 7
    %v3542 = vsub.s32 0, %v3541
    %v3543 = vrot.slane %v3256, %v3542
    %vm3545 = vcmask 130048
    %v3547 = vsel %vm3545, %v3531, 0
    %v3550 = vsel %vm3545, %v3532, 0
    %v3553 = vsel %vm3545, %v3533, 0
    %v3556 = vsel %vm3545, %v3534, 0
    %v3559 = vsel %vm3545, %v3535, 0
    %v3562 = vsel %vm3545, %v3536, 0
    %v3565 = vsel %vm3545, %v3537, 0
    %v3568 = vsel %vm3545, %v3538, 0
    %3570 = vmatprep.subr.mxu0 0.0
    %3571 = vmatpush1.msra.mxu0 %v3254
    %3572 = vmatprep.subr.mxu0 0.0
    %3573 = vmatpush1.msra.mxu0 %v3255
    %3574 = vmatprep.subr.mxu0 0.0
    %3575 = vmatpush1.msra.mxu0 0.0
    %3576 = vmatprep.subr.mxu0 0.0
    %3577 = vmatpush1.msra.mxu0 0.0
    %3578 = vmatprep.subr.mxu0 0.0
    %3579 = vmatpush1.msra.mxu0 0.0
    %3580 = vmatprep.subr.mxu0 0.0
    %3581 = vmatpush1.msra.mxu0 0.0
    %3582 = vmatprep.subr.mxu0 0.0
    %3583 = vmatpush1.msra.mxu0 0.0
    %3584 = vmatprep.subr.mxu0 0.0
    %3585 = vmatpush1.msra.mxu0 0.0
    %3586 = vmatprep.subr.mxu0 0.0
    %3587 = vmatpush1.msra.mxu0 0.0
    %3588 = vmatprep.subr.mxu0 0.0
    %3589 = vmatpush1.msra.mxu0 0.0
    %3590 = vmatprep.subr.mxu0 0.0
    %3591 = vmatpush1.msra.mxu0 0.0
    %3592 = vmatprep.subr.mxu0 0.0
    %3593 = vmatpush1.msra.mxu0 0.0
    %3594 = vmatprep.subr.mxu0 0.0
    %3595 = vmatpush1.msra.mxu0 0.0
    %3596 = vmatprep.subr.mxu0 0.0
    %3597 = vmatpush1.msra.mxu0 0.0
    %3598 = vmatprep.subr.mxu0 0.0
    %3599 = vmatpush1.msra.mxu0 0.0
    %3600 = vmatprep.subr.mxu0 0.0
    %3601 = vmatpush1.msra.mxu0 0.0
    %3602 = vmatprep.subr.mxu0 0.0
    %3603 = vmatpush1.msra.mxu0 0.0
    %3604 = vmatprep.subr.mxu0 0.0
    %3605 = vmatpush1.msra.mxu0 0.0
    %3606 = vmatprep.subr.mxu0 0.0
    %3607 = vmatpush1.msra.mxu0 0.0
    %3608 = vmatprep.subr.mxu0 0.0
    %3609 = vmatpush1.msra.mxu0 0.0
    %3610 = vmatprep.subr.mxu0 0.0
    %3611 = vmatpush1.msra.mxu0 0.0
    %3612 = vmatprep.subr.mxu0 0.0
    %3613 = vmatpush1.msra.mxu0 0.0
    %3614 = vmatprep.subr.mxu0 0.0
    %3615 = vmatpush1.msra.mxu0 0.0
    %3616 = vmatprep.subr.mxu0 0.0
    %3617 = vmatpush1.msra.mxu0 0.0
    %3618 = vmatprep.subr.mxu0 0.0
    %3619 = vmatpush1.msra.mxu0 0.0
    %3620 = vmatprep.subr.mxu0 0.0
    %3621 = vmatpush1.msra.mxu0 0.0
    %3622 = vmatprep.subr.mxu0 0.0
    %3623 = vmatpush1.msra.mxu0 0.0
    %3624 = vmatprep.subr.mxu0 0.0
    %3625 = vmatpush1.msra.mxu0 0.0
    %3626 = vmatprep.subr.mxu0 0.0
    %3627 = vmatpush1.msra.mxu0 0.0
    %3628 = vmatprep.subr.mxu0 0.0
    %3629 = vmatpush1.msra.mxu0 0.0
    %3630 = vmatprep.subr.mxu0 0.0
    %3631 = vmatpush1.msra.mxu0 0.0
    %3632 = vmatprep.subr.mxu0 0.0
    %3633 = vmatpush1.msra.mxu0 0.0
    %3634 = vmatprep.mubr.f32.mxu0 0.0
    %3635 = vmatmul.mubr.f32.gmra.mrb[0].mxu0 %v3547
    %v3636 = vpop.f32.mrb[0].mxu0
    %v3637 = vadd.f32 %v3543, %v3636
    %v3638 = vpop.f32.mrb[0].mxu0
    %3639 = vmatprep.mubr.f32.mxu0 0.0
    %3640 = vmatmul.mubr.f32.gmra.mrb[0].mxu0 %v3550
    %v3641 = vpop.f32.mrb[0].mxu0
    %v3642 = vadd.f32 %v3543, %v3641
    %v3643 = vpop.f32.mrb[0].mxu0
    %3644 = vmatprep.mubr.f32.mxu0 0.0
    %3645 = vmatmul.mubr.f32.gmra.mrb[0].mxu0 %v3553
    %v3646 = vpop.f32.mrb[0].mxu0
    %v3647 = vadd.f32 %v3543, %v3646
    %v3648 = vpop.f32.mrb[0].mxu0
    %3649 = vmatprep.mubr.f32.mxu0 0.0
    %3650 = vmatmul.mubr.f32.gmra.mrb[0].mxu0 %v3556
    %v3651 = vpop.f32.mrb[0].mxu0
    %v3652 = vadd.f32 %v3543, %v3651
    %v3653 = vpop.f32.mrb[0].mxu0
    %3654 = vmatprep.mubr.f32.mxu0 0.0
    %3655 = vmatmul.mubr.f32.gmra.mrb[0].mxu0 %v3559
    %v3656 = vpop.f32.mrb[0].mxu0
    %v3657 = vadd.f32 %v3543, %v3656
    %v3658 = vpop.f32.mrb[0].mxu0
    %3659 = vmatprep.mubr.f32.mxu0 0.0
    %3660 = vmatmul.mubr.f32.gmra.mrb[0].mxu0 %v3562
    %v3661 = vpop.f32.mrb[0].mxu0
    %v3662 = vadd.f32 %v3543, %v3661
    %v3663 = vpop.f32.mrb[0].mxu0
    %3664 = vmatprep.mubr.f32.mxu0 0.0
    %3665 = vmatmul.mubr.f32.gmra.mrb[0].mxu0 %v3565
    %v3666 = vpop.f32.mrb[0].mxu0
    %v3667 = vadd.f32 %v3543, %v3666
    %v3668 = vpop.f32.mrb[0].mxu0
    %3669 = vmatprep.mubr.f32.mxu0 0.0
    %3670 = vmatmul.mubr.f32.gmra.mrb[0].mxu0 %v3568
    %v3671 = vpop.f32.mrb[0].mxu0
    %v3672 = vadd.f32 %v3543, %v3671
    %v3673 = vpop.f32.mrb[0].mxu0
    %3674 = vdwg.mxu0
    %vm3675 = vcmask 7168
    %v3676 = vsel %vm3675, %v3637, -inf
    %v3677 = vsel %vm3675, %v3642, -inf
    %v3678 = vsel %vm3675, %v3647, -inf
    %v3679 = vsel %vm3675, %v3652, -inf
    %v3680 = vsel %vm3675, %v3657, -inf
    %v3681 = vmax.f32 %v3676, %v3680
    %v3682 = vsel %vm3675, %v3662, -inf
    %v3683 = vmax.f32 %v3677, %v3682
    %v3684 = vsel %vm3675, %v3667, -inf
    %v3685 = vmax.f32 %v3678, %v3684
    %v3686 = vsel %vm3675, %v3672, -inf
    %v3687 = vmax.f32 %v3679, %v3686
    %v3688 = vmax.f32 %v3681, %v3683
    %v3689 = vmax.f32 %v3685, %v3687
    %v3690 = vmax.f32 %v3688, %v3689
    %v3691 = vsub.f32 %v3637, %v3690
    %v3692 = vsub.f32 %v3642, %v3690
    %v3693 = vsub.f32 %v3647, %v3690
    %v3694 = vsub.f32 %v3652, %v3690
    %v3695 = vsub.f32 %v3657, %v3690
    %v3696 = vsub.f32 %v3662, %v3690
    %v3697 = vsub.f32 %v3667, %v3690
    %v3698 = vsub.f32 %v3672, %v3690
    %v3699 = vmul.f32 %v3691, 1.442695
    %v3700 = vpow.pop %v3699
    %v3701 = vmul.f32 %v3692, 1.442695
    %v3702 = vpow.pop %v3701
    %v3703 = vmul.f32 %v3693, 1.442695
    %v3704 = vpow.pop %v3703
    %v3705 = vmul.f32 %v3694, 1.442695
    %v3706 = vpow.pop %v3705
    %v3707 = vmul.f32 %v3695, 1.442695
    %v3708 = vpow.pop %v3707
    %v3709 = vmul.f32 %v3696, 1.442695
    %v3710 = vpow.pop %v3709
    %v3711 = vmul.f32 %v3697, 1.442695
    %v3712 = vpow.pop %v3711
    %v3713 = vmul.f32 %v3698, 1.442695
    %v3714 = vpow.pop %v3713
    %v3715 = vsel %vm3675, %v3700, 0.0
    %v3716 = vsel %vm3675, %v3702, 0.0
    %v3717 = vadd.f32 %v3715, %v3716
    %v3718 = vsel %vm3675, %v3704, 0.0
    %v3719 = vadd.f32 %v3717, %v3718
    %v3720 = vsel %vm3675, %v3706, 0.0
    %v3721 = vadd.f32 %v3719, %v3720
    %v3722 = vsel %vm3675, %v3708, 0.0
    %v3723 = vadd.f32 %v3721, %v3722
    %v3724 = vsel %vm3675, %v3710, 0.0
    %v3725 = vadd.f32 %v3723, %v3724
    %v3726 = vsel %vm3675, %v3712, 0.0
    %v3727 = vadd.f32 %v3725, %v3726
    %v3728 = vsel %vm3675, %v3714, 0.0
    %v3729 = vadd.f32 %v3727, %v3728
    %v3730 = vrcp.pop %v3729
    %v3731 = vmul.f32 %v3700, %v3730
    %v3732 = vmul.f32 %v3702, %v3730
    %v3733 = vmul.f32 %v3704, %v3730
    %v3734 = vmul.f32 %v3706, %v3730
    %v3735 = vmul.f32 %v3708, %v3730
    %v3736 = vmul.f32 %v3710, %v3730
    %v3737 = vmul.f32 %v3712, %v3730
    %v3738 = vmul.f32 %v3714, %v3730
    %3740 = vset.pattern.permute.xlu0 0
    %3741 = vperm.xlu0 %3740, %v3731
    %v3742 = vpop.permute.xlu0 %3741
    %3745 = vset.pattern.permute.xlu0 0
    %3746 = vperm.xlu0 %3745, %v3732
    %v3747 = vpop.permute.xlu0 %3746
    %3750 = vset.pattern.permute.xlu0 0
    %3751 = vperm.xlu0 %3750, %v3733
    %v3752 = vpop.permute.xlu0 %3751
    %3755 = vset.pattern.permute.xlu0 0
    %3756 = vperm.xlu0 %3755, %v3734
    %v3757 = vpop.permute.xlu0 %3756
    %3760 = vset.pattern.permute.xlu0 0
    %3761 = vperm.xlu0 %3760, %v3735
    %v3762 = vpop.permute.xlu0 %3761
    %3765 = vset.pattern.permute.xlu0 0
    %3766 = vperm.xlu0 %3765, %v3736
    %v3767 = vpop.permute.xlu0 %3766
    %3770 = vset.pattern.permute.xlu0 0
    %3771 = vperm.xlu0 %3770, %v3737
    %v3772 = vpop.permute.xlu0 %3771
    %3775 = vset.pattern.permute.xlu0 0
    %3776 = vperm.xlu0 %3775, %v3738
    %v3777 = vpop.permute.xlu0 %3776
    %v3779 = vmul.f32 %v3388, %v3742
    %v3780 = vmul.f32 %v3389, %v3747
    %v3781 = vmul.f32 %v3390, %v3752
    %v3782 = vmul.f32 %v3391, %v3757
    %v3783 = vmul.f32 %v3392, %v3762
    %v3784 = vmul.f32 %v3393, %v3767
    %v3785 = vmul.f32 %v3394, %v3772
    %v3786 = vmul.f32 %v3395, %v3777
    %v3787 = vsel %vm3262, %v3779, 0.0
    %v3788 = vsel %vm3262, %v3780, 0.0
    %v3789 = vadd.f32 %v3787, %v3788
    %v3790 = vsel %vm3262, %v3781, 0.0
    %v3791 = vadd.f32 %v3789, %v3790
    %v3792 = vsel %vm3262, %v3782, 0.0
    %v3793 = vadd.f32 %v3791, %v3792
    %v3794 = vsel %vm3262, %v3783, 0.0
    %v3795 = vadd.f32 %v3793, %v3794
    %v3796 = vsel %vm3262, %v3784, 0.0
    %v3797 = vadd.f32 %v3795, %v3796
    %v3798 = vsel %vm3262, %v3785, 0.0
    %v3799 = vadd.f32 %v3797, %v3798
    %v3800 = vsel %vm3262, %v3786, 0.0
    %v3801 = vadd.f32 %v3799, %v3800
    %v3803 = vlaneseq
    %v3804 = vshrl.u32 %v3803, 7
    %v3805 = vsub.s32 0, %v3804
    %v3806 = vrot.slane %v3261, %v3805
    %v3809 = vsel %vm3262, %v3801, 0
    %3811 = vmatprep.subr.mxu0 0.0
    %3812 = vmatpush1.msra.mxu0 %v3257
    %3813 = vmatprep.subr.mxu0 0.0
    %3814 = vmatpush1.msra.mxu0 %v3258
    %3815 = vmatprep.subr.mxu0 0.0
    %3816 = vmatpush1.msra.mxu0 %v3259
    %3817 = vmatprep.subr.mxu0 0.0
    %3818 = vmatpush1.msra.mxu0 %v3260
    %3819 = vmatprep.subr.mxu0 0.0
    %3820 = vmatpush1.msra.mxu0 0.0
    %3821 = vmatprep.subr.mxu0 0.0
    %3822 = vmatpush1.msra.mxu0 0.0
    %3823 = vmatprep.subr.mxu0 0.0
    %3824 = vmatpush1.msra.mxu0 0.0
    %3825 = vmatprep.subr.mxu0 0.0
    %3826 = vmatpush1.msra.mxu0 0.0
    %3827 = vmatprep.subr.mxu0 0.0
    %3828 = vmatpush1.msra.mxu0 0.0
    %3829 = vmatprep.subr.mxu0 0.0
    %3830 = vmatpush1.msra.mxu0 0.0
    %3831 = vmatprep.subr.mxu0 0.0
    %3832 = vmatpush1.msra.mxu0 0.0
    %3833 = vmatprep.subr.mxu0 0.0
    %3834 = vmatpush1.msra.mxu0 0.0
    %3835 = vmatprep.subr.mxu0 0.0
    %3836 = vmatpush1.msra.mxu0 0.0
    %3837 = vmatprep.subr.mxu0 0.0
    %3838 = vmatpush1.msra.mxu0 0.0
    %3839 = vmatprep.subr.mxu0 0.0
    %3840 = vmatpush1.msra.mxu0 0.0
    %3841 = vmatprep.subr.mxu0 0.0
    %3842 = vmatpush1.msra.mxu0 0.0
    %3843 = vmatprep.subr.mxu0 0.0
    %3844 = vmatpush1.msra.mxu0 0.0
    %3845 = vmatprep.subr.mxu0 0.0
    %3846 = vmatpush1.msra.mxu0 0.0
    %3847 = vmatprep.subr.mxu0 0.0
    %3848 = vmatpush1.msra.mxu0 0.0
    %3849 = vmatprep.subr.mxu0 0.0
    %3850 = vmatpush1.msra.mxu0 0.0
    %3851 = vmatprep.subr.mxu0 0.0
    %3852 = vmatpush1.msra.mxu0 0.0
    %3853 = vmatprep.subr.mxu0 0.0
    %3854 = vmatpush1.msra.mxu0 0.0
    %3855 = vmatprep.subr.mxu0 0.0
    %3856 = vmatpush1.msra.mxu0 0.0
    %3857 = vmatprep.subr.mxu0 0.0
    %3858 = vmatpush1.msra.mxu0 0.0
    %3859 = vmatprep.subr.mxu0 0.0
    %3860 = vmatpush1.msra.mxu0 0.0
    %3861 = vmatprep.subr.mxu0 0.0
    %3862 = vmatpush1.msra.mxu0 0.0
    %3863 = vmatprep.subr.mxu0 0.0
    %3864 = vmatpush1.msra.mxu0 0.0
    %3865 = vmatprep.subr.mxu0 0.0
    %3866 = vmatpush1.msra.mxu0 0.0
    %3867 = vmatprep.subr.mxu0 0.0
    %3868 = vmatpush1.msra.mxu0 0.0
    %3869 = vmatprep.subr.mxu0 0.0
    %3870 = vmatpush1.msra.mxu0 0.0
    %3871 = vmatprep.subr.mxu0 0.0
    %3872 = vmatpush1.msra.mxu0 0.0
    %3873 = vmatprep.subr.mxu0 0.0
    %3874 = vmatpush1.msra.mxu0 0.0
    %3875 = vmatprep.mubr.f32.mxu0 0.0
    %3876 = vmatmul.mubr.f32.gmra.mrb[0].mxu0 %v3809
    %v3877 = vpop.f32.mrb[0].mxu0
    %v3878 = vadd.f32 %v3806, %v3877
    %v3879 = vpop.f32.mrb[0].mxu0
    %3880 = vdwg.mxu0
    %v3881 = vmul.f32 %v3878, 0.5
    %v3882 = vmul.f32 %v3878, 0.70710677
    %vm3883 = vcmp.ge.f32.partialorder %v3882, 0.0
    %v3884 = vsel %vm3883, 1.0, -1.0
    %v3885 = vand.u32 2147483647, %v3882
    %v3886 = vmul.f32 %v3885, 0.3275911
    %v3887 = vadd.f32 %v3886, 1.0
    %v3888 = vrcp.pop %v3887
    %v3889 = vmul.f32 1.0, %v3888
    %v3890 = vmul.f32 %v3889, 1.0614054
    %v3891 = vadd.f32 %v3890, -1.4531521
    %v3892 = vmul.f32 %v3891, %v3889
    %v3893 = vadd.f32 %v3892, 1.4214138
    %v3894 = vmul.f32 %v3893, %v3889
    %v3895 = vadd.f32 %v3894, -0.28449672
    %v3896 = vmul.f32 %v3895, %v3889
    %v3897 = vadd.f32 %v3896, 0.2548296
    %v3898 = vmul.f32 %v3897, %v3889
    %v3899 = vsub.f32 0.0, %v3885
    %v3900 = vmul.f32 %v3899, %v3885
    %v3901 = vmul.f32 %v3900, 1.442695
    %v3902 = vpow.pop %v3901
    %v3903 = vmul.f32 %v3898, %v3902
    %v3904 = vsub.f32 1.0, %v3903
    %v3905 = vmul.f32 %v3884, %v3904
    %v3906 = vadd.f32 %v3905, 1.0
    %v3907 = vmul.f32 %v3881, %v3906
    %s3908 = scalar_lea.vmem [#allocation19], 1
    %v3909 = vld [vmem:[%s3908] sm:$0x1]
    %s3910 = scalar_lea.vmem [#allocation20], 1
    %v3911 = vld [vmem:[%s3910] sm:$0x1]
    %s3912 = scalar_lea.vmem %s23, 32
    %v3913 = vld [vmem:[%s3912] sm:$0xff]
    %v3914 = vld [vmem:[%s3912 + $0x8] sm:$0xff]
    %v3915 = vld [vmem:[%s3912 + $0x10] sm:$0xff]
    %v3916 = vld [vmem:[%s3912 + $0x18] sm:$0xff]
    %s3917 = scalar_lea.vmem [#allocation22], 1
    %v3918 = vld [vmem:[%s3917] sm:$0x1]
    %s3919 = scalar_lea.vmem %s27, 16
    %v3920 = vld [vmem:[%s3919] sm:$0xff]
    %v3921 = vld [vmem:[%s3919 + $0x8] sm:$0xff]
    %s3922 = scalar_lea.vmem %s29, 1
    %v3923 = vld [vmem:[%s3922] sm:$0x1]
    %s3924 = scalar_lea.vmem [#allocation23], 32
    %v3925 = vld [vmem:[%s3924] sm:$0xff]
    %v3926 = vld [vmem:[%s3924 + $0x8] sm:$0xff]
    %v3927 = vld [vmem:[%s3924 + $0x10] sm:$0xff]
    %v3928 = vld [vmem:[%s3924 + $0x18] sm:$0xff]
    %s3929 = scalar_lea.vmem %s33, 1
    %v3930 = vld [vmem:[%s3929] sm:$0x1]
    %3939 = vrot.lane.b32.xlu0 %v3239, 96
    %v3940 = vpop.permute.xlu0 %3939
    %3941 = vrot.lane.b32.xlu0 %v3240, 96
    %v3942 = vpop.permute.xlu0 %3941
    %3943 = vrot.lane.b32.xlu0 %v3241, 96
    %v3944 = vpop.permute.xlu0 %3943
    %3945 = vrot.lane.b32.xlu0 %v3242, 96
    %v3946 = vpop.permute.xlu0 %3945
    %3947 = vrot.lane.b32.xlu0 %v3243, 96
    %v3948 = vpop.permute.xlu0 %3947
    %3949 = vrot.lane.b32.xlu0 %v3244, 96
    %v3950 = vpop.permute.xlu0 %3949
    %3951 = vrot.lane.b32.xlu0 %v3245, 96
    %v3952 = vpop.permute.xlu0 %3951
    %3953 = vrot.lane.b32.xlu0 %v3246, 96
    %v3954 = vpop.permute.xlu0 %3953
    %v3963 = vsel %vm3262, %v3940, 0.0
    %3964 = vadd.xlane.f32.xlu0 %v3963
    %v3965 = vpop.xlane.xlu0 %3964
    %v3966 = vsel %vm3262, %v3942, 0.0
    %3967 = vadd.xlane.f32.xlu0 %v3966
    %v3968 = vpop.xlane.xlu0 %3967
    %v3969 = vsel %vm3262, %v3944, 0.0
    %3970 = vadd.xlane.f32.xlu0 %v3969
    %v3971 = vpop.xlane.xlu0 %3970
    %v3972 = vsel %vm3262, %v3946, 0.0
    %3973 = vadd.xlane.f32.xlu0 %v3972
    %v3974 = vpop.xlane.xlu0 %3973
    %v3975 = vsel %vm3262, %v3948, 0.0
    %3976 = vadd.xlane.f32.xlu0 %v3975
    %v3977 = vpop.xlane.xlu0 %3976
    %v3978 = vsel %vm3262, %v3950, 0.0
    %3979 = vadd.xlane.f32.xlu0 %v3978
    %v3980 = vpop.xlane.xlu0 %3979
    %v3981 = vsel %vm3262, %v3952, 0.0
    %3982 = vadd.xlane.f32.xlu0 %v3981
    %v3983 = vpop.xlane.xlu0 %3982
    %v3984 = vsel %vm3262, %v3954, 0.0
    %3985 = vadd.xlane.f32.xlu0 %v3984
    %v3986 = vpop.xlane.xlu0 %3985
    %v3987 = vmul.f32 %v3965, %v3287
    %v3988 = vmul.f32 %v3968, %v3287
    %v3989 = vmul.f32 %v3971, %v3287
    %v3990 = vmul.f32 %v3974, %v3287
    %v3991 = vmul.f32 %v3977, %v3287
    %v3992 = vmul.f32 %v3980, %v3287
    %v3993 = vmul.f32 %v3983, %v3287
    %v3994 = vmul.f32 %v3986, %v3287
    %v3995 = vsub.f32 %v3239, %v3987
    %v3996 = vsub.f32 %v3240, %v3988
    %v3997 = vsub.f32 %v3241, %v3989
    %v3998 = vsub.f32 %v3242, %v3990
    %v3999 = vsub.f32 %v3243, %v3991
    %v4000 = vsub.f32 %v3244, %v3992
    %v4001 = vsub.f32 %v3245, %v3993
    %v4002 = vsub.f32 %v3246, %v3994
    %v4003 = vmul.f32 %v3995, %v3995
    %v4004 = vmul.f32 %v3996, %v3996
    %v4005 = vmul.f32 %v3997, %v3997
    %v4006 = vmul.f32 %v3998, %v3998
    %v4007 = vmul.f32 %v3999, %v3999
    %v4008 = vmul.f32 %v4000, %v4000
    %v4009 = vmul.f32 %v4001, %v4001
    %v4010 = vmul.f32 %v4002, %v4002
    %4019 = vrot.lane.b32.xlu0 %v4003, 96
    %v4020 = vpop.permute.xlu0 %4019
    %4021 = vrot.lane.b32.xlu0 %v4004, 96
    %v4022 = vpop.permute.xlu0 %4021
    %4023 = vrot.lane.b32.xlu0 %v4005, 96
    %v4024 = vpop.permute.xlu0 %4023
    %4025 = vrot.lane.b32.xlu0 %v4006, 96
    %v4026 = vpop.permute.xlu0 %4025
    %4027 = vrot.lane.b32.xlu0 %v4007, 96
    %v4028 = vpop.permute.xlu0 %4027
    %4029 = vrot.lane.b32.xlu0 %v4008, 96
    %v4030 = vpop.permute.xlu0 %4029
    %4031 = vrot.lane.b32.xlu0 %v4009, 96
    %v4032 = vpop.permute.xlu0 %4031
    %4033 = vrot.lane.b32.xlu0 %v4010, 96
    %v4034 = vpop.permute.xlu0 %4033
    %v4043 = vsel %vm3262, %v4020, 0.0
    %4044 = vadd.xlane.f32.xlu0 %v4043
    %v4045 = vpop.xlane.xlu0 %4044
    %v4046 = vsel %vm3262, %v4022, 0.0
    %4047 = vadd.xlane.f32.xlu0 %v4046
    %v4048 = vpop.xlane.xlu0 %4047
    %v4049 = vsel %vm3262, %v4024, 0.0
    %4050 = vadd.xlane.f32.xlu0 %v4049
    %v4051 = vpop.xlane.xlu0 %4050
    %v4052 = vsel %vm3262, %v4026, 0.0
    %4053 = vadd.xlane.f32.xlu0 %v4052
    %v4054 = vpop.xlane.xlu0 %4053
    %v4055 = vsel %vm3262, %v4028, 0.0
    %4056 = vadd.xlane.f32.xlu0 %v4055
    %v4057 = vpop.xlane.xlu0 %4056
    %v4058 = vsel %vm3262, %v4030, 0.0
    %4059 = vadd.xlane.f32.xlu0 %v4058
    %v4060 = vpop.xlane.xlu0 %4059
    %v4061 = vsel %vm3262, %v4032, 0.0
    %4062 = vadd.xlane.f32.xlu0 %v4061
    %v4063 = vpop.xlane.xlu0 %4062
    %v4064 = vsel %vm3262, %v4034, 0.0
    %4065 = vadd.xlane.f32.xlu0 %v4064
    %v4066 = vpop.xlane.xlu0 %4065
    %v4067 = vmul.f32 %v4045, %v3287
    %v4068 = vmul.f32 %v4048, %v3287
    %v4069 = vmul.f32 %v4051, %v3287
    %v4070 = vmul.f32 %v4054, %v3287
    %v4071 = vmul.f32 %v4057, %v3287
    %v4072 = vmul.f32 %v4060, %v3287
    %v4073 = vmul.f32 %v4063, %v3287
    %v4074 = vmul.f32 %v4066, %v3287
    %v4075 = vadd.f32 %v4067, 1e-05
    %v4076 = vadd.f32 %v4068, 1e-05
    %v4077 = vadd.f32 %v4069, 1e-05
    %v4078 = vadd.f32 %v4070, 1e-05
    %v4079 = vadd.f32 %v4071, 1e-05
    %v4080 = vadd.f32 %v4072, 1e-05
    %v4081 = vadd.f32 %v4073, 1e-05
    %v4082 = vadd.f32 %v4074, 1e-05
    %v4083 = vrsqrt.pop %v4075
    %v4084 = vrsqrt.pop %v4076
    %v4085 = vrsqrt.pop %v4077
    %v4086 = vrsqrt.pop %v4078
    %v4087 = vrsqrt.pop %v4079
    %v4088 = vrsqrt.pop %v4080
    %v4089 = vrsqrt.pop %v4081
    %v4090 = vrsqrt.pop %v4082
    %v4091 = vmul.f32 %v3995, %v4083
    %v4092 = vmul.f32 %v3996, %v4084
    %v4093 = vmul.f32 %v3997, %v4085
    %v4094 = vmul.f32 %v3998, %v4086
    %v4095 = vmul.f32 %v3999, %v4087
    %v4096 = vmul.f32 %v4000, %v4088
    %v4097 = vmul.f32 %v4001, %v4089
    %v4098 = vmul.f32 %v4002, %v4090
    %v4100 = vlaneseq
    %v4101 = vshrl.u32 %v4100, 7
    %v4102 = vsub.s32 0, %v4101
    %v4103 = vrot.slane %v3909, %v4102
    %4104 = vrot.lane.b32.xlu0 %v4103, 32
    %v4105 = vpop.permute.xlu0 %4104
    %v4107 = vmul.f32 %v4091, %v4105
    %v4108 = vmul.f32 %v4092, %v4105
    %v4109 = vmul.f32 %v4093, %v4105
    %v4110 = vmul.f32 %v4094, %v4105
    %v4111 = vmul.f32 %v4095, %v4105
    %v4112 = vmul.f32 %v4096, %v4105
    %v4113 = vmul.f32 %v4097, %v4105
    %v4114 = vmul.f32 %v4098, %v4105
    %v4116 = vlaneseq
    %v4117 = vshrl.u32 %v4116, 7
    %v4118 = vsub.s32 0, %v4117
    %v4119 = vrot.slane %v3911, %v4118
    %4120 = vrot.lane.b32.xlu0 %v4119, 32
    %v4121 = vpop.permute.xlu0 %4120
    %v4123 = vadd.f32 %v4107, %v4121
    %v4124 = vadd.f32 %v4108, %v4121
    %v4125 = vadd.f32 %v4109, %v4121
    %v4126 = vadd.f32 %v4110, %v4121
    %v4127 = vadd.f32 %v4111, %v4121
    %v4128 = vadd.f32 %v4112, %v4121
    %v4129 = vadd.f32 %v4113, %v4121
    %v4130 = vadd.f32 %v4114, %v4121
    %v4132 = vlaneseq
    %v4133 = vshrl.u32 %v4132, 7
    %v4134 = vsub.s32 0, %v4133
    %v4135 = vrot.slane %v3918, %v4134
    %4145 = vrot.lane.b32.xlu0 %v4123, 96
    %v4146 = vpop.permute.xlu0 %4145
    %4147 = vrot.lane.b32.xlu0 %v4124, 96
    %v4148 = vpop.permute.xlu0 %4147
    %4149 = vrot.lane.b32.xlu0 %v4125, 96
    %v4150 = vpop.permute.xlu0 %4149
    %4151 = vrot.lane.b32.xlu0 %v4126, 96
    %v4152 = vpop.permute.xlu0 %4151
    %4153 = vrot.lane.b32.xlu0 %v4127, 96
    %v4154 = vpop.permute.xlu0 %4153
    %4155 = vrot.lane.b32.xlu0 %v4128, 96
    %v4156 = vpop.permute.xlu0 %4155
    %4157 = vrot.lane.b32.xlu0 %v4129, 96
    %v4158 = vpop.permute.xlu0 %4157
    %4159 = vrot.lane.b32.xlu0 %v4130, 96
    %v4160 = vpop.permute.xlu0 %4159
    %v4161 = vsel %vm3262, %v4146, 0
    %v4163 = vsel %vm3262, %v4148, 0
    %v4165 = vsel %vm3262, %v4150, 0
    %v4167 = vsel %vm3262, %v4152, 0
    %v4169 = vsel %vm3262, %v4154, 0
    %v4171 = vsel %vm3262, %v4156, 0
    %v4173 = vsel %vm3262, %v4158, 0
    %v4175 = vsel %vm3262, %v4160, 0
    %4177 = vmatprep.subr.mxu0 0.0
    %4178 = vmatpush1.msra.mxu0 %v3913
    %4179 = vmatprep.subr.mxu0 0.0
    %4180 = vmatpush1.msra.mxu0 %v3914
    %4181 = vmatprep.subr.mxu0 0.0
    %4182 = vmatpush1.msra.mxu0 %v3915
    %4183 = vmatprep.subr.mxu0 0.0
    %4184 = vmatpush1.msra.mxu0 %v3916
    %4185 = vmatprep.subr.mxu0 0.0
    %4186 = vmatpush1.msra.mxu0 0.0
    %4187 = vmatprep.subr.mxu0 0.0
    %4188 = vmatpush1.msra.mxu0 0.0
    %4189 = vmatprep.subr.mxu0 0.0
    %4190 = vmatpush1.msra.mxu0 0.0
    %4191 = vmatprep.subr.mxu0 0.0
    %4192 = vmatpush1.msra.mxu0 0.0
    %4193 = vmatprep.subr.mxu0 0.0
    %4194 = vmatpush1.msra.mxu0 0.0
    %4195 = vmatprep.subr.mxu0 0.0
    %4196 = vmatpush1.msra.mxu0 0.0
    %4197 = vmatprep.subr.mxu0 0.0
    %4198 = vmatpush1.msra.mxu0 0.0
    %4199 = vmatprep.subr.mxu0 0.0
    %4200 = vmatpush1.msra.mxu0 0.0
    %4201 = vmatprep.subr.mxu0 0.0
    %4202 = vmatpush1.msra.mxu0 0.0
    %4203 = vmatprep.subr.mxu0 0.0
    %4204 = vmatpush1.msra.mxu0 0.0
    %4205 = vmatprep.subr.mxu0 0.0
    %4206 = vmatpush1.msra.mxu0 0.0
    %4207 = vmatprep.subr.mxu0 0.0
    %4208 = vmatpush1.msra.mxu0 0.0
    %4209 = vmatprep.subr.mxu0 0.0
    %4210 = vmatpush1.msra.mxu0 0.0
    %4211 = vmatprep.subr.mxu0 0.0
    %4212 = vmatpush1.msra.mxu0 0.0
    %4213 = vmatprep.subr.mxu0 0.0
    %4214 = vmatpush1.msra.mxu0 0.0
    %4215 = vmatprep.subr.mxu0 0.0
    %4216 = vmatpush1.msra.mxu0 0.0
    %4217 = vmatprep.subr.mxu0 0.0
    %4218 = vmatpush1.msra.mxu0 0.0
    %4219 = vmatprep.subr.mxu0 0.0
    %4220 = vmatpush1.msra.mxu0 0.0
    %4221 = vmatprep.subr.mxu0 0.0
    %4222 = vmatpush1.msra.mxu0 0.0
    %4223 = vmatprep.subr.mxu0 0.0
    %4224 = vmatpush1.msra.mxu0 0.0
    %4225 = vmatprep.subr.mxu0 0.0
    %4226 = vmatpush1.msra.mxu0 0.0
    %4227 = vmatprep.subr.mxu0 0.0
    %4228 = vmatpush1.msra.mxu0 0.0
    %4229 = vmatprep.subr.mxu0 0.0
    %4230 = vmatpush1.msra.mxu0 0.0
    %4231 = vmatprep.subr.mxu0 0.0
    %4232 = vmatpush1.msra.mxu0 0.0
    %4233 = vmatprep.subr.mxu0 0.0
    %4234 = vmatpush1.msra.mxu0 0.0
    %4235 = vmatprep.subr.mxu0 0.0
    %4236 = vmatpush1.msra.mxu0 0.0
    %4237 = vmatprep.subr.mxu0 0.0
    %4238 = vmatpush1.msra.mxu0 0.0
    %4239 = vmatprep.subr.mxu0 0.0
    %4240 = vmatpush1.msra.mxu0 0.0
    %4241 = vmatprep.mubr.f32.mxu0 0.0
    %4242 = vmatmul.mubr.f32.gmra.mrb[0].mxu0 %v4161
    %v4243 = vpop.f32.mrb[0].mxu0
    %v4244 = vadd.f32 %v4135, %v4243
    %v4245 = vpop.f32.mrb[0].mxu0
    %4246 = vmatprep.mubr.f32.mxu0 0.0
    %4247 = vmatmul.mubr.f32.gmra.mrb[0].mxu0 %v4163
    %v4248 = vpop.f32.mrb[0].mxu0
    %v4249 = vadd.f32 %v4135, %v4248
    %v4250 = vpop.f32.mrb[0].mxu0
    %4251 = vmatprep.mubr.f32.mxu0 0.0
    %4252 = vmatmul.mubr.f32.gmra.mrb[0].mxu0 %v4165
    %v4253 = vpop.f32.mrb[0].mxu0
    %v4254 = vadd.f32 %v4135, %v4253
    %v4255 = vpop.f32.mrb[0].mxu0
    %4256 = vmatprep.mubr.f32.mxu0 0.0
    %4257 = vmatmul.mubr.f32.gmra.mrb[0].mxu0 %v4167
    %v4258 = vpop.f32.mrb[0].mxu0
    %v4259 = vadd.f32 %v4135, %v4258
    %v4260 = vpop.f32.mrb[0].mxu0
    %4261 = vmatprep.mubr.f32.mxu0 0.0
    %4262 = vmatmul.mubr.f32.gmra.mrb[0].mxu0 %v4169
    %v4263 = vpop.f32.mrb[0].mxu0
    %v4264 = vadd.f32 %v4135, %v4263
    %v4265 = vpop.f32.mrb[0].mxu0
    %4266 = vmatprep.mubr.f32.mxu0 0.0
    %4267 = vmatmul.mubr.f32.gmra.mrb[0].mxu0 %v4171
    %v4268 = vpop.f32.mrb[0].mxu0
    %v4269 = vadd.f32 %v4135, %v4268
    %v4270 = vpop.f32.mrb[0].mxu0
    %4271 = vmatprep.mubr.f32.mxu0 0.0
    %4272 = vmatmul.mubr.f32.gmra.mrb[0].mxu0 %v4173
    %v4273 = vpop.f32.mrb[0].mxu0
    %v4274 = vadd.f32 %v4135, %v4273
    %v4275 = vpop.f32.mrb[0].mxu0
    %4276 = vmatprep.mubr.f32.mxu0 0.0
    %4277 = vmatmul.mubr.f32.gmra.mrb[0].mxu0 %v4175
    %v4278 = vpop.f32.mrb[0].mxu0
    %v4279 = vadd.f32 %v4135, %v4278
    %v4280 = vpop.f32.mrb[0].mxu0
    %4281 = vdwg.mxu0
    %v4282 = vtanh.pop %v4244
    %v4283 = vtanh.pop %v4249
    %v4284 = vtanh.pop %v4254
    %v4285 = vtanh.pop %v4259
    %v4286 = vtanh.pop %v4264
    %v4287 = vtanh.pop %v4269
    %v4288 = vtanh.pop %v4274
    %v4289 = vtanh.pop %v4279
    %v4291 = vlaneseq
    %v4292 = vshrl.u32 %v4291, 7
    %v4293 = vsub.s32 0, %v4292
    %v4294 = vrot.slane %v3923, %v4293
    %v4297 = vsel %vm3545, %v4282, 0
    %v4300 = vsel %vm3545, %v4283, 0
    %v4303 = vsel %vm3545, %v4284, 0
    %v4306 = vsel %vm3545, %v4285, 0
    %v4309 = vsel %vm3545, %v4286, 0
    %v4312 = vsel %vm3545, %v4287, 0
    %v4315 = vsel %vm3545, %v4288, 0
    %v4318 = vsel %vm3545, %v4289, 0
    %4320 = vmatprep.subr.mxu0 0.0
    %4321 = vmatpush1.msra.mxu0 %v3920
    %4322 = vmatprep.subr.mxu0 0.0
    %4323 = vmatpush1.msra.mxu0 %v3921
    %4324 = vmatprep.subr.mxu0 0.0
    %4325 = vmatpush1.msra.mxu0 0.0
    %4326 = vmatprep.subr.mxu0 0.0
    %4327 = vmatpush1.msra.mxu0 0.0
    %4328 = vmatprep.subr.mxu0 0.0
    %4329 = vmatpush1.msra.mxu0 0.0
    %4330 = vmatprep.subr.mxu0 0.0
    %4331 = vmatpush1.msra.mxu0 0.0
    %4332 = vmatprep.subr.mxu0 0.0
    %4333 = vmatpush1.msra.mxu0 0.0
    %4334 = vmatprep.subr.mxu0 0.0
    %4335 = vmatpush1.msra.mxu0 0.0
    %4336 = vmatprep.subr.mxu0 0.0
    %4337 = vmatpush1.msra.mxu0 0.0
    %4338 = vmatprep.subr.mxu0 0.0
    %4339 = vmatpush1.msra.mxu0 0.0
    %4340 = vmatprep.subr.mxu0 0.0
    %4341 = vmatpush1.msra.mxu0 0.0
    %4342 = vmatprep.subr.mxu0 0.0
    %4343 = vmatpush1.msra.mxu0 0.0
    %4344 = vmatprep.subr.mxu0 0.0
    %4345 = vmatpush1.msra.mxu0 0.0
    %4346 = vmatprep.subr.mxu0 0.0
    %4347 = vmatpush1.msra.mxu0 0.0
    %4348 = vmatprep.subr.mxu0 0.0
    %4349 = vmatpush1.msra.mxu0 0.0
    %4350 = vmatprep.subr.mxu0 0.0
    %4351 = vmatpush1.msra.mxu0 0.0
    %4352 = vmatprep.subr.mxu0 0.0
    %4353 = vmatpush1.msra.mxu0 0.0
    %4354 = vmatprep.subr.mxu0 0.0
    %4355 = vmatpush1.msra.mxu0 0.0
    %4356 = vmatprep.subr.mxu0 0.0
    %4357 = vmatpush1.msra.mxu0 0.0
    %4358 = vmatprep.subr.mxu0 0.0
    %4359 = vmatpush1.msra.mxu0 0.0
    %4360 = vmatprep.subr.mxu0 0.0
    %4361 = vmatpush1.msra.mxu0 0.0
    %4362 = vmatprep.subr.mxu0 0.0
    %4363 = vmatpush1.msra.mxu0 0.0
    %4364 = vmatprep.subr.mxu0 0.0
    %4365 = vmatpush1.msra.mxu0 0.0
    %4366 = vmatprep.subr.mxu0 0.0
    %4367 = vmatpush1.msra.mxu0 0.0
    %4368 = vmatprep.subr.mxu0 0.0
    %4369 = vmatpush1.msra.mxu0 0.0
    %4370 = vmatprep.subr.mxu0 0.0
    %4371 = vmatpush1.msra.mxu0 0.0
    %4372 = vmatprep.subr.mxu0 0.0
    %4373 = vmatpush1.msra.mxu0 0.0
    %4374 = vmatprep.subr.mxu0 0.0
    %4375 = vmatpush1.msra.mxu0 0.0
    %4376 = vmatprep.subr.mxu0 0.0
    %4377 = vmatpush1.msra.mxu0 0.0
    %4378 = vmatprep.subr.mxu0 0.0
    %4379 = vmatpush1.msra.mxu0 0.0
    %4380 = vmatprep.subr.mxu0 0.0
    %4381 = vmatpush1.msra.mxu0 0.0
    %4382 = vmatprep.subr.mxu0 0.0
    %4383 = vmatpush1.msra.mxu0 0.0
    %4384 = vmatprep.mubr.f32.mxu0 0.0
    %4385 = vmatmul.mubr.f32.gmra.mrb[0].mxu0 %v4297
    %v4386 = vpop.f32.mrb[0].mxu0
    %v4387 = vadd.f32 %v4294, %v4386
    %v4388 = vpop.f32.mrb[0].mxu0
    %4389 = vmatprep.mubr.f32.mxu0 0.0
    %4390 = vmatmul.mubr.f32.gmra.mrb[0].mxu0 %v4300
    %v4391 = vpop.f32.mrb[0].mxu0
    %v4392 = vadd.f32 %v4294, %v4391
    %v4393 = vpop.f32.mrb[0].mxu0
    %4394 = vmatprep.mubr.f32.mxu0 0.0
    %4395 = vmatmul.mubr.f32.gmra.mrb[0].mxu0 %v4303
    %v4396 = vpop.f32.mrb[0].mxu0
    %v4397 = vadd.f32 %v4294, %v4396
    %v4398 = vpop.f32.mrb[0].mxu0
    %4399 = vmatprep.mubr.f32.mxu0 0.0
    %4400 = vmatmul.mubr.f32.gmra.mrb[0].mxu0 %v4306
    %v4401 = vpop.f32.mrb[0].mxu0
    %v4402 = vadd.f32 %v4294, %v4401
    %v4403 = vpop.f32.mrb[0].mxu0
    %4404 = vmatprep.mubr.f32.mxu0 0.0
    %4405 = vmatmul.mubr.f32.gmra.mrb[0].mxu0 %v4309
    %v4406 = vpop.f32.mrb[0].mxu0
    %v4407 = vadd.f32 %v4294, %v4406
    %v4408 = vpop.f32.mrb[0].mxu0
    %4409 = vmatprep.mubr.f32.mxu0 0.0
    %4410 = vmatmul.mubr.f32.gmra.mrb[0].mxu0 %v4312
    %v4411 = vpop.f32.mrb[0].mxu0
    %v4412 = vadd.f32 %v4294, %v4411
    %v4413 = vpop.f32.mrb[0].mxu0
    %4414 = vmatprep.mubr.f32.mxu0 0.0
    %4415 = vmatmul.mubr.f32.gmra.mrb[0].mxu0 %v4315
    %v4416 = vpop.f32.mrb[0].mxu0
    %v4417 = vadd.f32 %v4294, %v4416
    %v4418 = vpop.f32.mrb[0].mxu0
    %4419 = vmatprep.mubr.f32.mxu0 0.0
    %4420 = vmatmul.mubr.f32.gmra.mrb[0].mxu0 %v4318
    %v4421 = vpop.f32.mrb[0].mxu0
    %v4422 = vadd.f32 %v4294, %v4421
    %v4423 = vpop.f32.mrb[0].mxu0
    %4424 = vdwg.mxu0
    %v4425 = vsel %vm3675, %v4387, -inf
    %v4426 = vsel %vm3675, %v4392, -inf
    %v4427 = vsel %vm3675, %v4397, -inf
    %v4428 = vsel %vm3675, %v4402, -inf
    %v4429 = vsel %vm3675, %v4407, -inf
    %v4430 = vmax.f32 %v4425, %v4429
    %v4431 = vsel %vm3675, %v4412, -inf
    %v4432 = vmax.f32 %v4426, %v4431
    %v4433 = vsel %vm3675, %v4417, -inf
    %v4434 = vmax.f32 %v4427, %v4433
    %v4435 = vsel %vm3675, %v4422, -inf
    %v4436 = vmax.f32 %v4428, %v4435
    %v4437 = vmax.f32 %v4430, %v4432
    %v4438 = vmax.f32 %v4434, %v4436
    %v4439 = vmax.f32 %v4437, %v4438
    %v4440 = vsub.f32 %v4387, %v4439
    %v4441 = vsub.f32 %v4392, %v4439
    %v4442 = vsub.f32 %v4397, %v4439
    %v4443 = vsub.f32 %v4402, %v4439
    %v4444 = vsub.f32 %v4407, %v4439
    %v4445 = vsub.f32 %v4412, %v4439
    %v4446 = vsub.f32 %v4417, %v4439
    %v4447 = vsub.f32 %v4422, %v4439
    %v4448 = vmul.f32 %v4440, 1.442695
    %v4449 = vpow.pop %v4448
    %v4450 = vmul.f32 %v4441, 1.442695
    %v4451 = vpow.pop %v4450
    %v4452 = vmul.f32 %v4442, 1.442695
    %v4453 = vpow.pop %v4452
    %v4454 = vmul.f32 %v4443, 1.442695
    %v4455 = vpow.pop %v4454
    %v4456 = vmul.f32 %v4444, 1.442695
    %v4457 = vpow.pop %v4456
    %v4458 = vmul.f32 %v4445, 1.442695
    %v4459 = vpow.pop %v4458
    %v4460 = vmul.f32 %v4446, 1.442695
    %v4461 = vpow.pop %v4460
    %v4462 = vmul.f32 %v4447, 1.442695
    %v4463 = vpow.pop %v4462
    %v4464 = vsel %vm3675, %v4449, 0.0
    %v4465 = vsel %vm3675, %v4451, 0.0
    %v4466 = vadd.f32 %v4464, %v4465
    %v4467 = vsel %vm3675, %v4453, 0.0
    %v4468 = vadd.f32 %v4466, %v4467
    %v4469 = vsel %vm3675, %v4455, 0.0
    %v4470 = vadd.f32 %v4468, %v4469
    %v4471 = vsel %vm3675, %v4457, 0.0
    %v4472 = vadd.f32 %v4470, %v4471
    %v4473 = vsel %vm3675, %v4459, 0.0
    %v4474 = vadd.f32 %v4472, %v4473
    %v4475 = vsel %vm3675, %v4461, 0.0
    %v4476 = vadd.f32 %v4474, %v4475
    %v4477 = vsel %vm3675, %v4463, 0.0
    %v4478 = vadd.f32 %v4476, %v4477
    %v4479 = vrcp.pop %v4478
    %v4480 = vmul.f32 %v4449, %v4479
    %v4481 = vmul.f32 %v4451, %v4479
    %v4482 = vmul.f32 %v4453, %v4479
    %v4483 = vmul.f32 %v4455, %v4479
    %v4484 = vmul.f32 %v4457, %v4479
    %v4485 = vmul.f32 %v4459, %v4479
    %v4486 = vmul.f32 %v4461, %v4479
    %v4487 = vmul.f32 %v4463, %v4479
    %4489 = vset.pattern.permute.xlu0 0
    %4490 = vperm.xlu0 %4489, %v4480
    %v4491 = vpop.permute.xlu0 %4490
    %4494 = vset.pattern.permute.xlu0 0
    %4495 = vperm.xlu0 %4494, %v4481
    %v4496 = vpop.permute.xlu0 %4495
    %4499 = vset.pattern.permute.xlu0 0
    %4500 = vperm.xlu0 %4499, %v4482
    %v4501 = vpop.permute.xlu0 %4500
    %4504 = vset.pattern.permute.xlu0 0
    %4505 = vperm.xlu0 %4504, %v4483
    %v4506 = vpop.permute.xlu0 %4505
    %4509 = vset.pattern.permute.xlu0 0
    %4510 = vperm.xlu0 %4509, %v4484
    %v4511 = vpop.permute.xlu0 %4510
    %4514 = vset.pattern.permute.xlu0 0
    %4515 = vperm.xlu0 %4514, %v4485
    %v4516 = vpop.permute.xlu0 %4515
    %4519 = vset.pattern.permute.xlu0 0
    %4520 = vperm.xlu0 %4519, %v4486
    %v4521 = vpop.permute.xlu0 %4520
    %4524 = vset.pattern.permute.xlu0 0
    %4525 = vperm.xlu0 %4524, %v4487
    %v4526 = vpop.permute.xlu0 %4525
    %v4528 = vmul.f32 %v4123, %v4491
    %v4529 = vmul.f32 %v4124, %v4496
    %v4530 = vmul.f32 %v4125, %v4501
    %v4531 = vmul.f32 %v4126, %v4506
    %v4532 = vmul.f32 %v4127, %v4511
    %v4533 = vmul.f32 %v4128, %v4516
    %v4534 = vmul.f32 %v4129, %v4521
    %v4535 = vmul.f32 %v4130, %v4526
    %vm4536 = vcmask 523520
    %v4537 = vsel %vm4536, %v4528, 0.0
    %v4538 = vsel %vm4536, %v4529, 0.0
    %v4539 = vadd.f32 %v4537, %v4538
    %v4540 = vsel %vm4536, %v4530, 0.0
    %v4541 = vadd.f32 %v4539, %v4540
    %v4542 = vsel %vm4536, %v4531, 0.0
    %v4543 = vadd.f32 %v4541, %v4542
    %v4544 = vsel %vm4536, %v4532, 0.0
    %v4545 = vadd.f32 %v4543, %v4544
    %v4546 = vsel %vm4536, %v4533, 0.0
    %v4547 = vadd.f32 %v4545, %v4546
    %v4548 = vsel %vm4536, %v4534, 0.0
    %v4549 = vadd.f32 %v4547, %v4548
    %v4550 = vsel %vm4536, %v4535, 0.0
    %v4551 = vadd.f32 %v4549, %v4550
    %v4553 = vlaneseq
    %v4554 = vshrl.u32 %v4553, 7
    %v4555 = vsub.s32 0, %v4554
    %v4556 = vrot.slane %v3930, %v4555
    %4559 = vrot.lane.b32.xlu0 %v4551, 96
    %v4560 = vpop.permute.xlu0 %4559
    %v4561 = vsel %vm3262, %v4560, 0
    %4563 = vmatprep.subr.mxu0 0.0
    %4564 = vmatpush1.msra.mxu0 %v3925
    %4565 = vmatprep.subr.mxu0 0.0
    %4566 = vmatpush1.msra.mxu0 %v3926
    %4567 = vmatprep.subr.mxu0 0.0
    %4568 = vmatpush1.msra.mxu0 %v3927
    %4569 = vmatprep.subr.mxu0 0.0
    %4570 = vmatpush1.msra.mxu0 %v3928
    %4571 = vmatprep.subr.mxu0 0.0
    %4572 = vmatpush1.msra.mxu0 0.0
    %4573 = vmatprep.subr.mxu0 0.0
    %4574 = vmatpush1.msra.mxu0 0.0
    %4575 = vmatprep.subr.mxu0 0.0
    %4576 = vmatpush1.msra.mxu0 0.0
    %4577 = vmatprep.subr.mxu0 0.0
    %4578 = vmatpush1.msra.mxu0 0.0
    %4579 = vmatprep.subr.mxu0 0.0
    %4580 = vmatpush1.msra.mxu0 0.0
    %4581 = vmatprep.subr.mxu0 0.0
    %4582 = vmatpush1.msra.mxu0 0.0
    %4583 = vmatprep.subr.mxu0 0.0
    %4584 = vmatpush1.msra.mxu0 0.0
    %4585 = vmatprep.subr.mxu0 0.0
    %4586 = vmatpush1.msra.mxu0 0.0
    %4587 = vmatprep.subr.mxu0 0.0
    %4588 = vmatpush1.msra.mxu0 0.0
    %4589 = vmatprep.subr.mxu0 0.0
    %4590 = vmatpush1.msra.mxu0 0.0
    %4591 = vmatprep.subr.mxu0 0.0
    %4592 = vmatpush1.msra.mxu0 0.0
    %4593 = vmatprep.subr.mxu0 0.0
    %4594 = vmatpush1.msra.mxu0 0.0
    %4595 = vmatprep.subr.mxu0 0.0
    %4596 = vmatpush1.msra.mxu0 0.0
    %4597 = vmatprep.subr.mxu0 0.0
    %4598 = vmatpush1.msra.mxu0 0.0
    %4599 = vmatprep.subr.mxu0 0.0
    %4600 = vmatpush1.msra.mxu0 0.0
    %4601 = vmatprep.subr.mxu0 0.0
    %4602 = vmatpush1.msra.mxu0 0.0
    %4603 = vmatprep.subr.mxu0 0.0
    %4604 = vmatpush1.msra.mxu0 0.0
    %4605 = vmatprep.subr.mxu0 0.0
    %4606 = vmatpush1.msra.mxu0 0.0
    %4607 = vmatprep.subr.mxu0 0.0
    %4608 = vmatpush1.msra.mxu0 0.0
    %4609 = vmatprep.subr.mxu0 0.0
    %4610 = vmatpush1.msra.mxu0 0.0
    %4611 = vmatprep.subr.mxu0 0.0
    %4612 = vmatpush1.msra.mxu0 0.0
    %4613 = vmatprep.subr.mxu0 0.0
    %4614 = vmatpush1.msra.mxu0 0.0
    %4615 = vmatprep.subr.mxu0 0.0
    %4616 = vmatpush1.msra.mxu0 0.0
    %4617 = vmatprep.subr.mxu0 0.0
    %4618 = vmatpush1.msra.mxu0 0.0
    %4619 = vmatprep.subr.mxu0 0.0
    %4620 = vmatpush1.msra.mxu0 0.0
    %4621 = vmatprep.subr.mxu0 0.0
    %4622 = vmatpush1.msra.mxu0 0.0
    %4623 = vmatprep.subr.mxu0 0.0
    %4624 = vmatpush1.msra.mxu0 0.0
    %4625 = vmatprep.subr.mxu0 0.0
    %4626 = vmatpush1.msra.mxu0 0.0
    %4627 = vmatprep.mubr.f32.mxu0 0.0
    %4628 = vmatmul.mubr.f32.gmra.mrb[0].mxu0 %v4561
    %v4629 = vpop.f32.mrb[0].mxu0
    %v4630 = vadd.f32 %v4556, %v4629
    %v4631 = vpop.f32.mrb[0].mxu0
    %4632 = vdwg.mxu0
    %v4633 = vmul.f32 %v4630, 0.5
    %v4634 = vmul.f32 %v4630, 0.70710677
    %vm4635 = vcmp.ge.f32.partialorder %v4634, 0.0
    %v4636 = vsel %vm4635, 1.0, -1.0
    %v4637 = vand.u32 2147483647, %v4634
    %v4638 = vmul.f32 %v4637, 0.3275911
    %v4639 = vadd.f32 %v4638, 1.0
    %v4640 = vrcp.pop %v4639
    %v4641 = vmul.f32 1.0, %v4640
    %v4642 = vmul.f32 %v4641, 1.0614054
    %v4643 = vadd.f32 %v4642, -1.4531521
    %v4644 = vmul.f32 %v4643, %v4641
    %v4645 = vadd.f32 %v4644, 1.4214138
    %v4646 = vmul.f32 %v4645, %v4641
    %v4647 = vadd.f32 %v4646, -0.28449672
    %v4648 = vmul.f32 %v4647, %v4641
    %v4649 = vadd.f32 %v4648, 0.2548296
    %v4650 = vmul.f32 %v4649, %v4641
    %v4651 = vsub.f32 0.0, %v4637
    %v4652 = vmul.f32 %v4651, %v4637
    %v4653 = vmul.f32 %v4652, 1.442695
    %v4654 = vpow.pop %v4653
    %v4655 = vmul.f32 %v4650, %v4654
    %v4656 = vsub.f32 1.0, %v4655
    %v4657 = vmul.f32 %v4636, %v4656
    %v4658 = vadd.f32 %v4657, 1.0
    %v4659 = vmul.f32 %v4633, %v4658
    %v4660 = vld [vmem:[%s35] sm:$0xff]
    %v4661 = vld [vmem:[%s35 + $0x8] sm:$0xff]
    %v4662 = vld [vmem:[%s35 + $0x10] sm:$0xff]
    %v4663 = vld [vmem:[%s35 + $0x18] sm:$0xff]
    %v4664 = vld [vmem:[#allocation25] sm:$0x1]
    %v4666 = vlaneseq
    %v4667 = vshrl.u32 %v4666, 7
    %v4668 = vsub.s32 0, %v4667
    %v4669 = vrot.slane %v4664, %v4668
    %v4672 = vsel %vm3262, %v4659, 0
    %4674 = vmatprep.subr.mxu0 0.0
    %4675 = vmatpush1.msra.mxu0 %v4660
    %4676 = vmatprep.subr.mxu0 0.0
    %4677 = vmatpush1.msra.mxu0 %v4661
    %4678 = vmatprep.subr.mxu0 0.0
    %4679 = vmatpush1.msra.mxu0 %v4662
    %4680 = vmatprep.subr.mxu0 0.0
    %4681 = vmatpush1.msra.mxu0 %v4663
    %4682 = vmatprep.subr.mxu0 0.0
    %4683 = vmatpush1.msra.mxu0 0.0
    %4684 = vmatprep.subr.mxu0 0.0
    %4685 = vmatpush1.msra.mxu0 0.0
    %4686 = vmatprep.subr.mxu0 0.0
    %4687 = vmatpush1.msra.mxu0 0.0
    %4688 = vmatprep.subr.mxu0 0.0
    %4689 = vmatpush1.msra.mxu0 0.0
    %4690 = vmatprep.subr.mxu0 0.0
    %4691 = vmatpush1.msra.mxu0 0.0
    %4692 = vmatprep.subr.mxu0 0.0
    %4693 = vmatpush1.msra.mxu0 0.0
    %4694 = vmatprep.subr.mxu0 0.0
    %4695 = vmatpush1.msra.mxu0 0.0
    %4696 = vmatprep.subr.mxu0 0.0
    %4697 = vmatpush1.msra.mxu0 0.0
    %4698 = vmatprep.subr.mxu0 0.0
    %4699 = vmatpush1.msra.mxu0 0.0
    %4700 = vmatprep.subr.mxu0 0.0
    %4701 = vmatpush1.msra.mxu0 0.0
    %4702 = vmatprep.subr.mxu0 0.0
    %4703 = vmatpush1.msra.mxu0 0.0
    %4704 = vmatprep.subr.mxu0 0.0
    %4705 = vmatpush1.msra.mxu0 0.0
    %4706 = vmatprep.subr.mxu0 0.0
    %4707 = vmatpush1.msra.mxu0 0.0
    %4708 = vmatprep.subr.mxu0 0.0
    %4709 = vmatpush1.msra.mxu0 0.0
    %4710 = vmatprep.subr.mxu0 0.0
    %4711 = vmatpush1.msra.mxu0 0.0
    %4712 = vmatprep.subr.mxu0 0.0
    %4713 = vmatpush1.msra.mxu0 0.0
    %4714 = vmatprep.subr.mxu0 0.0
    %4715 = vmatpush1.msra.mxu0 0.0
    %4716 = vmatprep.subr.mxu0 0.0
    %4717 = vmatpush1.msra.mxu0 0.0
    %4718 = vmatprep.subr.mxu0 0.0
    %4719 = vmatpush1.msra.mxu0 0.0
    %4720 = vmatprep.subr.mxu0 0.0
    %4721 = vmatpush1.msra.mxu0 0.0
    %4722 = vmatprep.subr.mxu0 0.0
    %4723 = vmatpush1.msra.mxu0 0.0
    %4724 = vmatprep.subr.mxu0 0.0
    %4725 = vmatpush1.msra.mxu0 0.0
    %4726 = vmatprep.subr.mxu0 0.0
    %4727 = vmatpush1.msra.mxu0 0.0
    %4728 = vmatprep.subr.mxu0 0.0
    %4729 = vmatpush1.msra.mxu0 0.0
    %4730 = vmatprep.subr.mxu0 0.0
    %4731 = vmatpush1.msra.mxu0 0.0
    %4732 = vmatprep.subr.mxu0 0.0
    %4733 = vmatpush1.msra.mxu0 0.0
    %4734 = vmatprep.subr.mxu0 0.0
    %4735 = vmatpush1.msra.mxu0 0.0
    %4736 = vmatprep.subr.mxu0 0.0
    %4737 = vmatpush1.msra.mxu0 0.0
    %4738 = vmatprep.mubr.f32.mxu0 0.0
    %4739 = vmatmul.mubr.f32.gmra.mrb[0].mxu0 %v4672
    %v4740 = vpop.f32.mrb[0].mxu0
    %v4741 = vadd.f32 %v4669, %v4740
    %v4742 = vpop.f32.mrb[0].mxu0
    %4743 = vdwg.mxu0
    %v4744 = vld [vmem:[#allocation26] sm:$0xff]
    %v4745 = vld [vmem:[#allocation26 + $0x8] sm:$0xff]
    %v4746 = vld [vmem:[#allocation26 + $0x10] sm:$0xff]
    %v4747 = vld [vmem:[#allocation26 + $0x18] sm:$0xff]
    %v4748 = vld [vmem:[#allocation28] sm:$0x1]
    %v4750 = vlaneseq
    %v4751 = vshrl.u32 %v4750, 7
    %v4752 = vsub.s32 0, %v4751
    %v4753 = vrot.slane %v4748, %v4752
    %v4756 = vsel %vm3262, %v4741, 0
    %4758 = vmatprep.subr.mxu0 0.0
    %4759 = vmatpush1.msra.mxu0 %v4744
    %4760 = vmatprep.subr.mxu0 0.0
    %4761 = vmatpush1.msra.mxu0 %v4745
    %4762 = vmatprep.subr.mxu0 0.0
    %4763 = vmatpush1.msra.mxu0 %v4746
    %4764 = vmatprep.subr.mxu0 0.0
    %4765 = vmatpush1.msra.mxu0 %v4747
    %4766 = vmatprep.subr.mxu0 0.0
    %4767 = vmatpush1.msra.mxu0 0.0
    %4768 = vmatprep.subr.mxu0 0.0
    %4769 = vmatpush1.msra.mxu0 0.0
    %4770 = vmatprep.subr.mxu0 0.0
    %4771 = vmatpush1.msra.mxu0 0.0
    %4772 = vmatprep.subr.mxu0 0.0
    %4773 = vmatpush1.msra.mxu0 0.0
    %4774 = vmatprep.subr.mxu0 0.0
    %4775 = vmatpush1.msra.mxu0 0.0
    %4776 = vmatprep.subr.mxu0 0.0
    %4777 = vmatpush1.msra.mxu0 0.0
    %4778 = vmatprep.subr.mxu0 0.0
    %4779 = vmatpush1.msra.mxu0 0.0
    %4780 = vmatprep.subr.mxu0 0.0
    %4781 = vmatpush1.msra.mxu0 0.0
    %4782 = vmatprep.subr.mxu0 0.0
    %4783 = vmatpush1.msra.mxu0 0.0
    %4784 = vmatprep.subr.mxu0 0.0
    %4785 = vmatpush1.msra.mxu0 0.0
    %4786 = vmatprep.subr.mxu0 0.0
    %4787 = vmatpush1.msra.mxu0 0.0
    %4788 = vmatprep.subr.mxu0 0.0
    %4789 = vmatpush1.msra.mxu0 0.0
    %4790 = vmatprep.subr.mxu0 0.0
    %4791 = vmatpush1.msra.mxu0 0.0
    %4792 = vmatprep.subr.mxu0 0.0
    %4793 = vmatpush1.msra.mxu0 0.0
    %4794 = vmatprep.subr.mxu0 0.0
    %4795 = vmatpush1.msra.mxu0 0.0
    %4796 = vmatprep.subr.mxu0 0.0
    %4797 = vmatpush1.msra.mxu0 0.0
    %4798 = vmatprep.subr.mxu0 0.0
    %4799 = vmatpush1.msra.mxu0 0.0
    %4800 = vmatprep.subr.mxu0 0.0
    %4801 = vmatpush1.msra.mxu0 0.0
    %4802 = vmatprep.subr.mxu0 0.0
    %4803 = vmatpush1.msra.mxu0 0.0
    %4804 = vmatprep.subr.mxu0 0.0
    %4805 = vmatpush1.msra.mxu0 0.0
    %4806 = vmatprep.subr.mxu0 0.0
    %4807 = vmatpush1.msra.mxu0 0.0
    %4808 = vmatprep.subr.mxu0 0.0
    %4809 = vmatpush1.msra.mxu0 0.0
    %4810 = vmatprep.subr.mxu0 0.0
    %4811 = vmatpush1.msra.mxu0 0.0
    %4812 = vmatprep.subr.mxu0 0.0
    %4813 = vmatpush1.msra.mxu0 0.0
    %4814 = vmatprep.subr.mxu0 0.0
    %4815 = vmatpush1.msra.mxu0 0.0
    %4816 = vmatprep.subr.mxu0 0.0
    %4817 = vmatpush1.msra.mxu0 0.0
    %4818 = vmatprep.subr.mxu0 0.0
    %4819 = vmatpush1.msra.mxu0 0.0
    %4820 = vmatprep.subr.mxu0 0.0
    %4821 = vmatpush1.msra.mxu0 0.0
    %4822 = vmatprep.mubr.f32.mxu0 0.0
    %4823 = vmatmul.mubr.f32.gmra.mrb[0].mxu0 %v4756
    %v4824 = vpop.f32.mrb[0].mxu0
    %v4825 = vadd.f32 %v4753, %v4824
    %v4826 = vpop.f32.mrb[0].mxu0
    %4827 = vdwg.mxu0
    %v4828 = vld [vmem:[#allocation29] sm:$0xff]
    %v4829 = vld [vmem:[#allocation29 + $0x8] sm:$0xff]
    %v4830 = vld [vmem:[#allocation29 + $0x10] sm:$0xff]
    %v4831 = vld [vmem:[#allocation29 + $0x18] sm:$0xff]
    %v4832 = vld [vmem:[#allocation31] sm:$0xff]
    %v4833 = vld [vmem:[#allocation31 + $0x8] sm:$0xff]
    %v4834 = vld [vmem:[#allocation31 + $0x10] sm:$0xff]
    %v4835 = vld [vmem:[#allocation31 + $0x18] sm:$0xff]
    %v4837 = vsel %vm3262, %v4825, 0
    %4839 = vmatprep.subr.mxu0 0.0
    %4840 = vmatpush1.msra.mxu0 %v4832
    %4841 = vmatprep.subr.mxu0 0.0
    %4842 = vmatpush1.msra.mxu0 %v4833
    %4843 = vmatprep.subr.mxu0 0.0
    %4844 = vmatpush1.msra.mxu0 %v4834
    %4845 = vmatprep.subr.mxu0 0.0
    %4846 = vmatpush1.msra.mxu0 %v4835
    %4847 = vmatprep.subr.mxu0 0.0
    %4848 = vmatpush1.msra.mxu0 0.0
    %4849 = vmatprep.subr.mxu0 0.0
    %4850 = vmatpush1.msra.mxu0 0.0
    %4851 = vmatprep.subr.mxu0 0.0
    %4852 = vmatpush1.msra.mxu0 0.0
    %4853 = vmatprep.subr.mxu0 0.0
    %4854 = vmatpush1.msra.mxu0 0.0
    %4855 = vmatprep.subr.mxu0 0.0
    %4856 = vmatpush1.msra.mxu0 0.0
    %4857 = vmatprep.subr.mxu0 0.0
    %4858 = vmatpush1.msra.mxu0 0.0
    %4859 = vmatprep.subr.mxu0 0.0
    %4860 = vmatpush1.msra.mxu0 0.0
    %4861 = vmatprep.subr.mxu0 0.0
    %4862 = vmatpush1.msra.mxu0 0.0
    %4863 = vmatprep.subr.mxu0 0.0
    %4864 = vmatpush1.msra.mxu0 0.0
    %4865 = vmatprep.subr.mxu0 0.0
    %4866 = vmatpush1.msra.mxu0 0.0
    %4867 = vmatprep.subr.mxu0 0.0
    %4868 = vmatpush1.msra.mxu0 0.0
    %4869 = vmatprep.subr.mxu0 0.0
    %4870 = vmatpush1.msra.mxu0 0.0
    %4871 = vmatprep.subr.mxu0 0.0
    %4872 = vmatpush1.msra.mxu0 0.0
    %4873 = vmatprep.subr.mxu0 0.0
    %4874 = vmatpush1.msra.mxu0 0.0
    %4875 = vmatprep.subr.mxu0 0.0
    %4876 = vmatpush1.msra.mxu0 0.0
    %4877 = vmatprep.subr.mxu0 0.0
    %4878 = vmatpush1.msra.mxu0 0.0
    %4879 = vmatprep.subr.mxu0 0.0
    %4880 = vmatpush1.msra.mxu0 0.0
    %4881 = vmatprep.subr.mxu0 0.0
    %4882 = vmatpush1.msra.mxu0 0.0
    %4883 = vmatprep.subr.mxu0 0.0
    %4884 = vmatpush1.msra.mxu0 0.0
    %4885 = vmatprep.subr.mxu0 0.0
    %4886 = vmatpush1.msra.mxu0 0.0
    %4887 = vmatprep.subr.mxu0 0.0
    %4888 = vmatpush1.msra.mxu0 0.0
    %4889 = vmatprep.subr.mxu0 0.0
    %4890 = vmatpush1.msra.mxu0 0.0
    %4891 = vmatprep.subr.mxu0 0.0
    %4892 = vmatpush1.msra.mxu0 0.0
    %4893 = vmatprep.subr.mxu0 0.0
    %4894 = vmatpush1.msra.mxu0 0.0
    %4895 = vmatprep.subr.mxu0 0.0
    %4896 = vmatpush1.msra.mxu0 0.0
    %4897 = vmatprep.subr.mxu0 0.0
    %4898 = vmatpush1.msra.mxu0 0.0
    %4899 = vmatprep.subr.mxu0 0.0
    %4900 = vmatpush1.msra.mxu0 0.0
    %4901 = vmatprep.subr.mxu0 0.0
    %4902 = vmatpush1.msra.mxu0 0.0
    %4903 = vmatprep.mubr.f32.mxu0 0.0
    %4904 = vmatmul.mubr.f32.gmra.mrb[0].mxu0 %v4837
    %v4905 = vpop.f32.mrb[0].mxu0
    %v4906 = vadd.f32 0.0, %v4905
    %v4907 = vpop.f32.mrb[0].mxu0
    %4908 = vdwg.mxu0
    %v4910 = vsel %vm3262, %v3907, 0
    %4912 = vmatprep.subr.mxu0 0.0
    %4913 = vmatpush1.msra.mxu0 %v4828
    %4914 = vmatprep.subr.mxu0 0.0
    %4915 = vmatpush1.msra.mxu0 %v4829
    %4916 = vmatprep.subr.mxu0 0.0
    %4917 = vmatpush1.msra.mxu0 %v4830
    %4918 = vmatprep.subr.mxu0 0.0
    %4919 = vmatpush1.msra.mxu0 %v4831
    %4920 = vmatprep.subr.mxu0 0.0
    %4921 = vmatpush1.msra.mxu0 0.0
    %4922 = vmatprep.subr.mxu0 0.0
    %4923 = vmatpush1.msra.mxu0 0.0
    %4924 = vmatprep.subr.mxu0 0.0
    %4925 = vmatpush1.msra.mxu0 0.0
    %4926 = vmatprep.subr.mxu0 0.0
    %4927 = vmatpush1.msra.mxu0 0.0
    %4928 = vmatprep.subr.mxu0 0.0
    %4929 = vmatpush1.msra.mxu0 0.0
    %4930 = vmatprep.subr.mxu0 0.0
    %4931 = vmatpush1.msra.mxu0 0.0
    %4932 = vmatprep.subr.mxu0 0.0
    %4933 = vmatpush1.msra.mxu0 0.0
    %4934 = vmatprep.subr.mxu0 0.0
    %4935 = vmatpush1.msra.mxu0 0.0
    %4936 = vmatprep.subr.mxu0 0.0
    %4937 = vmatpush1.msra.mxu0 0.0
    %4938 = vmatprep.subr.mxu0 0.0
    %4939 = vmatpush1.msra.mxu0 0.0
    %4940 = vmatprep.subr.mxu0 0.0
    %4941 = vmatpush1.msra.mxu0 0.0
    %4942 = vmatprep.subr.mxu0 0.0
    %4943 = vmatpush1.msra.mxu0 0.0
    %4944 = vmatprep.subr.mxu0 0.0
    %4945 = vmatpush1.msra.mxu0 0.0
    %4946 = vmatprep.subr.mxu0 0.0
    %4947 = vmatpush1.msra.mxu0 0.0
    %4948 = vmatprep.subr.mxu0 0.0
    %4949 = vmatpush1.msra.mxu0 0.0
    %4950 = vmatprep.subr.mxu0 0.0
    %4951 = vmatpush1.msra.mxu0 0.0
    %4952 = vmatprep.subr.mxu0 0.0
    %4953 = vmatpush1.msra.mxu0 0.0
    %4954 = vmatprep.subr.mxu0 0.0
    %4955 = vmatpush1.msra.mxu0 0.0
    %4956 = vmatprep.subr.mxu0 0.0
    %4957 = vmatpush1.msra.mxu0 0.0
    %4958 = vmatprep.subr.mxu0 0.0
    %4959 = vmatpush1.msra.mxu0 0.0
    %4960 = vmatprep.subr.mxu0 0.0
    %4961 = vmatpush1.msra.mxu0 0.0
    %4962 = vmatprep.subr.mxu0 0.0
    %4963 = vmatpush1.msra.mxu0 0.0
    %4964 = vmatprep.subr.mxu0 0.0
    %4965 = vmatpush1.msra.mxu0 0.0
    %4966 = vmatprep.subr.mxu0 0.0
    %4967 = vmatpush1.msra.mxu0 0.0
    %4968 = vmatprep.subr.mxu0 0.0
    %4969 = vmatpush1.msra.mxu0 0.0
    %4970 = vmatprep.subr.mxu0 0.0
    %4971 = vmatpush1.msra.mxu0 0.0
    %4972 = vmatprep.subr.mxu0 0.0
    %4973 = vmatpush1.msra.mxu0 0.0
    %4974 = vmatprep.subr.mxu0 0.0
    %4975 = vmatpush1.msra.mxu0 0.0
    %4976 = vmatprep.mubr.f32.mxu0 0.0
    %4977 = vmatmul.mubr.f32.gmra.mrb[0].mxu0 %v4910
    %v4978 = vpop.f32.mrb[0].mxu0
    %v4979 = vadd.f32 %v4906, %v4978
    %v4980 = vpop.f32.mrb[0].mxu0
    %4981 = vdwg.mxu0
    %v4982 = vld [vmem:[#allocation32] sm:$0x1]
    %v4984 = vlaneseq
    %v4985 = vshrl.u32 %v4984, 7
    %v4986 = vsub.s32 0, %v4985
    %v4987 = vrot.slane %v4982, %v4986
    %v4989 = vadd.f32 %v4979, %v4987
    %v4990 = vxor.u32 %v4989, 2147483648
    %v4991 = vmul.f32 %v4990, 1.442695
    %v4992 = vpow.pop %v4991
    %v4993 = vadd.f32 %v4992, 1.0
    %v4994 = vrcp.pop %v4993
    %v4995 = vmul.f32 1.0, %v4994
    %v4996 = vmul.f32 %v4995, %v4825
    %v4997 = vadd.f32 %v3907, %v4996
    %v4998 = vsel %vm3262, %v4997, 0.0
    %4999 = vadd.xlane.f32.xlu0 %v4998
    %v5000 = vpop.xlane.xlu0 %4999
    %v5001 = vmul.f32 %v5000, %v3287
    %v5002 = vsub.f32 %v4997, %v5001
    %v5003 = vmul.f32 %v5002, %v5002
    %v5004 = vsel %vm3262, %v5003, 0.0
    %5005 = vadd.xlane.f32.xlu0 %v5004
    %v5006 = vpop.xlane.xlu0 %5005
    %v5007 = vmul.f32 %v5006, %v3287
    %v5008 = vadd.f32 %v5007, 1e-05
    %v5009 = vrsqrt.pop %v5008
    %v5010 = vmul.f32 %v5002, %v5009
    %v5011 = vld [vmem:[#allocation34] sm:$0x1]
    %v5013 = vlaneseq
    %v5014 = vshrl.u32 %v5013, 7
    %v5015 = vsub.s32 0, %v5014
    %v5016 = vrot.slane %v5011, %v5015
    %v5018 = vmul.f32 %v5010, %v5016
    %v5019 = vld [vmem:[%s51] sm:$0x1]
    %v5021 = vlaneseq
    %v5022 = vshrl.u32 %v5021, 7
    %v5023 = vsub.s32 0, %v5022
    %v5024 = vrot.slane %v5019, %v5023
    %v5026 = vadd.f32 %v5018, %v5024
    %v5027 = vld [vmem:[%s53] sm:$0xff]
    %v5028 = vld [vmem:[%s53 + $0x8] sm:$0xff]
    %v5029 = vld [vmem:[%s53 + $0x10] sm:$0xff]
    %v5030 = vld [vmem:[%s53 + $0x18] sm:$0xff]
    %v5031 = vld [vmem:[%s55] sm:$0x1]
    %v5033 = vlaneseq
    %v5034 = vshrl.u32 %v5033, 7
    %v5035 = vsub.s32 0, %v5034
    %v5036 = vrot.slane %v5031, %v5035
    %v5039 = vsel %vm3262, %v5026, 0
    %5041 = vmatprep.subr.mxu0 0.0
    %5042 = vmatpush1.msra.mxu0 %v5027
    %5043 = vmatprep.subr.mxu0 0.0
    %5044 = vmatpush1.msra.mxu0 %v5028
    %5045 = vmatprep.subr.mxu0 0.0
    %5046 = vmatpush1.msra.mxu0 %v5029
    %5047 = vmatprep.subr.mxu0 0.0
    %5048 = vmatpush1.msra.mxu0 %v5030
    %5049 = vmatprep.subr.mxu0 0.0
    %5050 = vmatpush1.msra.mxu0 0.0
    %5051 = vmatprep.subr.mxu0 0.0
    %5052 = vmatpush1.msra.mxu0 0.0
    %5053 = vmatprep.subr.mxu0 0.0
    %5054 = vmatpush1.msra.mxu0 0.0
    %5055 = vmatprep.subr.mxu0 0.0
    %5056 = vmatpush1.msra.mxu0 0.0
    %5057 = vmatprep.subr.mxu0 0.0
    %5058 = vmatpush1.msra.mxu0 0.0
    %5059 = vmatprep.subr.mxu0 0.0
    %5060 = vmatpush1.msra.mxu0 0.0
    %5061 = vmatprep.subr.mxu0 0.0
    %5062 = vmatpush1.msra.mxu0 0.0
    %5063 = vmatprep.subr.mxu0 0.0
    %5064 = vmatpush1.msra.mxu0 0.0
    %5065 = vmatprep.subr.mxu0 0.0
    %5066 = vmatpush1.msra.mxu0 0.0
    %5067 = vmatprep.subr.mxu0 0.0
    %5068 = vmatpush1.msra.mxu0 0.0
    %5069 = vmatprep.subr.mxu0 0.0
    %5070 = vmatpush1.msra.mxu0 0.0
    %5071 = vmatprep.subr.mxu0 0.0
    %5072 = vmatpush1.msra.mxu0 0.0
    %5073 = vmatprep.subr.mxu0 0.0
    %5074 = vmatpush1.msra.mxu0 0.0
    %5075 = vmatprep.subr.mxu0 0.0
    %5076 = vmatpush1.msra.mxu0 0.0
    %5077 = vmatprep.subr.mxu0 0.0
    %5078 = vmatpush1.msra.mxu0 0.0
    %5079 = vmatprep.subr.mxu0 0.0
    %5080 = vmatpush1.msra.mxu0 0.0
    %5081 = vmatprep.subr.mxu0 0.0
    %5082 = vmatpush1.msra.mxu0 0.0
    %5083 = vmatprep.subr.mxu0 0.0
    %5084 = vmatpush1.msra.mxu0 0.0
    %5085 = vmatprep.subr.mxu0 0.0
    %5086 = vmatpush1.msra.mxu0 0.0
    %5087 = vmatprep.subr.mxu0 0.0
    %5088 = vmatpush1.msra.mxu0 0.0
    %5089 = vmatprep.subr.mxu0 0.0
    %5090 = vmatpush1.msra.mxu0 0.0
    %5091 = vmatprep.subr.mxu0 0.0
    %5092 = vmatpush1.msra.mxu0 0.0
    %5093 = vmatprep.subr.mxu0 0.0
    %5094 = vmatpush1.msra.mxu0 0.0
    %5095 = vmatprep.subr.mxu0 0.0
    %5096 = vmatpush1.msra.mxu0 0.0
    %5097 = vmatprep.subr.mxu0 0.0
    %5098 = vmatpush1.msra.mxu0 0.0
    %5099 = vmatprep.subr.mxu0 0.0
    %5100 = vmatpush1.msra.mxu0 0.0
    %5101 = vmatprep.subr.mxu0 0.0
    %5102 = vmatpush1.msra.mxu0 0.0
    %5103 = vmatprep.subr.mxu0 0.0
    %5104 = vmatpush1.msra.mxu0 0.0
    %5105 = vmatprep.mubr.f32.mxu0 0.0
    %5106 = vmatmul.mubr.f32.gmra.mrb[0].mxu0 %v5039
    %v5107 = vpop.f32.mrb[0].mxu0
    %v5108 = vadd.f32 %v5036, %v5107
    %v5109 = vpop.f32.mrb[0].mxu0
    %5110 = vdwg.mxu0
    %v5111 = vmul.f32 %v5108, 0.5
    %v5112 = vmul.f32 %v5108, 0.70710677
    %vm5113 = vcmp.ge.f32.partialorder %v5112, 0.0
    %v5114 = vsel %vm5113, 1.0, -1.0
    %v5115 = vand.u32 2147483647, %v5112
    %v5116 = vmul.f32 %v5115, 0.3275911
    %v5117 = vadd.f32 %v5116, 1.0
    %v5118 = vrcp.pop %v5117
    %v5119 = vmul.f32 1.0, %v5118
    %v5120 = vmul.f32 %v5119, 1.0614054
    %v5121 = vadd.f32 %v5120, -1.4531521
    %v5122 = vmul.f32 %v5121, %v5119
    %v5123 = vadd.f32 %v5122, 1.4214138
    %v5124 = vmul.f32 %v5123, %v5119
    %v5125 = vadd.f32 %v5124, -0.28449672
    %v5126 = vmul.f32 %v5125, %v5119
    %v5127 = vadd.f32 %v5126, 0.2548296
    %v5128 = vmul.f32 %v5127, %v5119
    %v5129 = vsub.f32 0.0, %v5115
    %v5130 = vmul.f32 %v5129, %v5115
    %v5131 = vmul.f32 %v5130, 1.442695
    %v5132 = vpow.pop %v5131
    %v5133 = vmul.f32 %v5128, %v5132
    %v5134 = vsub.f32 1.0, %v5133
    %v5135 = vmul.f32 %v5114, %v5134
    %v5136 = vadd.f32 %v5135, 1.0
    %v5137 = vmul.f32 %v5111, %v5136
    %v5138 = vld [vmem:[%s57] sm:$0xff]
    %v5139 = vld [vmem:[%s57 + $0x8] sm:$0xff]
    %v5140 = vld [vmem:[%s57 + $0x10] sm:$0xff]
    %v5141 = vld [vmem:[%s57 + $0x18] sm:$0xff]
    %v5142 = vld [vmem:[%s59] sm:$0x1]
    %v5144 = vlaneseq
    %v5145 = vshrl.u32 %v5144, 7
    %v5146 = vsub.s32 0, %v5145
    %v5147 = vrot.slane %v5142, %v5146
    %v5150 = vsel %vm3262, %v5137, 0
    %5152 = vmatprep.subr.mxu0 0.0
    %5153 = vmatpush1.msra.mxu0 %v5138
    %5154 = vmatprep.subr.mxu0 0.0
    %5155 = vmatpush1.msra.mxu0 %v5139
    %5156 = vmatprep.subr.mxu0 0.0
    %5157 = vmatpush1.msra.mxu0 %v5140
    %5158 = vmatprep.subr.mxu0 0.0
    %5159 = vmatpush1.msra.mxu0 %v5141
    %5160 = vmatprep.subr.mxu0 0.0
    %5161 = vmatpush1.msra.mxu0 0.0
    %5162 = vmatprep.subr.mxu0 0.0
    %5163 = vmatpush1.msra.mxu0 0.0
    %5164 = vmatprep.subr.mxu0 0.0
    %5165 = vmatpush1.msra.mxu0 0.0
    %5166 = vmatprep.subr.mxu0 0.0
    %5167 = vmatpush1.msra.mxu0 0.0
    %5168 = vmatprep.subr.mxu0 0.0
    %5169 = vmatpush1.msra.mxu0 0.0
    %5170 = vmatprep.subr.mxu0 0.0
    %5171 = vmatpush1.msra.mxu0 0.0
    %5172 = vmatprep.subr.mxu0 0.0
    %5173 = vmatpush1.msra.mxu0 0.0
    %5174 = vmatprep.subr.mxu0 0.0
    %5175 = vmatpush1.msra.mxu0 0.0
    %5176 = vmatprep.subr.mxu0 0.0
    %5177 = vmatpush1.msra.mxu0 0.0
    %5178 = vmatprep.subr.mxu0 0.0
    %5179 = vmatpush1.msra.mxu0 0.0
    %5180 = vmatprep.subr.mxu0 0.0
    %5181 = vmatpush1.msra.mxu0 0.0
    %5182 = vmatprep.subr.mxu0 0.0
    %5183 = vmatpush1.msra.mxu0 0.0
    %5184 = vmatprep.subr.mxu0 0.0
    %5185 = vmatpush1.msra.mxu0 0.0
    %5186 = vmatprep.subr.mxu0 0.0
    %5187 = vmatpush1.msra.mxu0 0.0
    %5188 = vmatprep.subr.mxu0 0.0
    %5189 = vmatpush1.msra.mxu0 0.0
    %5190 = vmatprep.subr.mxu0 0.0
    %5191 = vmatpush1.msra.mxu0 0.0
    %5192 = vmatprep.subr.mxu0 0.0
    %5193 = vmatpush1.msra.mxu0 0.0
    %5194 = vmatprep.subr.mxu0 0.0
    %5195 = vmatpush1.msra.mxu0 0.0
    %5196 = vmatprep.subr.mxu0 0.0
    %5197 = vmatpush1.msra.mxu0 0.0
    %5198 = vmatprep.subr.mxu0 0.0
    %5199 = vmatpush1.msra.mxu0 0.0
    %5200 = vmatprep.subr.mxu0 0.0
    %5201 = vmatpush1.msra.mxu0 0.0
    %5202 = vmatprep.subr.mxu0 0.0
    %5203 = vmatpush1.msra.mxu0 0.0
    %5204 = vmatprep.subr.mxu0 0.0
    %5205 = vmatpush1.msra.mxu0 0.0
    %5206 = vmatprep.subr.mxu0 0.0
    %5207 = vmatpush1.msra.mxu0 0.0
    %5208 = vmatprep.subr.mxu0 0.0
    %5209 = vmatpush1.msra.mxu0 0.0
    %5210 = vmatprep.subr.mxu0 0.0
    %5211 = vmatpush1.msra.mxu0 0.0
    %5212 = vmatprep.subr.mxu0 0.0
    %5213 = vmatpush1.msra.mxu0 0.0
    %5214 = vmatprep.subr.mxu0 0.0
    %5215 = vmatpush1.msra.mxu0 0.0
    %5216 = vmatprep.mubr.f32.mxu0 0.0
    %5217 = vmatmul.mubr.f32.gmra.mrb[0].mxu0 %v5150
    %v5218 = vpop.f32.mrb[0].mxu0
    %v5219 = vadd.f32 %v5147, %v5218
    %v5220 = vpop.f32.mrb[0].mxu0
    %5221 = vdwg.mxu0
    %vm5222 = vcmask 15360
    %5223 = vst.msk [vmem:[%s61] sm:$0xff] %vm5222, %v5219
    // Predicated region
    $region198: #{tpu_custom_call.1} parent=1 // pred_check
      _
    $region199: #{tpu_custom_call.1} parent=1 // pred_check_branch
      %5225 = sbr.rel (0) target = $region201
    $region200: #{tpu_custom_call.1} parent=1 // pred_region
      _
    $region201: #{tpu_custom_call.1} parent=1 // pred_fallthru
      _
    // Predicated region
    $region202: #{tpu_custom_call.1} parent=1 // pred_check
      _
    $region203: #{tpu_custom_call.1} parent=1 // pred_check_branch
      %5227 = sbr.rel (0) target = $region205
    $region204: #{tpu_custom_call.1} parent=1 // pred_region
      _
    $region205: #{tpu_custom_call.1} parent=1 // pred_fallthru
      _
    %5228 = vsyncpa [#allocation7], 1
    %5229 = vsyncpa [#allocation9], 1
    %5230 = vsyncpa [#allocation12], 1
    %5231 = vsyncpa [#allocation15], 1
    %5232 = vsyncpa [#allocation18], 1
    %5233 = vsyncpa [#allocation21], 1
    %5234 = vsyncpa [#allocation24], 1
    %5235 = vsyncpa [#allocation27], 1
    %5236 = vsyncpa [#allocation30], 1
    %5237 = vsyncpa [#allocation33], 1

</llo_original>
